<compile_context>
chip_gen: v7x
topology: tpu7x:2x2x1
jax: 0.10.0
libtpu: 0.0.40
codegen_flags: <defaults>
</compile_context>

<pallas_src>
import functools

import numpy as np
import jax
import jax.numpy as jnp
from jax.experimental import pallas as pl
from jax.experimental.pallas import tpu as pltpu

INPUT_DIM = 2      # opt.input_dim (== output_dim, required by the autoregressive loop)
EMBED_DIM = 16
HIDDEN_DIM = 16
OUTPUT_DIM = 2
OUTPUT_N = 50

# Packed-weight slab layout: every piece padded to 128 lanes, 8-row aligned.
_R_WIH = 0      # rows 0:C     [ we@enc_wih | we@dec_wih ]                     (C, 8H)
_R_BCOMB = 8    # row  8       [ be@enc_wih + enc_b | be@dec_wih + dec_b ]     (1, 8H)
_R_BBIG = 16    # row  16      [ b_fold | bo ]                                 (1, 4H+2)
_R_WHH_E = 24   # rows 24:40   encoder weight_hh                               (H, 4H)
_R_WHH_D = 40   # rows 40:56   decoder weight_hh (step 0 only)                 (H, 4H)
_R_WHH_B = 56   # rows 56:72   [ whh_fold | wo ]                               (H, 4H+2)
_PACK_ROWS = 72
_PACK_LANES = 128


# -----------------------------------------------------------------------------
# Pallas kernel
# -----------------------------------------------------------------------------
def _seq2seq_kernel(x_ref, pack_ref, out_ref, *, in_n, output_n, batch, hidden, cdim):
    B, H = batch, hidden
    H4 = 4 * H

    # One-time static slices of the single packed weight slab (outside the loops).
    wih_comb = pack_ref[_R_WIH:_R_WIH + cdim, :]                 # (C, 8H)
    b_comb = pack_ref[_R_BCOMB:_R_BCOMB + 1, :]                  # (1, 8H)
    b_big = pack_ref[_R_BBIG:_R_BBIG + 1, 0:H4 + OUTPUT_DIM]     # (1, 4H+2)
    whh_e = pack_ref[_R_WHH_E:_R_WHH_E + H, 0:H4]                # (H, 4H)
    whh_d = pack_ref[_R_WHH_D:_R_WHH_D + H, 0:H4]                # (H, 4H)
    whh_big = pack_ref[_R_WHH_B:_R_WHH_B + H, 0:H4 + OUTPUT_DIM]  # (H, 4H+2)

    # Bulk, off-the-serial-chain input projection: encoder gate contributions in
    # lanes 0:4H and decoder-step-0 contribution in lanes 4H:8H (biases folded in).
    pre_all = (jnp.dot(x_ref[...], wih_comb, preferred_element_type=jnp.float32)
               + b_comb)                                          # (in_n*B, 8H)

    # Hoisted bias broadcast (JAX does not CSE broadcast_in_dim inside the loop).
    b_big_b = jnp.broadcast_to(b_big, (B, H4 + OUTPUT_DIM))

    def cell(gates, c):
        # gates: (B, 4H) pre-activations, PyTorch gate order [i, f, g, o].
        # sigmoid(x) == 0.5*(tanh(x/2)+1): one native tanh EUP op (no exp+recip chain).
        s = jnp.tanh(0.5 * gates) * 0.5 + 0.5
        i = s[:, 0 * H:1 * H]
        f = s[:, 1 * H:2 * H]
        o = s[:, 3 * H:4 * H]
        g = jnp.tanh(gates[:, 2 * H:3 * H])
        c_new = f * c + i * g
        h_new = o * jnp.tanh(c_new)
        return h_new, c_new

    h = jnp.zeros((B, H), jnp.float32)
    c = jnp.zeros((B, H), jnp.float32)

    # ---------------- encoder: ONE (B,H)@(H,4H) matmul per step (fully unrolled) ----
    for t in range(in_n):
        gates = (pre_all[t * B:(t + 1) * B, 0:H4]
                 + jnp.dot(h, whh_e, preferred_element_type=jnp.float32))
        h, c = cell(gates, c)

    # ---------------- decoder step 0: input term already precomputed ---------------
    gates = (pre_all[(in_n - 1) * B:in_n * B, H4:2 * H4]
             + jnp.dot(h, whh_d, preferred_element_type=jnp.float32))
    h, c = cell(gates, c)

    # ---------------- decoder steps 1..output_n-1: ONE fused matmul per step -------
    # Columns 0:4H are the folded gate pre-activations; columns 4H:4H+2 are y_{t-1}
    # (the previous step's Linear output), stored straight to the output block.
    for t in range(1, output_n):
        r = jnp.dot(h, whh_big, preferred_element_type=jnp.float32) + b_big_b
        out_ref[(t - 1) * B:t * B, :] = r[:, H4:H4 + OUTPUT_DIM]
        h, c = cell(r[:, 0:H4], c)

    # ---------------- last output y_{output_n-1}: reuse whh_big's tail columns ------
    r = jnp.dot(h, whh_big, preferred_element_type=jnp.float32) + b_big_b
    out_ref[(output_n - 1) * B:output_n * B, :] = r[:, H4:H4 + OUTPUT_DIM]


# -----------------------------------------------------------------------------
# Wrapper
# -----------------------------------------------------------------------------
def lstm_seq2seq_forward(x_btc, params):
    """x_btc: (batch, in_n, INPUT_DIM) float32 -> (batch, OUTPUT_N, OUTPUT_DIM)."""
    batch, in_n, cdim = x_btc.shape
    H, H4 = HIDDEN_DIM, 4 * HIDDEN_DIM
    assert H == 16 and cdim == INPUT_DIM  # packed-slab row layout assumes H == 16
    hp = jax.lax.Precision.HIGHEST        # one-time weight folds done in exact fp32

    we, be = params["we"], params["be"]
    wo, bo = params["wo"], params["bo"]

    # time-major, flattened to (in_n*batch, C) so the kernel never needs a reshape
    x_flat = jnp.transpose(x_btc, (1, 0, 2)).reshape(in_n * batch, cdim)

    # Fold input projections:  (x@we+be)@W_ih + b  ==  x@(we@W_ih) + (be@W_ih + b)
    wih_comb = jnp.concatenate(
        [jnp.dot(we, params["enc_wih"], precision=hp),
         jnp.dot(we, params["dec_wih"], precision=hp)], axis=1)              # (C, 8H)
    b_comb = jnp.concatenate(
        [jnp.dot(be, params["enc_wih"], precision=hp) + params["enc_b"],
         jnp.dot(be, params["dec_wih"], precision=hp) + params["dec_b"]], axis=1)  # (1, 8H)

    # Fold the decoder feedback path (Linear -> embed -> W_ih) into the recurrent
    # weights and fuse the output projection as 2 extra columns.
    wo_we = jnp.dot(wo, we, precision=hp)                                    # (H, E)
    whh_fold = params["dec_whh"] + jnp.dot(wo_we, params["dec_wih"], precision=hp)
    b_fold = params["dec_b"] + jnp.dot(
        jnp.dot(bo, we, precision=hp) + be, params["dec_wih"], precision=hp)  # (1, 4H)
    whh_big = jnp.concatenate([whh_fold, wo], axis=1)                         # (H, 4H+2)
    b_big = jnp.concatenate([b_fold, bo], axis=1)                             # (1, 4H+2)

    # Pack everything into ONE fp32 slab -> a single prologue DMA.
    def slab(a, rows):
        return jnp.pad(a, ((0, rows - a.shape[0]), (0, _PACK_LANES - a.shape[1])))

    pack = jnp.concatenate([
        slab(wih_comb, 8),             # rows  0:8
        slab(b_comb, 8),               # rows  8:16
        slab(b_big, 8),                # rows 16:24
        slab(params["enc_whh"], 16),   # rows 24:40
        slab(params["dec_whh"], 16),   # rows 40:56
        slab(whh_big, 16),             # rows 56:72
    ], axis=0)                         # (72, 128) fp32 = 36 KiB

    kernel = functools.partial(_seq2seq_kernel, in_n=in_n, output_n=OUTPUT_N,
                               batch=batch, hidden=H, cdim=cdim)
    vmem = pl.BlockSpec(memory_space=pltpu.MemorySpace.VMEM)

    out_flat = pl.pallas_call(
        kernel,
        out_shape=jax.ShapeDtypeStruct((OUTPUT_N * batch, OUTPUT_DIM), jnp.float32),
        in_specs=[vmem, vmem],
        out_specs=vmem,
    )(x_flat, pack)

    out = out_flat.reshape(OUTPUT_N, batch, OUTPUT_DIM)
    return jnp.transpose(out, (1, 0, 2))


# -----------------------------------------------------------------------------
# Deterministic parameter init (same shapes/init scales as the PyTorch module;
# LSTM weights stored pre-transposed with the 4 gates fused along the last dim,
# gate order [i, f, g, o]).
# -----------------------------------------------------------------------------
def init_params(key):
    ks = jax.random.split(key, 12)

    def u(k, shape, scale):
        return jax.random.uniform(k, shape, jnp.float32, -scale, scale)

    s_embed = 1.0 / np.sqrt(INPUT_DIM)
    s_lstm = 1.0 / np.sqrt(HIDDEN_DIM)
    s_out = 1.0 / np.sqrt(HIDDEN_DIM)
    H4 = 4 * HIDDEN_DIM

    return dict(
        we=u(ks[0], (INPUT_DIM, EMBED_DIM), s_embed),        # embed_layer.weight.T
        be=u(ks[1], (1, EMBED_DIM), s_embed),                # embed_layer.bias
        enc_wih=u(ks[2], (EMBED_DIM, H4), s_lstm),           # encoder weight_ih_l0.T (fused gates)
        enc_whh=u(ks[3], (HIDDEN_DIM, H4), s_lstm),          # encoder weight_hh_l0.T
        enc_b=u(ks[4], (1, H4), s_lstm) + u(ks[5], (1, H4), s_lstm),   # bias_ih + bias_hh
        dec_wih=u(ks[6], (EMBED_DIM, H4), s_lstm),           # decoder weight_ih_l0.T
        dec_whh=u(ks[7], (HIDDEN_DIM, H4), s_lstm),          # decoder weight_hh_l0.T
        dec_b=u(ks[8], (1, H4), s_lstm) + u(ks[9], (1, H4), s_lstm),
        wo=u(ks[10], (HIDDEN_DIM, OUTPUT_DIM), s_out),       # decoder.linear.weight.T
        bo=u(ks[11], (1, OUTPUT_DIM), s_out),                # decoder.linear.bias
    )


# -----------------------------------------------------------------------------
# Pure-JAX reference mirroring the PyTorch forward (no weight folding) for checking.
# -----------------------------------------------------------------------------
def reference_forward(x_btc, p):
    x = jnp.transpose(x_btc, (1, 0, 2))          # (T, B, C)
    T, B, _ = x.shape
    H = HIDDEN_DIM

    def cell(wih, whh, b, h, c, inp):
        gates = inp @ wih + h @ whh + b
        i = jax.nn.sigmoid(gates[:, 0 * H:1 * H])
        f = jax.nn.sigmoid(gates[:, 1 * H:2 * H])
        g = jnp.tanh(gates[:, 2 * H:3 * H])
        o = jax.nn.sigmoid(gates[:, 3 * H:4 * H])
        c = f * c + i * g
        h = o * jnp.tanh(c)
        return h, c

    h = jnp.zeros((B, H), jnp.float32)
    c = jnp.zeros((B, H), jnp.float32)
    emb = x @ p["we"] + p["be"]                  # (T, B, E)
    for t in range(T):
        h, c = cell(p["enc_wih"], p["enc_whh"], p["enc_b"], h, c, emb[t])

    dec_in = x[-1]
    outs = []
    for _ in range(OUTPUT_N):
        e = dec_in @ p["we"] + p["be"]
        h, c = cell(p["dec_wih"], p["dec_whh"], p["dec_b"], h, c, e)
        y = h @ p["wo"] + p["bo"]
        outs.append(y)
        dec_in = y
    return jnp.transpose(jnp.stack(outs, 0), (1, 0, 2))


if __name__ == "__main__":
    key = jax.random.PRNGKey(0)
    kp, kx = jax.random.split(key)
    params = init_params(kp)

    batch, in_n = 2, 8
    x = jax.random.normal(kx, (batch, in_n, INPUT_DIM), jnp.float32)

    out = jax.block_until_ready(jax.jit(lstm_seq2seq_forward)(x, params))
    ref = jax.block_until_ready(jax.jit(reference_forward)(x, params))

    assert out.shape == (batch, OUTPUT_N, OUTPUT_DIM), out.shape
    # Folded input/feedback projections change the fp32/bf16(MXU) rounding order vs.
    # the step-by-step reference, and errors compound mildly over the 50-step
    # autoregressive decoder -> documented relaxed tolerance.
    np.testing.assert_allclose(np.asarray(out), np.asarray(ref), rtol=1e-2, atol=2e-3)
    print("KERNEL_OK")
</pallas_src>

<mosaic_0001>
module attributes {stable_mosaic.version = 11 : i64} {
  func.func @_seq2seq_kernel(%arg0: memref<16x2xf32, #tpu.memory_space<vmem>>, %arg1: memref<72x128xf32, #tpu.memory_space<vmem>>, %arg2: memref<100x2xf32, #tpu.memory_space<vmem>>) attributes {dimension_semantics = [], scalar_prefetch = 0 : i64, scratch_operands = 0 : i64, tpu.core_type = #tpu.core_type<tc>} {
    %c0 = arith.constant 0 : index
    %c0_0 = arith.constant 0 : index
    %0 = vector.load %arg1[%c0, %c0_0] : memref<72x128xf32, #tpu.memory_space<vmem>>, vector<2x128xf32>
    %c8 = arith.constant 8 : index
    %c0_1 = arith.constant 0 : index
    %1 = vector.load %arg1[%c8, %c0_1] : memref<72x128xf32, #tpu.memory_space<vmem>>, vector<1x128xf32>
    %c16 = arith.constant 16 : index
    %c0_2 = arith.constant 0 : index
    %2 = vector.load %arg1[%c16, %c0_2] : memref<72x128xf32, #tpu.memory_space<vmem>>, vector<1x66xf32>
    %c24 = arith.constant 24 : index
    %c0_3 = arith.constant 0 : index
    %3 = vector.load %arg1[%c24, %c0_3] : memref<72x128xf32, #tpu.memory_space<vmem>>, vector<16x64xf32>
    %c40 = arith.constant 40 : index
    %c0_4 = arith.constant 0 : index
    %4 = vector.load %arg1[%c40, %c0_4] : memref<72x128xf32, #tpu.memory_space<vmem>>, vector<16x64xf32>
    %c56 = arith.constant 56 : index
    %c0_5 = arith.constant 0 : index
    %5 = vector.load %arg1[%c56, %c0_5] : memref<72x128xf32, #tpu.memory_space<vmem>>, vector<16x66xf32>
    %c0_6 = arith.constant 0 : index
    %c0_7 = arith.constant 0 : index
    %6 = vector.load %arg0[%c0_6, %c0_7] : memref<16x2xf32, #tpu.memory_space<vmem>>, vector<16x2xf32>
    %cst = arith.constant dense<0.000000e+00> : vector<16x128xf32>
    %7 = tpu.matmul %6, %0, %cst {dimension_numbers = #tpu.dot_dimension_numbers<[1], [0], [0], [1], [0, 0, 1, 1], [], []>} : vector<16x2xf32>, vector<2x128xf32>, vector<16x128xf32> -> vector<16x128xf32>
    %8 = vector.broadcast %1 : vector<1x128xf32> to vector<16x128xf32>
    %9 = arith.addf %7, %8 : vector<16x128xf32>
    %10 = vector.shape_cast %2 : vector<1x66xf32> to vector<1x66xf32>
    %11 = vector.broadcast %10 : vector<1x66xf32> to vector<2x66xf32>
    %cst_8 = arith.constant 0.000000e+00 : f32
    %12 = vector.broadcast %cst_8 : f32 to vector<2x16xf32>
    %cst_9 = arith.constant 0.000000e+00 : f32
    %13 = vector.broadcast %cst_9 : f32 to vector<2x16xf32>
    %14 = vector.extract_strided_slice %9 {offsets = [0, 0], sizes = [2, 64], strides = [1, 1]} : vector<16x128xf32> to vector<2x64xf32>
    %cst_10 = arith.constant dense<0.000000e+00> : vector<2x64xf32>
    %15 = tpu.matmul %12, %3, %cst_10 {dimension_numbers = #tpu.dot_dimension_numbers<[1], [0], [0], [1], [0, 0, 1, 1], [], []>} : vector<2x16xf32>, vector<16x64xf32>, vector<2x64xf32> -> vector<2x64xf32>
    %16 = arith.addf %14, %15 : vector<2x64xf32>
    %cst_11 = arith.constant 5.000000e-01 : f32
    %17 = vector.broadcast %cst_11 : f32 to vector<2x64xf32>
    %18 = arith.mulf %17, %16 : vector<2x64xf32>
    %19 = math.tanh %18 : vector<2x64xf32>
    %cst_12 = arith.constant 5.000000e-01 : f32
    %20 = vector.broadcast %cst_12 : f32 to vector<2x64xf32>
    %21 = arith.mulf %19, %20 : vector<2x64xf32>
    %cst_13 = arith.constant 5.000000e-01 : f32
    %22 = vector.broadcast %cst_13 : f32 to vector<2x64xf32>
    %23 = arith.addf %21, %22 : vector<2x64xf32>
    %24 = vector.extract_strided_slice %23 {offsets = [0, 0], sizes = [2, 16], strides = [1, 1]} : vector<2x64xf32> to vector<2x16xf32>
    %25 = vector.extract_strided_slice %23 {offsets = [0, 16], sizes = [2, 16], strides = [1, 1]} : vector<2x64xf32> to vector<2x16xf32>
    %26 = vector.extract_strided_slice %23 {offsets = [0, 48], sizes = [2, 16], strides = [1, 1]} : vector<2x64xf32> to vector<2x16xf32>
    %27 = vector.extract_strided_slice %16 {offsets = [0, 32], sizes = [2, 16], strides = [1, 1]} : vector<2x64xf32> to vector<2x16xf32>
    %28 = math.tanh %27 : vector<2x16xf32>
    %29 = arith.mulf %25, %13 : vector<2x16xf32>
    %30 = arith.mulf %24, %28 : vector<2x16xf32>
    %31 = arith.addf %29, %30 : vector<2x16xf32>
    %32 = math.tanh %31 : vector<2x16xf32>
    %33 = arith.mulf %26, %32 : vector<2x16xf32>
    %34 = vector.extract_strided_slice %9 {offsets = [2, 0], sizes = [2, 64], strides = [1, 1]} : vector<16x128xf32> to vector<2x64xf32>
    %cst_14 = arith.constant dense<0.000000e+00> : vector<2x64xf32>
    %35 = tpu.matmul %33, %3, %cst_14 {dimension_numbers = #tpu.dot_dimension_numbers<[1], [0], [0], [1], [0, 0, 1, 1], [], []>} : vector<2x16xf32>, vector<16x64xf32>, vector<2x64xf32> -> vector<2x64xf32>
    %36 = arith.addf %34, %35 : vector<2x64xf32>
    %cst_15 = arith.constant 5.000000e-01 : f32
    %37 = vector.broadcast %cst_15 : f32 to vector<2x64xf32>
    %38 = arith.mulf %37, %36 : vector<2x64xf32>
    %39 = math.tanh %38 : vector<2x64xf32>
    %cst_16 = arith.constant 5.000000e-01 : f32
    %40 = vector.broadcast %cst_16 : f32 to vector<2x64xf32>
    %41 = arith.mulf %39, %40 : vector<2x64xf32>
    %cst_17 = arith.constant 5.000000e-01 : f32
    %42 = vector.broadcast %cst_17 : f32 to vector<2x64xf32>
    %43 = arith.addf %41, %42 : vector<2x64xf32>
    %44 = vector.extract_strided_slice %43 {offsets = [0, 0], sizes = [2, 16], strides = [1, 1]} : vector<2x64xf32> to vector<2x16xf32>
    %45 = vector.extract_strided_slice %43 {offsets = [0, 16], sizes = [2, 16], strides = [1, 1]} : vector<2x64xf32> to vector<2x16xf32>
    %46 = vector.extract_strided_slice %43 {offsets = [0, 48], sizes = [2, 16], strides = [1, 1]} : vector<2x64xf32> to vector<2x16xf32>
    %47 = vector.extract_strided_slice %36 {offsets = [0, 32], sizes = [2, 16], strides = [1, 1]} : vector<2x64xf32> to vector<2x16xf32>
    %48 = math.tanh %47 : vector<2x16xf32>
    %49 = arith.mulf %45, %31 : vector<2x16xf32>
    %50 = arith.mulf %44, %48 : vector<2x16xf32>
    %51 = arith.addf %49, %50 : vector<2x16xf32>
    %52 = math.tanh %51 : vector<2x16xf32>
    %53 = arith.mulf %46, %52 : vector<2x16xf32>
    %54 = vector.extract_strided_slice %9 {offsets = [4, 0], sizes = [2, 64], strides = [1, 1]} : vector<16x128xf32> to vector<2x64xf32>
    %cst_18 = arith.constant dense<0.000000e+00> : vector<2x64xf32>
    %55 = tpu.matmul %53, %3, %cst_18 {dimension_numbers = #tpu.dot_dimension_numbers<[1], [0], [0], [1], [0, 0, 1, 1], [], []>} : vector<2x16xf32>, vector<16x64xf32>, vector<2x64xf32> -> vector<2x64xf32>
    %56 = arith.addf %54, %55 : vector<2x64xf32>
    %cst_19 = arith.constant 5.000000e-01 : f32
    %57 = vector.broadcast %cst_19 : f32 to vector<2x64xf32>
    %58 = arith.mulf %57, %56 : vector<2x64xf32>
    %59 = math.tanh %58 : vector<2x64xf32>
    %cst_20 = arith.constant 5.000000e-01 : f32
    %60 = vector.broadcast %cst_20 : f32 to vector<2x64xf32>
    %61 = arith.mulf %59, %60 : vector<2x64xf32>
    %cst_21 = arith.constant 5.000000e-01 : f32
    %62 = vector.broadcast %cst_21 : f32 to vector<2x64xf32>
    %63 = arith.addf %61, %62 : vector<2x64xf32>
    %64 = vector.extract_strided_slice %63 {offsets = [0, 0], sizes = [2, 16], strides = [1, 1]} : vector<2x64xf32> to vector<2x16xf32>
    %65 = vector.extract_strided_slice %63 {offsets = [0, 16], sizes = [2, 16], strides = [1, 1]} : vector<2x64xf32> to vector<2x16xf32>
    %66 = vector.extract_strided_slice %63 {offsets = [0, 48], sizes = [2, 16], strides = [1, 1]} : vector<2x64xf32> to vector<2x16xf32>
    %67 = vector.extract_strided_slice %56 {offsets = [0, 32], sizes = [2, 16], strides = [1, 1]} : vector<2x64xf32> to vector<2x16xf32>
    %68 = math.tanh %67 : vector<2x16xf32>
    %69 = arith.mulf %65, %51 : vector<2x16xf32>
    %70 = arith.mulf %64, %68 : vector<2x16xf32>
    %71 = arith.addf %69, %70 : vector<2x16xf32>
    %72 = math.tanh %71 : vector<2x16xf32>
    %73 = arith.mulf %66, %72 : vector<2x16xf32>
    %74 = vector.extract_strided_slice %9 {offsets = [6, 0], sizes = [2, 64], strides = [1, 1]} : vector<16x128xf32> to vector<2x64xf32>
    %cst_22 = arith.constant dense<0.000000e+00> : vector<2x64xf32>
    %75 = tpu.matmul %73, %3, %cst_22 {dimension_numbers = #tpu.dot_dimension_numbers<[1], [0], [0], [1], [0, 0, 1, 1], [], []>} : vector<2x16xf32>, vector<16x64xf32>, vector<2x64xf32> -> vector<2x64xf32>
    %76 = arith.addf %74, %75 : vector<2x64xf32>
    %cst_23 = arith.constant 5.000000e-01 : f32
    %77 = vector.broadcast %cst_23 : f32 to vector<2x64xf32>
    %78 = arith.mulf %77, %76 : vector<2x64xf32>
    %79 = math.tanh %78 : vector<2x64xf32>
    %cst_24 = arith.constant 5.000000e-01 : f32
    %80 = vector.broadcast %cst_24 : f32 to vector<2x64xf32>
    %81 = arith.mulf %79, %80 : vector<2x64xf32>
    %cst_25 = arith.constant 5.000000e-01 : f32
    %82 = vector.broadcast %cst_25 : f32 to vector<2x64xf32>
    %83 = arith.addf %81, %82 : vector<2x64xf32>
    %84 = vector.extract_strided_slice %83 {offsets = [0, 0], sizes = [2, 16], strides = [1, 1]} : vector<2x64xf32> to vector<2x16xf32>
    %85 = vector.extract_strided_slice %83 {offsets = [0, 16], sizes = [2, 16], strides = [1, 1]} : vector<2x64xf32> to vector<2x16xf32>
    %86 = vector.extract_strided_slice %83 {offsets = [0, 48], sizes = [2, 16], strides = [1, 1]} : vector<2x64xf32> to vector<2x16xf32>
    %87 = vector.extract_strided_slice %76 {offsets = [0, 32], sizes = [2, 16], strides = [1, 1]} : vector<2x64xf32> to vector<2x16xf32>
    %88 = math.tanh %87 : vector<2x16xf32>
    %89 = arith.mulf %85, %71 : vector<2x16xf32>
    %90 = arith.mulf %84, %88 : vector<2x16xf32>
    %91 = arith.addf %89, %90 : vector<2x16xf32>
    %92 = math.tanh %91 : vector<2x16xf32>
    %93 = arith.mulf %86, %92 : vector<2x16xf32>
    %94 = vector.extract_strided_slice %9 {offsets = [8, 0], sizes = [2, 64], strides = [1, 1]} : vector<16x128xf32> to vector<2x64xf32>
    %cst_26 = arith.constant dense<0.000000e+00> : vector<2x64xf32>
    %95 = tpu.matmul %93, %3, %cst_26 {dimension_numbers = #tpu.dot_dimension_numbers<[1], [0], [0], [1], [0, 0, 1, 1], [], []>} : vector<2x16xf32>, vector<16x64xf32>, vector<2x64xf32> -> vector<2x64xf32>
    %96 = arith.addf %94, %95 : vector<2x64xf32>
    %cst_27 = arith.constant 5.000000e-01 : f32
    %97 = vector.broadcast %cst_27 : f32 to vector<2x64xf32>
    %98 = arith.mulf %97, %96 : vector<2x64xf32>
    %99 = math.tanh %98 : vector<2x64xf32>
    %cst_28 = arith.constant 5.000000e-01 : f32
    %100 = vector.broadcast %cst_28 : f32 to vector<2x64xf32>
    %101 = arith.mulf %99, %100 : vector<2x64xf32>
    %cst_29 = arith.constant 5.000000e-01 : f32
    %102 = vector.broadcast %cst_29 : f32 to vector<2x64xf32>
    %103 = arith.addf %101, %102 : vector<2x64xf32>
    %104 = vector.extract_strided_slice %103 {offsets = [0, 0], sizes = [2, 16], strides = [1, 1]} : vector<2x64xf32> to vector<2x16xf32>
    %105 = vector.extract_strided_slice %103 {offsets = [0, 16], sizes = [2, 16], strides = [1, 1]} : vector<2x64xf32> to vector<2x16xf32>
    %106 = vector.extract_strided_slice %103 {offsets = [0, 48], sizes = [2, 16], strides = [1, 1]} : vector<2x64xf32> to vector<2x16xf32>
    %107 = vector.extract_strided_slice %96 {offsets = [0, 32], sizes = [2, 16], strides = [1, 1]} : vector<2x64xf32> to vector<2x16xf32>
    %108 = math.tanh %107 : vector<2x16xf32>
    %109 = arith.mulf %105, %91 : vector<2x16xf32>
    %110 = arith.mulf %104, %108 : vector<2x16xf32>
    %111 = arith.addf %109, %110 : vector<2x16xf32>
    %112 = math.tanh %111 : vector<2x16xf32>
    %113 = arith.mulf %106, %112 : vector<2x16xf32>
    %114 = vector.extract_strided_slice %9 {offsets = [10, 0], sizes = [2, 64], strides = [1, 1]} : vector<16x128xf32> to vector<2x64xf32>
    %cst_30 = arith.constant dense<0.000000e+00> : vector<2x64xf32>
    %115 = tpu.matmul %113, %3, %cst_30 {dimension_numbers = #tpu.dot_dimension_numbers<[1], [0], [0], [1], [0, 0, 1, 1], [], []>} : vector<2x16xf32>, vector<16x64xf32>, vector<2x64xf32> -> vector<2x64xf32>
    %116 = arith.addf %114, %115 : vector<2x64xf32>
    %cst_31 = arith.constant 5.000000e-01 : f32
    %117 = vector.broadcast %cst_31 : f32 to vector<2x64xf32>
    %118 = arith.mulf %117, %116 : vector<2x64xf32>
    %119 = math.tanh %118 : vector<2x64xf32>
    %cst_32 = arith.constant 5.000000e-01 : f32
    %120 = vector.broadcast %cst_32 : f32 to vector<2x64xf32>
    %121 = arith.mulf %119, %120 : vector<2x64xf32>
    %cst_33 = arith.constant 5.000000e-01 : f32
    %122 = vector.broadcast %cst_33 : f32 to vector<2x64xf32>
    %123 = arith.addf %121, %122 : vector<2x64xf32>
    %124 = vector.extract_strided_slice %123 {offsets = [0, 0], sizes = [2, 16], strides = [1, 1]} : vector<2x64xf32> to vector<2x16xf32>
    %125 = vector.extract_strided_slice %123 {offsets = [0, 16], sizes = [2, 16], strides = [1, 1]} : vector<2x64xf32> to vector<2x16xf32>
    %126 = vector.extract_strided_slice %123 {offsets = [0, 48], sizes = [2, 16], strides = [1, 1]} : vector<2x64xf32> to vector<2x16xf32>
    %127 = vector.extract_strided_slice %116 {offsets = [0, 32], sizes = [2, 16], strides = [1, 1]} : vector<2x64xf32> to vector<2x16xf32>
    %128 = math.tanh %127 : vector<2x16xf32>
    %129 = arith.mulf %125, %111 : vector<2x16xf32>
    %130 = arith.mulf %124, %128 : vector<2x16xf32>
    %131 = arith.addf %129, %130 : vector<2x16xf32>
    %132 = math.tanh %131 : vector<2x16xf32>
    %133 = arith.mulf %126, %132 : vector<2x16xf32>
    %134 = vector.extract_strided_slice %9 {offsets = [12, 0], sizes = [2, 64], strides = [1, 1]} : vector<16x128xf32> to vector<2x64xf32>
    %cst_34 = arith.constant dense<0.000000e+00> : vector<2x64xf32>
    %135 = tpu.matmul %133, %3, %cst_34 {dimension_numbers = #tpu.dot_dimension_numbers<[1], [0], [0], [1], [0, 0, 1, 1], [], []>} : vector<2x16xf32>, vector<16x64xf32>, vector<2x64xf32> -> vector<2x64xf32>
    %136 = arith.addf %134, %135 : vector<2x64xf32>
    %cst_35 = arith.constant 5.000000e-01 : f32
    %137 = vector.broadcast %cst_35 : f32 to vector<2x64xf32>
    %138 = arith.mulf %137, %136 : vector<2x64xf32>
    %139 = math.tanh %138 : vector<2x64xf32>
    %cst_36 = arith.constant 5.000000e-01 : f32
    %140 = vector.broadcast %cst_36 : f32 to vector<2x64xf32>
    %141 = arith.mulf %139, %140 : vector<2x64xf32>
    %cst_37 = arith.constant 5.000000e-01 : f32
    %142 = vector.broadcast %cst_37 : f32 to vector<2x64xf32>
    %143 = arith.addf %141, %142 : vector<2x64xf32>
    %144 = vector.extract_strided_slice %143 {offsets = [0, 0], sizes = [2, 16], strides = [1, 1]} : vector<2x64xf32> to vector<2x16xf32>
    %145 = vector.extract_strided_slice %143 {offsets = [0, 16], sizes = [2, 16], strides = [1, 1]} : vector<2x64xf32> to vector<2x16xf32>
    %146 = vector.extract_strided_slice %143 {offsets = [0, 48], sizes = [2, 16], strides = [1, 1]} : vector<2x64xf32> to vector<2x16xf32>
    %147 = vector.extract_strided_slice %136 {offsets = [0, 32], sizes = [2, 16], strides = [1, 1]} : vector<2x64xf32> to vector<2x16xf32>
    %148 = math.tanh %147 : vector<2x16xf32>
    %149 = arith.mulf %145, %131 : vector<2x16xf32>
    %150 = arith.mulf %144, %148 : vector<2x16xf32>
    %151 = arith.addf %149, %150 : vector<2x16xf32>
    %152 = math.tanh %151 : vector<2x16xf32>
    %153 = arith.mulf %146, %152 : vector<2x16xf32>
    %154 = vector.extract_strided_slice %9 {offsets = [14, 0], sizes = [2, 64], strides = [1, 1]} : vector<16x128xf32> to vector<2x64xf32>
    %cst_38 = arith.constant dense<0.000000e+00> : vector<2x64xf32>
    %155 = tpu.matmul %153, %3, %cst_38 {dimension_numbers = #tpu.dot_dimension_numbers<[1], [0], [0], [1], [0, 0, 1, 1], [], []>} : vector<2x16xf32>, vector<16x64xf32>, vector<2x64xf32> -> vector<2x64xf32>
    %156 = arith.addf %154, %155 : vector<2x64xf32>
    %cst_39 = arith.constant 5.000000e-01 : f32
    %157 = vector.broadcast %cst_39 : f32 to vector<2x64xf32>
    %158 = arith.mulf %157, %156 : vector<2x64xf32>
    %159 = math.tanh %158 : vector<2x64xf32>
    %cst_40 = arith.constant 5.000000e-01 : f32
    %160 = vector.broadcast %cst_40 : f32 to vector<2x64xf32>
    %161 = arith.mulf %159, %160 : vector<2x64xf32>
    %cst_41 = arith.constant 5.000000e-01 : f32
    %162 = vector.broadcast %cst_41 : f32 to vector<2x64xf32>
    %163 = arith.addf %161, %162 : vector<2x64xf32>
    %164 = vector.extract_strided_slice %163 {offsets = [0, 0], sizes = [2, 16], strides = [1, 1]} : vector<2x64xf32> to vector<2x16xf32>
    %165 = vector.extract_strided_slice %163 {offsets = [0, 16], sizes = [2, 16], strides = [1, 1]} : vector<2x64xf32> to vector<2x16xf32>
    %166 = vector.extract_strided_slice %163 {offsets = [0, 48], sizes = [2, 16], strides = [1, 1]} : vector<2x64xf32> to vector<2x16xf32>
    %167 = vector.extract_strided_slice %156 {offsets = [0, 32], sizes = [2, 16], strides = [1, 1]} : vector<2x64xf32> to vector<2x16xf32>
    %168 = math.tanh %167 : vector<2x16xf32>
    %169 = arith.mulf %165, %151 : vector<2x16xf32>
    %170 = arith.mulf %164, %168 : vector<2x16xf32>
    %171 = arith.addf %169, %170 : vector<2x16xf32>
    %172 = math.tanh %171 : vector<2x16xf32>
    %173 = arith.mulf %166, %172 : vector<2x16xf32>
    %174 = vector.extract_strided_slice %9 {offsets = [14, 64], sizes = [2, 64], strides = [1, 1]} : vector<16x128xf32> to vector<2x64xf32>
    %cst_42 = arith.constant dense<0.000000e+00> : vector<2x64xf32>
    %175 = tpu.matmul %173, %4, %cst_42 {dimension_numbers = #tpu.dot_dimension_numbers<[1], [0], [0], [1], [0, 0, 1, 1], [], []>} : vector<2x16xf32>, vector<16x64xf32>, vector<2x64xf32> -> vector<2x64xf32>
    %176 = arith.addf %174, %175 : vector<2x64xf32>
    %cst_43 = arith.constant 5.000000e-01 : f32
    %177 = vector.broadcast %cst_43 : f32 to vector<2x64xf32>
    %178 = arith.mulf %177, %176 : vector<2x64xf32>
    %179 = math.tanh %178 : vector<2x64xf32>
    %cst_44 = arith.constant 5.000000e-01 : f32
    %180 = vector.broadcast %cst_44 : f32 to vector<2x64xf32>
    %181 = arith.mulf %179, %180 : vector<2x64xf32>
    %cst_45 = arith.constant 5.000000e-01 : f32
    %182 = vector.broadcast %cst_45 : f32 to vector<2x64xf32>
    %183 = arith.addf %181, %182 : vector<2x64xf32>
    %184 = vector.extract_strided_slice %183 {offsets = [0, 0], sizes = [2, 16], strides = [1, 1]} : vector<2x64xf32> to vector<2x16xf32>
    %185 = vector.extract_strided_slice %183 {offsets = [0, 16], sizes = [2, 16], strides = [1, 1]} : vector<2x64xf32> to vector<2x16xf32>
    %186 = vector.extract_strided_slice %183 {offsets = [0, 48], sizes = [2, 16], strides = [1, 1]} : vector<2x64xf32> to vector<2x16xf32>
    %187 = vector.extract_strided_slice %176 {offsets = [0, 32], sizes = [2, 16], strides = [1, 1]} : vector<2x64xf32> to vector<2x16xf32>
    %188 = math.tanh %187 : vector<2x16xf32>
    %189 = arith.mulf %185, %171 : vector<2x16xf32>
    %190 = arith.mulf %184, %188 : vector<2x16xf32>
    %191 = arith.addf %189, %190 : vector<2x16xf32>
    %192 = math.tanh %191 : vector<2x16xf32>
    %193 = arith.mulf %186, %192 : vector<2x16xf32>
    %cst_46 = arith.constant dense<0.000000e+00> : vector<2x66xf32>
    %194 = tpu.matmul %193, %5, %cst_46 {dimension_numbers = #tpu.dot_dimension_numbers<[1], [0], [0], [1], [0, 0, 1, 1], [], []>} : vector<2x16xf32>, vector<16x66xf32>, vector<2x66xf32> -> vector<2x66xf32>
    %195 = arith.addf %194, %11 : vector<2x66xf32>
    %196 = vector.extract_strided_slice %195 {offsets = [0, 64], sizes = [2, 2], strides = [1, 1]} : vector<2x66xf32> to vector<2x2xf32>
    %c0_47 = arith.constant 0 : index
    %c0_48 = arith.constant 0 : index
    %197 = vector.load %arg2[%c0_47, %c0_48] : memref<100x2xf32, #tpu.memory_space<vmem>>, vector<2x2xf32>
    tpu.vector_store %arg2[%c0_47, %c0_48], %196 {strides = array<i32>} : memref<100x2xf32, #tpu.memory_space<vmem>>, vector<2x2xf32>,
    %198 = vector.extract_strided_slice %195 {offsets = [0, 0], sizes = [2, 64], strides = [1, 1]} : vector<2x66xf32> to vector<2x64xf32>
    %cst_49 = arith.constant 5.000000e-01 : f32
    %199 = vector.broadcast %cst_49 : f32 to vector<2x64xf32>
    %200 = arith.mulf %199, %198 : vector<2x64xf32>
    %201 = math.tanh %200 : vector<2x64xf32>
    %cst_50 = arith.constant 5.000000e-01 : f32
    %202 = vector.broadcast %cst_50 : f32 to vector<2x64xf32>
    %203 = arith.mulf %201, %202 : vector<2x64xf32>
    %cst_51 = arith.constant 5.000000e-01 : f32
    %204 = vector.broadcast %cst_51 : f32 to vector<2x64xf32>
    %205 = arith.addf %203, %204 : vector<2x64xf32>
    %206 = vector.extract_strided_slice %205 {offsets = [0, 0], sizes = [2, 16], strides = [1, 1]} : vector<2x64xf32> to vector<2x16xf32>
    %207 = vector.extract_strided_slice %205 {offsets = [0, 16], sizes = [2, 16], strides = [1, 1]} : vector<2x64xf32> to vector<2x16xf32>
    %208 = vector.extract_strided_slice %205 {offsets = [0, 48], sizes = [2, 16], strides = [1, 1]} : vector<2x64xf32> to vector<2x16xf32>
    %209 = vector.extract_strided_slice %198 {offsets = [0, 32], sizes = [2, 16], strides = [1, 1]} : vector<2x64xf32> to vector<2x16xf32>
    %210 = math.tanh %209 : vector<2x16xf32>
    %211 = arith.mulf %207, %191 : vector<2x16xf32>
    %212 = arith.mulf %206, %210 : vector<2x16xf32>
    %213 = arith.addf %211, %212 : vector<2x16xf32>
    %214 = math.tanh %213 : vector<2x16xf32>
    %215 = arith.mulf %208, %214 : vector<2x16xf32>
    %cst_52 = arith.constant dense<0.000000e+00> : vector<2x66xf32>
    %216 = tpu.matmul %215, %5, %cst_52 {dimension_numbers = #tpu.dot_dimension_numbers<[1], [0], [0], [1], [0, 0, 1, 1], [], []>} : vector<2x16xf32>, vector<16x66xf32>, vector<2x66xf32> -> vector<2x66xf32>
    %217 = arith.addf %216, %11 : vector<2x66xf32>
    %218 = vector.extract_strided_slice %217 {offsets = [0, 64], sizes = [2, 2], strides = [1, 1]} : vector<2x66xf32> to vector<2x2xf32>
    %c2 = arith.constant 2 : index
    %c0_53 = arith.constant 0 : index
    %219 = vector.load %arg2[%c2, %c0_53] : memref<100x2xf32, #tpu.memory_space<vmem>>, vector<2x2xf32>
    tpu.vector_store %arg2[%c2, %c0_53], %218 {strides = array<i32>} : memref<100x2xf32, #tpu.memory_space<vmem>>, vector<2x2xf32>,
    %220 = vector.extract_strided_slice %217 {offsets = [0, 0], sizes = [2, 64], strides = [1, 1]} : vector<2x66xf32> to vector<2x64xf32>
    %cst_54 = arith.constant 5.000000e-01 : f32
    %221 = vector.broadcast %cst_54 : f32 to vector<2x64xf32>
    %222 = arith.mulf %221, %220 : vector<2x64xf32>
    %223 = math.tanh %222 : vector<2x64xf32>
    %cst_55 = arith.constant 5.000000e-01 : f32
    %224 = vector.broadcast %cst_55 : f32 to vector<2x64xf32>
    %225 = arith.mulf %223, %224 : vector<2x64xf32>
    %cst_56 = arith.constant 5.000000e-01 : f32
    %226 = vector.broadcast %cst_56 : f32 to vector<2x64xf32>
    %227 = arith.addf %225, %226 : vector<2x64xf32>
    %228 = vector.extract_strided_slice %227 {offsets = [0, 0], sizes = [2, 16], strides = [1, 1]} : vector<2x64xf32> to vector<2x16xf32>
    %229 = vector.extract_strided_slice %227 {offsets = [0, 16], sizes = [2, 16], strides = [1, 1]} : vector<2x64xf32> to vector<2x16xf32>
    %230 = vector.extract_strided_slice %227 {offsets = [0, 48], sizes = [2, 16], strides = [1, 1]} : vector<2x64xf32> to vector<2x16xf32>
    %231 = vector.extract_strided_slice %220 {offsets = [0, 32], sizes = [2, 16], strides = [1, 1]} : vector<2x64xf32> to vector<2x16xf32>
    %232 = math.tanh %231 : vector<2x16xf32>
    %233 = arith.mulf %229, %213 : vector<2x16xf32>
    %234 = arith.mulf %228, %232 : vector<2x16xf32>
    %235 = arith.addf %233, %234 : vector<2x16xf32>
    %236 = math.tanh %235 : vector<2x16xf32>
    %237 = arith.mulf %230, %236 : vector<2x16xf32>
    %cst_57 = arith.constant dense<0.000000e+00> : vector<2x66xf32>
    %238 = tpu.matmul %237, %5, %cst_57 {dimension_numbers = #tpu.dot_dimension_numbers<[1], [0], [0], [1], [0, 0, 1, 1], [], []>} : vector<2x16xf32>, vector<16x66xf32>, vector<2x66xf32> -> vector<2x66xf32>
    %239 = arith.addf %238, %11 : vector<2x66xf32>
    %240 = vector.extract_strided_slice %239 {offsets = [0, 64], sizes = [2, 2], strides = [1, 1]} : vector<2x66xf32> to vector<2x2xf32>
    %c4 = arith.constant 4 : index
    %c0_58 = arith.constant 0 : index
    %241 = vector.load %arg2[%c4, %c0_58] : memref<100x2xf32, #tpu.memory_space<vmem>>, vector<2x2xf32>
    tpu.vector_store %arg2[%c4, %c0_58], %240 {strides = array<i32>} : memref<100x2xf32, #tpu.memory_space<vmem>>, vector<2x2xf32>,
    %242 = vector.extract_strided_slice %239 {offsets = [0, 0], sizes = [2, 64], strides = [1, 1]} : vector<2x66xf32> to vector<2x64xf32>
    %cst_59 = arith.constant 5.000000e-01 : f32
    %243 = vector.broadcast %cst_59 : f32 to vector<2x64xf32>
    %244 = arith.mulf %243, %242 : vector<2x64xf32>
    %245 = math.tanh %244 : vector<2x64xf32>
    %cst_60 = arith.constant 5.000000e-01 : f32
    %246 = vector.broadcast %cst_60 : f32 to vector<2x64xf32>
    %247 = arith.mulf %245, %246 : vector<2x64xf32>
    %cst_61 = arith.constant 5.000000e-01 : f32
    %248 = vector.broadcast %cst_61 : f32 to vector<2x64xf32>
    %249 = arith.addf %247, %248 : vector<2x64xf32>
    %250 = vector.extract_strided_slice %249 {offsets = [0, 0], sizes = [2, 16], strides = [1, 1]} : vector<2x64xf32> to vector<2x16xf32>
    %251 = vector.extract_strided_slice %249 {offsets = [0, 16], sizes = [2, 16], strides = [1, 1]} : vector<2x64xf32> to vector<2x16xf32>
    %252 = vector.extract_strided_slice %249 {offsets = [0, 48], sizes = [2, 16], strides = [1, 1]} : vector<2x64xf32> to vector<2x16xf32>
    %253 = vector.extract_strided_slice %242 {offsets = [0, 32], sizes = [2, 16], strides = [1, 1]} : vector<2x64xf32> to vector<2x16xf32>
    %254 = math.tanh %253 : vector<2x16xf32>
    %255 = arith.mulf %251, %235 : vector<2x16xf32>
    %256 = arith.mulf %250, %254 : vector<2x16xf32>
    %257 = arith.addf %255, %256 : vector<2x16xf32>
    %258 = math.tanh %257 : vector<2x16xf32>
    %259 = arith.mulf %252, %258 : vector<2x16xf32>
    %cst_62 = arith.constant dense<0.000000e+00> : vector<2x66xf32>
    %260 = tpu.matmul %259, %5, %cst_62 {dimension_numbers = #tpu.dot_dimension_numbers<[1], [0], [0], [1], [0, 0, 1, 1], [], []>} : vector<2x16xf32>, vector<16x66xf32>, vector<2x66xf32> -> vector<2x66xf32>
    %261 = arith.addf %260, %11 : vector<2x66xf32>
    %262 = vector.extract_strided_slice %261 {offsets = [0, 64], sizes = [2, 2], strides = [1, 1]} : vector<2x66xf32> to vector<2x2xf32>
    %c6 = arith.constant 6 : index
    %c0_63 = arith.constant 0 : index
    %263 = vector.load %arg2[%c6, %c0_63] : memref<100x2xf32, #tpu.memory_space<vmem>>, vector<2x2xf32>
    tpu.vector_store %arg2[%c6, %c0_63], %262 {strides = array<i32>} : memref<100x2xf32, #tpu.memory_space<vmem>>, vector<2x2xf32>,
    %264 = vector.extract_strided_slice %261 {offsets = [0, 0], sizes = [2, 64], strides = [1, 1]} : vector<2x66xf32> to vector<2x64xf32>
    %cst_64 = arith.constant 5.000000e-01 : f32
    %265 = vector.broadcast %cst_64 : f32 to vector<2x64xf32>
    %266 = arith.mulf %265, %264 : vector<2x64xf32>
    %267 = math.tanh %266 : vector<2x64xf32>
    %cst_65 = arith.constant 5.000000e-01 : f32
    %268 = vector.broadcast %cst_65 : f32 to vector<2x64xf32>
    %269 = arith.mulf %267, %268 : vector<2x64xf32>
    %cst_66 = arith.constant 5.000000e-01 : f32
    %270 = vector.broadcast %cst_66 : f32 to vector<2x64xf32>
    %271 = arith.addf %269, %270 : vector<2x64xf32>
    %272 = vector.extract_strided_slice %271 {offsets = [0, 0], sizes = [2, 16], strides = [1, 1]} : vector<2x64xf32> to vector<2x16xf32>
    %273 = vector.extract_strided_slice %271 {offsets = [0, 16], sizes = [2, 16], strides = [1, 1]} : vector<2x64xf32> to vector<2x16xf32>
    %274 = vector.extract_strided_slice %271 {offsets = [0, 48], sizes = [2, 16], strides = [1, 1]} : vector<2x64xf32> to vector<2x16xf32>
    %275 = vector.extract_strided_slice %264 {offsets = [0, 32], sizes = [2, 16], strides = [1, 1]} : vector<2x64xf32> to vector<2x16xf32>
    %276 = math.tanh %275 : vector<2x16xf32>
    %277 = arith.mulf %273, %257 : vector<2x16xf32>
    %278 = arith.mulf %272, %276 : vector<2x16xf32>
    %279 = arith.addf %277, %278 : vector<2x16xf32>
    %280 = math.tanh %279 : vector<2x16xf32>
    %281 = arith.mulf %274, %280 : vector<2x16xf32>
    %cst_67 = arith.constant dense<0.000000e+00> : vector<2x66xf32>
    %282 = tpu.matmul %281, %5, %cst_67 {dimension_numbers = #tpu.dot_dimension_numbers<[1], [0], [0], [1], [0, 0, 1, 1], [], []>} : vector<2x16xf32>, vector<16x66xf32>, vector<2x66xf32> -> vector<2x66xf32>
    %283 = arith.addf %282, %11 : vector<2x66xf32>
    %284 = vector.extract_strided_slice %283 {offsets = [0, 64], sizes = [2, 2], strides = [1, 1]} : vector<2x66xf32> to vector<2x2xf32>
    %c8_68 = arith.constant 8 : index
    %c0_69 = arith.constant 0 : index
    %285 = vector.load %arg2[%c8_68, %c0_69] : memref<100x2xf32, #tpu.memory_space<vmem>>, vector<2x2xf32>
    tpu.vector_store %arg2[%c8_68, %c0_69], %284 {strides = array<i32>} : memref<100x2xf32, #tpu.memory_space<vmem>>, vector<2x2xf32>,
    %286 = vector.extract_strided_slice %283 {offsets = [0, 0], sizes = [2, 64], strides = [1, 1]} : vector<2x66xf32> to vector<2x64xf32>
    %cst_70 = arith.constant 5.000000e-01 : f32
    %287 = vector.broadcast %cst_70 : f32 to vector<2x64xf32>
    %288 = arith.mulf %287, %286 : vector<2x64xf32>
    %289 = math.tanh %288 : vector<2x64xf32>
    %cst_71 = arith.constant 5.000000e-01 : f32
    %290 = vector.broadcast %cst_71 : f32 to vector<2x64xf32>
    %291 = arith.mulf %289, %290 : vector<2x64xf32>
    %cst_72 = arith.constant 5.000000e-01 : f32
    %292 = vector.broadcast %cst_72 : f32 to vector<2x64xf32>
    %293 = arith.addf %291, %292 : vector<2x64xf32>
    %294 = vector.extract_strided_slice %293 {offsets = [0, 0], sizes = [2, 16], strides = [1, 1]} : vector<2x64xf32> to vector<2x16xf32>
    %295 = vector.extract_strided_slice %293 {offsets = [0, 16], sizes = [2, 16], strides = [1, 1]} : vector<2x64xf32> to vector<2x16xf32>
    %296 = vector.extract_strided_slice %293 {offsets = [0, 48], sizes = [2, 16], strides = [1, 1]} : vector<2x64xf32> to vector<2x16xf32>
    %297 = vector.extract_strided_slice %286 {offsets = [0, 32], sizes = [2, 16], strides = [1, 1]} : vector<2x64xf32> to vector<2x16xf32>
    %298 = math.tanh %297 : vector<2x16xf32>
    %299 = arith.mulf %295, %279 : vector<2x16xf32>
    %300 = arith.mulf %294, %298 : vector<2x16xf32>
    %301 = arith.addf %299, %300 : vector<2x16xf32>
    %302 = math.tanh %301 : vector<2x16xf32>
    %303 = arith.mulf %296, %302 : vector<2x16xf32>
    %cst_73 = arith.constant dense<0.000000e+00> : vector<2x66xf32>
    %304 = tpu.matmul %303, %5, %cst_73 {dimension_numbers = #tpu.dot_dimension_numbers<[1], [0], [0], [1], [0, 0, 1, 1], [], []>} : vector<2x16xf32>, vector<16x66xf32>, vector<2x66xf32> -> vector<2x66xf32>
    %305 = arith.addf %304, %11 : vector<2x66xf32>
    %306 = vector.extract_strided_slice %305 {offsets = [0, 64], sizes = [2, 2], strides = [1, 1]} : vector<2x66xf32> to vector<2x2xf32>
    %c10 = arith.constant 10 : index
    %c0_74 = arith.constant 0 : index
    %307 = vector.load %arg2[%c10, %c0_74] : memref<100x2xf32, #tpu.memory_space<vmem>>, vector<2x2xf32>
    tpu.vector_store %arg2[%c10, %c0_74], %306 {strides = array<i32>} : memref<100x2xf32, #tpu.memory_space<vmem>>, vector<2x2xf32>,
    %308 = vector.extract_strided_slice %305 {offsets = [0, 0], sizes = [2, 64], strides = [1, 1]} : vector<2x66xf32> to vector<2x64xf32>
    %cst_75 = arith.constant 5.000000e-01 : f32
    %309 = vector.broadcast %cst_75 : f32 to vector<2x64xf32>
    %310 = arith.mulf %309, %308 : vector<2x64xf32>
    %311 = math.tanh %310 : vector<2x64xf32>
    %cst_76 = arith.constant 5.000000e-01 : f32
    %312 = vector.broadcast %cst_76 : f32 to vector<2x64xf32>
    %313 = arith.mulf %311, %312 : vector<2x64xf32>
    %cst_77 = arith.constant 5.000000e-01 : f32
    %314 = vector.broadcast %cst_77 : f32 to vector<2x64xf32>
    %315 = arith.addf %313, %314 : vector<2x64xf32>
    %316 = vector.extract_strided_slice %315 {offsets = [0, 0], sizes = [2, 16], strides = [1, 1]} : vector<2x64xf32> to vector<2x16xf32>
    %317 = vector.extract_strided_slice %315 {offsets = [0, 16], sizes = [2, 16], strides = [1, 1]} : vector<2x64xf32> to vector<2x16xf32>
    %318 = vector.extract_strided_slice %315 {offsets = [0, 48], sizes = [2, 16], strides = [1, 1]} : vector<2x64xf32> to vector<2x16xf32>
    %319 = vector.extract_strided_slice %308 {offsets = [0, 32], sizes = [2, 16], strides = [1, 1]} : vector<2x64xf32> to vector<2x16xf32>
    %320 = math.tanh %319 : vector<2x16xf32>
    %321 = arith.mulf %317, %301 : vector<2x16xf32>
    %322 = arith.mulf %316, %320 : vector<2x16xf32>
    %323 = arith.addf %321, %322 : vector<2x16xf32>
    %324 = math.tanh %323 : vector<2x16xf32>
    %325 = arith.mulf %318, %324 : vector<2x16xf32>
    %cst_78 = arith.constant dense<0.000000e+00> : vector<2x66xf32>
    %326 = tpu.matmul %325, %5, %cst_78 {dimension_numbers = #tpu.dot_dimension_numbers<[1], [0], [0], [1], [0, 0, 1, 1], [], []>} : vector<2x16xf32>, vector<16x66xf32>, vector<2x66xf32> -> vector<2x66xf32>
    %327 = arith.addf %326, %11 : vector<2x66xf32>
    %328 = vector.extract_strided_slice %327 {offsets = [0, 64], sizes = [2, 2], strides = [1, 1]} : vector<2x66xf32> to vector<2x2xf32>
    %c12 = arith.constant 12 : index
    %c0_79 = arith.constant 0 : index
    %329 = vector.load %arg2[%c12, %c0_79] : memref<100x2xf32, #tpu.memory_space<vmem>>, vector<2x2xf32>
    tpu.vector_store %arg2[%c12, %c0_79], %328 {strides = array<i32>} : memref<100x2xf32, #tpu.memory_space<vmem>>, vector<2x2xf32>,
    %330 = vector.extract_strided_slice %327 {offsets = [0, 0], sizes = [2, 64], strides = [1, 1]} : vector<2x66xf32> to vector<2x64xf32>
    %cst_80 = arith.constant 5.000000e-01 : f32
    %331 = vector.broadcast %cst_80 : f32 to vector<2x64xf32>
    %332 = arith.mulf %331, %330 : vector<2x64xf32>
    %333 = math.tanh %332 : vector<2x64xf32>
    %cst_81 = arith.constant 5.000000e-01 : f32
    %334 = vector.broadcast %cst_81 : f32 to vector<2x64xf32>
    %335 = arith.mulf %333, %334 : vector<2x64xf32>
    %cst_82 = arith.constant 5.000000e-01 : f32
    %336 = vector.broadcast %cst_82 : f32 to vector<2x64xf32>
    %337 = arith.addf %335, %336 : vector<2x64xf32>
    %338 = vector.extract_strided_slice %337 {offsets = [0, 0], sizes = [2, 16], strides = [1, 1]} : vector<2x64xf32> to vector<2x16xf32>
    %339 = vector.extract_strided_slice %337 {offsets = [0, 16], sizes = [2, 16], strides = [1, 1]} : vector<2x64xf32> to vector<2x16xf32>
    %340 = vector.extract_strided_slice %337 {offsets = [0, 48], sizes = [2, 16], strides = [1, 1]} : vector<2x64xf32> to vector<2x16xf32>
    %341 = vector.extract_strided_slice %330 {offsets = [0, 32], sizes = [2, 16], strides = [1, 1]} : vector<2x64xf32> to vector<2x16xf32>
    %342 = math.tanh %341 : vector<2x16xf32>
    %343 = arith.mulf %339, %323 : vector<2x16xf32>
    %344 = arith.mulf %338, %342 : vector<2x16xf32>
    %345 = arith.addf %343, %344 : vector<2x16xf32>
    %346 = math.tanh %345 : vector<2x16xf32>
    %347 = arith.mulf %340, %346 : vector<2x16xf32>
    %cst_83 = arith.constant dense<0.000000e+00> : vector<2x66xf32>
    %348 = tpu.matmul %347, %5, %cst_83 {dimension_numbers = #tpu.dot_dimension_numbers<[1], [0], [0], [1], [0, 0, 1, 1], [], []>} : vector<2x16xf32>, vector<16x66xf32>, vector<2x66xf32> -> vector<2x66xf32>
    %349 = arith.addf %348, %11 : vector<2x66xf32>
    %350 = vector.extract_strided_slice %349 {offsets = [0, 64], sizes = [2, 2], strides = [1, 1]} : vector<2x66xf32> to vector<2x2xf32>
    %c14 = arith.constant 14 : index
    %c0_84 = arith.constant 0 : index
    %351 = vector.load %arg2[%c14, %c0_84] : memref<100x2xf32, #tpu.memory_space<vmem>>, vector<2x2xf32>
    tpu.vector_store %arg2[%c14, %c0_84], %350 {strides = array<i32>} : memref<100x2xf32, #tpu.memory_space<vmem>>, vector<2x2xf32>,
    %352 = vector.extract_strided_slice %349 {offsets = [0, 0], sizes = [2, 64], strides = [1, 1]} : vector<2x66xf32> to vector<2x64xf32>
    %cst_85 = arith.constant 5.000000e-01 : f32
    %353 = vector.broadcast %cst_85 : f32 to vector<2x64xf32>
    %354 = arith.mulf %353, %352 : vector<2x64xf32>
    %355 = math.tanh %354 : vector<2x64xf32>
    %cst_86 = arith.constant 5.000000e-01 : f32
    %356 = vector.broadcast %cst_86 : f32 to vector<2x64xf32>
    %357 = arith.mulf %355, %356 : vector<2x64xf32>
    %cst_87 = arith.constant 5.000000e-01 : f32
    %358 = vector.broadcast %cst_87 : f32 to vector<2x64xf32>
    %359 = arith.addf %357, %358 : vector<2x64xf32>
    %360 = vector.extract_strided_slice %359 {offsets = [0, 0], sizes = [2, 16], strides = [1, 1]} : vector<2x64xf32> to vector<2x16xf32>
    %361 = vector.extract_strided_slice %359 {offsets = [0, 16], sizes = [2, 16], strides = [1, 1]} : vector<2x64xf32> to vector<2x16xf32>
    %362 = vector.extract_strided_slice %359 {offsets = [0, 48], sizes = [2, 16], strides = [1, 1]} : vector<2x64xf32> to vector<2x16xf32>
    %363 = vector.extract_strided_slice %352 {offsets = [0, 32], sizes = [2, 16], strides = [1, 1]} : vector<2x64xf32> to vector<2x16xf32>
    %364 = math.tanh %363 : vector<2x16xf32>
    %365 = arith.mulf %361, %345 : vector<2x16xf32>
    %366 = arith.mulf %360, %364 : vector<2x16xf32>
    %367 = arith.addf %365, %366 : vector<2x16xf32>
    %368 = math.tanh %367 : vector<2x16xf32>
    %369 = arith.mulf %362, %368 : vector<2x16xf32>
    %cst_88 = arith.constant dense<0.000000e+00> : vector<2x66xf32>
    %370 = tpu.matmul %369, %5, %cst_88 {dimension_numbers = #tpu.dot_dimension_numbers<[1], [0], [0], [1], [0, 0, 1, 1], [], []>} : vector<2x16xf32>, vector<16x66xf32>, vector<2x66xf32> -> vector<2x66xf32>
    %371 = arith.addf %370, %11 : vector<2x66xf32>
    %372 = vector.extract_strided_slice %371 {offsets = [0, 64], sizes = [2, 2], strides = [1, 1]} : vector<2x66xf32> to vector<2x2xf32>
    %c16_89 = arith.constant 16 : index
    %c0_90 = arith.constant 0 : index
    %373 = vector.load %arg2[%c16_89, %c0_90] : memref<100x2xf32, #tpu.memory_space<vmem>>, vector<2x2xf32>
    tpu.vector_store %arg2[%c16_89, %c0_90], %372 {strides = array<i32>} : memref<100x2xf32, #tpu.memory_space<vmem>>, vector<2x2xf32>,
    %374 = vector.extract_strided_slice %371 {offsets = [0, 0], sizes = [2, 64], strides = [1, 1]} : vector<2x66xf32> to vector<2x64xf32>
    %cst_91 = arith.constant 5.000000e-01 : f32
    %375 = vector.broadcast %cst_91 : f32 to vector<2x64xf32>
    %376 = arith.mulf %375, %374 : vector<2x64xf32>
    %377 = math.tanh %376 : vector<2x64xf32>
    %cst_92 = arith.constant 5.000000e-01 : f32
    %378 = vector.broadcast %cst_92 : f32 to vector<2x64xf32>
    %379 = arith.mulf %377, %378 : vector<2x64xf32>
    %cst_93 = arith.constant 5.000000e-01 : f32
    %380 = vector.broadcast %cst_93 : f32 to vector<2x64xf32>
    %381 = arith.addf %379, %380 : vector<2x64xf32>
    %382 = vector.extract_strided_slice %381 {offsets = [0, 0], sizes = [2, 16], strides = [1, 1]} : vector<2x64xf32> to vector<2x16xf32>
    %383 = vector.extract_strided_slice %381 {offsets = [0, 16], sizes = [2, 16], strides = [1, 1]} : vector<2x64xf32> to vector<2x16xf32>
    %384 = vector.extract_strided_slice %381 {offsets = [0, 48], sizes = [2, 16], strides = [1, 1]} : vector<2x64xf32> to vector<2x16xf32>
    %385 = vector.extract_strided_slice %374 {offsets = [0, 32], sizes = [2, 16], strides = [1, 1]} : vector<2x64xf32> to vector<2x16xf32>
    %386 = math.tanh %385 : vector<2x16xf32>
    %387 = arith.mulf %383, %367 : vector<2x16xf32>
    %388 = arith.mulf %382, %386 : vector<2x16xf32>
    %389 = arith.addf %387, %388 : vector<2x16xf32>
    %390 = math.tanh %389 : vector<2x16xf32>
    %391 = arith.mulf %384, %390 : vector<2x16xf32>
    %cst_94 = arith.constant dense<0.000000e+00> : vector<2x66xf32>
    %392 = tpu.matmul %391, %5, %cst_94 {dimension_numbers = #tpu.dot_dimension_numbers<[1], [0], [0], [1], [0, 0, 1, 1], [], []>} : vector<2x16xf32>, vector<16x66xf32>, vector<2x66xf32> -> vector<2x66xf32>
    %393 = arith.addf %392, %11 : vector<2x66xf32>
    %394 = vector.extract_strided_slice %393 {offsets = [0, 64], sizes = [2, 2], strides = [1, 1]} : vector<2x66xf32> to vector<2x2xf32>
    %c18 = arith.constant 18 : index
    %c0_95 = arith.constant 0 : index
    %395 = vector.load %arg2[%c18, %c0_95] : memref<100x2xf32, #tpu.memory_space<vmem>>, vector<2x2xf32>
    tpu.vector_store %arg2[%c18, %c0_95], %394 {strides = array<i32>} : memref<100x2xf32, #tpu.memory_space<vmem>>, vector<2x2xf32>,
    %396 = vector.extract_strided_slice %393 {offsets = [0, 0], sizes = [2, 64], strides = [1, 1]} : vector<2x66xf32> to vector<2x64xf32>
    %cst_96 = arith.constant 5.000000e-01 : f32
    %397 = vector.broadcast %cst_96 : f32 to vector<2x64xf32>
    %398 = arith.mulf %397, %396 : vector<2x64xf32>
    %399 = math.tanh %398 : vector<2x64xf32>
    %cst_97 = arith.constant 5.000000e-01 : f32
    %400 = vector.broadcast %cst_97 : f32 to vector<2x64xf32>
    %401 = arith.mulf %399, %400 : vector<2x64xf32>
    %cst_98 = arith.constant 5.000000e-01 : f32
    %402 = vector.broadcast %cst_98 : f32 to vector<2x64xf32>
    %403 = arith.addf %401, %402 : vector<2x64xf32>
    %404 = vector.extract_strided_slice %403 {offsets = [0, 0], sizes = [2, 16], strides = [1, 1]} : vector<2x64xf32> to vector<2x16xf32>
    %405 = vector.extract_strided_slice %403 {offsets = [0, 16], sizes = [2, 16], strides = [1, 1]} : vector<2x64xf32> to vector<2x16xf32>
    %406 = vector.extract_strided_slice %403 {offsets = [0, 48], sizes = [2, 16], strides = [1, 1]} : vector<2x64xf32> to vector<2x16xf32>
    %407 = vector.extract_strided_slice %396 {offsets = [0, 32], sizes = [2, 16], strides = [1, 1]} : vector<2x64xf32> to vector<2x16xf32>
    %408 = math.tanh %407 : vector<2x16xf32>
    %409 = arith.mulf %405, %389 : vector<2x16xf32>
    %410 = arith.mulf %404, %408 : vector<2x16xf32>
    %411 = arith.addf %409, %410 : vector<2x16xf32>
    %412 = math.tanh %411 : vector<2x16xf32>
    %413 = arith.mulf %406, %412 : vector<2x16xf32>
    %cst_99 = arith.constant dense<0.000000e+00> : vector<2x66xf32>
    %414 = tpu.matmul %413, %5, %cst_99 {dimension_numbers = #tpu.dot_dimension_numbers<[1], [0], [0], [1], [0, 0, 1, 1], [], []>} : vector<2x16xf32>, vector<16x66xf32>, vector<2x66xf32> -> vector<2x66xf32>
    %415 = arith.addf %414, %11 : vector<2x66xf32>
    %416 = vector.extract_strided_slice %415 {offsets = [0, 64], sizes = [2, 2], strides = [1, 1]} : vector<2x66xf32> to vector<2x2xf32>
    %c20 = arith.constant 20 : index
    %c0_100 = arith.constant 0 : index
    %417 = vector.load %arg2[%c20, %c0_100] : memref<100x2xf32, #tpu.memory_space<vmem>>, vector<2x2xf32>
    tpu.vector_store %arg2[%c20, %c0_100], %416 {strides = array<i32>} : memref<100x2xf32, #tpu.memory_space<vmem>>, vector<2x2xf32>,
    %418 = vector.extract_strided_slice %415 {offsets = [0, 0], sizes = [2, 64], strides = [1, 1]} : vector<2x66xf32> to vector<2x64xf32>
    %cst_101 = arith.constant 5.000000e-01 : f32
    %419 = vector.broadcast %cst_101 : f32 to vector<2x64xf32>
    %420 = arith.mulf %419, %418 : vector<2x64xf32>
    %421 = math.tanh %420 : vector<2x64xf32>
    %cst_102 = arith.constant 5.000000e-01 : f32
    %422 = vector.broadcast %cst_102 : f32 to vector<2x64xf32>
    %423 = arith.mulf %421, %422 : vector<2x64xf32>
    %cst_103 = arith.constant 5.000000e-01 : f32
    %424 = vector.broadcast %cst_103 : f32 to vector<2x64xf32>
    %425 = arith.addf %423, %424 : vector<2x64xf32>
    %426 = vector.extract_strided_slice %425 {offsets = [0, 0], sizes = [2, 16], strides = [1, 1]} : vector<2x64xf32> to vector<2x16xf32>
    %427 = vector.extract_strided_slice %425 {offsets = [0, 16], sizes = [2, 16], strides = [1, 1]} : vector<2x64xf32> to vector<2x16xf32>
    %428 = vector.extract_strided_slice %425 {offsets = [0, 48], sizes = [2, 16], strides = [1, 1]} : vector<2x64xf32> to vector<2x16xf32>
    %429 = vector.extract_strided_slice %418 {offsets = [0, 32], sizes = [2, 16], strides = [1, 1]} : vector<2x64xf32> to vector<2x16xf32>
    %430 = math.tanh %429 : vector<2x16xf32>
    %431 = arith.mulf %427, %411 : vector<2x16xf32>
    %432 = arith.mulf %426, %430 : vector<2x16xf32>
    %433 = arith.addf %431, %432 : vector<2x16xf32>
    %434 = math.tanh %433 : vector<2x16xf32>
    %435 = arith.mulf %428, %434 : vector<2x16xf32>
    %cst_104 = arith.constant dense<0.000000e+00> : vector<2x66xf32>
    %436 = tpu.matmul %435, %5, %cst_104 {dimension_numbers = #tpu.dot_dimension_numbers<[1], [0], [0], [1], [0, 0, 1, 1], [], []>} : vector<2x16xf32>, vector<16x66xf32>, vector<2x66xf32> -> vector<2x66xf32>
    %437 = arith.addf %436, %11 : vector<2x66xf32>
    %438 = vector.extract_strided_slice %437 {offsets = [0, 64], sizes = [2, 2], strides = [1, 1]} : vector<2x66xf32> to vector<2x2xf32>
    %c22 = arith.constant 22 : index
    %c0_105 = arith.constant 0 : index
    %439 = vector.load %arg2[%c22, %c0_105] : memref<100x2xf32, #tpu.memory_space<vmem>>, vector<2x2xf32>
    tpu.vector_store %arg2[%c22, %c0_105], %438 {strides = array<i32>} : memref<100x2xf32, #tpu.memory_space<vmem>>, vector<2x2xf32>,
    %440 = vector.extract_strided_slice %437 {offsets = [0, 0], sizes = [2, 64], strides = [1, 1]} : vector<2x66xf32> to vector<2x64xf32>
    %cst_106 = arith.constant 5.000000e-01 : f32
    %441 = vector.broadcast %cst_106 : f32 to vector<2x64xf32>
    %442 = arith.mulf %441, %440 : vector<2x64xf32>
    %443 = math.tanh %442 : vector<2x64xf32>
    %cst_107 = arith.constant 5.000000e-01 : f32
    %444 = vector.broadcast %cst_107 : f32 to vector<2x64xf32>
    %445 = arith.mulf %443, %444 : vector<2x64xf32>
    %cst_108 = arith.constant 5.000000e-01 : f32
    %446 = vector.broadcast %cst_108 : f32 to vector<2x64xf32>
    %447 = arith.addf %445, %446 : vector<2x64xf32>
    %448 = vector.extract_strided_slice %447 {offsets = [0, 0], sizes = [2, 16], strides = [1, 1]} : vector<2x64xf32> to vector<2x16xf32>
    %449 = vector.extract_strided_slice %447 {offsets = [0, 16], sizes = [2, 16], strides = [1, 1]} : vector<2x64xf32> to vector<2x16xf32>
    %450 = vector.extract_strided_slice %447 {offsets = [0, 48], sizes = [2, 16], strides = [1, 1]} : vector<2x64xf32> to vector<2x16xf32>
    %451 = vector.extract_strided_slice %440 {offsets = [0, 32], sizes = [2, 16], strides = [1, 1]} : vector<2x64xf32> to vector<2x16xf32>
    %452 = math.tanh %451 : vector<2x16xf32>
    %453 = arith.mulf %449, %433 : vector<2x16xf32>
    %454 = arith.mulf %448, %452 : vector<2x16xf32>
    %455 = arith.addf %453, %454 : vector<2x16xf32>
    %456 = math.tanh %455 : vector<2x16xf32>
    %457 = arith.mulf %450, %456 : vector<2x16xf32>
    %cst_109 = arith.constant dense<0.000000e+00> : vector<2x66xf32>
    %458 = tpu.matmul %457, %5, %cst_109 {dimension_numbers = #tpu.dot_dimension_numbers<[1], [0], [0], [1], [0, 0, 1, 1], [], []>} : vector<2x16xf32>, vector<16x66xf32>, vector<2x66xf32> -> vector<2x66xf32>
    %459 = arith.addf %458, %11 : vector<2x66xf32>
    %460 = vector.extract_strided_slice %459 {offsets = [0, 64], sizes = [2, 2], strides = [1, 1]} : vector<2x66xf32> to vector<2x2xf32>
    %c24_110 = arith.constant 24 : index
    %c0_111 = arith.constant 0 : index
    %461 = vector.load %arg2[%c24_110, %c0_111] : memref<100x2xf32, #tpu.memory_space<vmem>>, vector<2x2xf32>
    tpu.vector_store %arg2[%c24_110, %c0_111], %460 {strides = array<i32>} : memref<100x2xf32, #tpu.memory_space<vmem>>, vector<2x2xf32>,
    %462 = vector.extract_strided_slice %459 {offsets = [0, 0], sizes = [2, 64], strides = [1, 1]} : vector<2x66xf32> to vector<2x64xf32>
    %cst_112 = arith.constant 5.000000e-01 : f32
    %463 = vector.broadcast %cst_112 : f32 to vector<2x64xf32>
    %464 = arith.mulf %463, %462 : vector<2x64xf32>
    %465 = math.tanh %464 : vector<2x64xf32>
    %cst_113 = arith.constant 5.000000e-01 : f32
    %466 = vector.broadcast %cst_113 : f32 to vector<2x64xf32>
    %467 = arith.mulf %465, %466 : vector<2x64xf32>
    %cst_114 = arith.constant 5.000000e-01 : f32
    %468 = vector.broadcast %cst_114 : f32 to vector<2x64xf32>
    %469 = arith.addf %467, %468 : vector<2x64xf32>
    %470 = vector.extract_strided_slice %469 {offsets = [0, 0], sizes = [2, 16], strides = [1, 1]} : vector<2x64xf32> to vector<2x16xf32>
    %471 = vector.extract_strided_slice %469 {offsets = [0, 16], sizes = [2, 16], strides = [1, 1]} : vector<2x64xf32> to vector<2x16xf32>
    %472 = vector.extract_strided_slice %469 {offsets = [0, 48], sizes = [2, 16], strides = [1, 1]} : vector<2x64xf32> to vector<2x16xf32>
    %473 = vector.extract_strided_slice %462 {offsets = [0, 32], sizes = [2, 16], strides = [1, 1]} : vector<2x64xf32> to vector<2x16xf32>
    %474 = math.tanh %473 : vector<2x16xf32>
    %475 = arith.mulf %471, %455 : vector<2x16xf32>
    %476 = arith.mulf %470, %474 : vector<2x16xf32>
    %477 = arith.addf %475, %476 : vector<2x16xf32>
    %478 = math.tanh %477 : vector<2x16xf32>
    %479 = arith.mulf %472, %478 : vector<2x16xf32>
    %cst_115 = arith.constant dense<0.000000e+00> : vector<2x66xf32>
    %480 = tpu.matmul %479, %5, %cst_115 {dimension_numbers = #tpu.dot_dimension_numbers<[1], [0], [0], [1], [0, 0, 1, 1], [], []>} : vector<2x16xf32>, vector<16x66xf32>, vector<2x66xf32> -> vector<2x66xf32>
    %481 = arith.addf %480, %11 : vector<2x66xf32>
    %482 = vector.extract_strided_slice %481 {offsets = [0, 64], sizes = [2, 2], strides = [1, 1]} : vector<2x66xf32> to vector<2x2xf32>
    %c26 = arith.constant 26 : index
    %c0_116 = arith.constant 0 : index
    %483 = vector.load %arg2[%c26, %c0_116] : memref<100x2xf32, #tpu.memory_space<vmem>>, vector<2x2xf32>
    tpu.vector_store %arg2[%c26, %c0_116], %482 {strides = array<i32>} : memref<100x2xf32, #tpu.memory_space<vmem>>, vector<2x2xf32>,
    %484 = vector.extract_strided_slice %481 {offsets = [0, 0], sizes = [2, 64], strides = [1, 1]} : vector<2x66xf32> to vector<2x64xf32>
    %cst_117 = arith.constant 5.000000e-01 : f32
    %485 = vector.broadcast %cst_117 : f32 to vector<2x64xf32>
    %486 = arith.mulf %485, %484 : vector<2x64xf32>
    %487 = math.tanh %486 : vector<2x64xf32>
    %cst_118 = arith.constant 5.000000e-01 : f32
    %488 = vector.broadcast %cst_118 : f32 to vector<2x64xf32>
    %489 = arith.mulf %487, %488 : vector<2x64xf32>
    %cst_119 = arith.constant 5.000000e-01 : f32
    %490 = vector.broadcast %cst_119 : f32 to vector<2x64xf32>
    %491 = arith.addf %489, %490 : vector<2x64xf32>
    %492 = vector.extract_strided_slice %491 {offsets = [0, 0], sizes = [2, 16], strides = [1, 1]} : vector<2x64xf32> to vector<2x16xf32>
    %493 = vector.extract_strided_slice %491 {offsets = [0, 16], sizes = [2, 16], strides = [1, 1]} : vector<2x64xf32> to vector<2x16xf32>
    %494 = vector.extract_strided_slice %491 {offsets = [0, 48], sizes = [2, 16], strides = [1, 1]} : vector<2x64xf32> to vector<2x16xf32>
    %495 = vector.extract_strided_slice %484 {offsets = [0, 32], sizes = [2, 16], strides = [1, 1]} : vector<2x64xf32> to vector<2x16xf32>
    %496 = math.tanh %495 : vector<2x16xf32>
    %497 = arith.mulf %493, %477 : vector<2x16xf32>
    %498 = arith.mulf %492, %496 : vector<2x16xf32>
    %499 = arith.addf %497, %498 : vector<2x16xf32>
    %500 = math.tanh %499 : vector<2x16xf32>
    %501 = arith.mulf %494, %500 : vector<2x16xf32>
    %cst_120 = arith.constant dense<0.000000e+00> : vector<2x66xf32>
    %502 = tpu.matmul %501, %5, %cst_120 {dimension_numbers = #tpu.dot_dimension_numbers<[1], [0], [0], [1], [0, 0, 1, 1], [], []>} : vector<2x16xf32>, vector<16x66xf32>, vector<2x66xf32> -> vector<2x66xf32>
    %503 = arith.addf %502, %11 : vector<2x66xf32>
    %504 = vector.extract_strided_slice %503 {offsets = [0, 64], sizes = [2, 2], strides = [1, 1]} : vector<2x66xf32> to vector<2x2xf32>
    %c28 = arith.constant 28 : index
    %c0_121 = arith.constant 0 : index
    %505 = vector.load %arg2[%c28, %c0_121] : memref<100x2xf32, #tpu.memory_space<vmem>>, vector<2x2xf32>
    tpu.vector_store %arg2[%c28, %c0_121], %504 {strides = array<i32>} : memref<100x2xf32, #tpu.memory_space<vmem>>, vector<2x2xf32>,
    %506 = vector.extract_strided_slice %503 {offsets = [0, 0], sizes = [2, 64], strides = [1, 1]} : vector<2x66xf32> to vector<2x64xf32>
    %cst_122 = arith.constant 5.000000e-01 : f32
    %507 = vector.broadcast %cst_122 : f32 to vector<2x64xf32>
    %508 = arith.mulf %507, %506 : vector<2x64xf32>
    %509 = math.tanh %508 : vector<2x64xf32>
    %cst_123 = arith.constant 5.000000e-01 : f32
    %510 = vector.broadcast %cst_123 : f32 to vector<2x64xf32>
    %511 = arith.mulf %509, %510 : vector<2x64xf32>
    %cst_124 = arith.constant 5.000000e-01 : f32
    %512 = vector.broadcast %cst_124 : f32 to vector<2x64xf32>
    %513 = arith.addf %511, %512 : vector<2x64xf32>
    %514 = vector.extract_strided_slice %513 {offsets = [0, 0], sizes = [2, 16], strides = [1, 1]} : vector<2x64xf32> to vector<2x16xf32>
    %515 = vector.extract_strided_slice %513 {offsets = [0, 16], sizes = [2, 16], strides = [1, 1]} : vector<2x64xf32> to vector<2x16xf32>
    %516 = vector.extract_strided_slice %513 {offsets = [0, 48], sizes = [2, 16], strides = [1, 1]} : vector<2x64xf32> to vector<2x16xf32>
    %517 = vector.extract_strided_slice %506 {offsets = [0, 32], sizes = [2, 16], strides = [1, 1]} : vector<2x64xf32> to vector<2x16xf32>
    %518 = math.tanh %517 : vector<2x16xf32>
    %519 = arith.mulf %515, %499 : vector<2x16xf32>
    %520 = arith.mulf %514, %518 : vector<2x16xf32>
    %521 = arith.addf %519, %520 : vector<2x16xf32>
    %522 = math.tanh %521 : vector<2x16xf32>
    %523 = arith.mulf %516, %522 : vector<2x16xf32>
    %cst_125 = arith.constant dense<0.000000e+00> : vector<2x66xf32>
    %524 = tpu.matmul %523, %5, %cst_125 {dimension_numbers = #tpu.dot_dimension_numbers<[1], [0], [0], [1], [0, 0, 1, 1], [], []>} : vector<2x16xf32>, vector<16x66xf32>, vector<2x66xf32> -> vector<2x66xf32>
    %525 = arith.addf %524, %11 : vector<2x66xf32>
    %526 = vector.extract_strided_slice %525 {offsets = [0, 64], sizes = [2, 2], strides = [1, 1]} : vector<2x66xf32> to vector<2x2xf32>
    %c30 = arith.constant 30 : index
    %c0_126 = arith.constant 0 : index
    %527 = vector.load %arg2[%c30, %c0_126] : memref<100x2xf32, #tpu.memory_space<vmem>>, vector<2x2xf32>
    tpu.vector_store %arg2[%c30, %c0_126], %526 {strides = array<i32>} : memref<100x2xf32, #tpu.memory_space<vmem>>, vector<2x2xf32>,
    %528 = vector.extract_strided_slice %525 {offsets = [0, 0], sizes = [2, 64], strides = [1, 1]} : vector<2x66xf32> to vector<2x64xf32>
    %cst_127 = arith.constant 5.000000e-01 : f32
    %529 = vector.broadcast %cst_127 : f32 to vector<2x64xf32>
    %530 = arith.mulf %529, %528 : vector<2x64xf32>
    %531 = math.tanh %530 : vector<2x64xf32>
    %cst_128 = arith.constant 5.000000e-01 : f32
    %532 = vector.broadcast %cst_128 : f32 to vector<2x64xf32>
    %533 = arith.mulf %531, %532 : vector<2x64xf32>
    %cst_129 = arith.constant 5.000000e-01 : f32
    %534 = vector.broadcast %cst_129 : f32 to vector<2x64xf32>
    %535 = arith.addf %533, %534 : vector<2x64xf32>
    %536 = vector.extract_strided_slice %535 {offsets = [0, 0], sizes = [2, 16], strides = [1, 1]} : vector<2x64xf32> to vector<2x16xf32>
    %537 = vector.extract_strided_slice %535 {offsets = [0, 16], sizes = [2, 16], strides = [1, 1]} : vector<2x64xf32> to vector<2x16xf32>
    %538 = vector.extract_strided_slice %535 {offsets = [0, 48], sizes = [2, 16], strides = [1, 1]} : vector<2x64xf32> to vector<2x16xf32>
    %539 = vector.extract_strided_slice %528 {offsets = [0, 32], sizes = [2, 16], strides = [1, 1]} : vector<2x64xf32> to vector<2x16xf32>
    %540 = math.tanh %539 : vector<2x16xf32>
    %541 = arith.mulf %537, %521 : vector<2x16xf32>
    %542 = arith.mulf %536, %540 : vector<2x16xf32>
    %543 = arith.addf %541, %542 : vector<2x16xf32>
    %544 = math.tanh %543 : vector<2x16xf32>
    %545 = arith.mulf %538, %544 : vector<2x16xf32>
    %cst_130 = arith.constant dense<0.000000e+00> : vector<2x66xf32>
    %546 = tpu.matmul %545, %5, %cst_130 {dimension_numbers = #tpu.dot_dimension_numbers<[1], [0], [0], [1], [0, 0, 1, 1], [], []>} : vector<2x16xf32>, vector<16x66xf32>, vector<2x66xf32> -> vector<2x66xf32>
    %547 = arith.addf %546, %11 : vector<2x66xf32>
    %548 = vector.extract_strided_slice %547 {offsets = [0, 64], sizes = [2, 2], strides = [1, 1]} : vector<2x66xf32> to vector<2x2xf32>
    %c32 = arith.constant 32 : index
    %c0_131 = arith.constant 0 : index
    %549 = vector.load %arg2[%c32, %c0_131] : memref<100x2xf32, #tpu.memory_space<vmem>>, vector<2x2xf32>
    tpu.vector_store %arg2[%c32, %c0_131], %548 {strides = array<i32>} : memref<100x2xf32, #tpu.memory_space<vmem>>, vector<2x2xf32>,
    %550 = vector.extract_strided_slice %547 {offsets = [0, 0], sizes = [2, 64], strides = [1, 1]} : vector<2x66xf32> to vector<2x64xf32>
    %cst_132 = arith.constant 5.000000e-01 : f32
    %551 = vector.broadcast %cst_132 : f32 to vector<2x64xf32>
    %552 = arith.mulf %551, %550 : vector<2x64xf32>
    %553 = math.tanh %552 : vector<2x64xf32>
    %cst_133 = arith.constant 5.000000e-01 : f32
    %554 = vector.broadcast %cst_133 : f32 to vector<2x64xf32>
    %555 = arith.mulf %553, %554 : vector<2x64xf32>
    %cst_134 = arith.constant 5.000000e-01 : f32
    %556 = vector.broadcast %cst_134 : f32 to vector<2x64xf32>
    %557 = arith.addf %555, %556 : vector<2x64xf32>
    %558 = vector.extract_strided_slice %557 {offsets = [0, 0], sizes = [2, 16], strides = [1, 1]} : vector<2x64xf32> to vector<2x16xf32>
    %559 = vector.extract_strided_slice %557 {offsets = [0, 16], sizes = [2, 16], strides = [1, 1]} : vector<2x64xf32> to vector<2x16xf32>
    %560 = vector.extract_strided_slice %557 {offsets = [0, 48], sizes = [2, 16], strides = [1, 1]} : vector<2x64xf32> to vector<2x16xf32>
    %561 = vector.extract_strided_slice %550 {offsets = [0, 32], sizes = [2, 16], strides = [1, 1]} : vector<2x64xf32> to vector<2x16xf32>
    %562 = math.tanh %561 : vector<2x16xf32>
    %563 = arith.mulf %559, %543 : vector<2x16xf32>
    %564 = arith.mulf %558, %562 : vector<2x16xf32>
    %565 = arith.addf %563, %564 : vector<2x16xf32>
    %566 = math.tanh %565 : vector<2x16xf32>
    %567 = arith.mulf %560, %566 : vector<2x16xf32>
    %cst_135 = arith.constant dense<0.000000e+00> : vector<2x66xf32>
    %568 = tpu.matmul %567, %5, %cst_135 {dimension_numbers = #tpu.dot_dimension_numbers<[1], [0], [0], [1], [0, 0, 1, 1], [], []>} : vector<2x16xf32>, vector<16x66xf32>, vector<2x66xf32> -> vector<2x66xf32>
    %569 = arith.addf %568, %11 : vector<2x66xf32>
    %570 = vector.extract_strided_slice %569 {offsets = [0, 64], sizes = [2, 2], strides = [1, 1]} : vector<2x66xf32> to vector<2x2xf32>
    %c34 = arith.constant 34 : index
    %c0_136 = arith.constant 0 : index
    %571 = vector.load %arg2[%c34, %c0_136] : memref<100x2xf32, #tpu.memory_space<vmem>>, vector<2x2xf32>
    tpu.vector_store %arg2[%c34, %c0_136], %570 {strides = array<i32>} : memref<100x2xf32, #tpu.memory_space<vmem>>, vector<2x2xf32>,
    %572 = vector.extract_strided_slice %569 {offsets = [0, 0], sizes = [2, 64], strides = [1, 1]} : vector<2x66xf32> to vector<2x64xf32>
    %cst_137 = arith.constant 5.000000e-01 : f32
    %573 = vector.broadcast %cst_137 : f32 to vector<2x64xf32>
    %574 = arith.mulf %573, %572 : vector<2x64xf32>
    %575 = math.tanh %574 : vector<2x64xf32>
    %cst_138 = arith.constant 5.000000e-01 : f32
    %576 = vector.broadcast %cst_138 : f32 to vector<2x64xf32>
    %577 = arith.mulf %575, %576 : vector<2x64xf32>
    %cst_139 = arith.constant 5.000000e-01 : f32
    %578 = vector.broadcast %cst_139 : f32 to vector<2x64xf32>
    %579 = arith.addf %577, %578 : vector<2x64xf32>
    %580 = vector.extract_strided_slice %579 {offsets = [0, 0], sizes = [2, 16], strides = [1, 1]} : vector<2x64xf32> to vector<2x16xf32>
    %581 = vector.extract_strided_slice %579 {offsets = [0, 16], sizes = [2, 16], strides = [1, 1]} : vector<2x64xf32> to vector<2x16xf32>
    %582 = vector.extract_strided_slice %579 {offsets = [0, 48], sizes = [2, 16], strides = [1, 1]} : vector<2x64xf32> to vector<2x16xf32>
    %583 = vector.extract_strided_slice %572 {offsets = [0, 32], sizes = [2, 16], strides = [1, 1]} : vector<2x64xf32> to vector<2x16xf32>
    %584 = math.tanh %583 : vector<2x16xf32>
    %585 = arith.mulf %581, %565 : vector<2x16xf32>
    %586 = arith.mulf %580, %584 : vector<2x16xf32>
    %587 = arith.addf %585, %586 : vector<2x16xf32>
    %588 = math.tanh %587 : vector<2x16xf32>
    %589 = arith.mulf %582, %588 : vector<2x16xf32>
    %cst_140 = arith.constant dense<0.000000e+00> : vector<2x66xf32>
    %590 = tpu.matmul %589, %5, %cst_140 {dimension_numbers = #tpu.dot_dimension_numbers<[1], [0], [0], [1], [0, 0, 1, 1], [], []>} : vector<2x16xf32>, vector<16x66xf32>, vector<2x66xf32> -> vector<2x66xf32>
    %591 = arith.addf %590, %11 : vector<2x66xf32>
    %592 = vector.extract_strided_slice %591 {offsets = [0, 64], sizes = [2, 2], strides = [1, 1]} : vector<2x66xf32> to vector<2x2xf32>
    %c36 = arith.constant 36 : index
    %c0_141 = arith.constant 0 : index
    %593 = vector.load %arg2[%c36, %c0_141] : memref<100x2xf32, #tpu.memory_space<vmem>>, vector<2x2xf32>
    tpu.vector_store %arg2[%c36, %c0_141], %592 {strides = array<i32>} : memref<100x2xf32, #tpu.memory_space<vmem>>, vector<2x2xf32>,
    %594 = vector.extract_strided_slice %591 {offsets = [0, 0], sizes = [2, 64], strides = [1, 1]} : vector<2x66xf32> to vector<2x64xf32>
    %cst_142 = arith.constant 5.000000e-01 : f32
    %595 = vector.broadcast %cst_142 : f32 to vector<2x64xf32>
    %596 = arith.mulf %595, %594 : vector<2x64xf32>
    %597 = math.tanh %596 : vector<2x64xf32>
    %cst_143 = arith.constant 5.000000e-01 : f32
    %598 = vector.broadcast %cst_143 : f32 to vector<2x64xf32>
    %599 = arith.mulf %597, %598 : vector<2x64xf32>
    %cst_144 = arith.constant 5.000000e-01 : f32
    %600 = vector.broadcast %cst_144 : f32 to vector<2x64xf32>
    %601 = arith.addf %599, %600 : vector<2x64xf32>
    %602 = vector.extract_strided_slice %601 {offsets = [0, 0], sizes = [2, 16], strides = [1, 1]} : vector<2x64xf32> to vector<2x16xf32>
    %603 = vector.extract_strided_slice %601 {offsets = [0, 16], sizes = [2, 16], strides = [1, 1]} : vector<2x64xf32> to vector<2x16xf32>
    %604 = vector.extract_strided_slice %601 {offsets = [0, 48], sizes = [2, 16], strides = [1, 1]} : vector<2x64xf32> to vector<2x16xf32>
    %605 = vector.extract_strided_slice %594 {offsets = [0, 32], sizes = [2, 16], strides = [1, 1]} : vector<2x64xf32> to vector<2x16xf32>
    %606 = math.tanh %605 : vector<2x16xf32>
    %607 = arith.mulf %603, %587 : vector<2x16xf32>
    %608 = arith.mulf %602, %606 : vector<2x16xf32>
    %609 = arith.addf %607, %608 : vector<2x16xf32>
    %610 = math.tanh %609 : vector<2x16xf32>
    %611 = arith.mulf %604, %610 : vector<2x16xf32>
    %cst_145 = arith.constant dense<0.000000e+00> : vector<2x66xf32>
    %612 = tpu.matmul %611, %5, %cst_145 {dimension_numbers = #tpu.dot_dimension_numbers<[1], [0], [0], [1], [0, 0, 1, 1], [], []>} : vector<2x16xf32>, vector<16x66xf32>, vector<2x66xf32> -> vector<2x66xf32>
    %613 = arith.addf %612, %11 : vector<2x66xf32>
    %614 = vector.extract_strided_slice %613 {offsets = [0, 64], sizes = [2, 2], strides = [1, 1]} : vector<2x66xf32> to vector<2x2xf32>
    %c38 = arith.constant 38 : index
    %c0_146 = arith.constant 0 : index
    %615 = vector.load %arg2[%c38, %c0_146] : memref<100x2xf32, #tpu.memory_space<vmem>>, vector<2x2xf32>
    tpu.vector_store %arg2[%c38, %c0_146], %614 {strides = array<i32>} : memref<100x2xf32, #tpu.memory_space<vmem>>, vector<2x2xf32>,
    %616 = vector.extract_strided_slice %613 {offsets = [0, 0], sizes = [2, 64], strides = [1, 1]} : vector<2x66xf32> to vector<2x64xf32>
    %cst_147 = arith.constant 5.000000e-01 : f32
    %617 = vector.broadcast %cst_147 : f32 to vector<2x64xf32>
    %618 = arith.mulf %617, %616 : vector<2x64xf32>
    %619 = math.tanh %618 : vector<2x64xf32>
    %cst_148 = arith.constant 5.000000e-01 : f32
    %620 = vector.broadcast %cst_148 : f32 to vector<2x64xf32>
    %621 = arith.mulf %619, %620 : vector<2x64xf32>
    %cst_149 = arith.constant 5.000000e-01 : f32
    %622 = vector.broadcast %cst_149 : f32 to vector<2x64xf32>
    %623 = arith.addf %621, %622 : vector<2x64xf32>
    %624 = vector.extract_strided_slice %623 {offsets = [0, 0], sizes = [2, 16], strides = [1, 1]} : vector<2x64xf32> to vector<2x16xf32>
    %625 = vector.extract_strided_slice %623 {offsets = [0, 16], sizes = [2, 16], strides = [1, 1]} : vector<2x64xf32> to vector<2x16xf32>
    %626 = vector.extract_strided_slice %623 {offsets = [0, 48], sizes = [2, 16], strides = [1, 1]} : vector<2x64xf32> to vector<2x16xf32>
    %627 = vector.extract_strided_slice %616 {offsets = [0, 32], sizes = [2, 16], strides = [1, 1]} : vector<2x64xf32> to vector<2x16xf32>
    %628 = math.tanh %627 : vector<2x16xf32>
    %629 = arith.mulf %625, %609 : vector<2x16xf32>
    %630 = arith.mulf %624, %628 : vector<2x16xf32>
    %631 = arith.addf %629, %630 : vector<2x16xf32>
    %632 = math.tanh %631 : vector<2x16xf32>
    %633 = arith.mulf %626, %632 : vector<2x16xf32>
    %cst_150 = arith.constant dense<0.000000e+00> : vector<2x66xf32>
    %634 = tpu.matmul %633, %5, %cst_150 {dimension_numbers = #tpu.dot_dimension_numbers<[1], [0], [0], [1], [0, 0, 1, 1], [], []>} : vector<2x16xf32>, vector<16x66xf32>, vector<2x66xf32> -> vector<2x66xf32>
    %635 = arith.addf %634, %11 : vector<2x66xf32>
    %636 = vector.extract_strided_slice %635 {offsets = [0, 64], sizes = [2, 2], strides = [1, 1]} : vector<2x66xf32> to vector<2x2xf32>
    %c40_151 = arith.constant 40 : index
    %c0_152 = arith.constant 0 : index
    %637 = vector.load %arg2[%c40_151, %c0_152] : memref<100x2xf32, #tpu.memory_space<vmem>>, vector<2x2xf32>
    tpu.vector_store %arg2[%c40_151, %c0_152], %636 {strides = array<i32>} : memref<100x2xf32, #tpu.memory_space<vmem>>, vector<2x2xf32>,
    %638 = vector.extract_strided_slice %635 {offsets = [0, 0], sizes = [2, 64], strides = [1, 1]} : vector<2x66xf32> to vector<2x64xf32>
    %cst_153 = arith.constant 5.000000e-01 : f32
    %639 = vector.broadcast %cst_153 : f32 to vector<2x64xf32>
    %640 = arith.mulf %639, %638 : vector<2x64xf32>
    %641 = math.tanh %640 : vector<2x64xf32>
    %cst_154 = arith.constant 5.000000e-01 : f32
    %642 = vector.broadcast %cst_154 : f32 to vector<2x64xf32>
    %643 = arith.mulf %641, %642 : vector<2x64xf32>
    %cst_155 = arith.constant 5.000000e-01 : f32
    %644 = vector.broadcast %cst_155 : f32 to vector<2x64xf32>
    %645 = arith.addf %643, %644 : vector<2x64xf32>
    %646 = vector.extract_strided_slice %645 {offsets = [0, 0], sizes = [2, 16], strides = [1, 1]} : vector<2x64xf32> to vector<2x16xf32>
    %647 = vector.extract_strided_slice %645 {offsets = [0, 16], sizes = [2, 16], strides = [1, 1]} : vector<2x64xf32> to vector<2x16xf32>
    %648 = vector.extract_strided_slice %645 {offsets = [0, 48], sizes = [2, 16], strides = [1, 1]} : vector<2x64xf32> to vector<2x16xf32>
    %649 = vector.extract_strided_slice %638 {offsets = [0, 32], sizes = [2, 16], strides = [1, 1]} : vector<2x64xf32> to vector<2x16xf32>
    %650 = math.tanh %649 : vector<2x16xf32>
    %651 = arith.mulf %647, %631 : vector<2x16xf32>
    %652 = arith.mulf %646, %650 : vector<2x16xf32>
    %653 = arith.addf %651, %652 : vector<2x16xf32>
    %654 = math.tanh %653 : vector<2x16xf32>
    %655 = arith.mulf %648, %654 : vector<2x16xf32>
    %cst_156 = arith.constant dense<0.000000e+00> : vector<2x66xf32>
    %656 = tpu.matmul %655, %5, %cst_156 {dimension_numbers = #tpu.dot_dimension_numbers<[1], [0], [0], [1], [0, 0, 1, 1], [], []>} : vector<2x16xf32>, vector<16x66xf32>, vector<2x66xf32> -> vector<2x66xf32>
    %657 = arith.addf %656, %11 : vector<2x66xf32>
    %658 = vector.extract_strided_slice %657 {offsets = [0, 64], sizes = [2, 2], strides = [1, 1]} : vector<2x66xf32> to vector<2x2xf32>
    %c42 = arith.constant 42 : index
    %c0_157 = arith.constant 0 : index
    %659 = vector.load %arg2[%c42, %c0_157] : memref<100x2xf32, #tpu.memory_space<vmem>>, vector<2x2xf32>
    tpu.vector_store %arg2[%c42, %c0_157], %658 {strides = array<i32>} : memref<100x2xf32, #tpu.memory_space<vmem>>, vector<2x2xf32>,
    %660 = vector.extract_strided_slice %657 {offsets = [0, 0], sizes = [2, 64], strides = [1, 1]} : vector<2x66xf32> to vector<2x64xf32>
    %cst_158 = arith.constant 5.000000e-01 : f32
    %661 = vector.broadcast %cst_158 : f32 to vector<2x64xf32>
    %662 = arith.mulf %661, %660 : vector<2x64xf32>
    %663 = math.tanh %662 : vector<2x64xf32>
    %cst_159 = arith.constant 5.000000e-01 : f32
    %664 = vector.broadcast %cst_159 : f32 to vector<2x64xf32>
    %665 = arith.mulf %663, %664 : vector<2x64xf32>
    %cst_160 = arith.constant 5.000000e-01 : f32
    %666 = vector.broadcast %cst_160 : f32 to vector<2x64xf32>
    %667 = arith.addf %665, %666 : vector<2x64xf32>
    %668 = vector.extract_strided_slice %667 {offsets = [0, 0], sizes = [2, 16], strides = [1, 1]} : vector<2x64xf32> to vector<2x16xf32>
    %669 = vector.extract_strided_slice %667 {offsets = [0, 16], sizes = [2, 16], strides = [1, 1]} : vector<2x64xf32> to vector<2x16xf32>
    %670 = vector.extract_strided_slice %667 {offsets = [0, 48], sizes = [2, 16], strides = [1, 1]} : vector<2x64xf32> to vector<2x16xf32>
    %671 = vector.extract_strided_slice %660 {offsets = [0, 32], sizes = [2, 16], strides = [1, 1]} : vector<2x64xf32> to vector<2x16xf32>
    %672 = math.tanh %671 : vector<2x16xf32>
    %673 = arith.mulf %669, %653 : vector<2x16xf32>
    %674 = arith.mulf %668, %672 : vector<2x16xf32>
    %675 = arith.addf %673, %674 : vector<2x16xf32>
    %676 = math.tanh %675 : vector<2x16xf32>
    %677 = arith.mulf %670, %676 : vector<2x16xf32>
    %cst_161 = arith.constant dense<0.000000e+00> : vector<2x66xf32>
    %678 = tpu.matmul %677, %5, %cst_161 {dimension_numbers = #tpu.dot_dimension_numbers<[1], [0], [0], [1], [0, 0, 1, 1], [], []>} : vector<2x16xf32>, vector<16x66xf32>, vector<2x66xf32> -> vector<2x66xf32>
    %679 = arith.addf %678, %11 : vector<2x66xf32>
    %680 = vector.extract_strided_slice %679 {offsets = [0, 64], sizes = [2, 2], strides = [1, 1]} : vector<2x66xf32> to vector<2x2xf32>
    %c44 = arith.constant 44 : index
    %c0_162 = arith.constant 0 : index
    %681 = vector.load %arg2[%c44, %c0_162] : memref<100x2xf32, #tpu.memory_space<vmem>>, vector<2x2xf32>
    tpu.vector_store %arg2[%c44, %c0_162], %680 {strides = array<i32>} : memref<100x2xf32, #tpu.memory_space<vmem>>, vector<2x2xf32>,
    %682 = vector.extract_strided_slice %679 {offsets = [0, 0], sizes = [2, 64], strides = [1, 1]} : vector<2x66xf32> to vector<2x64xf32>
    %cst_163 = arith.constant 5.000000e-01 : f32
    %683 = vector.broadcast %cst_163 : f32 to vector<2x64xf32>
    %684 = arith.mulf %683, %682 : vector<2x64xf32>
    %685 = math.tanh %684 : vector<2x64xf32>
    %cst_164 = arith.constant 5.000000e-01 : f32
    %686 = vector.broadcast %cst_164 : f32 to vector<2x64xf32>
    %687 = arith.mulf %685, %686 : vector<2x64xf32>
    %cst_165 = arith.constant 5.000000e-01 : f32
    %688 = vector.broadcast %cst_165 : f32 to vector<2x64xf32>
    %689 = arith.addf %687, %688 : vector<2x64xf32>
    %690 = vector.extract_strided_slice %689 {offsets = [0, 0], sizes = [2, 16], strides = [1, 1]} : vector<2x64xf32> to vector<2x16xf32>
    %691 = vector.extract_strided_slice %689 {offsets = [0, 16], sizes = [2, 16], strides = [1, 1]} : vector<2x64xf32> to vector<2x16xf32>
    %692 = vector.extract_strided_slice %689 {offsets = [0, 48], sizes = [2, 16], strides = [1, 1]} : vector<2x64xf32> to vector<2x16xf32>
    %693 = vector.extract_strided_slice %682 {offsets = [0, 32], sizes = [2, 16], strides = [1, 1]} : vector<2x64xf32> to vector<2x16xf32>
    %694 = math.tanh %693 : vector<2x16xf32>
    %695 = arith.mulf %691, %675 : vector<2x16xf32>
    %696 = arith.mulf %690, %694 : vector<2x16xf32>
    %697 = arith.addf %695, %696 : vector<2x16xf32>
    %698 = math.tanh %697 : vector<2x16xf32>
    %699 = arith.mulf %692, %698 : vector<2x16xf32>
    %cst_166 = arith.constant dense<0.000000e+00> : vector<2x66xf32>
    %700 = tpu.matmul %699, %5, %cst_166 {dimension_numbers = #tpu.dot_dimension_numbers<[1], [0], [0], [1], [0, 0, 1, 1], [], []>} : vector<2x16xf32>, vector<16x66xf32>, vector<2x66xf32> -> vector<2x66xf32>
    %701 = arith.addf %700, %11 : vector<2x66xf32>
    %702 = vector.extract_strided_slice %701 {offsets = [0, 64], sizes = [2, 2], strides = [1, 1]} : vector<2x66xf32> to vector<2x2xf32>
    %c46 = arith.constant 46 : index
    %c0_167 = arith.constant 0 : index
    %703 = vector.load %arg2[%c46, %c0_167] : memref<100x2xf32, #tpu.memory_space<vmem>>, vector<2x2xf32>
    tpu.vector_store %arg2[%c46, %c0_167], %702 {strides = array<i32>} : memref<100x2xf32, #tpu.memory_space<vmem>>, vector<2x2xf32>,
    %704 = vector.extract_strided_slice %701 {offsets = [0, 0], sizes = [2, 64], strides = [1, 1]} : vector<2x66xf32> to vector<2x64xf32>
    %cst_168 = arith.constant 5.000000e-01 : f32
    %705 = vector.broadcast %cst_168 : f32 to vector<2x64xf32>
    %706 = arith.mulf %705, %704 : vector<2x64xf32>
    %707 = math.tanh %706 : vector<2x64xf32>
    %cst_169 = arith.constant 5.000000e-01 : f32
    %708 = vector.broadcast %cst_169 : f32 to vector<2x64xf32>
    %709 = arith.mulf %707, %708 : vector<2x64xf32>
    %cst_170 = arith.constant 5.000000e-01 : f32
    %710 = vector.broadcast %cst_170 : f32 to vector<2x64xf32>
    %711 = arith.addf %709, %710 : vector<2x64xf32>
    %712 = vector.extract_strided_slice %711 {offsets = [0, 0], sizes = [2, 16], strides = [1, 1]} : vector<2x64xf32> to vector<2x16xf32>
    %713 = vector.extract_strided_slice %711 {offsets = [0, 16], sizes = [2, 16], strides = [1, 1]} : vector<2x64xf32> to vector<2x16xf32>
    %714 = vector.extract_strided_slice %711 {offsets = [0, 48], sizes = [2, 16], strides = [1, 1]} : vector<2x64xf32> to vector<2x16xf32>
    %715 = vector.extract_strided_slice %704 {offsets = [0, 32], sizes = [2, 16], strides = [1, 1]} : vector<2x64xf32> to vector<2x16xf32>
    %716 = math.tanh %715 : vector<2x16xf32>
    %717 = arith.mulf %713, %697 : vector<2x16xf32>
    %718 = arith.mulf %712, %716 : vector<2x16xf32>
    %719 = arith.addf %717, %718 : vector<2x16xf32>
    %720 = math.tanh %719 : vector<2x16xf32>
    %721 = arith.mulf %714, %720 : vector<2x16xf32>
    %cst_171 = arith.constant dense<0.000000e+00> : vector<2x66xf32>
    %722 = tpu.matmul %721, %5, %cst_171 {dimension_numbers = #tpu.dot_dimension_numbers<[1], [0], [0], [1], [0, 0, 1, 1], [], []>} : vector<2x16xf32>, vector<16x66xf32>, vector<2x66xf32> -> vector<2x66xf32>
    %723 = arith.addf %722, %11 : vector<2x66xf32>
    %724 = vector.extract_strided_slice %723 {offsets = [0, 64], sizes = [2, 2], strides = [1, 1]} : vector<2x66xf32> to vector<2x2xf32>
    %c48 = arith.constant 48 : index
    %c0_172 = arith.constant 0 : index
    %725 = vector.load %arg2[%c48, %c0_172] : memref<100x2xf32, #tpu.memory_space<vmem>>, vector<2x2xf32>
    tpu.vector_store %arg2[%c48, %c0_172], %724 {strides = array<i32>} : memref<100x2xf32, #tpu.memory_space<vmem>>, vector<2x2xf32>,
    %726 = vector.extract_strided_slice %723 {offsets = [0, 0], sizes = [2, 64], strides = [1, 1]} : vector<2x66xf32> to vector<2x64xf32>
    %cst_173 = arith.constant 5.000000e-01 : f32
    %727 = vector.broadcast %cst_173 : f32 to vector<2x64xf32>
    %728 = arith.mulf %727, %726 : vector<2x64xf32>
    %729 = math.tanh %728 : vector<2x64xf32>
    %cst_174 = arith.constant 5.000000e-01 : f32
    %730 = vector.broadcast %cst_174 : f32 to vector<2x64xf32>
    %731 = arith.mulf %729, %730 : vector<2x64xf32>
    %cst_175 = arith.constant 5.000000e-01 : f32
    %732 = vector.broadcast %cst_175 : f32 to vector<2x64xf32>
    %733 = arith.addf %731, %732 : vector<2x64xf32>
    %734 = vector.extract_strided_slice %733 {offsets = [0, 0], sizes = [2, 16], strides = [1, 1]} : vector<2x64xf32> to vector<2x16xf32>
    %735 = vector.extract_strided_slice %733 {offsets = [0, 16], sizes = [2, 16], strides = [1, 1]} : vector<2x64xf32> to vector<2x16xf32>
    %736 = vector.extract_strided_slice %733 {offsets = [0, 48], sizes = [2, 16], strides = [1, 1]} : vector<2x64xf32> to vector<2x16xf32>
    %737 = vector.extract_strided_slice %726 {offsets = [0, 32], sizes = [2, 16], strides = [1, 1]} : vector<2x64xf32> to vector<2x16xf32>
    %738 = math.tanh %737 : vector<2x16xf32>
    %739 = arith.mulf %735, %719 : vector<2x16xf32>
    %740 = arith.mulf %734, %738 : vector<2x16xf32>
    %741 = arith.addf %739, %740 : vector<2x16xf32>
    %742 = math.tanh %741 : vector<2x16xf32>
    %743 = arith.mulf %736, %742 : vector<2x16xf32>
    %cst_176 = arith.constant dense<0.000000e+00> : vector<2x66xf32>
    %744 = tpu.matmul %743, %5, %cst_176 {dimension_numbers = #tpu.dot_dimension_numbers<[1], [0], [0], [1], [0, 0, 1, 1], [], []>} : vector<2x16xf32>, vector<16x66xf32>, vector<2x66xf32> -> vector<2x66xf32>
    %745 = arith.addf %744, %11 : vector<2x66xf32>
    %746 = vector.extract_strided_slice %745 {offsets = [0, 64], sizes = [2, 2], strides = [1, 1]} : vector<2x66xf32> to vector<2x2xf32>
    %c50 = arith.constant 50 : index
    %c0_177 = arith.constant 0 : index
    %747 = vector.load %arg2[%c50, %c0_177] : memref<100x2xf32, #tpu.memory_space<vmem>>, vector<2x2xf32>
    tpu.vector_store %arg2[%c50, %c0_177], %746 {strides = array<i32>} : memref<100x2xf32, #tpu.memory_space<vmem>>, vector<2x2xf32>,
    %748 = vector.extract_strided_slice %745 {offsets = [0, 0], sizes = [2, 64], strides = [1, 1]} : vector<2x66xf32> to vector<2x64xf32>
    %cst_178 = arith.constant 5.000000e-01 : f32
    %749 = vector.broadcast %cst_178 : f32 to vector<2x64xf32>
    %750 = arith.mulf %749, %748 : vector<2x64xf32>
    %751 = math.tanh %750 : vector<2x64xf32>
    %cst_179 = arith.constant 5.000000e-01 : f32
    %752 = vector.broadcast %cst_179 : f32 to vector<2x64xf32>
    %753 = arith.mulf %751, %752 : vector<2x64xf32>
    %cst_180 = arith.constant 5.000000e-01 : f32
    %754 = vector.broadcast %cst_180 : f32 to vector<2x64xf32>
    %755 = arith.addf %753, %754 : vector<2x64xf32>
    %756 = vector.extract_strided_slice %755 {offsets = [0, 0], sizes = [2, 16], strides = [1, 1]} : vector<2x64xf32> to vector<2x16xf32>
    %757 = vector.extract_strided_slice %755 {offsets = [0, 16], sizes = [2, 16], strides = [1, 1]} : vector<2x64xf32> to vector<2x16xf32>
    %758 = vector.extract_strided_slice %755 {offsets = [0, 48], sizes = [2, 16], strides = [1, 1]} : vector<2x64xf32> to vector<2x16xf32>
    %759 = vector.extract_strided_slice %748 {offsets = [0, 32], sizes = [2, 16], strides = [1, 1]} : vector<2x64xf32> to vector<2x16xf32>
    %760 = math.tanh %759 : vector<2x16xf32>
    %761 = arith.mulf %757, %741 : vector<2x16xf32>
    %762 = arith.mulf %756, %760 : vector<2x16xf32>
    %763 = arith.addf %761, %762 : vector<2x16xf32>
    %764 = math.tanh %763 : vector<2x16xf32>
    %765 = arith.mulf %758, %764 : vector<2x16xf32>
    %cst_181 = arith.constant dense<0.000000e+00> : vector<2x66xf32>
    %766 = tpu.matmul %765, %5, %cst_181 {dimension_numbers = #tpu.dot_dimension_numbers<[1], [0], [0], [1], [0, 0, 1, 1], [], []>} : vector<2x16xf32>, vector<16x66xf32>, vector<2x66xf32> -> vector<2x66xf32>
    %767 = arith.addf %766, %11 : vector<2x66xf32>
    %768 = vector.extract_strided_slice %767 {offsets = [0, 64], sizes = [2, 2], strides = [1, 1]} : vector<2x66xf32> to vector<2x2xf32>
    %c52 = arith.constant 52 : index
    %c0_182 = arith.constant 0 : index
    %769 = vector.load %arg2[%c52, %c0_182] : memref<100x2xf32, #tpu.memory_space<vmem>>, vector<2x2xf32>
    tpu.vector_store %arg2[%c52, %c0_182], %768 {strides = array<i32>} : memref<100x2xf32, #tpu.memory_space<vmem>>, vector<2x2xf32>,
    %770 = vector.extract_strided_slice %767 {offsets = [0, 0], sizes = [2, 64], strides = [1, 1]} : vector<2x66xf32> to vector<2x64xf32>
    %cst_183 = arith.constant 5.000000e-01 : f32
    %771 = vector.broadcast %cst_183 : f32 to vector<2x64xf32>
    %772 = arith.mulf %771, %770 : vector<2x64xf32>
    %773 = math.tanh %772 : vector<2x64xf32>
    %cst_184 = arith.constant 5.000000e-01 : f32
    %774 = vector.broadcast %cst_184 : f32 to vector<2x64xf32>
    %775 = arith.mulf %773, %774 : vector<2x64xf32>
    %cst_185 = arith.constant 5.000000e-01 : f32
    %776 = vector.broadcast %cst_185 : f32 to vector<2x64xf32>
    %777 = arith.addf %775, %776 : vector<2x64xf32>
    %778 = vector.extract_strided_slice %777 {offsets = [0, 0], sizes = [2, 16], strides = [1, 1]} : vector<2x64xf32> to vector<2x16xf32>
    %779 = vector.extract_strided_slice %777 {offsets = [0, 16], sizes = [2, 16], strides = [1, 1]} : vector<2x64xf32> to vector<2x16xf32>
    %780 = vector.extract_strided_slice %777 {offsets = [0, 48], sizes = [2, 16], strides = [1, 1]} : vector<2x64xf32> to vector<2x16xf32>
    %781 = vector.extract_strided_slice %770 {offsets = [0, 32], sizes = [2, 16], strides = [1, 1]} : vector<2x64xf32> to vector<2x16xf32>
    %782 = math.tanh %781 : vector<2x16xf32>
    %783 = arith.mulf %779, %763 : vector<2x16xf32>
    %784 = arith.mulf %778, %782 : vector<2x16xf32>
    %785 = arith.addf %783, %784 : vector<2x16xf32>
    %786 = math.tanh %785 : vector<2x16xf32>
    %787 = arith.mulf %780, %786 : vector<2x16xf32>
    %cst_186 = arith.constant dense<0.000000e+00> : vector<2x66xf32>
    %788 = tpu.matmul %787, %5, %cst_186 {dimension_numbers = #tpu.dot_dimension_numbers<[1], [0], [0], [1], [0, 0, 1, 1], [], []>} : vector<2x16xf32>, vector<16x66xf32>, vector<2x66xf32> -> vector<2x66xf32>
    %789 = arith.addf %788, %11 : vector<2x66xf32>
    %790 = vector.extract_strided_slice %789 {offsets = [0, 64], sizes = [2, 2], strides = [1, 1]} : vector<2x66xf32> to vector<2x2xf32>
    %c54 = arith.constant 54 : index
    %c0_187 = arith.constant 0 : index
    %791 = vector.load %arg2[%c54, %c0_187] : memref<100x2xf32, #tpu.memory_space<vmem>>, vector<2x2xf32>
    tpu.vector_store %arg2[%c54, %c0_187], %790 {strides = array<i32>} : memref<100x2xf32, #tpu.memory_space<vmem>>, vector<2x2xf32>,
    %792 = vector.extract_strided_slice %789 {offsets = [0, 0], sizes = [2, 64], strides = [1, 1]} : vector<2x66xf32> to vector<2x64xf32>
    %cst_188 = arith.constant 5.000000e-01 : f32
    %793 = vector.broadcast %cst_188 : f32 to vector<2x64xf32>
    %794 = arith.mulf %793, %792 : vector<2x64xf32>
    %795 = math.tanh %794 : vector<2x64xf32>
    %cst_189 = arith.constant 5.000000e-01 : f32
    %796 = vector.broadcast %cst_189 : f32 to vector<2x64xf32>
    %797 = arith.mulf %795, %796 : vector<2x64xf32>
    %cst_190 = arith.constant 5.000000e-01 : f32
    %798 = vector.broadcast %cst_190 : f32 to vector<2x64xf32>
    %799 = arith.addf %797, %798 : vector<2x64xf32>
    %800 = vector.extract_strided_slice %799 {offsets = [0, 0], sizes = [2, 16], strides = [1, 1]} : vector<2x64xf32> to vector<2x16xf32>
    %801 = vector.extract_strided_slice %799 {offsets = [0, 16], sizes = [2, 16], strides = [1, 1]} : vector<2x64xf32> to vector<2x16xf32>
    %802 = vector.extract_strided_slice %799 {offsets = [0, 48], sizes = [2, 16], strides = [1, 1]} : vector<2x64xf32> to vector<2x16xf32>
    %803 = vector.extract_strided_slice %792 {offsets = [0, 32], sizes = [2, 16], strides = [1, 1]} : vector<2x64xf32> to vector<2x16xf32>
    %804 = math.tanh %803 : vector<2x16xf32>
    %805 = arith.mulf %801, %785 : vector<2x16xf32>
    %806 = arith.mulf %800, %804 : vector<2x16xf32>
    %807 = arith.addf %805, %806 : vector<2x16xf32>
    %808 = math.tanh %807 : vector<2x16xf32>
    %809 = arith.mulf %802, %808 : vector<2x16xf32>
    %cst_191 = arith.constant dense<0.000000e+00> : vector<2x66xf32>
    %810 = tpu.matmul %809, %5, %cst_191 {dimension_numbers = #tpu.dot_dimension_numbers<[1], [0], [0], [1], [0, 0, 1, 1], [], []>} : vector<2x16xf32>, vector<16x66xf32>, vector<2x66xf32> -> vector<2x66xf32>
    %811 = arith.addf %810, %11 : vector<2x66xf32>
    %812 = vector.extract_strided_slice %811 {offsets = [0, 64], sizes = [2, 2], strides = [1, 1]} : vector<2x66xf32> to vector<2x2xf32>
    %c56_192 = arith.constant 56 : index
    %c0_193 = arith.constant 0 : index
    %813 = vector.load %arg2[%c56_192, %c0_193] : memref<100x2xf32, #tpu.memory_space<vmem>>, vector<2x2xf32>
    tpu.vector_store %arg2[%c56_192, %c0_193], %812 {strides = array<i32>} : memref<100x2xf32, #tpu.memory_space<vmem>>, vector<2x2xf32>,
    %814 = vector.extract_strided_slice %811 {offsets = [0, 0], sizes = [2, 64], strides = [1, 1]} : vector<2x66xf32> to vector<2x64xf32>
    %cst_194 = arith.constant 5.000000e-01 : f32
    %815 = vector.broadcast %cst_194 : f32 to vector<2x64xf32>
    %816 = arith.mulf %815, %814 : vector<2x64xf32>
    %817 = math.tanh %816 : vector<2x64xf32>
    %cst_195 = arith.constant 5.000000e-01 : f32
    %818 = vector.broadcast %cst_195 : f32 to vector<2x64xf32>
    %819 = arith.mulf %817, %818 : vector<2x64xf32>
    %cst_196 = arith.constant 5.000000e-01 : f32
    %820 = vector.broadcast %cst_196 : f32 to vector<2x64xf32>
    %821 = arith.addf %819, %820 : vector<2x64xf32>
    %822 = vector.extract_strided_slice %821 {offsets = [0, 0], sizes = [2, 16], strides = [1, 1]} : vector<2x64xf32> to vector<2x16xf32>
    %823 = vector.extract_strided_slice %821 {offsets = [0, 16], sizes = [2, 16], strides = [1, 1]} : vector<2x64xf32> to vector<2x16xf32>
    %824 = vector.extract_strided_slice %821 {offsets = [0, 48], sizes = [2, 16], strides = [1, 1]} : vector<2x64xf32> to vector<2x16xf32>
    %825 = vector.extract_strided_slice %814 {offsets = [0, 32], sizes = [2, 16], strides = [1, 1]} : vector<2x64xf32> to vector<2x16xf32>
    %826 = math.tanh %825 : vector<2x16xf32>
    %827 = arith.mulf %823, %807 : vector<2x16xf32>
    %828 = arith.mulf %822, %826 : vector<2x16xf32>
    %829 = arith.addf %827, %828 : vector<2x16xf32>
    %830 = math.tanh %829 : vector<2x16xf32>
    %831 = arith.mulf %824, %830 : vector<2x16xf32>
    %cst_197 = arith.constant dense<0.000000e+00> : vector<2x66xf32>
    %832 = tpu.matmul %831, %5, %cst_197 {dimension_numbers = #tpu.dot_dimension_numbers<[1], [0], [0], [1], [0, 0, 1, 1], [], []>} : vector<2x16xf32>, vector<16x66xf32>, vector<2x66xf32> -> vector<2x66xf32>
    %833 = arith.addf %832, %11 : vector<2x66xf32>
    %834 = vector.extract_strided_slice %833 {offsets = [0, 64], sizes = [2, 2], strides = [1, 1]} : vector<2x66xf32> to vector<2x2xf32>
    %c58 = arith.constant 58 : index
    %c0_198 = arith.constant 0 : index
    %835 = vector.load %arg2[%c58, %c0_198] : memref<100x2xf32, #tpu.memory_space<vmem>>, vector<2x2xf32>
    tpu.vector_store %arg2[%c58, %c0_198], %834 {strides = array<i32>} : memref<100x2xf32, #tpu.memory_space<vmem>>, vector<2x2xf32>,
    %836 = vector.extract_strided_slice %833 {offsets = [0, 0], sizes = [2, 64], strides = [1, 1]} : vector<2x66xf32> to vector<2x64xf32>
    %cst_199 = arith.constant 5.000000e-01 : f32
    %837 = vector.broadcast %cst_199 : f32 to vector<2x64xf32>
    %838 = arith.mulf %837, %836 : vector<2x64xf32>
    %839 = math.tanh %838 : vector<2x64xf32>
    %cst_200 = arith.constant 5.000000e-01 : f32
    %840 = vector.broadcast %cst_200 : f32 to vector<2x64xf32>
    %841 = arith.mulf %839, %840 : vector<2x64xf32>
    %cst_201 = arith.constant 5.000000e-01 : f32
    %842 = vector.broadcast %cst_201 : f32 to vector<2x64xf32>
    %843 = arith.addf %841, %842 : vector<2x64xf32>
    %844 = vector.extract_strided_slice %843 {offsets = [0, 0], sizes = [2, 16], strides = [1, 1]} : vector<2x64xf32> to vector<2x16xf32>
    %845 = vector.extract_strided_slice %843 {offsets = [0, 16], sizes = [2, 16], strides = [1, 1]} : vector<2x64xf32> to vector<2x16xf32>
    %846 = vector.extract_strided_slice %843 {offsets = [0, 48], sizes = [2, 16], strides = [1, 1]} : vector<2x64xf32> to vector<2x16xf32>
    %847 = vector.extract_strided_slice %836 {offsets = [0, 32], sizes = [2, 16], strides = [1, 1]} : vector<2x64xf32> to vector<2x16xf32>
    %848 = math.tanh %847 : vector<2x16xf32>
    %849 = arith.mulf %845, %829 : vector<2x16xf32>
    %850 = arith.mulf %844, %848 : vector<2x16xf32>
    %851 = arith.addf %849, %850 : vector<2x16xf32>
    %852 = math.tanh %851 : vector<2x16xf32>
    %853 = arith.mulf %846, %852 : vector<2x16xf32>
    %cst_202 = arith.constant dense<0.000000e+00> : vector<2x66xf32>
    %854 = tpu.matmul %853, %5, %cst_202 {dimension_numbers = #tpu.dot_dimension_numbers<[1], [0], [0], [1], [0, 0, 1, 1], [], []>} : vector<2x16xf32>, vector<16x66xf32>, vector<2x66xf32> -> vector<2x66xf32>
    %855 = arith.addf %854, %11 : vector<2x66xf32>
    %856 = vector.extract_strided_slice %855 {offsets = [0, 64], sizes = [2, 2], strides = [1, 1]} : vector<2x66xf32> to vector<2x2xf32>
    %c60 = arith.constant 60 : index
    %c0_203 = arith.constant 0 : index
    %857 = vector.load %arg2[%c60, %c0_203] : memref<100x2xf32, #tpu.memory_space<vmem>>, vector<2x2xf32>
    tpu.vector_store %arg2[%c60, %c0_203], %856 {strides = array<i32>} : memref<100x2xf32, #tpu.memory_space<vmem>>, vector<2x2xf32>,
    %858 = vector.extract_strided_slice %855 {offsets = [0, 0], sizes = [2, 64], strides = [1, 1]} : vector<2x66xf32> to vector<2x64xf32>
    %cst_204 = arith.constant 5.000000e-01 : f32
    %859 = vector.broadcast %cst_204 : f32 to vector<2x64xf32>
    %860 = arith.mulf %859, %858 : vector<2x64xf32>
    %861 = math.tanh %860 : vector<2x64xf32>
    %cst_205 = arith.constant 5.000000e-01 : f32
    %862 = vector.broadcast %cst_205 : f32 to vector<2x64xf32>
    %863 = arith.mulf %861, %862 : vector<2x64xf32>
    %cst_206 = arith.constant 5.000000e-01 : f32
    %864 = vector.broadcast %cst_206 : f32 to vector<2x64xf32>
    %865 = arith.addf %863, %864 : vector<2x64xf32>
    %866 = vector.extract_strided_slice %865 {offsets = [0, 0], sizes = [2, 16], strides = [1, 1]} : vector<2x64xf32> to vector<2x16xf32>
    %867 = vector.extract_strided_slice %865 {offsets = [0, 16], sizes = [2, 16], strides = [1, 1]} : vector<2x64xf32> to vector<2x16xf32>
    %868 = vector.extract_strided_slice %865 {offsets = [0, 48], sizes = [2, 16], strides = [1, 1]} : vector<2x64xf32> to vector<2x16xf32>
    %869 = vector.extract_strided_slice %858 {offsets = [0, 32], sizes = [2, 16], strides = [1, 1]} : vector<2x64xf32> to vector<2x16xf32>
    %870 = math.tanh %869 : vector<2x16xf32>
    %871 = arith.mulf %867, %851 : vector<2x16xf32>
    %872 = arith.mulf %866, %870 : vector<2x16xf32>
    %873 = arith.addf %871, %872 : vector<2x16xf32>
    %874 = math.tanh %873 : vector<2x16xf32>
    %875 = arith.mulf %868, %874 : vector<2x16xf32>
    %cst_207 = arith.constant dense<0.000000e+00> : vector<2x66xf32>
    %876 = tpu.matmul %875, %5, %cst_207 {dimension_numbers = #tpu.dot_dimension_numbers<[1], [0], [0], [1], [0, 0, 1, 1], [], []>} : vector<2x16xf32>, vector<16x66xf32>, vector<2x66xf32> -> vector<2x66xf32>
    %877 = arith.addf %876, %11 : vector<2x66xf32>
    %878 = vector.extract_strided_slice %877 {offsets = [0, 64], sizes = [2, 2], strides = [1, 1]} : vector<2x66xf32> to vector<2x2xf32>
    %c62 = arith.constant 62 : index
    %c0_208 = arith.constant 0 : index
    %879 = vector.load %arg2[%c62, %c0_208] : memref<100x2xf32, #tpu.memory_space<vmem>>, vector<2x2xf32>
    tpu.vector_store %arg2[%c62, %c0_208], %878 {strides = array<i32>} : memref<100x2xf32, #tpu.memory_space<vmem>>, vector<2x2xf32>,
    %880 = vector.extract_strided_slice %877 {offsets = [0, 0], sizes = [2, 64], strides = [1, 1]} : vector<2x66xf32> to vector<2x64xf32>
    %cst_209 = arith.constant 5.000000e-01 : f32
    %881 = vector.broadcast %cst_209 : f32 to vector<2x64xf32>
    %882 = arith.mulf %881, %880 : vector<2x64xf32>
    %883 = math.tanh %882 : vector<2x64xf32>
    %cst_210 = arith.constant 5.000000e-01 : f32
    %884 = vector.broadcast %cst_210 : f32 to vector<2x64xf32>
    %885 = arith.mulf %883, %884 : vector<2x64xf32>
    %cst_211 = arith.constant 5.000000e-01 : f32
    %886 = vector.broadcast %cst_211 : f32 to vector<2x64xf32>
    %887 = arith.addf %885, %886 : vector<2x64xf32>
    %888 = vector.extract_strided_slice %887 {offsets = [0, 0], sizes = [2, 16], strides = [1, 1]} : vector<2x64xf32> to vector<2x16xf32>
    %889 = vector.extract_strided_slice %887 {offsets = [0, 16], sizes = [2, 16], strides = [1, 1]} : vector<2x64xf32> to vector<2x16xf32>
    %890 = vector.extract_strided_slice %887 {offsets = [0, 48], sizes = [2, 16], strides = [1, 1]} : vector<2x64xf32> to vector<2x16xf32>
    %891 = vector.extract_strided_slice %880 {offsets = [0, 32], sizes = [2, 16], strides = [1, 1]} : vector<2x64xf32> to vector<2x16xf32>
    %892 = math.tanh %891 : vector<2x16xf32>
    %893 = arith.mulf %889, %873 : vector<2x16xf32>
    %894 = arith.mulf %888, %892 : vector<2x16xf32>
    %895 = arith.addf %893, %894 : vector<2x16xf32>
    %896 = math.tanh %895 : vector<2x16xf32>
    %897 = arith.mulf %890, %896 : vector<2x16xf32>
    %cst_212 = arith.constant dense<0.000000e+00> : vector<2x66xf32>
    %898 = tpu.matmul %897, %5, %cst_212 {dimension_numbers = #tpu.dot_dimension_numbers<[1], [0], [0], [1], [0, 0, 1, 1], [], []>} : vector<2x16xf32>, vector<16x66xf32>, vector<2x66xf32> -> vector<2x66xf32>
    %899 = arith.addf %898, %11 : vector<2x66xf32>
    %900 = vector.extract_strided_slice %899 {offsets = [0, 64], sizes = [2, 2], strides = [1, 1]} : vector<2x66xf32> to vector<2x2xf32>
    %c64 = arith.constant 64 : index
    %c0_213 = arith.constant 0 : index
    %901 = vector.load %arg2[%c64, %c0_213] : memref<100x2xf32, #tpu.memory_space<vmem>>, vector<2x2xf32>
    tpu.vector_store %arg2[%c64, %c0_213], %900 {strides = array<i32>} : memref<100x2xf32, #tpu.memory_space<vmem>>, vector<2x2xf32>,
    %902 = vector.extract_strided_slice %899 {offsets = [0, 0], sizes = [2, 64], strides = [1, 1]} : vector<2x66xf32> to vector<2x64xf32>
    %cst_214 = arith.constant 5.000000e-01 : f32
    %903 = vector.broadcast %cst_214 : f32 to vector<2x64xf32>
    %904 = arith.mulf %903, %902 : vector<2x64xf32>
    %905 = math.tanh %904 : vector<2x64xf32>
    %cst_215 = arith.constant 5.000000e-01 : f32
    %906 = vector.broadcast %cst_215 : f32 to vector<2x64xf32>
    %907 = arith.mulf %905, %906 : vector<2x64xf32>
    %cst_216 = arith.constant 5.000000e-01 : f32
    %908 = vector.broadcast %cst_216 : f32 to vector<2x64xf32>
    %909 = arith.addf %907, %908 : vector<2x64xf32>
    %910 = vector.extract_strided_slice %909 {offsets = [0, 0], sizes = [2, 16], strides = [1, 1]} : vector<2x64xf32> to vector<2x16xf32>
    %911 = vector.extract_strided_slice %909 {offsets = [0, 16], sizes = [2, 16], strides = [1, 1]} : vector<2x64xf32> to vector<2x16xf32>
    %912 = vector.extract_strided_slice %909 {offsets = [0, 48], sizes = [2, 16], strides = [1, 1]} : vector<2x64xf32> to vector<2x16xf32>
    %913 = vector.extract_strided_slice %902 {offsets = [0, 32], sizes = [2, 16], strides = [1, 1]} : vector<2x64xf32> to vector<2x16xf32>
    %914 = math.tanh %913 : vector<2x16xf32>
    %915 = arith.mulf %911, %895 : vector<2x16xf32>
    %916 = arith.mulf %910, %914 : vector<2x16xf32>
    %917 = arith.addf %915, %916 : vector<2x16xf32>
    %918 = math.tanh %917 : vector<2x16xf32>
    %919 = arith.mulf %912, %918 : vector<2x16xf32>
    %cst_217 = arith.constant dense<0.000000e+00> : vector<2x66xf32>
    %920 = tpu.matmul %919, %5, %cst_217 {dimension_numbers = #tpu.dot_dimension_numbers<[1], [0], [0], [1], [0, 0, 1, 1], [], []>} : vector<2x16xf32>, vector<16x66xf32>, vector<2x66xf32> -> vector<2x66xf32>
    %921 = arith.addf %920, %11 : vector<2x66xf32>
    %922 = vector.extract_strided_slice %921 {offsets = [0, 64], sizes = [2, 2], strides = [1, 1]} : vector<2x66xf32> to vector<2x2xf32>
    %c66 = arith.constant 66 : index
    %c0_218 = arith.constant 0 : index
    %923 = vector.load %arg2[%c66, %c0_218] : memref<100x2xf32, #tpu.memory_space<vmem>>, vector<2x2xf32>
    tpu.vector_store %arg2[%c66, %c0_218], %922 {strides = array<i32>} : memref<100x2xf32, #tpu.memory_space<vmem>>, vector<2x2xf32>,
    %924 = vector.extract_strided_slice %921 {offsets = [0, 0], sizes = [2, 64], strides = [1, 1]} : vector<2x66xf32> to vector<2x64xf32>
    %cst_219 = arith.constant 5.000000e-01 : f32
    %925 = vector.broadcast %cst_219 : f32 to vector<2x64xf32>
    %926 = arith.mulf %925, %924 : vector<2x64xf32>
    %927 = math.tanh %926 : vector<2x64xf32>
    %cst_220 = arith.constant 5.000000e-01 : f32
    %928 = vector.broadcast %cst_220 : f32 to vector<2x64xf32>
    %929 = arith.mulf %927, %928 : vector<2x64xf32>
    %cst_221 = arith.constant 5.000000e-01 : f32
    %930 = vector.broadcast %cst_221 : f32 to vector<2x64xf32>
    %931 = arith.addf %929, %930 : vector<2x64xf32>
    %932 = vector.extract_strided_slice %931 {offsets = [0, 0], sizes = [2, 16], strides = [1, 1]} : vector<2x64xf32> to vector<2x16xf32>
    %933 = vector.extract_strided_slice %931 {offsets = [0, 16], sizes = [2, 16], strides = [1, 1]} : vector<2x64xf32> to vector<2x16xf32>
    %934 = vector.extract_strided_slice %931 {offsets = [0, 48], sizes = [2, 16], strides = [1, 1]} : vector<2x64xf32> to vector<2x16xf32>
    %935 = vector.extract_strided_slice %924 {offsets = [0, 32], sizes = [2, 16], strides = [1, 1]} : vector<2x64xf32> to vector<2x16xf32>
    %936 = math.tanh %935 : vector<2x16xf32>
    %937 = arith.mulf %933, %917 : vector<2x16xf32>
    %938 = arith.mulf %932, %936 : vector<2x16xf32>
    %939 = arith.addf %937, %938 : vector<2x16xf32>
    %940 = math.tanh %939 : vector<2x16xf32>
    %941 = arith.mulf %934, %940 : vector<2x16xf32>
    %cst_222 = arith.constant dense<0.000000e+00> : vector<2x66xf32>
    %942 = tpu.matmul %941, %5, %cst_222 {dimension_numbers = #tpu.dot_dimension_numbers<[1], [0], [0], [1], [0, 0, 1, 1], [], []>} : vector<2x16xf32>, vector<16x66xf32>, vector<2x66xf32> -> vector<2x66xf32>
    %943 = arith.addf %942, %11 : vector<2x66xf32>
    %944 = vector.extract_strided_slice %943 {offsets = [0, 64], sizes = [2, 2], strides = [1, 1]} : vector<2x66xf32> to vector<2x2xf32>
    %c68 = arith.constant 68 : index
    %c0_223 = arith.constant 0 : index
    %945 = vector.load %arg2[%c68, %c0_223] : memref<100x2xf32, #tpu.memory_space<vmem>>, vector<2x2xf32>
    tpu.vector_store %arg2[%c68, %c0_223], %944 {strides = array<i32>} : memref<100x2xf32, #tpu.memory_space<vmem>>, vector<2x2xf32>,
    %946 = vector.extract_strided_slice %943 {offsets = [0, 0], sizes = [2, 64], strides = [1, 1]} : vector<2x66xf32> to vector<2x64xf32>
    %cst_224 = arith.constant 5.000000e-01 : f32
    %947 = vector.broadcast %cst_224 : f32 to vector<2x64xf32>
    %948 = arith.mulf %947, %946 : vector<2x64xf32>
    %949 = math.tanh %948 : vector<2x64xf32>
    %cst_225 = arith.constant 5.000000e-01 : f32
    %950 = vector.broadcast %cst_225 : f32 to vector<2x64xf32>
    %951 = arith.mulf %949, %950 : vector<2x64xf32>
    %cst_226 = arith.constant 5.000000e-01 : f32
    %952 = vector.broadcast %cst_226 : f32 to vector<2x64xf32>
    %953 = arith.addf %951, %952 : vector<2x64xf32>
    %954 = vector.extract_strided_slice %953 {offsets = [0, 0], sizes = [2, 16], strides = [1, 1]} : vector<2x64xf32> to vector<2x16xf32>
    %955 = vector.extract_strided_slice %953 {offsets = [0, 16], sizes = [2, 16], strides = [1, 1]} : vector<2x64xf32> to vector<2x16xf32>
    %956 = vector.extract_strided_slice %953 {offsets = [0, 48], sizes = [2, 16], strides = [1, 1]} : vector<2x64xf32> to vector<2x16xf32>
    %957 = vector.extract_strided_slice %946 {offsets = [0, 32], sizes = [2, 16], strides = [1, 1]} : vector<2x64xf32> to vector<2x16xf32>
    %958 = math.tanh %957 : vector<2x16xf32>
    %959 = arith.mulf %955, %939 : vector<2x16xf32>
    %960 = arith.mulf %954, %958 : vector<2x16xf32>
    %961 = arith.addf %959, %960 : vector<2x16xf32>
    %962 = math.tanh %961 : vector<2x16xf32>
    %963 = arith.mulf %956, %962 : vector<2x16xf32>
    %cst_227 = arith.constant dense<0.000000e+00> : vector<2x66xf32>
    %964 = tpu.matmul %963, %5, %cst_227 {dimension_numbers = #tpu.dot_dimension_numbers<[1], [0], [0], [1], [0, 0, 1, 1], [], []>} : vector<2x16xf32>, vector<16x66xf32>, vector<2x66xf32> -> vector<2x66xf32>
    %965 = arith.addf %964, %11 : vector<2x66xf32>
    %966 = vector.extract_strided_slice %965 {offsets = [0, 64], sizes = [2, 2], strides = [1, 1]} : vector<2x66xf32> to vector<2x2xf32>
    %c70 = arith.constant 70 : index
    %c0_228 = arith.constant 0 : index
    %967 = vector.load %arg2[%c70, %c0_228] : memref<100x2xf32, #tpu.memory_space<vmem>>, vector<2x2xf32>
    tpu.vector_store %arg2[%c70, %c0_228], %966 {strides = array<i32>} : memref<100x2xf32, #tpu.memory_space<vmem>>, vector<2x2xf32>,
    %968 = vector.extract_strided_slice %965 {offsets = [0, 0], sizes = [2, 64], strides = [1, 1]} : vector<2x66xf32> to vector<2x64xf32>
    %cst_229 = arith.constant 5.000000e-01 : f32
    %969 = vector.broadcast %cst_229 : f32 to vector<2x64xf32>
    %970 = arith.mulf %969, %968 : vector<2x64xf32>
    %971 = math.tanh %970 : vector<2x64xf32>
    %cst_230 = arith.constant 5.000000e-01 : f32
    %972 = vector.broadcast %cst_230 : f32 to vector<2x64xf32>
    %973 = arith.mulf %971, %972 : vector<2x64xf32>
    %cst_231 = arith.constant 5.000000e-01 : f32
    %974 = vector.broadcast %cst_231 : f32 to vector<2x64xf32>
    %975 = arith.addf %973, %974 : vector<2x64xf32>
    %976 = vector.extract_strided_slice %975 {offsets = [0, 0], sizes = [2, 16], strides = [1, 1]} : vector<2x64xf32> to vector<2x16xf32>
    %977 = vector.extract_strided_slice %975 {offsets = [0, 16], sizes = [2, 16], strides = [1, 1]} : vector<2x64xf32> to vector<2x16xf32>
    %978 = vector.extract_strided_slice %975 {offsets = [0, 48], sizes = [2, 16], strides = [1, 1]} : vector<2x64xf32> to vector<2x16xf32>
    %979 = vector.extract_strided_slice %968 {offsets = [0, 32], sizes = [2, 16], strides = [1, 1]} : vector<2x64xf32> to vector<2x16xf32>
    %980 = math.tanh %979 : vector<2x16xf32>
    %981 = arith.mulf %977, %961 : vector<2x16xf32>
    %982 = arith.mulf %976, %980 : vector<2x16xf32>
    %983 = arith.addf %981, %982 : vector<2x16xf32>
    %984 = math.tanh %983 : vector<2x16xf32>
    %985 = arith.mulf %978, %984 : vector<2x16xf32>
    %cst_232 = arith.constant dense<0.000000e+00> : vector<2x66xf32>
    %986 = tpu.matmul %985, %5, %cst_232 {dimension_numbers = #tpu.dot_dimension_numbers<[1], [0], [0], [1], [0, 0, 1, 1], [], []>} : vector<2x16xf32>, vector<16x66xf32>, vector<2x66xf32> -> vector<2x66xf32>
    %987 = arith.addf %986, %11 : vector<2x66xf32>
    %988 = vector.extract_strided_slice %987 {offsets = [0, 64], sizes = [2, 2], strides = [1, 1]} : vector<2x66xf32> to vector<2x2xf32>
    %c72 = arith.constant 72 : index
    %c0_233 = arith.constant 0 : index
    %989 = vector.load %arg2[%c72, %c0_233] : memref<100x2xf32, #tpu.memory_space<vmem>>, vector<2x2xf32>
    tpu.vector_store %arg2[%c72, %c0_233], %988 {strides = array<i32>} : memref<100x2xf32, #tpu.memory_space<vmem>>, vector<2x2xf32>,
    %990 = vector.extract_strided_slice %987 {offsets = [0, 0], sizes = [2, 64], strides = [1, 1]} : vector<2x66xf32> to vector<2x64xf32>
    %cst_234 = arith.constant 5.000000e-01 : f32
    %991 = vector.broadcast %cst_234 : f32 to vector<2x64xf32>
    %992 = arith.mulf %991, %990 : vector<2x64xf32>
    %993 = math.tanh %992 : vector<2x64xf32>
    %cst_235 = arith.constant 5.000000e-01 : f32
    %994 = vector.broadcast %cst_235 : f32 to vector<2x64xf32>
    %995 = arith.mulf %993, %994 : vector<2x64xf32>
    %cst_236 = arith.constant 5.000000e-01 : f32
    %996 = vector.broadcast %cst_236 : f32 to vector<2x64xf32>
    %997 = arith.addf %995, %996 : vector<2x64xf32>
    %998 = vector.extract_strided_slice %997 {offsets = [0, 0], sizes = [2, 16], strides = [1, 1]} : vector<2x64xf32> to vector<2x16xf32>
    %999 = vector.extract_strided_slice %997 {offsets = [0, 16], sizes = [2, 16], strides = [1, 1]} : vector<2x64xf32> to vector<2x16xf32>
    %1000 = vector.extract_strided_slice %997 {offsets = [0, 48], sizes = [2, 16], strides = [1, 1]} : vector<2x64xf32> to vector<2x16xf32>
    %1001 = vector.extract_strided_slice %990 {offsets = [0, 32], sizes = [2, 16], strides = [1, 1]} : vector<2x64xf32> to vector<2x16xf32>
    %1002 = math.tanh %1001 : vector<2x16xf32>
    %1003 = arith.mulf %999, %983 : vector<2x16xf32>
    %1004 = arith.mulf %998, %1002 : vector<2x16xf32>
    %1005 = arith.addf %1003, %1004 : vector<2x16xf32>
    %1006 = math.tanh %1005 : vector<2x16xf32>
    %1007 = arith.mulf %1000, %1006 : vector<2x16xf32>
    %cst_237 = arith.constant dense<0.000000e+00> : vector<2x66xf32>
    %1008 = tpu.matmul %1007, %5, %cst_237 {dimension_numbers = #tpu.dot_dimension_numbers<[1], [0], [0], [1], [0, 0, 1, 1], [], []>} : vector<2x16xf32>, vector<16x66xf32>, vector<2x66xf32> -> vector<2x66xf32>
    %1009 = arith.addf %1008, %11 : vector<2x66xf32>
    %1010 = vector.extract_strided_slice %1009 {offsets = [0, 64], sizes = [2, 2], strides = [1, 1]} : vector<2x66xf32> to vector<2x2xf32>
    %c74 = arith.constant 74 : index
    %c0_238 = arith.constant 0 : index
    %1011 = vector.load %arg2[%c74, %c0_238] : memref<100x2xf32, #tpu.memory_space<vmem>>, vector<2x2xf32>
    tpu.vector_store %arg2[%c74, %c0_238], %1010 {strides = array<i32>} : memref<100x2xf32, #tpu.memory_space<vmem>>, vector<2x2xf32>,
    %1012 = vector.extract_strided_slice %1009 {offsets = [0, 0], sizes = [2, 64], strides = [1, 1]} : vector<2x66xf32> to vector<2x64xf32>
    %cst_239 = arith.constant 5.000000e-01 : f32
    %1013 = vector.broadcast %cst_239 : f32 to vector<2x64xf32>
    %1014 = arith.mulf %1013, %1012 : vector<2x64xf32>
    %1015 = math.tanh %1014 : vector<2x64xf32>
    %cst_240 = arith.constant 5.000000e-01 : f32
    %1016 = vector.broadcast %cst_240 : f32 to vector<2x64xf32>
    %1017 = arith.mulf %1015, %1016 : vector<2x64xf32>
    %cst_241 = arith.constant 5.000000e-01 : f32
    %1018 = vector.broadcast %cst_241 : f32 to vector<2x64xf32>
    %1019 = arith.addf %1017, %1018 : vector<2x64xf32>
    %1020 = vector.extract_strided_slice %1019 {offsets = [0, 0], sizes = [2, 16], strides = [1, 1]} : vector<2x64xf32> to vector<2x16xf32>
    %1021 = vector.extract_strided_slice %1019 {offsets = [0, 16], sizes = [2, 16], strides = [1, 1]} : vector<2x64xf32> to vector<2x16xf32>
    %1022 = vector.extract_strided_slice %1019 {offsets = [0, 48], sizes = [2, 16], strides = [1, 1]} : vector<2x64xf32> to vector<2x16xf32>
    %1023 = vector.extract_strided_slice %1012 {offsets = [0, 32], sizes = [2, 16], strides = [1, 1]} : vector<2x64xf32> to vector<2x16xf32>
    %1024 = math.tanh %1023 : vector<2x16xf32>
    %1025 = arith.mulf %1021, %1005 : vector<2x16xf32>
    %1026 = arith.mulf %1020, %1024 : vector<2x16xf32>
    %1027 = arith.addf %1025, %1026 : vector<2x16xf32>
    %1028 = math.tanh %1027 : vector<2x16xf32>
    %1029 = arith.mulf %1022, %1028 : vector<2x16xf32>
    %cst_242 = arith.constant dense<0.000000e+00> : vector<2x66xf32>
    %1030 = tpu.matmul %1029, %5, %cst_242 {dimension_numbers = #tpu.dot_dimension_numbers<[1], [0], [0], [1], [0, 0, 1, 1], [], []>} : vector<2x16xf32>, vector<16x66xf32>, vector<2x66xf32> -> vector<2x66xf32>
    %1031 = arith.addf %1030, %11 : vector<2x66xf32>
    %1032 = vector.extract_strided_slice %1031 {offsets = [0, 64], sizes = [2, 2], strides = [1, 1]} : vector<2x66xf32> to vector<2x2xf32>
    %c76 = arith.constant 76 : index
    %c0_243 = arith.constant 0 : index
    %1033 = vector.load %arg2[%c76, %c0_243] : memref<100x2xf32, #tpu.memory_space<vmem>>, vector<2x2xf32>
    tpu.vector_store %arg2[%c76, %c0_243], %1032 {strides = array<i32>} : memref<100x2xf32, #tpu.memory_space<vmem>>, vector<2x2xf32>,
    %1034 = vector.extract_strided_slice %1031 {offsets = [0, 0], sizes = [2, 64], strides = [1, 1]} : vector<2x66xf32> to vector<2x64xf32>
    %cst_244 = arith.constant 5.000000e-01 : f32
    %1035 = vector.broadcast %cst_244 : f32 to vector<2x64xf32>
    %1036 = arith.mulf %1035, %1034 : vector<2x64xf32>
    %1037 = math.tanh %1036 : vector<2x64xf32>
    %cst_245 = arith.constant 5.000000e-01 : f32
    %1038 = vector.broadcast %cst_245 : f32 to vector<2x64xf32>
    %1039 = arith.mulf %1037, %1038 : vector<2x64xf32>
    %cst_246 = arith.constant 5.000000e-01 : f32
    %1040 = vector.broadcast %cst_246 : f32 to vector<2x64xf32>
    %1041 = arith.addf %1039, %1040 : vector<2x64xf32>
    %1042 = vector.extract_strided_slice %1041 {offsets = [0, 0], sizes = [2, 16], strides = [1, 1]} : vector<2x64xf32> to vector<2x16xf32>
    %1043 = vector.extract_strided_slice %1041 {offsets = [0, 16], sizes = [2, 16], strides = [1, 1]} : vector<2x64xf32> to vector<2x16xf32>
    %1044 = vector.extract_strided_slice %1041 {offsets = [0, 48], sizes = [2, 16], strides = [1, 1]} : vector<2x64xf32> to vector<2x16xf32>
    %1045 = vector.extract_strided_slice %1034 {offsets = [0, 32], sizes = [2, 16], strides = [1, 1]} : vector<2x64xf32> to vector<2x16xf32>
    %1046 = math.tanh %1045 : vector<2x16xf32>
    %1047 = arith.mulf %1043, %1027 : vector<2x16xf32>
    %1048 = arith.mulf %1042, %1046 : vector<2x16xf32>
    %1049 = arith.addf %1047, %1048 : vector<2x16xf32>
    %1050 = math.tanh %1049 : vector<2x16xf32>
    %1051 = arith.mulf %1044, %1050 : vector<2x16xf32>
    %cst_247 = arith.constant dense<0.000000e+00> : vector<2x66xf32>
    %1052 = tpu.matmul %1051, %5, %cst_247 {dimension_numbers = #tpu.dot_dimension_numbers<[1], [0], [0], [1], [0, 0, 1, 1], [], []>} : vector<2x16xf32>, vector<16x66xf32>, vector<2x66xf32> -> vector<2x66xf32>
    %1053 = arith.addf %1052, %11 : vector<2x66xf32>
    %1054 = vector.extract_strided_slice %1053 {offsets = [0, 64], sizes = [2, 2], strides = [1, 1]} : vector<2x66xf32> to vector<2x2xf32>
    %c78 = arith.constant 78 : index
    %c0_248 = arith.constant 0 : index
    %1055 = vector.load %arg2[%c78, %c0_248] : memref<100x2xf32, #tpu.memory_space<vmem>>, vector<2x2xf32>
    tpu.vector_store %arg2[%c78, %c0_248], %1054 {strides = array<i32>} : memref<100x2xf32, #tpu.memory_space<vmem>>, vector<2x2xf32>,
    %1056 = vector.extract_strided_slice %1053 {offsets = [0, 0], sizes = [2, 64], strides = [1, 1]} : vector<2x66xf32> to vector<2x64xf32>
    %cst_249 = arith.constant 5.000000e-01 : f32
    %1057 = vector.broadcast %cst_249 : f32 to vector<2x64xf32>
    %1058 = arith.mulf %1057, %1056 : vector<2x64xf32>
    %1059 = math.tanh %1058 : vector<2x64xf32>
    %cst_250 = arith.constant 5.000000e-01 : f32
    %1060 = vector.broadcast %cst_250 : f32 to vector<2x64xf32>
    %1061 = arith.mulf %1059, %1060 : vector<2x64xf32>
    %cst_251 = arith.constant 5.000000e-01 : f32
    %1062 = vector.broadcast %cst_251 : f32 to vector<2x64xf32>
    %1063 = arith.addf %1061, %1062 : vector<2x64xf32>
    %1064 = vector.extract_strided_slice %1063 {offsets = [0, 0], sizes = [2, 16], strides = [1, 1]} : vector<2x64xf32> to vector<2x16xf32>
    %1065 = vector.extract_strided_slice %1063 {offsets = [0, 16], sizes = [2, 16], strides = [1, 1]} : vector<2x64xf32> to vector<2x16xf32>
    %1066 = vector.extract_strided_slice %1063 {offsets = [0, 48], sizes = [2, 16], strides = [1, 1]} : vector<2x64xf32> to vector<2x16xf32>
    %1067 = vector.extract_strided_slice %1056 {offsets = [0, 32], sizes = [2, 16], strides = [1, 1]} : vector<2x64xf32> to vector<2x16xf32>
    %1068 = math.tanh %1067 : vector<2x16xf32>
    %1069 = arith.mulf %1065, %1049 : vector<2x16xf32>
    %1070 = arith.mulf %1064, %1068 : vector<2x16xf32>
    %1071 = arith.addf %1069, %1070 : vector<2x16xf32>
    %1072 = math.tanh %1071 : vector<2x16xf32>
    %1073 = arith.mulf %1066, %1072 : vector<2x16xf32>
    %cst_252 = arith.constant dense<0.000000e+00> : vector<2x66xf32>
    %1074 = tpu.matmul %1073, %5, %cst_252 {dimension_numbers = #tpu.dot_dimension_numbers<[1], [0], [0], [1], [0, 0, 1, 1], [], []>} : vector<2x16xf32>, vector<16x66xf32>, vector<2x66xf32> -> vector<2x66xf32>
    %1075 = arith.addf %1074, %11 : vector<2x66xf32>
    %1076 = vector.extract_strided_slice %1075 {offsets = [0, 64], sizes = [2, 2], strides = [1, 1]} : vector<2x66xf32> to vector<2x2xf32>
    %c80 = arith.constant 80 : index
    %c0_253 = arith.constant 0 : index
    %1077 = vector.load %arg2[%c80, %c0_253] : memref<100x2xf32, #tpu.memory_space<vmem>>, vector<2x2xf32>
    tpu.vector_store %arg2[%c80, %c0_253], %1076 {strides = array<i32>} : memref<100x2xf32, #tpu.memory_space<vmem>>, vector<2x2xf32>,
    %1078 = vector.extract_strided_slice %1075 {offsets = [0, 0], sizes = [2, 64], strides = [1, 1]} : vector<2x66xf32> to vector<2x64xf32>
    %cst_254 = arith.constant 5.000000e-01 : f32
    %1079 = vector.broadcast %cst_254 : f32 to vector<2x64xf32>
    %1080 = arith.mulf %1079, %1078 : vector<2x64xf32>
    %1081 = math.tanh %1080 : vector<2x64xf32>
    %cst_255 = arith.constant 5.000000e-01 : f32
    %1082 = vector.broadcast %cst_255 : f32 to vector<2x64xf32>
    %1083 = arith.mulf %1081, %1082 : vector<2x64xf32>
    %cst_256 = arith.constant 5.000000e-01 : f32
    %1084 = vector.broadcast %cst_256 : f32 to vector<2x64xf32>
    %1085 = arith.addf %1083, %1084 : vector<2x64xf32>
    %1086 = vector.extract_strided_slice %1085 {offsets = [0, 0], sizes = [2, 16], strides = [1, 1]} : vector<2x64xf32> to vector<2x16xf32>
    %1087 = vector.extract_strided_slice %1085 {offsets = [0, 16], sizes = [2, 16], strides = [1, 1]} : vector<2x64xf32> to vector<2x16xf32>
    %1088 = vector.extract_strided_slice %1085 {offsets = [0, 48], sizes = [2, 16], strides = [1, 1]} : vector<2x64xf32> to vector<2x16xf32>
    %1089 = vector.extract_strided_slice %1078 {offsets = [0, 32], sizes = [2, 16], strides = [1, 1]} : vector<2x64xf32> to vector<2x16xf32>
    %1090 = math.tanh %1089 : vector<2x16xf32>
    %1091 = arith.mulf %1087, %1071 : vector<2x16xf32>
    %1092 = arith.mulf %1086, %1090 : vector<2x16xf32>
    %1093 = arith.addf %1091, %1092 : vector<2x16xf32>
    %1094 = math.tanh %1093 : vector<2x16xf32>
    %1095 = arith.mulf %1088, %1094 : vector<2x16xf32>
    %cst_257 = arith.constant dense<0.000000e+00> : vector<2x66xf32>
    %1096 = tpu.matmul %1095, %5, %cst_257 {dimension_numbers = #tpu.dot_dimension_numbers<[1], [0], [0], [1], [0, 0, 1, 1], [], []>} : vector<2x16xf32>, vector<16x66xf32>, vector<2x66xf32> -> vector<2x66xf32>
    %1097 = arith.addf %1096, %11 : vector<2x66xf32>
    %1098 = vector.extract_strided_slice %1097 {offsets = [0, 64], sizes = [2, 2], strides = [1, 1]} : vector<2x66xf32> to vector<2x2xf32>
    %c82 = arith.constant 82 : index
    %c0_258 = arith.constant 0 : index
    %1099 = vector.load %arg2[%c82, %c0_258] : memref<100x2xf32, #tpu.memory_space<vmem>>, vector<2x2xf32>
    tpu.vector_store %arg2[%c82, %c0_258], %1098 {strides = array<i32>} : memref<100x2xf32, #tpu.memory_space<vmem>>, vector<2x2xf32>,
    %1100 = vector.extract_strided_slice %1097 {offsets = [0, 0], sizes = [2, 64], strides = [1, 1]} : vector<2x66xf32> to vector<2x64xf32>
    %cst_259 = arith.constant 5.000000e-01 : f32
    %1101 = vector.broadcast %cst_259 : f32 to vector<2x64xf32>
    %1102 = arith.mulf %1101, %1100 : vector<2x64xf32>
    %1103 = math.tanh %1102 : vector<2x64xf32>
    %cst_260 = arith.constant 5.000000e-01 : f32
    %1104 = vector.broadcast %cst_260 : f32 to vector<2x64xf32>
    %1105 = arith.mulf %1103, %1104 : vector<2x64xf32>
    %cst_261 = arith.constant 5.000000e-01 : f32
    %1106 = vector.broadcast %cst_261 : f32 to vector<2x64xf32>
    %1107 = arith.addf %1105, %1106 : vector<2x64xf32>
    %1108 = vector.extract_strided_slice %1107 {offsets = [0, 0], sizes = [2, 16], strides = [1, 1]} : vector<2x64xf32> to vector<2x16xf32>
    %1109 = vector.extract_strided_slice %1107 {offsets = [0, 16], sizes = [2, 16], strides = [1, 1]} : vector<2x64xf32> to vector<2x16xf32>
    %1110 = vector.extract_strided_slice %1107 {offsets = [0, 48], sizes = [2, 16], strides = [1, 1]} : vector<2x64xf32> to vector<2x16xf32>
    %1111 = vector.extract_strided_slice %1100 {offsets = [0, 32], sizes = [2, 16], strides = [1, 1]} : vector<2x64xf32> to vector<2x16xf32>
    %1112 = math.tanh %1111 : vector<2x16xf32>
    %1113 = arith.mulf %1109, %1093 : vector<2x16xf32>
    %1114 = arith.mulf %1108, %1112 : vector<2x16xf32>
    %1115 = arith.addf %1113, %1114 : vector<2x16xf32>
    %1116 = math.tanh %1115 : vector<2x16xf32>
    %1117 = arith.mulf %1110, %1116 : vector<2x16xf32>
    %cst_262 = arith.constant dense<0.000000e+00> : vector<2x66xf32>
    %1118 = tpu.matmul %1117, %5, %cst_262 {dimension_numbers = #tpu.dot_dimension_numbers<[1], [0], [0], [1], [0, 0, 1, 1], [], []>} : vector<2x16xf32>, vector<16x66xf32>, vector<2x66xf32> -> vector<2x66xf32>
    %1119 = arith.addf %1118, %11 : vector<2x66xf32>
    %1120 = vector.extract_strided_slice %1119 {offsets = [0, 64], sizes = [2, 2], strides = [1, 1]} : vector<2x66xf32> to vector<2x2xf32>
    %c84 = arith.constant 84 : index
    %c0_263 = arith.constant 0 : index
    %1121 = vector.load %arg2[%c84, %c0_263] : memref<100x2xf32, #tpu.memory_space<vmem>>, vector<2x2xf32>
    tpu.vector_store %arg2[%c84, %c0_263], %1120 {strides = array<i32>} : memref<100x2xf32, #tpu.memory_space<vmem>>, vector<2x2xf32>,
    %1122 = vector.extract_strided_slice %1119 {offsets = [0, 0], sizes = [2, 64], strides = [1, 1]} : vector<2x66xf32> to vector<2x64xf32>
    %cst_264 = arith.constant 5.000000e-01 : f32
    %1123 = vector.broadcast %cst_264 : f32 to vector<2x64xf32>
    %1124 = arith.mulf %1123, %1122 : vector<2x64xf32>
    %1125 = math.tanh %1124 : vector<2x64xf32>
    %cst_265 = arith.constant 5.000000e-01 : f32
    %1126 = vector.broadcast %cst_265 : f32 to vector<2x64xf32>
    %1127 = arith.mulf %1125, %1126 : vector<2x64xf32>
    %cst_266 = arith.constant 5.000000e-01 : f32
    %1128 = vector.broadcast %cst_266 : f32 to vector<2x64xf32>
    %1129 = arith.addf %1127, %1128 : vector<2x64xf32>
    %1130 = vector.extract_strided_slice %1129 {offsets = [0, 0], sizes = [2, 16], strides = [1, 1]} : vector<2x64xf32> to vector<2x16xf32>
    %1131 = vector.extract_strided_slice %1129 {offsets = [0, 16], sizes = [2, 16], strides = [1, 1]} : vector<2x64xf32> to vector<2x16xf32>
    %1132 = vector.extract_strided_slice %1129 {offsets = [0, 48], sizes = [2, 16], strides = [1, 1]} : vector<2x64xf32> to vector<2x16xf32>
    %1133 = vector.extract_strided_slice %1122 {offsets = [0, 32], sizes = [2, 16], strides = [1, 1]} : vector<2x64xf32> to vector<2x16xf32>
    %1134 = math.tanh %1133 : vector<2x16xf32>
    %1135 = arith.mulf %1131, %1115 : vector<2x16xf32>
    %1136 = arith.mulf %1130, %1134 : vector<2x16xf32>
    %1137 = arith.addf %1135, %1136 : vector<2x16xf32>
    %1138 = math.tanh %1137 : vector<2x16xf32>
    %1139 = arith.mulf %1132, %1138 : vector<2x16xf32>
    %cst_267 = arith.constant dense<0.000000e+00> : vector<2x66xf32>
    %1140 = tpu.matmul %1139, %5, %cst_267 {dimension_numbers = #tpu.dot_dimension_numbers<[1], [0], [0], [1], [0, 0, 1, 1], [], []>} : vector<2x16xf32>, vector<16x66xf32>, vector<2x66xf32> -> vector<2x66xf32>
    %1141 = arith.addf %1140, %11 : vector<2x66xf32>
    %1142 = vector.extract_strided_slice %1141 {offsets = [0, 64], sizes = [2, 2], strides = [1, 1]} : vector<2x66xf32> to vector<2x2xf32>
    %c86 = arith.constant 86 : index
    %c0_268 = arith.constant 0 : index
    %1143 = vector.load %arg2[%c86, %c0_268] : memref<100x2xf32, #tpu.memory_space<vmem>>, vector<2x2xf32>
    tpu.vector_store %arg2[%c86, %c0_268], %1142 {strides = array<i32>} : memref<100x2xf32, #tpu.memory_space<vmem>>, vector<2x2xf32>,
    %1144 = vector.extract_strided_slice %1141 {offsets = [0, 0], sizes = [2, 64], strides = [1, 1]} : vector<2x66xf32> to vector<2x64xf32>
    %cst_269 = arith.constant 5.000000e-01 : f32
    %1145 = vector.broadcast %cst_269 : f32 to vector<2x64xf32>
    %1146 = arith.mulf %1145, %1144 : vector<2x64xf32>
    %1147 = math.tanh %1146 : vector<2x64xf32>
    %cst_270 = arith.constant 5.000000e-01 : f32
    %1148 = vector.broadcast %cst_270 : f32 to vector<2x64xf32>
    %1149 = arith.mulf %1147, %1148 : vector<2x64xf32>
    %cst_271 = arith.constant 5.000000e-01 : f32
    %1150 = vector.broadcast %cst_271 : f32 to vector<2x64xf32>
    %1151 = arith.addf %1149, %1150 : vector<2x64xf32>
    %1152 = vector.extract_strided_slice %1151 {offsets = [0, 0], sizes = [2, 16], strides = [1, 1]} : vector<2x64xf32> to vector<2x16xf32>
    %1153 = vector.extract_strided_slice %1151 {offsets = [0, 16], sizes = [2, 16], strides = [1, 1]} : vector<2x64xf32> to vector<2x16xf32>
    %1154 = vector.extract_strided_slice %1151 {offsets = [0, 48], sizes = [2, 16], strides = [1, 1]} : vector<2x64xf32> to vector<2x16xf32>
    %1155 = vector.extract_strided_slice %1144 {offsets = [0, 32], sizes = [2, 16], strides = [1, 1]} : vector<2x64xf32> to vector<2x16xf32>
    %1156 = math.tanh %1155 : vector<2x16xf32>
    %1157 = arith.mulf %1153, %1137 : vector<2x16xf32>
    %1158 = arith.mulf %1152, %1156 : vector<2x16xf32>
    %1159 = arith.addf %1157, %1158 : vector<2x16xf32>
    %1160 = math.tanh %1159 : vector<2x16xf32>
    %1161 = arith.mulf %1154, %1160 : vector<2x16xf32>
    %cst_272 = arith.constant dense<0.000000e+00> : vector<2x66xf32>
    %1162 = tpu.matmul %1161, %5, %cst_272 {dimension_numbers = #tpu.dot_dimension_numbers<[1], [0], [0], [1], [0, 0, 1, 1], [], []>} : vector<2x16xf32>, vector<16x66xf32>, vector<2x66xf32> -> vector<2x66xf32>
    %1163 = arith.addf %1162, %11 : vector<2x66xf32>
    %1164 = vector.extract_strided_slice %1163 {offsets = [0, 64], sizes = [2, 2], strides = [1, 1]} : vector<2x66xf32> to vector<2x2xf32>
    %c88 = arith.constant 88 : index
    %c0_273 = arith.constant 0 : index
    %1165 = vector.load %arg2[%c88, %c0_273] : memref<100x2xf32, #tpu.memory_space<vmem>>, vector<2x2xf32>
    tpu.vector_store %arg2[%c88, %c0_273], %1164 {strides = array<i32>} : memref<100x2xf32, #tpu.memory_space<vmem>>, vector<2x2xf32>,
    %1166 = vector.extract_strided_slice %1163 {offsets = [0, 0], sizes = [2, 64], strides = [1, 1]} : vector<2x66xf32> to vector<2x64xf32>
    %cst_274 = arith.constant 5.000000e-01 : f32
    %1167 = vector.broadcast %cst_274 : f32 to vector<2x64xf32>
    %1168 = arith.mulf %1167, %1166 : vector<2x64xf32>
    %1169 = math.tanh %1168 : vector<2x64xf32>
    %cst_275 = arith.constant 5.000000e-01 : f32
    %1170 = vector.broadcast %cst_275 : f32 to vector<2x64xf32>
    %1171 = arith.mulf %1169, %1170 : vector<2x64xf32>
    %cst_276 = arith.constant 5.000000e-01 : f32
    %1172 = vector.broadcast %cst_276 : f32 to vector<2x64xf32>
    %1173 = arith.addf %1171, %1172 : vector<2x64xf32>
    %1174 = vector.extract_strided_slice %1173 {offsets = [0, 0], sizes = [2, 16], strides = [1, 1]} : vector<2x64xf32> to vector<2x16xf32>
    %1175 = vector.extract_strided_slice %1173 {offsets = [0, 16], sizes = [2, 16], strides = [1, 1]} : vector<2x64xf32> to vector<2x16xf32>
    %1176 = vector.extract_strided_slice %1173 {offsets = [0, 48], sizes = [2, 16], strides = [1, 1]} : vector<2x64xf32> to vector<2x16xf32>
    %1177 = vector.extract_strided_slice %1166 {offsets = [0, 32], sizes = [2, 16], strides = [1, 1]} : vector<2x64xf32> to vector<2x16xf32>
    %1178 = math.tanh %1177 : vector<2x16xf32>
    %1179 = arith.mulf %1175, %1159 : vector<2x16xf32>
    %1180 = arith.mulf %1174, %1178 : vector<2x16xf32>
    %1181 = arith.addf %1179, %1180 : vector<2x16xf32>
    %1182 = math.tanh %1181 : vector<2x16xf32>
    %1183 = arith.mulf %1176, %1182 : vector<2x16xf32>
    %cst_277 = arith.constant dense<0.000000e+00> : vector<2x66xf32>
    %1184 = tpu.matmul %1183, %5, %cst_277 {dimension_numbers = #tpu.dot_dimension_numbers<[1], [0], [0], [1], [0, 0, 1, 1], [], []>} : vector<2x16xf32>, vector<16x66xf32>, vector<2x66xf32> -> vector<2x66xf32>
    %1185 = arith.addf %1184, %11 : vector<2x66xf32>
    %1186 = vector.extract_strided_slice %1185 {offsets = [0, 64], sizes = [2, 2], strides = [1, 1]} : vector<2x66xf32> to vector<2x2xf32>
    %c90 = arith.constant 90 : index
    %c0_278 = arith.constant 0 : index
    %1187 = vector.load %arg2[%c90, %c0_278] : memref<100x2xf32, #tpu.memory_space<vmem>>, vector<2x2xf32>
    tpu.vector_store %arg2[%c90, %c0_278], %1186 {strides = array<i32>} : memref<100x2xf32, #tpu.memory_space<vmem>>, vector<2x2xf32>,
    %1188 = vector.extract_strided_slice %1185 {offsets = [0, 0], sizes = [2, 64], strides = [1, 1]} : vector<2x66xf32> to vector<2x64xf32>
    %cst_279 = arith.constant 5.000000e-01 : f32
    %1189 = vector.broadcast %cst_279 : f32 to vector<2x64xf32>
    %1190 = arith.mulf %1189, %1188 : vector<2x64xf32>
    %1191 = math.tanh %1190 : vector<2x64xf32>
    %cst_280 = arith.constant 5.000000e-01 : f32
    %1192 = vector.broadcast %cst_280 : f32 to vector<2x64xf32>
    %1193 = arith.mulf %1191, %1192 : vector<2x64xf32>
    %cst_281 = arith.constant 5.000000e-01 : f32
    %1194 = vector.broadcast %cst_281 : f32 to vector<2x64xf32>
    %1195 = arith.addf %1193, %1194 : vector<2x64xf32>
    %1196 = vector.extract_strided_slice %1195 {offsets = [0, 0], sizes = [2, 16], strides = [1, 1]} : vector<2x64xf32> to vector<2x16xf32>
    %1197 = vector.extract_strided_slice %1195 {offsets = [0, 16], sizes = [2, 16], strides = [1, 1]} : vector<2x64xf32> to vector<2x16xf32>
    %1198 = vector.extract_strided_slice %1195 {offsets = [0, 48], sizes = [2, 16], strides = [1, 1]} : vector<2x64xf32> to vector<2x16xf32>
    %1199 = vector.extract_strided_slice %1188 {offsets = [0, 32], sizes = [2, 16], strides = [1, 1]} : vector<2x64xf32> to vector<2x16xf32>
    %1200 = math.tanh %1199 : vector<2x16xf32>
    %1201 = arith.mulf %1197, %1181 : vector<2x16xf32>
    %1202 = arith.mulf %1196, %1200 : vector<2x16xf32>
    %1203 = arith.addf %1201, %1202 : vector<2x16xf32>
    %1204 = math.tanh %1203 : vector<2x16xf32>
    %1205 = arith.mulf %1198, %1204 : vector<2x16xf32>
    %cst_282 = arith.constant dense<0.000000e+00> : vector<2x66xf32>
    %1206 = tpu.matmul %1205, %5, %cst_282 {dimension_numbers = #tpu.dot_dimension_numbers<[1], [0], [0], [1], [0, 0, 1, 1], [], []>} : vector<2x16xf32>, vector<16x66xf32>, vector<2x66xf32> -> vector<2x66xf32>
    %1207 = arith.addf %1206, %11 : vector<2x66xf32>
    %1208 = vector.extract_strided_slice %1207 {offsets = [0, 64], sizes = [2, 2], strides = [1, 1]} : vector<2x66xf32> to vector<2x2xf32>
    %c92 = arith.constant 92 : index
    %c0_283 = arith.constant 0 : index
    %1209 = vector.load %arg2[%c92, %c0_283] : memref<100x2xf32, #tpu.memory_space<vmem>>, vector<2x2xf32>
    tpu.vector_store %arg2[%c92, %c0_283], %1208 {strides = array<i32>} : memref<100x2xf32, #tpu.memory_space<vmem>>, vector<2x2xf32>,
    %1210 = vector.extract_strided_slice %1207 {offsets = [0, 0], sizes = [2, 64], strides = [1, 1]} : vector<2x66xf32> to vector<2x64xf32>
    %cst_284 = arith.constant 5.000000e-01 : f32
    %1211 = vector.broadcast %cst_284 : f32 to vector<2x64xf32>
    %1212 = arith.mulf %1211, %1210 : vector<2x64xf32>
    %1213 = math.tanh %1212 : vector<2x64xf32>
    %cst_285 = arith.constant 5.000000e-01 : f32
    %1214 = vector.broadcast %cst_285 : f32 to vector<2x64xf32>
    %1215 = arith.mulf %1213, %1214 : vector<2x64xf32>
    %cst_286 = arith.constant 5.000000e-01 : f32
    %1216 = vector.broadcast %cst_286 : f32 to vector<2x64xf32>
    %1217 = arith.addf %1215, %1216 : vector<2x64xf32>
    %1218 = vector.extract_strided_slice %1217 {offsets = [0, 0], sizes = [2, 16], strides = [1, 1]} : vector<2x64xf32> to vector<2x16xf32>
    %1219 = vector.extract_strided_slice %1217 {offsets = [0, 16], sizes = [2, 16], strides = [1, 1]} : vector<2x64xf32> to vector<2x16xf32>
    %1220 = vector.extract_strided_slice %1217 {offsets = [0, 48], sizes = [2, 16], strides = [1, 1]} : vector<2x64xf32> to vector<2x16xf32>
    %1221 = vector.extract_strided_slice %1210 {offsets = [0, 32], sizes = [2, 16], strides = [1, 1]} : vector<2x64xf32> to vector<2x16xf32>
    %1222 = math.tanh %1221 : vector<2x16xf32>
    %1223 = arith.mulf %1219, %1203 : vector<2x16xf32>
    %1224 = arith.mulf %1218, %1222 : vector<2x16xf32>
    %1225 = arith.addf %1223, %1224 : vector<2x16xf32>
    %1226 = math.tanh %1225 : vector<2x16xf32>
    %1227 = arith.mulf %1220, %1226 : vector<2x16xf32>
    %cst_287 = arith.constant dense<0.000000e+00> : vector<2x66xf32>
    %1228 = tpu.matmul %1227, %5, %cst_287 {dimension_numbers = #tpu.dot_dimension_numbers<[1], [0], [0], [1], [0, 0, 1, 1], [], []>} : vector<2x16xf32>, vector<16x66xf32>, vector<2x66xf32> -> vector<2x66xf32>
    %1229 = arith.addf %1228, %11 : vector<2x66xf32>
    %1230 = vector.extract_strided_slice %1229 {offsets = [0, 64], sizes = [2, 2], strides = [1, 1]} : vector<2x66xf32> to vector<2x2xf32>
    %c94 = arith.constant 94 : index
    %c0_288 = arith.constant 0 : index
    %1231 = vector.load %arg2[%c94, %c0_288] : memref<100x2xf32, #tpu.memory_space<vmem>>, vector<2x2xf32>
    tpu.vector_store %arg2[%c94, %c0_288], %1230 {strides = array<i32>} : memref<100x2xf32, #tpu.memory_space<vmem>>, vector<2x2xf32>,
    %1232 = vector.extract_strided_slice %1229 {offsets = [0, 0], sizes = [2, 64], strides = [1, 1]} : vector<2x66xf32> to vector<2x64xf32>
    %cst_289 = arith.constant 5.000000e-01 : f32
    %1233 = vector.broadcast %cst_289 : f32 to vector<2x64xf32>
    %1234 = arith.mulf %1233, %1232 : vector<2x64xf32>
    %1235 = math.tanh %1234 : vector<2x64xf32>
    %cst_290 = arith.constant 5.000000e-01 : f32
    %1236 = vector.broadcast %cst_290 : f32 to vector<2x64xf32>
    %1237 = arith.mulf %1235, %1236 : vector<2x64xf32>
    %cst_291 = arith.constant 5.000000e-01 : f32
    %1238 = vector.broadcast %cst_291 : f32 to vector<2x64xf32>
    %1239 = arith.addf %1237, %1238 : vector<2x64xf32>
    %1240 = vector.extract_strided_slice %1239 {offsets = [0, 0], sizes = [2, 16], strides = [1, 1]} : vector<2x64xf32> to vector<2x16xf32>
    %1241 = vector.extract_strided_slice %1239 {offsets = [0, 16], sizes = [2, 16], strides = [1, 1]} : vector<2x64xf32> to vector<2x16xf32>
    %1242 = vector.extract_strided_slice %1239 {offsets = [0, 48], sizes = [2, 16], strides = [1, 1]} : vector<2x64xf32> to vector<2x16xf32>
    %1243 = vector.extract_strided_slice %1232 {offsets = [0, 32], sizes = [2, 16], strides = [1, 1]} : vector<2x64xf32> to vector<2x16xf32>
    %1244 = math.tanh %1243 : vector<2x16xf32>
    %1245 = arith.mulf %1241, %1225 : vector<2x16xf32>
    %1246 = arith.mulf %1240, %1244 : vector<2x16xf32>
    %1247 = arith.addf %1245, %1246 : vector<2x16xf32>
    %1248 = math.tanh %1247 : vector<2x16xf32>
    %1249 = arith.mulf %1242, %1248 : vector<2x16xf32>
    %cst_292 = arith.constant dense<0.000000e+00> : vector<2x66xf32>
    %1250 = tpu.matmul %1249, %5, %cst_292 {dimension_numbers = #tpu.dot_dimension_numbers<[1], [0], [0], [1], [0, 0, 1, 1], [], []>} : vector<2x16xf32>, vector<16x66xf32>, vector<2x66xf32> -> vector<2x66xf32>
    %1251 = arith.addf %1250, %11 : vector<2x66xf32>
    %1252 = vector.extract_strided_slice %1251 {offsets = [0, 64], sizes = [2, 2], strides = [1, 1]} : vector<2x66xf32> to vector<2x2xf32>
    %c96 = arith.constant 96 : index
    %c0_293 = arith.constant 0 : index
    %1253 = vector.load %arg2[%c96, %c0_293] : memref<100x2xf32, #tpu.memory_space<vmem>>, vector<2x2xf32>
    tpu.vector_store %arg2[%c96, %c0_293], %1252 {strides = array<i32>} : memref<100x2xf32, #tpu.memory_space<vmem>>, vector<2x2xf32>,
    %1254 = vector.extract_strided_slice %1251 {offsets = [0, 0], sizes = [2, 64], strides = [1, 1]} : vector<2x66xf32> to vector<2x64xf32>
    %cst_294 = arith.constant 5.000000e-01 : f32
    %1255 = vector.broadcast %cst_294 : f32 to vector<2x64xf32>
    %1256 = arith.mulf %1255, %1254 : vector<2x64xf32>
    %1257 = math.tanh %1256 : vector<2x64xf32>
    %cst_295 = arith.constant 5.000000e-01 : f32
    %1258 = vector.broadcast %cst_295 : f32 to vector<2x64xf32>
    %1259 = arith.mulf %1257, %1258 : vector<2x64xf32>
    %cst_296 = arith.constant 5.000000e-01 : f32
    %1260 = vector.broadcast %cst_296 : f32 to vector<2x64xf32>
    %1261 = arith.addf %1259, %1260 : vector<2x64xf32>
    %1262 = vector.extract_strided_slice %1261 {offsets = [0, 0], sizes = [2, 16], strides = [1, 1]} : vector<2x64xf32> to vector<2x16xf32>
    %1263 = vector.extract_strided_slice %1261 {offsets = [0, 16], sizes = [2, 16], strides = [1, 1]} : vector<2x64xf32> to vector<2x16xf32>
    %1264 = vector.extract_strided_slice %1261 {offsets = [0, 48], sizes = [2, 16], strides = [1, 1]} : vector<2x64xf32> to vector<2x16xf32>
    %1265 = vector.extract_strided_slice %1254 {offsets = [0, 32], sizes = [2, 16], strides = [1, 1]} : vector<2x64xf32> to vector<2x16xf32>
    %1266 = math.tanh %1265 : vector<2x16xf32>
    %1267 = arith.mulf %1263, %1247 : vector<2x16xf32>
    %1268 = arith.mulf %1262, %1266 : vector<2x16xf32>
    %1269 = arith.addf %1267, %1268 : vector<2x16xf32>
    %1270 = math.tanh %1269 : vector<2x16xf32>
    %1271 = arith.mulf %1264, %1270 : vector<2x16xf32>
    %cst_297 = arith.constant dense<0.000000e+00> : vector<2x66xf32>
    %1272 = tpu.matmul %1271, %5, %cst_297 {dimension_numbers = #tpu.dot_dimension_numbers<[1], [0], [0], [1], [0, 0, 1, 1], [], []>} : vector<2x16xf32>, vector<16x66xf32>, vector<2x66xf32> -> vector<2x66xf32>
    %1273 = arith.addf %1272, %11 : vector<2x66xf32>
    %1274 = vector.extract_strided_slice %1273 {offsets = [0, 64], sizes = [2, 2], strides = [1, 1]} : vector<2x66xf32> to vector<2x2xf32>
    %c98 = arith.constant 98 : index
    %c0_298 = arith.constant 0 : index
    %1275 = vector.load %arg2[%c98, %c0_298] : memref<100x2xf32, #tpu.memory_space<vmem>>, vector<2x2xf32>
    tpu.vector_store %arg2[%c98, %c0_298], %1274 {strides = array<i32>} : memref<100x2xf32, #tpu.memory_space<vmem>>, vector<2x2xf32>,
    return
  }
}

</mosaic_0001>

<llo_original>
// kernel: lstm_seq2seq_forward.1
$region0: #{lstm_seq2seq_forward.1}
  #allocation0 [shape = 'u32[]', space=smem, size = 0x4, offset = 0x4, fixed_abs, tag = 'smem constant byte address 0x4 - core index']
  #allocation1 [shape = 'u32[144,128]{1,0:T(1,128)}', space=vmem, size = 0x12000, scoped, tag = 'internal scratch']
  %s0 = inlined_call_operand.vmem [shape: f32[16,2], index: 0, kind: input, shape index: {}]
  %s1 = inlined_call_operand.vmem [shape: f32[72,128], index: 1, kind: input, shape index: {}]
  %s2 = inlined_call_operand.vmem [shape: f32[100,2], index: 2, kind: output, shape index: {}]
  %s3 = sld [smem:[#allocation0]]
  $region18: #{lstm_seq2seq_forward.1} parent=0
    _
  %s5 = ssub.s32 1, %s3
  %s6 = scalar_select 0, %s5, %s3
  // Predicated region
  $region2: #{lstm_seq2seq_forward.1} parent=0 // pred_check
    _
  $region3: #{lstm_seq2seq_forward.1} parent=0 // pred_check_branch
    %8 = sbr.rel (0) target = $region5
  $region4: #{lstm_seq2seq_forward.1} parent=0 // pred_region
    _
  $region5: #{lstm_seq2seq_forward.1} parent=0 // pred_fallthru
    _
  // Predicated region
  $region6: #{lstm_seq2seq_forward.1} parent=0 // pred_check
    _
  $region7: #{lstm_seq2seq_forward.1} parent=0 // pred_check_branch
    %10 = sbr.rel (0) target = $region9
  $region8: #{lstm_seq2seq_forward.1} parent=0 // pred_region
    _
  $region9: #{lstm_seq2seq_forward.1} parent=0 // pred_fallthru
    _
  %v11 = vld [vmem:[%s1] sm:$0x3]
  %v12 = vld [vmem:[%s1 + $0x8] sm:$0x1]
  %v13 = vld [vmem:[%s1 + $0x10] sm:$0x1]
  %v14 = vld [vmem:[%s1 + $0x18] sm:$0xff]
  %v15 = vld [vmem:[%s1 + $0x20] sm:$0xff]
  %v16 = vld [vmem:[%s1 + $0x28] sm:$0xff]
  %v17 = vld [vmem:[%s1 + $0x30] sm:$0xff]
  %v18 = vld [vmem:[%s1 + $0x38] sm:$0xff]
  %v19 = vld [vmem:[%s1 + $0x40] sm:$0xff]
  %v20 = vld [vmem:[%s0] sm:$0xff]
  %v21 = vld [vmem:[%s0 + $0x8] sm:$0xff]
  %v22 = vlaneseq
  %v23 = vshrl.u32 %v22, 7
  %v24 = vsub.s32 0, %v23
  %v25 = vrot.slane %v12, %v24
  %vm26 = vcmask 15360
  %v28 = vsel %vm26, %v20, 0
  %v31 = vsel %vm26, %v21, 0
  %vm33 = vcmask 1041408
  %v35 = vsel %vm33, %v11, 0
  %37 = vmatprep.subr.mxu0 0.0
  %38 = vmatpush1.msra.mxu0 %v35
  %39 = vmatprep.subr.mxu0 0.0
  %40 = vmatpush1.msra.mxu0 0.0
  %41 = vmatprep.subr.mxu0 0.0
  %42 = vmatpush1.msra.mxu0 0.0
  %43 = vmatprep.subr.mxu0 0.0
  %44 = vmatpush1.msra.mxu0 0.0
  %45 = vmatprep.subr.mxu0 0.0
  %46 = vmatpush1.msra.mxu0 0.0
  %47 = vmatprep.subr.mxu0 0.0
  %48 = vmatpush1.msra.mxu0 0.0
  %49 = vmatprep.subr.mxu0 0.0
  %50 = vmatpush1.msra.mxu0 0.0
  %51 = vmatprep.subr.mxu0 0.0
  %52 = vmatpush1.msra.mxu0 0.0
  %53 = vmatprep.subr.mxu0 0.0
  %54 = vmatpush1.msra.mxu0 0.0
  %55 = vmatprep.subr.mxu0 0.0
  %56 = vmatpush1.msra.mxu0 0.0
  %57 = vmatprep.subr.mxu0 0.0
  %58 = vmatpush1.msra.mxu0 0.0
  %59 = vmatprep.subr.mxu0 0.0
  %60 = vmatpush1.msra.mxu0 0.0
  %61 = vmatprep.subr.mxu0 0.0
  %62 = vmatpush1.msra.mxu0 0.0
  %63 = vmatprep.subr.mxu0 0.0
  %64 = vmatpush1.msra.mxu0 0.0
  %65 = vmatprep.subr.mxu0 0.0
  %66 = vmatpush1.msra.mxu0 0.0
  %67 = vmatprep.subr.mxu0 0.0
  %68 = vmatpush1.msra.mxu0 0.0
  %69 = vmatprep.subr.mxu0 0.0
  %70 = vmatpush1.msra.mxu0 0.0
  %71 = vmatprep.subr.mxu0 0.0
  %72 = vmatpush1.msra.mxu0 0.0
  %73 = vmatprep.subr.mxu0 0.0
  %74 = vmatpush1.msra.mxu0 0.0
  %75 = vmatprep.subr.mxu0 0.0
  %76 = vmatpush1.msra.mxu0 0.0
  %77 = vmatprep.subr.mxu0 0.0
  %78 = vmatpush1.msra.mxu0 0.0
  %79 = vmatprep.subr.mxu0 0.0
  %80 = vmatpush1.msra.mxu0 0.0
  %81 = vmatprep.subr.mxu0 0.0
  %82 = vmatpush1.msra.mxu0 0.0
  %83 = vmatprep.subr.mxu0 0.0
  %84 = vmatpush1.msra.mxu0 0.0
  %85 = vmatprep.subr.mxu0 0.0
  %86 = vmatpush1.msra.mxu0 0.0
  %87 = vmatprep.subr.mxu0 0.0
  %88 = vmatpush1.msra.mxu0 0.0
  %89 = vmatprep.subr.mxu0 0.0
  %90 = vmatpush1.msra.mxu0 0.0
  %91 = vmatprep.subr.mxu0 0.0
  %92 = vmatpush1.msra.mxu0 0.0
  %93 = vmatprep.subr.mxu0 0.0
  %94 = vmatpush1.msra.mxu0 0.0
  %95 = vmatprep.subr.mxu0 0.0
  %96 = vmatpush1.msra.mxu0 0.0
  %97 = vmatprep.subr.mxu0 0.0
  %98 = vmatpush1.msra.mxu0 0.0
  %99 = vmatprep.subr.mxu0 0.0
  %100 = vmatpush1.msra.mxu0 0.0
  %101 = vmatprep.mubr.f32.mxu0 0.0
  %102 = vmatmul.mubr.f32.gmra.mrb[0].mxu0 %v28
  %v103 = vpop.f32.mrb[0].mxu0
  %v104 = vadd.f32 %v25, %v103
  %v105 = vpop.f32.mrb[0].mxu0
  %106 = vmatprep.mubr.f32.mxu0 0.0
  %107 = vmatmul.mubr.f32.gmra.mrb[0].mxu0 %v31
  %v108 = vpop.f32.mrb[0].mxu0
  %v109 = vadd.f32 %v25, %v108
  %v110 = vpop.f32.mrb[0].mxu0
  %111 = vdwg.mxu0
  %v112 = vlaneseq
  %v113 = vshrl.u32 %v112, 7
  %v114 = vsub.s32 0, %v113
  %v115 = vrot.slane %v13, %v114
  %vm116 = vcmask 130048
  %v118 = vsel %vm116, 0.0, 0
  %120 = vmatprep.subr.mxu0 0.0
  %121 = vmatpush1.msra.mxu0 %v14
  %122 = vmatprep.subr.mxu0 0.0
  %123 = vmatpush1.msra.mxu0 %v15
  %124 = vmatprep.subr.mxu0 0.0
  %125 = vmatpush1.msra.mxu0 0.0
  %126 = vmatprep.subr.mxu0 0.0
  %127 = vmatpush1.msra.mxu0 0.0
  %128 = vmatprep.subr.mxu0 0.0
  %129 = vmatpush1.msra.mxu0 0.0
  %130 = vmatprep.subr.mxu0 0.0
  %131 = vmatpush1.msra.mxu0 0.0
  %132 = vmatprep.subr.mxu0 0.0
  %133 = vmatpush1.msra.mxu0 0.0
  %134 = vmatprep.subr.mxu0 0.0
  %135 = vmatpush1.msra.mxu0 0.0
  %136 = vmatprep.subr.mxu0 0.0
  %137 = vmatpush1.msra.mxu0 0.0
  %138 = vmatprep.subr.mxu0 0.0
  %139 = vmatpush1.msra.mxu0 0.0
  %140 = vmatprep.subr.mxu0 0.0
  %141 = vmatpush1.msra.mxu0 0.0
  %142 = vmatprep.subr.mxu0 0.0
  %143 = vmatpush1.msra.mxu0 0.0
  %144 = vmatprep.subr.mxu0 0.0
  %145 = vmatpush1.msra.mxu0 0.0
  %146 = vmatprep.subr.mxu0 0.0
  %147 = vmatpush1.msra.mxu0 0.0
  %148 = vmatprep.subr.mxu0 0.0
  %149 = vmatpush1.msra.mxu0 0.0
  %150 = vmatprep.subr.mxu0 0.0
  %151 = vmatpush1.msra.mxu0 0.0
  %152 = vmatprep.subr.mxu0 0.0
  %153 = vmatpush1.msra.mxu0 0.0
  %154 = vmatprep.subr.mxu0 0.0
  %155 = vmatpush1.msra.mxu0 0.0
  %156 = vmatprep.subr.mxu0 0.0
  %157 = vmatpush1.msra.mxu0 0.0
  %158 = vmatprep.subr.mxu0 0.0
  %159 = vmatpush1.msra.mxu0 0.0
  %160 = vmatprep.subr.mxu0 0.0
  %161 = vmatpush1.msra.mxu0 0.0
  %162 = vmatprep.subr.mxu0 0.0
  %163 = vmatpush1.msra.mxu0 0.0
  %164 = vmatprep.subr.mxu0 0.0
  %165 = vmatpush1.msra.mxu0 0.0
  %166 = vmatprep.subr.mxu0 0.0
  %167 = vmatpush1.msra.mxu0 0.0
  %168 = vmatprep.subr.mxu0 0.0
  %169 = vmatpush1.msra.mxu0 0.0
  %170 = vmatprep.subr.mxu0 0.0
  %171 = vmatpush1.msra.mxu0 0.0
  %172 = vmatprep.subr.mxu0 0.0
  %173 = vmatpush1.msra.mxu0 0.0
  %174 = vmatprep.subr.mxu0 0.0
  %175 = vmatpush1.msra.mxu0 0.0
  %176 = vmatprep.subr.mxu0 0.0
  %177 = vmatpush1.msra.mxu0 0.0
  %178 = vmatprep.subr.mxu0 0.0
  %179 = vmatpush1.msra.mxu0 0.0
  %180 = vmatprep.subr.mxu0 0.0
  %181 = vmatpush1.msra.mxu0 0.0
  %182 = vmatprep.subr.mxu0 0.0
  %183 = vmatpush1.msra.mxu0 0.0
  %184 = vmatprep.mubr.f32.mxu0 0.0
  %185 = vmatmul.mubr.f32.gmra.mrb[0].mxu0 %v118
  %v186 = vpop.f32.mrb[0].mxu0
  %v187 = vadd.f32 0.0, %v186
  %v188 = vpop.f32.mrb[0].mxu0
  %189 = vdwg.mxu0
  %v190 = vadd.f32 %v104, %v187
  %v191 = vmul.f32 %v190, 0.5
  %v192 = vtanh.pop %v191
  %v193 = vmul.f32 %v192, 0.5
  %v194 = vadd.f32 %v193, 0.5
  %v195 = vtanh.pop %v190
  %v196 = vmul.f32 %v194, 0.0
  %198 = vrot.lane.b32.xlu0 %v195, 96
  %v199 = vpop.permute.xlu0 %198
  %v201 = vmul.f32 %v194, %v199
  %203 = vrot.lane.b32.xlu0 %v201, 16
  %v204 = vpop.permute.xlu0 %203
  %v206 = vadd.f32 %v196, %v204
  %v207 = vtanh.pop %v206
  %209 = vrot.lane.b32.xlu0 %v207, 32
  %v210 = vpop.permute.xlu0 %209
  %v212 = vmul.f32 %v194, %v210
  %214 = vrot.lane.b32.xlu0 %v212, 80
  %v215 = vpop.permute.xlu0 %214
  %v216 = vsel %vm116, %v215, 0
  %218 = vmatprep.subr.mxu0 0.0
  %219 = vmatpush1.msra.mxu0 %v14
  %220 = vmatprep.subr.mxu0 0.0
  %221 = vmatpush1.msra.mxu0 %v15
  %222 = vmatprep.subr.mxu0 0.0
  %223 = vmatpush1.msra.mxu0 0.0
  %224 = vmatprep.subr.mxu0 0.0
  %225 = vmatpush1.msra.mxu0 0.0
  %226 = vmatprep.subr.mxu0 0.0
  %227 = vmatpush1.msra.mxu0 0.0
  %228 = vmatprep.subr.mxu0 0.0
  %229 = vmatpush1.msra.mxu0 0.0
  %230 = vmatprep.subr.mxu0 0.0
  %231 = vmatpush1.msra.mxu0 0.0
  %232 = vmatprep.subr.mxu0 0.0
  %233 = vmatpush1.msra.mxu0 0.0
  %234 = vmatprep.subr.mxu0 0.0
  %235 = vmatpush1.msra.mxu0 0.0
  %236 = vmatprep.subr.mxu0 0.0
  %237 = vmatpush1.msra.mxu0 0.0
  %238 = vmatprep.subr.mxu0 0.0
  %239 = vmatpush1.msra.mxu0 0.0
  %240 = vmatprep.subr.mxu0 0.0
  %241 = vmatpush1.msra.mxu0 0.0
  %242 = vmatprep.subr.mxu0 0.0
  %243 = vmatpush1.msra.mxu0 0.0
  %244 = vmatprep.subr.mxu0 0.0
  %245 = vmatpush1.msra.mxu0 0.0
  %246 = vmatprep.subr.mxu0 0.0
  %247 = vmatpush1.msra.mxu0 0.0
  %248 = vmatprep.subr.mxu0 0.0
  %249 = vmatpush1.msra.mxu0 0.0
  %250 = vmatprep.subr.mxu0 0.0
  %251 = vmatpush1.msra.mxu0 0.0
  %252 = vmatprep.subr.mxu0 0.0
  %253 = vmatpush1.msra.mxu0 0.0
  %254 = vmatprep.subr.mxu0 0.0
  %255 = vmatpush1.msra.mxu0 0.0
  %256 = vmatprep.subr.mxu0 0.0
  %257 = vmatpush1.msra.mxu0 0.0
  %258 = vmatprep.subr.mxu0 0.0
  %259 = vmatpush1.msra.mxu0 0.0
  %260 = vmatprep.subr.mxu0 0.0
  %261 = vmatpush1.msra.mxu0 0.0
  %262 = vmatprep.subr.mxu0 0.0
  %263 = vmatpush1.msra.mxu0 0.0
  %264 = vmatprep.subr.mxu0 0.0
  %265 = vmatpush1.msra.mxu0 0.0
  %266 = vmatprep.subr.mxu0 0.0
  %267 = vmatpush1.msra.mxu0 0.0
  %268 = vmatprep.subr.mxu0 0.0
  %269 = vmatpush1.msra.mxu0 0.0
  %270 = vmatprep.subr.mxu0 0.0
  %271 = vmatpush1.msra.mxu0 0.0
  %272 = vmatprep.subr.mxu0 0.0
  %273 = vmatpush1.msra.mxu0 0.0
  %274 = vmatprep.subr.mxu0 0.0
  %275 = vmatpush1.msra.mxu0 0.0
  %276 = vmatprep.subr.mxu0 0.0
  %277 = vmatpush1.msra.mxu0 0.0
  %278 = vmatprep.subr.mxu0 0.0
  %279 = vmatpush1.msra.mxu0 0.0
  %280 = vmatprep.subr.mxu0 0.0
  %281 = vmatpush1.msra.mxu0 0.0
  %282 = vmatprep.mubr.f32.mxu0 0.0
  %283 = vmatmul.mubr.f32.gmra.mrb[0].mxu0 %v216
  %v284 = vpop.f32.mrb[0].mxu0
  %v285 = vadd.f32 0.0, %v284
  %v286 = vpop.f32.mrb[0].mxu0
  %287 = vdwg.mxu0
  %v289 = vrot.slane %v285, 6
  %v291 = vadd.f32 %v104, %v289
  %v292 = vmul.f32 %v291, 0.5
  %v293 = vtanh.pop %v292
  %v294 = vmul.f32 %v293, 0.5
  %v295 = vadd.f32 %v294, 0.5
  %v296 = vtanh.pop %v291
  %v298 = vrot.slane %v206, 6
  %v300 = vmul.f32 %v295, %v298
  %302 = vrot.lane.b32.xlu0 %v296, 96
  %v303 = vpop.permute.xlu0 %302
  %v305 = vmul.f32 %v295, %v303
  %307 = vrot.lane.b32.xlu0 %v305, 16
  %v308 = vpop.permute.xlu0 %307
  %v310 = vadd.f32 %v300, %v308
  %v311 = vtanh.pop %v310
  %313 = vrot.lane.b32.xlu0 %v311, 32
  %v314 = vpop.permute.xlu0 %313
  %v316 = vmul.f32 %v295, %v314
  %v318 = vrot.slane %v316, 2
  %319 = vrot.lane.b32.xlu0 %v318, 80
  %v320 = vpop.permute.xlu0 %319
  %v321 = vsel %vm116, %v320, 0
  %323 = vmatprep.subr.mxu0 0.0
  %324 = vmatpush1.msra.mxu0 %v14
  %325 = vmatprep.subr.mxu0 0.0
  %326 = vmatpush1.msra.mxu0 %v15
  %327 = vmatprep.subr.mxu0 0.0
  %328 = vmatpush1.msra.mxu0 0.0
  %329 = vmatprep.subr.mxu0 0.0
  %330 = vmatpush1.msra.mxu0 0.0
  %331 = vmatprep.subr.mxu0 0.0
  %332 = vmatpush1.msra.mxu0 0.0
  %333 = vmatprep.subr.mxu0 0.0
  %334 = vmatpush1.msra.mxu0 0.0
  %335 = vmatprep.subr.mxu0 0.0
  %336 = vmatpush1.msra.mxu0 0.0
  %337 = vmatprep.subr.mxu0 0.0
  %338 = vmatpush1.msra.mxu0 0.0
  %339 = vmatprep.subr.mxu0 0.0
  %340 = vmatpush1.msra.mxu0 0.0
  %341 = vmatprep.subr.mxu0 0.0
  %342 = vmatpush1.msra.mxu0 0.0
  %343 = vmatprep.subr.mxu0 0.0
  %344 = vmatpush1.msra.mxu0 0.0
  %345 = vmatprep.subr.mxu0 0.0
  %346 = vmatpush1.msra.mxu0 0.0
  %347 = vmatprep.subr.mxu0 0.0
  %348 = vmatpush1.msra.mxu0 0.0
  %349 = vmatprep.subr.mxu0 0.0
  %350 = vmatpush1.msra.mxu0 0.0
  %351 = vmatprep.subr.mxu0 0.0
  %352 = vmatpush1.msra.mxu0 0.0
  %353 = vmatprep.subr.mxu0 0.0
  %354 = vmatpush1.msra.mxu0 0.0
  %355 = vmatprep.subr.mxu0 0.0
  %356 = vmatpush1.msra.mxu0 0.0
  %357 = vmatprep.subr.mxu0 0.0
  %358 = vmatpush1.msra.mxu0 0.0
  %359 = vmatprep.subr.mxu0 0.0
  %360 = vmatpush1.msra.mxu0 0.0
  %361 = vmatprep.subr.mxu0 0.0
  %362 = vmatpush1.msra.mxu0 0.0
  %363 = vmatprep.subr.mxu0 0.0
  %364 = vmatpush1.msra.mxu0 0.0
  %365 = vmatprep.subr.mxu0 0.0
  %366 = vmatpush1.msra.mxu0 0.0
  %367 = vmatprep.subr.mxu0 0.0
  %368 = vmatpush1.msra.mxu0 0.0
  %369 = vmatprep.subr.mxu0 0.0
  %370 = vmatpush1.msra.mxu0 0.0
  %371 = vmatprep.subr.mxu0 0.0
  %372 = vmatpush1.msra.mxu0 0.0
  %373 = vmatprep.subr.mxu0 0.0
  %374 = vmatpush1.msra.mxu0 0.0
  %375 = vmatprep.subr.mxu0 0.0
  %376 = vmatpush1.msra.mxu0 0.0
  %377 = vmatprep.subr.mxu0 0.0
  %378 = vmatpush1.msra.mxu0 0.0
  %379 = vmatprep.subr.mxu0 0.0
  %380 = vmatpush1.msra.mxu0 0.0
  %381 = vmatprep.subr.mxu0 0.0
  %382 = vmatpush1.msra.mxu0 0.0
  %383 = vmatprep.subr.mxu0 0.0
  %384 = vmatpush1.msra.mxu0 0.0
  %385 = vmatprep.subr.mxu0 0.0
  %386 = vmatpush1.msra.mxu0 0.0
  %387 = vmatprep.mubr.f32.mxu0 0.0
  %388 = vmatmul.mubr.f32.gmra.mrb[0].mxu0 %v321
  %v389 = vpop.f32.mrb[0].mxu0
  %v390 = vadd.f32 0.0, %v389
  %v391 = vpop.f32.mrb[0].mxu0
  %392 = vdwg.mxu0
  %v394 = vrot.slane %v390, 4
  %v396 = vadd.f32 %v104, %v394
  %v397 = vmul.f32 %v396, 0.5
  %v398 = vtanh.pop %v397
  %v399 = vmul.f32 %v398, 0.5
  %v400 = vadd.f32 %v399, 0.5
  %v401 = vtanh.pop %v396
  %v403 = vrot.slane %v310, 6
  %v405 = vmul.f32 %v400, %v403
  %407 = vrot.lane.b32.xlu0 %v401, 96
  %v408 = vpop.permute.xlu0 %407
  %v410 = vmul.f32 %v400, %v408
  %412 = vrot.lane.b32.xlu0 %v410, 16
  %v413 = vpop.permute.xlu0 %412
  %v415 = vadd.f32 %v405, %v413
  %v416 = vtanh.pop %v415
  %418 = vrot.lane.b32.xlu0 %v416, 32
  %v419 = vpop.permute.xlu0 %418
  %v421 = vmul.f32 %v400, %v419
  %v423 = vrot.slane %v421, 4
  %424 = vrot.lane.b32.xlu0 %v423, 80
  %v425 = vpop.permute.xlu0 %424
  %v426 = vsel %vm116, %v425, 0
  %428 = vmatprep.subr.mxu0 0.0
  %429 = vmatpush1.msra.mxu0 %v14
  %430 = vmatprep.subr.mxu0 0.0
  %431 = vmatpush1.msra.mxu0 %v15
  %432 = vmatprep.subr.mxu0 0.0
  %433 = vmatpush1.msra.mxu0 0.0
  %434 = vmatprep.subr.mxu0 0.0
  %435 = vmatpush1.msra.mxu0 0.0
  %436 = vmatprep.subr.mxu0 0.0
  %437 = vmatpush1.msra.mxu0 0.0
  %438 = vmatprep.subr.mxu0 0.0
  %439 = vmatpush1.msra.mxu0 0.0
  %440 = vmatprep.subr.mxu0 0.0
  %441 = vmatpush1.msra.mxu0 0.0
  %442 = vmatprep.subr.mxu0 0.0
  %443 = vmatpush1.msra.mxu0 0.0
  %444 = vmatprep.subr.mxu0 0.0
  %445 = vmatpush1.msra.mxu0 0.0
  %446 = vmatprep.subr.mxu0 0.0
  %447 = vmatpush1.msra.mxu0 0.0
  %448 = vmatprep.subr.mxu0 0.0
  %449 = vmatpush1.msra.mxu0 0.0
  %450 = vmatprep.subr.mxu0 0.0
  %451 = vmatpush1.msra.mxu0 0.0
  %452 = vmatprep.subr.mxu0 0.0
  %453 = vmatpush1.msra.mxu0 0.0
  %454 = vmatprep.subr.mxu0 0.0
  %455 = vmatpush1.msra.mxu0 0.0
  %456 = vmatprep.subr.mxu0 0.0
  %457 = vmatpush1.msra.mxu0 0.0
  %458 = vmatprep.subr.mxu0 0.0
  %459 = vmatpush1.msra.mxu0 0.0
  %460 = vmatprep.subr.mxu0 0.0
  %461 = vmatpush1.msra.mxu0 0.0
  %462 = vmatprep.subr.mxu0 0.0
  %463 = vmatpush1.msra.mxu0 0.0
  %464 = vmatprep.subr.mxu0 0.0
  %465 = vmatpush1.msra.mxu0 0.0
  %466 = vmatprep.subr.mxu0 0.0
  %467 = vmatpush1.msra.mxu0 0.0
  %468 = vmatprep.subr.mxu0 0.0
  %469 = vmatpush1.msra.mxu0 0.0
  %470 = vmatprep.subr.mxu0 0.0
  %471 = vmatpush1.msra.mxu0 0.0
  %472 = vmatprep.subr.mxu0 0.0
  %473 = vmatpush1.msra.mxu0 0.0
  %474 = vmatprep.subr.mxu0 0.0
  %475 = vmatpush1.msra.mxu0 0.0
  %476 = vmatprep.subr.mxu0 0.0
  %477 = vmatpush1.msra.mxu0 0.0
  %478 = vmatprep.subr.mxu0 0.0
  %479 = vmatpush1.msra.mxu0 0.0
  %480 = vmatprep.subr.mxu0 0.0
  %481 = vmatpush1.msra.mxu0 0.0
  %482 = vmatprep.subr.mxu0 0.0
  %483 = vmatpush1.msra.mxu0 0.0
  %484 = vmatprep.subr.mxu0 0.0
  %485 = vmatpush1.msra.mxu0 0.0
  %486 = vmatprep.subr.mxu0 0.0
  %487 = vmatpush1.msra.mxu0 0.0
  %488 = vmatprep.subr.mxu0 0.0
  %489 = vmatpush1.msra.mxu0 0.0
  %490 = vmatprep.subr.mxu0 0.0
  %491 = vmatpush1.msra.mxu0 0.0
  %492 = vmatprep.mubr.f32.mxu0 0.0
  %493 = vmatmul.mubr.f32.gmra.mrb[0].mxu0 %v426
  %v494 = vpop.f32.mrb[0].mxu0
  %v495 = vadd.f32 0.0, %v494
  %v496 = vpop.f32.mrb[0].mxu0
  %497 = vdwg.mxu0
  %v499 = vrot.slane %v495, 2
  %v501 = vadd.f32 %v104, %v499
  %v502 = vmul.f32 %v501, 0.5
  %v503 = vtanh.pop %v502
  %v504 = vmul.f32 %v503, 0.5
  %v505 = vadd.f32 %v504, 0.5
  %v506 = vtanh.pop %v501
  %v508 = vrot.slane %v415, 6
  %v510 = vmul.f32 %v505, %v508
  %512 = vrot.lane.b32.xlu0 %v506, 96
  %v513 = vpop.permute.xlu0 %512
  %v515 = vmul.f32 %v505, %v513
  %517 = vrot.lane.b32.xlu0 %v515, 16
  %v518 = vpop.permute.xlu0 %517
  %v520 = vadd.f32 %v510, %v518
  %v521 = vtanh.pop %v520
  %523 = vrot.lane.b32.xlu0 %v521, 32
  %v524 = vpop.permute.xlu0 %523
  %v526 = vmul.f32 %v505, %v524
  %v528 = vrot.slane %v526, 6
  %529 = vrot.lane.b32.xlu0 %v528, 80
  %v530 = vpop.permute.xlu0 %529
  %v531 = vsel %vm116, %v530, 0
  %533 = vmatprep.subr.mxu0 0.0
  %534 = vmatpush1.msra.mxu0 %v14
  %535 = vmatprep.subr.mxu0 0.0
  %536 = vmatpush1.msra.mxu0 %v15
  %537 = vmatprep.subr.mxu0 0.0
  %538 = vmatpush1.msra.mxu0 0.0
  %539 = vmatprep.subr.mxu0 0.0
  %540 = vmatpush1.msra.mxu0 0.0
  %541 = vmatprep.subr.mxu0 0.0
  %542 = vmatpush1.msra.mxu0 0.0
  %543 = vmatprep.subr.mxu0 0.0
  %544 = vmatpush1.msra.mxu0 0.0
  %545 = vmatprep.subr.mxu0 0.0
  %546 = vmatpush1.msra.mxu0 0.0
  %547 = vmatprep.subr.mxu0 0.0
  %548 = vmatpush1.msra.mxu0 0.0
  %549 = vmatprep.subr.mxu0 0.0
  %550 = vmatpush1.msra.mxu0 0.0
  %551 = vmatprep.subr.mxu0 0.0
  %552 = vmatpush1.msra.mxu0 0.0
  %553 = vmatprep.subr.mxu0 0.0
  %554 = vmatpush1.msra.mxu0 0.0
  %555 = vmatprep.subr.mxu0 0.0
  %556 = vmatpush1.msra.mxu0 0.0
  %557 = vmatprep.subr.mxu0 0.0
  %558 = vmatpush1.msra.mxu0 0.0
  %559 = vmatprep.subr.mxu0 0.0
  %560 = vmatpush1.msra.mxu0 0.0
  %561 = vmatprep.subr.mxu0 0.0
  %562 = vmatpush1.msra.mxu0 0.0
  %563 = vmatprep.subr.mxu0 0.0
  %564 = vmatpush1.msra.mxu0 0.0
  %565 = vmatprep.subr.mxu0 0.0
  %566 = vmatpush1.msra.mxu0 0.0
  %567 = vmatprep.subr.mxu0 0.0
  %568 = vmatpush1.msra.mxu0 0.0
  %569 = vmatprep.subr.mxu0 0.0
  %570 = vmatpush1.msra.mxu0 0.0
  %571 = vmatprep.subr.mxu0 0.0
  %572 = vmatpush1.msra.mxu0 0.0
  %573 = vmatprep.subr.mxu0 0.0
  %574 = vmatpush1.msra.mxu0 0.0
  %575 = vmatprep.subr.mxu0 0.0
  %576 = vmatpush1.msra.mxu0 0.0
  %577 = vmatprep.subr.mxu0 0.0
  %578 = vmatpush1.msra.mxu0 0.0
  %579 = vmatprep.subr.mxu0 0.0
  %580 = vmatpush1.msra.mxu0 0.0
  %581 = vmatprep.subr.mxu0 0.0
  %582 = vmatpush1.msra.mxu0 0.0
  %583 = vmatprep.subr.mxu0 0.0
  %584 = vmatpush1.msra.mxu0 0.0
  %585 = vmatprep.subr.mxu0 0.0
  %586 = vmatpush1.msra.mxu0 0.0
  %587 = vmatprep.subr.mxu0 0.0
  %588 = vmatpush1.msra.mxu0 0.0
  %589 = vmatprep.subr.mxu0 0.0
  %590 = vmatpush1.msra.mxu0 0.0
  %591 = vmatprep.subr.mxu0 0.0
  %592 = vmatpush1.msra.mxu0 0.0
  %593 = vmatprep.subr.mxu0 0.0
  %594 = vmatpush1.msra.mxu0 0.0
  %595 = vmatprep.subr.mxu0 0.0
  %596 = vmatpush1.msra.mxu0 0.0
  %597 = vmatprep.mubr.f32.mxu0 0.0
  %598 = vmatmul.mubr.f32.gmra.mrb[0].mxu0 %v531
  %v599 = vpop.f32.mrb[0].mxu0
  %v600 = vadd.f32 0.0, %v599
  %v601 = vpop.f32.mrb[0].mxu0
  %602 = vdwg.mxu0
  %v603 = vadd.f32 %v109, %v600
  %v604 = vmul.f32 %v603, 0.5
  %v605 = vtanh.pop %v604
  %v606 = vmul.f32 %v605, 0.5
  %v607 = vadd.f32 %v606, 0.5
  %v608 = vtanh.pop %v603
  %v610 = vrot.slane %v520, 6
  %v612 = vmul.f32 %v607, %v610
  %614 = vrot.lane.b32.xlu0 %v608, 96
  %v615 = vpop.permute.xlu0 %614
  %v617 = vmul.f32 %v607, %v615
  %619 = vrot.lane.b32.xlu0 %v617, 16
  %v620 = vpop.permute.xlu0 %619
  %v622 = vadd.f32 %v612, %v620
  %v623 = vtanh.pop %v622
  %625 = vrot.lane.b32.xlu0 %v623, 32
  %v626 = vpop.permute.xlu0 %625
  %v628 = vmul.f32 %v607, %v626
  %630 = vrot.lane.b32.xlu0 %v628, 80
  %v631 = vpop.permute.xlu0 %630
  %v632 = vsel %vm116, %v631, 0
  %634 = vmatprep.subr.mxu0 0.0
  %635 = vmatpush1.msra.mxu0 %v14
  %636 = vmatprep.subr.mxu0 0.0
  %637 = vmatpush1.msra.mxu0 %v15
  %638 = vmatprep.subr.mxu0 0.0
  %639 = vmatpush1.msra.mxu0 0.0
  %640 = vmatprep.subr.mxu0 0.0
  %641 = vmatpush1.msra.mxu0 0.0
  %642 = vmatprep.subr.mxu0 0.0
  %643 = vmatpush1.msra.mxu0 0.0
  %644 = vmatprep.subr.mxu0 0.0
  %645 = vmatpush1.msra.mxu0 0.0
  %646 = vmatprep.subr.mxu0 0.0
  %647 = vmatpush1.msra.mxu0 0.0
  %648 = vmatprep.subr.mxu0 0.0
  %649 = vmatpush1.msra.mxu0 0.0
  %650 = vmatprep.subr.mxu0 0.0
  %651 = vmatpush1.msra.mxu0 0.0
  %652 = vmatprep.subr.mxu0 0.0
  %653 = vmatpush1.msra.mxu0 0.0
  %654 = vmatprep.subr.mxu0 0.0
  %655 = vmatpush1.msra.mxu0 0.0
  %656 = vmatprep.subr.mxu0 0.0
  %657 = vmatpush1.msra.mxu0 0.0
  %658 = vmatprep.subr.mxu0 0.0
  %659 = vmatpush1.msra.mxu0 0.0
  %660 = vmatprep.subr.mxu0 0.0
  %661 = vmatpush1.msra.mxu0 0.0
  %662 = vmatprep.subr.mxu0 0.0
  %663 = vmatpush1.msra.mxu0 0.0
  %664 = vmatprep.subr.mxu0 0.0
  %665 = vmatpush1.msra.mxu0 0.0
  %666 = vmatprep.subr.mxu0 0.0
  %667 = vmatpush1.msra.mxu0 0.0
  %668 = vmatprep.subr.mxu0 0.0
  %669 = vmatpush1.msra.mxu0 0.0
  %670 = vmatprep.subr.mxu0 0.0
  %671 = vmatpush1.msra.mxu0 0.0
  %672 = vmatprep.subr.mxu0 0.0
  %673 = vmatpush1.msra.mxu0 0.0
  %674 = vmatprep.subr.mxu0 0.0
  %675 = vmatpush1.msra.mxu0 0.0
  %676 = vmatprep.subr.mxu0 0.0
  %677 = vmatpush1.msra.mxu0 0.0
  %678 = vmatprep.subr.mxu0 0.0
  %679 = vmatpush1.msra.mxu0 0.0
  %680 = vmatprep.subr.mxu0 0.0
  %681 = vmatpush1.msra.mxu0 0.0
  %682 = vmatprep.subr.mxu0 0.0
  %683 = vmatpush1.msra.mxu0 0.0
  %684 = vmatprep.subr.mxu0 0.0
  %685 = vmatpush1.msra.mxu0 0.0
  %686 = vmatprep.subr.mxu0 0.0
  %687 = vmatpush1.msra.mxu0 0.0
  %688 = vmatprep.subr.mxu0 0.0
  %689 = vmatpush1.msra.mxu0 0.0
  %690 = vmatprep.subr.mxu0 0.0
  %691 = vmatpush1.msra.mxu0 0.0
  %692 = vmatprep.subr.mxu0 0.0
  %693 = vmatpush1.msra.mxu0 0.0
  %694 = vmatprep.subr.mxu0 0.0
  %695 = vmatpush1.msra.mxu0 0.0
  %696 = vmatprep.subr.mxu0 0.0
  %697 = vmatpush1.msra.mxu0 0.0
  %698 = vmatprep.mubr.f32.mxu0 0.0
  %699 = vmatmul.mubr.f32.gmra.mrb[0].mxu0 %v632
  %v700 = vpop.f32.mrb[0].mxu0
  %v701 = vadd.f32 0.0, %v700
  %v702 = vpop.f32.mrb[0].mxu0
  %703 = vdwg.mxu0
  %v705 = vrot.slane %v701, 6
  %v707 = vadd.f32 %v109, %v705
  %v708 = vmul.f32 %v707, 0.5
  %v709 = vtanh.pop %v708
  %v710 = vmul.f32 %v709, 0.5
  %v711 = vadd.f32 %v710, 0.5
  %v712 = vtanh.pop %v707
  %v714 = vrot.slane %v622, 6
  %v716 = vmul.f32 %v711, %v714
  %718 = vrot.lane.b32.xlu0 %v712, 96
  %v719 = vpop.permute.xlu0 %718
  %v721 = vmul.f32 %v711, %v719
  %723 = vrot.lane.b32.xlu0 %v721, 16
  %v724 = vpop.permute.xlu0 %723
  %v726 = vadd.f32 %v716, %v724
  %v727 = vtanh.pop %v726
  %729 = vrot.lane.b32.xlu0 %v727, 32
  %v730 = vpop.permute.xlu0 %729
  %v732 = vmul.f32 %v711, %v730
  %v734 = vrot.slane %v732, 2
  %735 = vrot.lane.b32.xlu0 %v734, 80
  %v736 = vpop.permute.xlu0 %735
  %v737 = vsel %vm116, %v736, 0
  %739 = vmatprep.subr.mxu0 0.0
  %740 = vmatpush1.msra.mxu0 %v14
  %741 = vmatprep.subr.mxu0 0.0
  %742 = vmatpush1.msra.mxu0 %v15
  %743 = vmatprep.subr.mxu0 0.0
  %744 = vmatpush1.msra.mxu0 0.0
  %745 = vmatprep.subr.mxu0 0.0
  %746 = vmatpush1.msra.mxu0 0.0
  %747 = vmatprep.subr.mxu0 0.0
  %748 = vmatpush1.msra.mxu0 0.0
  %749 = vmatprep.subr.mxu0 0.0
  %750 = vmatpush1.msra.mxu0 0.0
  %751 = vmatprep.subr.mxu0 0.0
  %752 = vmatpush1.msra.mxu0 0.0
  %753 = vmatprep.subr.mxu0 0.0
  %754 = vmatpush1.msra.mxu0 0.0
  %755 = vmatprep.subr.mxu0 0.0
  %756 = vmatpush1.msra.mxu0 0.0
  %757 = vmatprep.subr.mxu0 0.0
  %758 = vmatpush1.msra.mxu0 0.0
  %759 = vmatprep.subr.mxu0 0.0
  %760 = vmatpush1.msra.mxu0 0.0
  %761 = vmatprep.subr.mxu0 0.0
  %762 = vmatpush1.msra.mxu0 0.0
  %763 = vmatprep.subr.mxu0 0.0
  %764 = vmatpush1.msra.mxu0 0.0
  %765 = vmatprep.subr.mxu0 0.0
  %766 = vmatpush1.msra.mxu0 0.0
  %767 = vmatprep.subr.mxu0 0.0
  %768 = vmatpush1.msra.mxu0 0.0
  %769 = vmatprep.subr.mxu0 0.0
  %770 = vmatpush1.msra.mxu0 0.0
  %771 = vmatprep.subr.mxu0 0.0
  %772 = vmatpush1.msra.mxu0 0.0
  %773 = vmatprep.subr.mxu0 0.0
  %774 = vmatpush1.msra.mxu0 0.0
  %775 = vmatprep.subr.mxu0 0.0
  %776 = vmatpush1.msra.mxu0 0.0
  %777 = vmatprep.subr.mxu0 0.0
  %778 = vmatpush1.msra.mxu0 0.0
  %779 = vmatprep.subr.mxu0 0.0
  %780 = vmatpush1.msra.mxu0 0.0
  %781 = vmatprep.subr.mxu0 0.0
  %782 = vmatpush1.msra.mxu0 0.0
  %783 = vmatprep.subr.mxu0 0.0
  %784 = vmatpush1.msra.mxu0 0.0
  %785 = vmatprep.subr.mxu0 0.0
  %786 = vmatpush1.msra.mxu0 0.0
  %787 = vmatprep.subr.mxu0 0.0
  %788 = vmatpush1.msra.mxu0 0.0
  %789 = vmatprep.subr.mxu0 0.0
  %790 = vmatpush1.msra.mxu0 0.0
  %791 = vmatprep.subr.mxu0 0.0
  %792 = vmatpush1.msra.mxu0 0.0
  %793 = vmatprep.subr.mxu0 0.0
  %794 = vmatpush1.msra.mxu0 0.0
  %795 = vmatprep.subr.mxu0 0.0
  %796 = vmatpush1.msra.mxu0 0.0
  %797 = vmatprep.subr.mxu0 0.0
  %798 = vmatpush1.msra.mxu0 0.0
  %799 = vmatprep.subr.mxu0 0.0
  %800 = vmatpush1.msra.mxu0 0.0
  %801 = vmatprep.subr.mxu0 0.0
  %802 = vmatpush1.msra.mxu0 0.0
  %803 = vmatprep.mubr.f32.mxu0 0.0
  %804 = vmatmul.mubr.f32.gmra.mrb[0].mxu0 %v737
  %v805 = vpop.f32.mrb[0].mxu0
  %v806 = vadd.f32 0.0, %v805
  %v807 = vpop.f32.mrb[0].mxu0
  %808 = vdwg.mxu0
  %v810 = vrot.slane %v806, 4
  %v812 = vadd.f32 %v109, %v810
  %v813 = vmul.f32 %v812, 0.5
  %v814 = vtanh.pop %v813
  %v815 = vmul.f32 %v814, 0.5
  %v816 = vadd.f32 %v815, 0.5
  %v817 = vtanh.pop %v812
  %v819 = vrot.slane %v726, 6
  %v821 = vmul.f32 %v816, %v819
  %823 = vrot.lane.b32.xlu0 %v817, 96
  %v824 = vpop.permute.xlu0 %823
  %v826 = vmul.f32 %v816, %v824
  %828 = vrot.lane.b32.xlu0 %v826, 16
  %v829 = vpop.permute.xlu0 %828
  %v831 = vadd.f32 %v821, %v829
  %v832 = vtanh.pop %v831
  %834 = vrot.lane.b32.xlu0 %v832, 32
  %v835 = vpop.permute.xlu0 %834
  %v837 = vmul.f32 %v816, %v835
  %v839 = vrot.slane %v837, 4
  %840 = vrot.lane.b32.xlu0 %v839, 80
  %v841 = vpop.permute.xlu0 %840
  %v842 = vsel %vm116, %v841, 0
  %844 = vmatprep.subr.mxu0 0.0
  %845 = vmatpush1.msra.mxu0 %v14
  %846 = vmatprep.subr.mxu0 0.0
  %847 = vmatpush1.msra.mxu0 %v15
  %848 = vmatprep.subr.mxu0 0.0
  %849 = vmatpush1.msra.mxu0 0.0
  %850 = vmatprep.subr.mxu0 0.0
  %851 = vmatpush1.msra.mxu0 0.0
  %852 = vmatprep.subr.mxu0 0.0
  %853 = vmatpush1.msra.mxu0 0.0
  %854 = vmatprep.subr.mxu0 0.0
  %855 = vmatpush1.msra.mxu0 0.0
  %856 = vmatprep.subr.mxu0 0.0
  %857 = vmatpush1.msra.mxu0 0.0
  %858 = vmatprep.subr.mxu0 0.0
  %859 = vmatpush1.msra.mxu0 0.0
  %860 = vmatprep.subr.mxu0 0.0
  %861 = vmatpush1.msra.mxu0 0.0
  %862 = vmatprep.subr.mxu0 0.0
  %863 = vmatpush1.msra.mxu0 0.0
  %864 = vmatprep.subr.mxu0 0.0
  %865 = vmatpush1.msra.mxu0 0.0
  %866 = vmatprep.subr.mxu0 0.0
  %867 = vmatpush1.msra.mxu0 0.0
  %868 = vmatprep.subr.mxu0 0.0
  %869 = vmatpush1.msra.mxu0 0.0
  %870 = vmatprep.subr.mxu0 0.0
  %871 = vmatpush1.msra.mxu0 0.0
  %872 = vmatprep.subr.mxu0 0.0
  %873 = vmatpush1.msra.mxu0 0.0
  %874 = vmatprep.subr.mxu0 0.0
  %875 = vmatpush1.msra.mxu0 0.0
  %876 = vmatprep.subr.mxu0 0.0
  %877 = vmatpush1.msra.mxu0 0.0
  %878 = vmatprep.subr.mxu0 0.0
  %879 = vmatpush1.msra.mxu0 0.0
  %880 = vmatprep.subr.mxu0 0.0
  %881 = vmatpush1.msra.mxu0 0.0
  %882 = vmatprep.subr.mxu0 0.0
  %883 = vmatpush1.msra.mxu0 0.0
  %884 = vmatprep.subr.mxu0 0.0
  %885 = vmatpush1.msra.mxu0 0.0
  %886 = vmatprep.subr.mxu0 0.0
  %887 = vmatpush1.msra.mxu0 0.0
  %888 = vmatprep.subr.mxu0 0.0
  %889 = vmatpush1.msra.mxu0 0.0
  %890 = vmatprep.subr.mxu0 0.0
  %891 = vmatpush1.msra.mxu0 0.0
  %892 = vmatprep.subr.mxu0 0.0
  %893 = vmatpush1.msra.mxu0 0.0
  %894 = vmatprep.subr.mxu0 0.0
  %895 = vmatpush1.msra.mxu0 0.0
  %896 = vmatprep.subr.mxu0 0.0
  %897 = vmatpush1.msra.mxu0 0.0
  %898 = vmatprep.subr.mxu0 0.0
  %899 = vmatpush1.msra.mxu0 0.0
  %900 = vmatprep.subr.mxu0 0.0
  %901 = vmatpush1.msra.mxu0 0.0
  %902 = vmatprep.subr.mxu0 0.0
  %903 = vmatpush1.msra.mxu0 0.0
  %904 = vmatprep.subr.mxu0 0.0
  %905 = vmatpush1.msra.mxu0 0.0
  %906 = vmatprep.subr.mxu0 0.0
  %907 = vmatpush1.msra.mxu0 0.0
  %908 = vmatprep.mubr.f32.mxu0 0.0
  %909 = vmatmul.mubr.f32.gmra.mrb[0].mxu0 %v842
  %v910 = vpop.f32.mrb[0].mxu0
  %v911 = vadd.f32 0.0, %v910
  %v912 = vpop.f32.mrb[0].mxu0
  %913 = vdwg.mxu0
  %v915 = vrot.slane %v911, 2
  %v917 = vadd.f32 %v109, %v915
  %v918 = vmul.f32 %v917, 0.5
  %v919 = vtanh.pop %v918
  %v920 = vmul.f32 %v919, 0.5
  %v921 = vadd.f32 %v920, 0.5
  %v922 = vtanh.pop %v917
  %v924 = vrot.slane %v831, 6
  %v926 = vmul.f32 %v921, %v924
  %928 = vrot.lane.b32.xlu0 %v922, 96
  %v929 = vpop.permute.xlu0 %928
  %v931 = vmul.f32 %v921, %v929
  %933 = vrot.lane.b32.xlu0 %v931, 16
  %v934 = vpop.permute.xlu0 %933
  %v936 = vadd.f32 %v926, %v934
  %v937 = vtanh.pop %v936
  %939 = vrot.lane.b32.xlu0 %v937, 32
  %v940 = vpop.permute.xlu0 %939
  %v942 = vmul.f32 %v921, %v940
  %v944 = vrot.slane %v942, 6
  %945 = vrot.lane.b32.xlu0 %v944, 80
  %v946 = vpop.permute.xlu0 %945
  %v947 = vsel %vm116, %v946, 0
  %949 = vmatprep.subr.mxu0 0.0
  %950 = vmatpush1.msra.mxu0 %v16
  %951 = vmatprep.subr.mxu0 0.0
  %952 = vmatpush1.msra.mxu0 %v17
  %953 = vmatprep.subr.mxu0 0.0
  %954 = vmatpush1.msra.mxu0 0.0
  %955 = vmatprep.subr.mxu0 0.0
  %956 = vmatpush1.msra.mxu0 0.0
  %957 = vmatprep.subr.mxu0 0.0
  %958 = vmatpush1.msra.mxu0 0.0
  %959 = vmatprep.subr.mxu0 0.0
  %960 = vmatpush1.msra.mxu0 0.0
  %961 = vmatprep.subr.mxu0 0.0
  %962 = vmatpush1.msra.mxu0 0.0
  %963 = vmatprep.subr.mxu0 0.0
  %964 = vmatpush1.msra.mxu0 0.0
  %965 = vmatprep.subr.mxu0 0.0
  %966 = vmatpush1.msra.mxu0 0.0
  %967 = vmatprep.subr.mxu0 0.0
  %968 = vmatpush1.msra.mxu0 0.0
  %969 = vmatprep.subr.mxu0 0.0
  %970 = vmatpush1.msra.mxu0 0.0
  %971 = vmatprep.subr.mxu0 0.0
  %972 = vmatpush1.msra.mxu0 0.0
  %973 = vmatprep.subr.mxu0 0.0
  %974 = vmatpush1.msra.mxu0 0.0
  %975 = vmatprep.subr.mxu0 0.0
  %976 = vmatpush1.msra.mxu0 0.0
  %977 = vmatprep.subr.mxu0 0.0
  %978 = vmatpush1.msra.mxu0 0.0
  %979 = vmatprep.subr.mxu0 0.0
  %980 = vmatpush1.msra.mxu0 0.0
  %981 = vmatprep.subr.mxu0 0.0
  %982 = vmatpush1.msra.mxu0 0.0
  %983 = vmatprep.subr.mxu0 0.0
  %984 = vmatpush1.msra.mxu0 0.0
  %985 = vmatprep.subr.mxu0 0.0
  %986 = vmatpush1.msra.mxu0 0.0
  %987 = vmatprep.subr.mxu0 0.0
  %988 = vmatpush1.msra.mxu0 0.0
  %989 = vmatprep.subr.mxu0 0.0
  %990 = vmatpush1.msra.mxu0 0.0
  %991 = vmatprep.subr.mxu0 0.0
  %992 = vmatpush1.msra.mxu0 0.0
  %993 = vmatprep.subr.mxu0 0.0
  %994 = vmatpush1.msra.mxu0 0.0
  %995 = vmatprep.subr.mxu0 0.0
  %996 = vmatpush1.msra.mxu0 0.0
  %997 = vmatprep.subr.mxu0 0.0
  %998 = vmatpush1.msra.mxu0 0.0
  %999 = vmatprep.subr.mxu0 0.0
  %1000 = vmatpush1.msra.mxu0 0.0
  %1001 = vmatprep.subr.mxu0 0.0
  %1002 = vmatpush1.msra.mxu0 0.0
  %1003 = vmatprep.subr.mxu0 0.0
  %1004 = vmatpush1.msra.mxu0 0.0
  %1005 = vmatprep.subr.mxu0 0.0
  %1006 = vmatpush1.msra.mxu0 0.0
  %1007 = vmatprep.subr.mxu0 0.0
  %1008 = vmatpush1.msra.mxu0 0.0
  %1009 = vmatprep.subr.mxu0 0.0
  %1010 = vmatpush1.msra.mxu0 0.0
  %1011 = vmatprep.subr.mxu0 0.0
  %1012 = vmatpush1.msra.mxu0 0.0
  %1013 = vmatprep.mubr.f32.mxu0 0.0
  %1014 = vmatmul.mubr.f32.gmra.mrb[0].mxu0 %v947
  %v1015 = vpop.f32.mrb[0].mxu0
  %v1016 = vadd.f32 0.0, %v1015
  %v1017 = vpop.f32.mrb[0].mxu0
  %1018 = vdwg.mxu0
  %v1020 = vrot.slane %v1016, 2
  %1021 = vrot.lane.b32.xlu0 %v1020, 64
  %v1022 = vpop.permute.xlu0 %1021
  %v1024 = vadd.f32 %v109, %v1022
  %v1025 = vmul.f32 %v1024, 0.5
  %v1026 = vtanh.pop %v1025
  %v1027 = vmul.f32 %v1026, 0.5
  %v1028 = vadd.f32 %v1027, 0.5
  %v1029 = vtanh.pop %v1024
  %1031 = vrot.lane.b32.xlu0 %v936, 64
  %v1032 = vpop.permute.xlu0 %1031
  %v1034 = vmul.f32 %v1028, %v1032
  %1036 = vrot.lane.b32.xlu0 %v1029, 96
  %v1037 = vpop.permute.xlu0 %1036
  %v1039 = vmul.f32 %v1028, %v1037
  %1041 = vrot.lane.b32.xlu0 %v1039, 16
  %v1042 = vpop.permute.xlu0 %1041
  %v1044 = vadd.f32 %v1034, %v1042
  %v1045 = vtanh.pop %v1044
  %1047 = vrot.lane.b32.xlu0 %v1045, 32
  %v1048 = vpop.permute.xlu0 %1047
  %v1050 = vmul.f32 %v1028, %v1048
  %v1052 = vrot.slane %v1050, 6
  %1053 = vrot.lane.b32.xlu0 %v1052, 16
  %v1054 = vpop.permute.xlu0 %1053
  %v1055 = vsel %vm116, %v1054, 0
  %1057 = vmatprep.subr.mxu0 0.0
  %1058 = vmatpush1.msra.mxu0 %v18
  %1059 = vmatprep.subr.mxu0 0.0
  %1060 = vmatpush1.msra.mxu0 %v19
  %1061 = vmatprep.subr.mxu0 0.0
  %1062 = vmatpush1.msra.mxu0 0.0
  %1063 = vmatprep.subr.mxu0 0.0
  %1064 = vmatpush1.msra.mxu0 0.0
  %1065 = vmatprep.subr.mxu0 0.0
  %1066 = vmatpush1.msra.mxu0 0.0
  %1067 = vmatprep.subr.mxu0 0.0
  %1068 = vmatpush1.msra.mxu0 0.0
  %1069 = vmatprep.subr.mxu0 0.0
  %1070 = vmatpush1.msra.mxu0 0.0
  %1071 = vmatprep.subr.mxu0 0.0
  %1072 = vmatpush1.msra.mxu0 0.0
  %1073 = vmatprep.subr.mxu0 0.0
  %1074 = vmatpush1.msra.mxu0 0.0
  %1075 = vmatprep.subr.mxu0 0.0
  %1076 = vmatpush1.msra.mxu0 0.0
  %1077 = vmatprep.subr.mxu0 0.0
  %1078 = vmatpush1.msra.mxu0 0.0
  %1079 = vmatprep.subr.mxu0 0.0
  %1080 = vmatpush1.msra.mxu0 0.0
  %1081 = vmatprep.subr.mxu0 0.0
  %1082 = vmatpush1.msra.mxu0 0.0
  %1083 = vmatprep.subr.mxu0 0.0
  %1084 = vmatpush1.msra.mxu0 0.0
  %1085 = vmatprep.subr.mxu0 0.0
  %1086 = vmatpush1.msra.mxu0 0.0
  %1087 = vmatprep.subr.mxu0 0.0
  %1088 = vmatpush1.msra.mxu0 0.0
  %1089 = vmatprep.subr.mxu0 0.0
  %1090 = vmatpush1.msra.mxu0 0.0
  %1091 = vmatprep.subr.mxu0 0.0
  %1092 = vmatpush1.msra.mxu0 0.0
  %1093 = vmatprep.subr.mxu0 0.0
  %1094 = vmatpush1.msra.mxu0 0.0
  %1095 = vmatprep.subr.mxu0 0.0
  %1096 = vmatpush1.msra.mxu0 0.0
  %1097 = vmatprep.subr.mxu0 0.0
  %1098 = vmatpush1.msra.mxu0 0.0
  %1099 = vmatprep.subr.mxu0 0.0
  %1100 = vmatpush1.msra.mxu0 0.0
  %1101 = vmatprep.subr.mxu0 0.0
  %1102 = vmatpush1.msra.mxu0 0.0
  %1103 = vmatprep.subr.mxu0 0.0
  %1104 = vmatpush1.msra.mxu0 0.0
  %1105 = vmatprep.subr.mxu0 0.0
  %1106 = vmatpush1.msra.mxu0 0.0
  %1107 = vmatprep.subr.mxu0 0.0
  %1108 = vmatpush1.msra.mxu0 0.0
  %1109 = vmatprep.subr.mxu0 0.0
  %1110 = vmatpush1.msra.mxu0 0.0
  %1111 = vmatprep.subr.mxu0 0.0
  %1112 = vmatpush1.msra.mxu0 0.0
  %1113 = vmatprep.subr.mxu0 0.0
  %1114 = vmatpush1.msra.mxu0 0.0
  %1115 = vmatprep.subr.mxu0 0.0
  %1116 = vmatpush1.msra.mxu0 0.0
  %1117 = vmatprep.subr.mxu0 0.0
  %1118 = vmatpush1.msra.mxu0 0.0
  %1119 = vmatprep.subr.mxu0 0.0
  %1120 = vmatpush1.msra.mxu0 0.0
  %1121 = vmatprep.mubr.f32.mxu0 0.0
  %1122 = vmatmul.mubr.f32.gmra.mrb[0].mxu0 %v1055
  %v1123 = vpop.f32.mrb[0].mxu0
  %v1124 = vadd.f32 %v115, %v1123
  %v1125 = vpop.f32.mrb[0].mxu0
  %1126 = vdwg.mxu0
  %1128 = vrot.lane.b32.xlu0 %v1124, 64
  %v1129 = vpop.permute.xlu0 %1128
  %vm1131 = vcmask 9216
  %1132 = vst.msk [vmem:[%s2] sm:$0x3] %vm1131, %v1129
  %v1133 = vmul.f32 %v1124, 0.5
  %v1134 = vtanh.pop %v1133
  %v1135 = vmul.f32 %v1134, 0.5
  %v1136 = vadd.f32 %v1135, 0.5
  %v1137 = vtanh.pop %v1124
  %v1139 = vrot.slane %v1044, 6
  %1140 = vrot.lane.b32.xlu0 %v1139, 64
  %v1141 = vpop.permute.xlu0 %1140
  %v1143 = vmul.f32 %v1136, %v1141
  %1145 = vrot.lane.b32.xlu0 %v1137, 96
  %v1146 = vpop.permute.xlu0 %1145
  %v1148 = vmul.f32 %v1136, %v1146
  %1150 = vrot.lane.b32.xlu0 %v1148, 16
  %v1151 = vpop.permute.xlu0 %1150
  %v1153 = vadd.f32 %v1143, %v1151
  %v1154 = vtanh.pop %v1153
  %1156 = vrot.lane.b32.xlu0 %v1154, 32
  %v1157 = vpop.permute.xlu0 %1156
  %v1159 = vmul.f32 %v1136, %v1157
  %1161 = vrot.lane.b32.xlu0 %v1159, 80
  %v1162 = vpop.permute.xlu0 %1161
  %v1163 = vsel %vm116, %v1162, 0
  %1165 = vmatprep.subr.mxu0 0.0
  %1166 = vmatpush1.msra.mxu0 %v18
  %1167 = vmatprep.subr.mxu0 0.0
  %1168 = vmatpush1.msra.mxu0 %v19
  %1169 = vmatprep.subr.mxu0 0.0
  %1170 = vmatpush1.msra.mxu0 0.0
  %1171 = vmatprep.subr.mxu0 0.0
  %1172 = vmatpush1.msra.mxu0 0.0
  %1173 = vmatprep.subr.mxu0 0.0
  %1174 = vmatpush1.msra.mxu0 0.0
  %1175 = vmatprep.subr.mxu0 0.0
  %1176 = vmatpush1.msra.mxu0 0.0
  %1177 = vmatprep.subr.mxu0 0.0
  %1178 = vmatpush1.msra.mxu0 0.0
  %1179 = vmatprep.subr.mxu0 0.0
  %1180 = vmatpush1.msra.mxu0 0.0
  %1181 = vmatprep.subr.mxu0 0.0
  %1182 = vmatpush1.msra.mxu0 0.0
  %1183 = vmatprep.subr.mxu0 0.0
  %1184 = vmatpush1.msra.mxu0 0.0
  %1185 = vmatprep.subr.mxu0 0.0
  %1186 = vmatpush1.msra.mxu0 0.0
  %1187 = vmatprep.subr.mxu0 0.0
  %1188 = vmatpush1.msra.mxu0 0.0
  %1189 = vmatprep.subr.mxu0 0.0
  %1190 = vmatpush1.msra.mxu0 0.0
  %1191 = vmatprep.subr.mxu0 0.0
  %1192 = vmatpush1.msra.mxu0 0.0
  %1193 = vmatprep.subr.mxu0 0.0
  %1194 = vmatpush1.msra.mxu0 0.0
  %1195 = vmatprep.subr.mxu0 0.0
  %1196 = vmatpush1.msra.mxu0 0.0
  %1197 = vmatprep.subr.mxu0 0.0
  %1198 = vmatpush1.msra.mxu0 0.0
  %1199 = vmatprep.subr.mxu0 0.0
  %1200 = vmatpush1.msra.mxu0 0.0
  %1201 = vmatprep.subr.mxu0 0.0
  %1202 = vmatpush1.msra.mxu0 0.0
  %1203 = vmatprep.subr.mxu0 0.0
  %1204 = vmatpush1.msra.mxu0 0.0
  %1205 = vmatprep.subr.mxu0 0.0
  %1206 = vmatpush1.msra.mxu0 0.0
  %1207 = vmatprep.subr.mxu0 0.0
  %1208 = vmatpush1.msra.mxu0 0.0
  %1209 = vmatprep.subr.mxu0 0.0
  %1210 = vmatpush1.msra.mxu0 0.0
  %1211 = vmatprep.subr.mxu0 0.0
  %1212 = vmatpush1.msra.mxu0 0.0
  %1213 = vmatprep.subr.mxu0 0.0
  %1214 = vmatpush1.msra.mxu0 0.0
  %1215 = vmatprep.subr.mxu0 0.0
  %1216 = vmatpush1.msra.mxu0 0.0
  %1217 = vmatprep.subr.mxu0 0.0
  %1218 = vmatpush1.msra.mxu0 0.0
  %1219 = vmatprep.subr.mxu0 0.0
  %1220 = vmatpush1.msra.mxu0 0.0
  %1221 = vmatprep.subr.mxu0 0.0
  %1222 = vmatpush1.msra.mxu0 0.0
  %1223 = vmatprep.subr.mxu0 0.0
  %1224 = vmatpush1.msra.mxu0 0.0
  %1225 = vmatprep.subr.mxu0 0.0
  %1226 = vmatpush1.msra.mxu0 0.0
  %1227 = vmatprep.subr.mxu0 0.0
  %1228 = vmatpush1.msra.mxu0 0.0
  %1229 = vmatprep.mubr.f32.mxu0 0.0
  %1230 = vmatmul.mubr.f32.gmra.mrb[0].mxu0 %v1163
  %v1231 = vpop.f32.mrb[0].mxu0
  %v1232 = vadd.f32 %v115, %v1231
  %v1233 = vpop.f32.mrb[0].mxu0
  %1234 = vdwg.mxu0
  %1236 = vrot.lane.b32.xlu0 %v1232, 64
  %v1237 = vpop.permute.xlu0 %1236
  %1239 = vst.msk [vmem:[%s2 + $0x2] sm:$0x3] %vm1131, %v1237
  %v1240 = vmul.f32 %v1232, 0.5
  %v1241 = vtanh.pop %v1240
  %v1242 = vmul.f32 %v1241, 0.5
  %v1243 = vadd.f32 %v1242, 0.5
  %v1244 = vtanh.pop %v1232
  %v1245 = vmul.f32 %v1243, %v1153
  %1247 = vrot.lane.b32.xlu0 %v1244, 96
  %v1248 = vpop.permute.xlu0 %1247
  %v1250 = vmul.f32 %v1243, %v1248
  %1252 = vrot.lane.b32.xlu0 %v1250, 16
  %v1253 = vpop.permute.xlu0 %1252
  %v1255 = vadd.f32 %v1245, %v1253
  %v1256 = vtanh.pop %v1255
  %1258 = vrot.lane.b32.xlu0 %v1256, 32
  %v1259 = vpop.permute.xlu0 %1258
  %v1261 = vmul.f32 %v1243, %v1259
  %1263 = vrot.lane.b32.xlu0 %v1261, 80
  %v1264 = vpop.permute.xlu0 %1263
  %v1265 = vsel %vm116, %v1264, 0
  %1267 = vmatprep.subr.mxu0 0.0
  %1268 = vmatpush1.msra.mxu0 %v18
  %1269 = vmatprep.subr.mxu0 0.0
  %1270 = vmatpush1.msra.mxu0 %v19
  %1271 = vmatprep.subr.mxu0 0.0
  %1272 = vmatpush1.msra.mxu0 0.0
  %1273 = vmatprep.subr.mxu0 0.0
  %1274 = vmatpush1.msra.mxu0 0.0
  %1275 = vmatprep.subr.mxu0 0.0
  %1276 = vmatpush1.msra.mxu0 0.0
  %1277 = vmatprep.subr.mxu0 0.0
  %1278 = vmatpush1.msra.mxu0 0.0
  %1279 = vmatprep.subr.mxu0 0.0
  %1280 = vmatpush1.msra.mxu0 0.0
  %1281 = vmatprep.subr.mxu0 0.0
  %1282 = vmatpush1.msra.mxu0 0.0
  %1283 = vmatprep.subr.mxu0 0.0
  %1284 = vmatpush1.msra.mxu0 0.0
  %1285 = vmatprep.subr.mxu0 0.0
  %1286 = vmatpush1.msra.mxu0 0.0
  %1287 = vmatprep.subr.mxu0 0.0
  %1288 = vmatpush1.msra.mxu0 0.0
  %1289 = vmatprep.subr.mxu0 0.0
  %1290 = vmatpush1.msra.mxu0 0.0
  %1291 = vmatprep.subr.mxu0 0.0
  %1292 = vmatpush1.msra.mxu0 0.0
  %1293 = vmatprep.subr.mxu0 0.0
  %1294 = vmatpush1.msra.mxu0 0.0
  %1295 = vmatprep.subr.mxu0 0.0
  %1296 = vmatpush1.msra.mxu0 0.0
  %1297 = vmatprep.subr.mxu0 0.0
  %1298 = vmatpush1.msra.mxu0 0.0
  %1299 = vmatprep.subr.mxu0 0.0
  %1300 = vmatpush1.msra.mxu0 0.0
  %1301 = vmatprep.subr.mxu0 0.0
  %1302 = vmatpush1.msra.mxu0 0.0
  %1303 = vmatprep.subr.mxu0 0.0
  %1304 = vmatpush1.msra.mxu0 0.0
  %1305 = vmatprep.subr.mxu0 0.0
  %1306 = vmatpush1.msra.mxu0 0.0
  %1307 = vmatprep.subr.mxu0 0.0
  %1308 = vmatpush1.msra.mxu0 0.0
  %1309 = vmatprep.subr.mxu0 0.0
  %1310 = vmatpush1.msra.mxu0 0.0
  %1311 = vmatprep.subr.mxu0 0.0
  %1312 = vmatpush1.msra.mxu0 0.0
  %1313 = vmatprep.subr.mxu0 0.0
  %1314 = vmatpush1.msra.mxu0 0.0
  %1315 = vmatprep.subr.mxu0 0.0
  %1316 = vmatpush1.msra.mxu0 0.0
  %1317 = vmatprep.subr.mxu0 0.0
  %1318 = vmatpush1.msra.mxu0 0.0
  %1319 = vmatprep.subr.mxu0 0.0
  %1320 = vmatpush1.msra.mxu0 0.0
  %1321 = vmatprep.subr.mxu0 0.0
  %1322 = vmatpush1.msra.mxu0 0.0
  %1323 = vmatprep.subr.mxu0 0.0
  %1324 = vmatpush1.msra.mxu0 0.0
  %1325 = vmatprep.subr.mxu0 0.0
  %1326 = vmatpush1.msra.mxu0 0.0
  %1327 = vmatprep.subr.mxu0 0.0
  %1328 = vmatpush1.msra.mxu0 0.0
  %1329 = vmatprep.subr.mxu0 0.0
  %1330 = vmatpush1.msra.mxu0 0.0
  %1331 = vmatprep.mubr.f32.mxu0 0.0
  %1332 = vmatmul.mubr.f32.gmra.mrb[0].mxu0 %v1265
  %v1333 = vpop.f32.mrb[0].mxu0
  %v1334 = vadd.f32 %v115, %v1333
  %v1335 = vpop.f32.mrb[0].mxu0
  %1336 = vdwg.mxu0
  %1338 = vrot.lane.b32.xlu0 %v1334, 64
  %v1339 = vpop.permute.xlu0 %1338
  %1341 = vst.msk [vmem:[%s2 + $0x4] sm:$0x3] %vm1131, %v1339
  %v1342 = vmul.f32 %v1334, 0.5
  %v1343 = vtanh.pop %v1342
  %v1344 = vmul.f32 %v1343, 0.5
  %v1345 = vadd.f32 %v1344, 0.5
  %v1346 = vtanh.pop %v1334
  %v1347 = vmul.f32 %v1345, %v1255
  %1349 = vrot.lane.b32.xlu0 %v1346, 96
  %v1350 = vpop.permute.xlu0 %1349
  %v1352 = vmul.f32 %v1345, %v1350
  %1354 = vrot.lane.b32.xlu0 %v1352, 16
  %v1355 = vpop.permute.xlu0 %1354
  %v1357 = vadd.f32 %v1347, %v1355
  %v1358 = vtanh.pop %v1357
  %1360 = vrot.lane.b32.xlu0 %v1358, 32
  %v1361 = vpop.permute.xlu0 %1360
  %v1363 = vmul.f32 %v1345, %v1361
  %1365 = vrot.lane.b32.xlu0 %v1363, 80
  %v1366 = vpop.permute.xlu0 %1365
  %v1367 = vsel %vm116, %v1366, 0
  %1369 = vmatprep.subr.mxu0 0.0
  %1370 = vmatpush1.msra.mxu0 %v18
  %1371 = vmatprep.subr.mxu0 0.0
  %1372 = vmatpush1.msra.mxu0 %v19
  %1373 = vmatprep.subr.mxu0 0.0
  %1374 = vmatpush1.msra.mxu0 0.0
  %1375 = vmatprep.subr.mxu0 0.0
  %1376 = vmatpush1.msra.mxu0 0.0
  %1377 = vmatprep.subr.mxu0 0.0
  %1378 = vmatpush1.msra.mxu0 0.0
  %1379 = vmatprep.subr.mxu0 0.0
  %1380 = vmatpush1.msra.mxu0 0.0
  %1381 = vmatprep.subr.mxu0 0.0
  %1382 = vmatpush1.msra.mxu0 0.0
  %1383 = vmatprep.subr.mxu0 0.0
  %1384 = vmatpush1.msra.mxu0 0.0
  %1385 = vmatprep.subr.mxu0 0.0
  %1386 = vmatpush1.msra.mxu0 0.0
  %1387 = vmatprep.subr.mxu0 0.0
  %1388 = vmatpush1.msra.mxu0 0.0
  %1389 = vmatprep.subr.mxu0 0.0
  %1390 = vmatpush1.msra.mxu0 0.0
  %1391 = vmatprep.subr.mxu0 0.0
  %1392 = vmatpush1.msra.mxu0 0.0
  %1393 = vmatprep.subr.mxu0 0.0
  %1394 = vmatpush1.msra.mxu0 0.0
  %1395 = vmatprep.subr.mxu0 0.0
  %1396 = vmatpush1.msra.mxu0 0.0
  %1397 = vmatprep.subr.mxu0 0.0
  %1398 = vmatpush1.msra.mxu0 0.0
  %1399 = vmatprep.subr.mxu0 0.0
  %1400 = vmatpush1.msra.mxu0 0.0
  %1401 = vmatprep.subr.mxu0 0.0
  %1402 = vmatpush1.msra.mxu0 0.0
  %1403 = vmatprep.subr.mxu0 0.0
  %1404 = vmatpush1.msra.mxu0 0.0
  %1405 = vmatprep.subr.mxu0 0.0
  %1406 = vmatpush1.msra.mxu0 0.0
  %1407 = vmatprep.subr.mxu0 0.0
  %1408 = vmatpush1.msra.mxu0 0.0
  %1409 = vmatprep.subr.mxu0 0.0
  %1410 = vmatpush1.msra.mxu0 0.0
  %1411 = vmatprep.subr.mxu0 0.0
  %1412 = vmatpush1.msra.mxu0 0.0
  %1413 = vmatprep.subr.mxu0 0.0
  %1414 = vmatpush1.msra.mxu0 0.0
  %1415 = vmatprep.subr.mxu0 0.0
  %1416 = vmatpush1.msra.mxu0 0.0
  %1417 = vmatprep.subr.mxu0 0.0
  %1418 = vmatpush1.msra.mxu0 0.0
  %1419 = vmatprep.subr.mxu0 0.0
  %1420 = vmatpush1.msra.mxu0 0.0
  %1421 = vmatprep.subr.mxu0 0.0
  %1422 = vmatpush1.msra.mxu0 0.0
  %1423 = vmatprep.subr.mxu0 0.0
  %1424 = vmatpush1.msra.mxu0 0.0
  %1425 = vmatprep.subr.mxu0 0.0
  %1426 = vmatpush1.msra.mxu0 0.0
  %1427 = vmatprep.subr.mxu0 0.0
  %1428 = vmatpush1.msra.mxu0 0.0
  %1429 = vmatprep.subr.mxu0 0.0
  %1430 = vmatpush1.msra.mxu0 0.0
  %1431 = vmatprep.subr.mxu0 0.0
  %1432 = vmatpush1.msra.mxu0 0.0
  %1433 = vmatprep.mubr.f32.mxu0 0.0
  %1434 = vmatmul.mubr.f32.gmra.mrb[0].mxu0 %v1367
  %v1435 = vpop.f32.mrb[0].mxu0
  %v1436 = vadd.f32 %v115, %v1435
  %v1437 = vpop.f32.mrb[0].mxu0
  %1438 = vdwg.mxu0
  %1440 = vrot.lane.b32.xlu0 %v1436, 64
  %v1441 = vpop.permute.xlu0 %1440
  %1443 = vst.msk [vmem:[%s2 + $0x6] sm:$0x3] %vm1131, %v1441
  %v1444 = vmul.f32 %v1436, 0.5
  %v1445 = vtanh.pop %v1444
  %v1446 = vmul.f32 %v1445, 0.5
  %v1447 = vadd.f32 %v1446, 0.5
  %v1448 = vtanh.pop %v1436
  %v1449 = vmul.f32 %v1447, %v1357
  %1451 = vrot.lane.b32.xlu0 %v1448, 96
  %v1452 = vpop.permute.xlu0 %1451
  %v1454 = vmul.f32 %v1447, %v1452
  %1456 = vrot.lane.b32.xlu0 %v1454, 16
  %v1457 = vpop.permute.xlu0 %1456
  %v1459 = vadd.f32 %v1449, %v1457
  %v1460 = vtanh.pop %v1459
  %1462 = vrot.lane.b32.xlu0 %v1460, 32
  %v1463 = vpop.permute.xlu0 %1462
  %v1465 = vmul.f32 %v1447, %v1463
  %1467 = vrot.lane.b32.xlu0 %v1465, 80
  %v1468 = vpop.permute.xlu0 %1467
  %v1469 = vsel %vm116, %v1468, 0
  %1471 = vmatprep.subr.mxu0 0.0
  %1472 = vmatpush1.msra.mxu0 %v18
  %1473 = vmatprep.subr.mxu0 0.0
  %1474 = vmatpush1.msra.mxu0 %v19
  %1475 = vmatprep.subr.mxu0 0.0
  %1476 = vmatpush1.msra.mxu0 0.0
  %1477 = vmatprep.subr.mxu0 0.0
  %1478 = vmatpush1.msra.mxu0 0.0
  %1479 = vmatprep.subr.mxu0 0.0
  %1480 = vmatpush1.msra.mxu0 0.0
  %1481 = vmatprep.subr.mxu0 0.0
  %1482 = vmatpush1.msra.mxu0 0.0
  %1483 = vmatprep.subr.mxu0 0.0
  %1484 = vmatpush1.msra.mxu0 0.0
  %1485 = vmatprep.subr.mxu0 0.0
  %1486 = vmatpush1.msra.mxu0 0.0
  %1487 = vmatprep.subr.mxu0 0.0
  %1488 = vmatpush1.msra.mxu0 0.0
  %1489 = vmatprep.subr.mxu0 0.0
  %1490 = vmatpush1.msra.mxu0 0.0
  %1491 = vmatprep.subr.mxu0 0.0
  %1492 = vmatpush1.msra.mxu0 0.0
  %1493 = vmatprep.subr.mxu0 0.0
  %1494 = vmatpush1.msra.mxu0 0.0
  %1495 = vmatprep.subr.mxu0 0.0
  %1496 = vmatpush1.msra.mxu0 0.0
  %1497 = vmatprep.subr.mxu0 0.0
  %1498 = vmatpush1.msra.mxu0 0.0
  %1499 = vmatprep.subr.mxu0 0.0
  %1500 = vmatpush1.msra.mxu0 0.0
  %1501 = vmatprep.subr.mxu0 0.0
  %1502 = vmatpush1.msra.mxu0 0.0
  %1503 = vmatprep.subr.mxu0 0.0
  %1504 = vmatpush1.msra.mxu0 0.0
  %1505 = vmatprep.subr.mxu0 0.0
  %1506 = vmatpush1.msra.mxu0 0.0
  %1507 = vmatprep.subr.mxu0 0.0
  %1508 = vmatpush1.msra.mxu0 0.0
  %1509 = vmatprep.subr.mxu0 0.0
  %1510 = vmatpush1.msra.mxu0 0.0
  %1511 = vmatprep.subr.mxu0 0.0
  %1512 = vmatpush1.msra.mxu0 0.0
  %1513 = vmatprep.subr.mxu0 0.0
  %1514 = vmatpush1.msra.mxu0 0.0
  %1515 = vmatprep.subr.mxu0 0.0
  %1516 = vmatpush1.msra.mxu0 0.0
  %1517 = vmatprep.subr.mxu0 0.0
  %1518 = vmatpush1.msra.mxu0 0.0
  %1519 = vmatprep.subr.mxu0 0.0
  %1520 = vmatpush1.msra.mxu0 0.0
  %1521 = vmatprep.subr.mxu0 0.0
  %1522 = vmatpush1.msra.mxu0 0.0
  %1523 = vmatprep.subr.mxu0 0.0
  %1524 = vmatpush1.msra.mxu0 0.0
  %1525 = vmatprep.subr.mxu0 0.0
  %1526 = vmatpush1.msra.mxu0 0.0
  %1527 = vmatprep.subr.mxu0 0.0
  %1528 = vmatpush1.msra.mxu0 0.0
  %1529 = vmatprep.subr.mxu0 0.0
  %1530 = vmatpush1.msra.mxu0 0.0
  %1531 = vmatprep.subr.mxu0 0.0
  %1532 = vmatpush1.msra.mxu0 0.0
  %1533 = vmatprep.subr.mxu0 0.0
  %1534 = vmatpush1.msra.mxu0 0.0
  %1535 = vmatprep.mubr.f32.mxu0 0.0
  %1536 = vmatmul.mubr.f32.gmra.mrb[0].mxu0 %v1469
  %v1537 = vpop.f32.mrb[0].mxu0
  %v1538 = vadd.f32 %v115, %v1537
  %v1539 = vpop.f32.mrb[0].mxu0
  %1540 = vdwg.mxu0
  %1542 = vrot.lane.b32.xlu0 %v1538, 64
  %v1543 = vpop.permute.xlu0 %1542
  %1545 = vst.msk [vmem:[%s2 + $0x8] sm:$0x3] %vm1131, %v1543
  %v1546 = vmul.f32 %v1538, 0.5
  %v1547 = vtanh.pop %v1546
  %v1548 = vmul.f32 %v1547, 0.5
  %v1549 = vadd.f32 %v1548, 0.5
  %v1550 = vtanh.pop %v1538
  %v1551 = vmul.f32 %v1549, %v1459
  %1553 = vrot.lane.b32.xlu0 %v1550, 96
  %v1554 = vpop.permute.xlu0 %1553
  %v1556 = vmul.f32 %v1549, %v1554
  %1558 = vrot.lane.b32.xlu0 %v1556, 16
  %v1559 = vpop.permute.xlu0 %1558
  %v1561 = vadd.f32 %v1551, %v1559
  %v1562 = vtanh.pop %v1561
  %1564 = vrot.lane.b32.xlu0 %v1562, 32
  %v1565 = vpop.permute.xlu0 %1564
  %v1567 = vmul.f32 %v1549, %v1565
  %1569 = vrot.lane.b32.xlu0 %v1567, 80
  %v1570 = vpop.permute.xlu0 %1569
  %v1571 = vsel %vm116, %v1570, 0
  %1573 = vmatprep.subr.mxu0 0.0
  %1574 = vmatpush1.msra.mxu0 %v18
  %1575 = vmatprep.subr.mxu0 0.0
  %1576 = vmatpush1.msra.mxu0 %v19
  %1577 = vmatprep.subr.mxu0 0.0
  %1578 = vmatpush1.msra.mxu0 0.0
  %1579 = vmatprep.subr.mxu0 0.0
  %1580 = vmatpush1.msra.mxu0 0.0
  %1581 = vmatprep.subr.mxu0 0.0
  %1582 = vmatpush1.msra.mxu0 0.0
  %1583 = vmatprep.subr.mxu0 0.0
  %1584 = vmatpush1.msra.mxu0 0.0
  %1585 = vmatprep.subr.mxu0 0.0
  %1586 = vmatpush1.msra.mxu0 0.0
  %1587 = vmatprep.subr.mxu0 0.0
  %1588 = vmatpush1.msra.mxu0 0.0
  %1589 = vmatprep.subr.mxu0 0.0
  %1590 = vmatpush1.msra.mxu0 0.0
  %1591 = vmatprep.subr.mxu0 0.0
  %1592 = vmatpush1.msra.mxu0 0.0
  %1593 = vmatprep.subr.mxu0 0.0
  %1594 = vmatpush1.msra.mxu0 0.0
  %1595 = vmatprep.subr.mxu0 0.0
  %1596 = vmatpush1.msra.mxu0 0.0
  %1597 = vmatprep.subr.mxu0 0.0
  %1598 = vmatpush1.msra.mxu0 0.0
  %1599 = vmatprep.subr.mxu0 0.0
  %1600 = vmatpush1.msra.mxu0 0.0
  %1601 = vmatprep.subr.mxu0 0.0
  %1602 = vmatpush1.msra.mxu0 0.0
  %1603 = vmatprep.subr.mxu0 0.0
  %1604 = vmatpush1.msra.mxu0 0.0
  %1605 = vmatprep.subr.mxu0 0.0
  %1606 = vmatpush1.msra.mxu0 0.0
  %1607 = vmatprep.subr.mxu0 0.0
  %1608 = vmatpush1.msra.mxu0 0.0
  %1609 = vmatprep.subr.mxu0 0.0
  %1610 = vmatpush1.msra.mxu0 0.0
  %1611 = vmatprep.subr.mxu0 0.0
  %1612 = vmatpush1.msra.mxu0 0.0
  %1613 = vmatprep.subr.mxu0 0.0
  %1614 = vmatpush1.msra.mxu0 0.0
  %1615 = vmatprep.subr.mxu0 0.0
  %1616 = vmatpush1.msra.mxu0 0.0
  %1617 = vmatprep.subr.mxu0 0.0
  %1618 = vmatpush1.msra.mxu0 0.0
  %1619 = vmatprep.subr.mxu0 0.0
  %1620 = vmatpush1.msra.mxu0 0.0
  %1621 = vmatprep.subr.mxu0 0.0
  %1622 = vmatpush1.msra.mxu0 0.0
  %1623 = vmatprep.subr.mxu0 0.0
  %1624 = vmatpush1.msra.mxu0 0.0
  %1625 = vmatprep.subr.mxu0 0.0
  %1626 = vmatpush1.msra.mxu0 0.0
  %1627 = vmatprep.subr.mxu0 0.0
  %1628 = vmatpush1.msra.mxu0 0.0
  %1629 = vmatprep.subr.mxu0 0.0
  %1630 = vmatpush1.msra.mxu0 0.0
  %1631 = vmatprep.subr.mxu0 0.0
  %1632 = vmatpush1.msra.mxu0 0.0
  %1633 = vmatprep.subr.mxu0 0.0
  %1634 = vmatpush1.msra.mxu0 0.0
  %1635 = vmatprep.subr.mxu0 0.0
  %1636 = vmatpush1.msra.mxu0 0.0
  %1637 = vmatprep.mubr.f32.mxu0 0.0
  %1638 = vmatmul.mubr.f32.gmra.mrb[0].mxu0 %v1571
  %v1639 = vpop.f32.mrb[0].mxu0
  %v1640 = vadd.f32 %v115, %v1639
  %v1641 = vpop.f32.mrb[0].mxu0
  %1642 = vdwg.mxu0
  %1644 = vrot.lane.b32.xlu0 %v1640, 64
  %v1645 = vpop.permute.xlu0 %1644
  %1647 = vst.msk [vmem:[%s2 + $0xa] sm:$0x3] %vm1131, %v1645
  %v1648 = vmul.f32 %v1640, 0.5
  %v1649 = vtanh.pop %v1648
  %v1650 = vmul.f32 %v1649, 0.5
  %v1651 = vadd.f32 %v1650, 0.5
  %v1652 = vtanh.pop %v1640
  %v1653 = vmul.f32 %v1651, %v1561
  %1655 = vrot.lane.b32.xlu0 %v1652, 96
  %v1656 = vpop.permute.xlu0 %1655
  %v1658 = vmul.f32 %v1651, %v1656
  %1660 = vrot.lane.b32.xlu0 %v1658, 16
  %v1661 = vpop.permute.xlu0 %1660
  %v1663 = vadd.f32 %v1653, %v1661
  %v1664 = vtanh.pop %v1663
  %1666 = vrot.lane.b32.xlu0 %v1664, 32
  %v1667 = vpop.permute.xlu0 %1666
  %v1669 = vmul.f32 %v1651, %v1667
  %1671 = vrot.lane.b32.xlu0 %v1669, 80
  %v1672 = vpop.permute.xlu0 %1671
  %v1673 = vsel %vm116, %v1672, 0
  %1675 = vmatprep.subr.mxu0 0.0
  %1676 = vmatpush1.msra.mxu0 %v18
  %1677 = vmatprep.subr.mxu0 0.0
  %1678 = vmatpush1.msra.mxu0 %v19
  %1679 = vmatprep.subr.mxu0 0.0
  %1680 = vmatpush1.msra.mxu0 0.0
  %1681 = vmatprep.subr.mxu0 0.0
  %1682 = vmatpush1.msra.mxu0 0.0
  %1683 = vmatprep.subr.mxu0 0.0
  %1684 = vmatpush1.msra.mxu0 0.0
  %1685 = vmatprep.subr.mxu0 0.0
  %1686 = vmatpush1.msra.mxu0 0.0
  %1687 = vmatprep.subr.mxu0 0.0
  %1688 = vmatpush1.msra.mxu0 0.0
  %1689 = vmatprep.subr.mxu0 0.0
  %1690 = vmatpush1.msra.mxu0 0.0
  %1691 = vmatprep.subr.mxu0 0.0
  %1692 = vmatpush1.msra.mxu0 0.0
  %1693 = vmatprep.subr.mxu0 0.0
  %1694 = vmatpush1.msra.mxu0 0.0
  %1695 = vmatprep.subr.mxu0 0.0
  %1696 = vmatpush1.msra.mxu0 0.0
  %1697 = vmatprep.subr.mxu0 0.0
  %1698 = vmatpush1.msra.mxu0 0.0
  %1699 = vmatprep.subr.mxu0 0.0
  %1700 = vmatpush1.msra.mxu0 0.0
  %1701 = vmatprep.subr.mxu0 0.0
  %1702 = vmatpush1.msra.mxu0 0.0
  %1703 = vmatprep.subr.mxu0 0.0
  %1704 = vmatpush1.msra.mxu0 0.0
  %1705 = vmatprep.subr.mxu0 0.0
  %1706 = vmatpush1.msra.mxu0 0.0
  %1707 = vmatprep.subr.mxu0 0.0
  %1708 = vmatpush1.msra.mxu0 0.0
  %1709 = vmatprep.subr.mxu0 0.0
  %1710 = vmatpush1.msra.mxu0 0.0
  %1711 = vmatprep.subr.mxu0 0.0
  %1712 = vmatpush1.msra.mxu0 0.0
  %1713 = vmatprep.subr.mxu0 0.0
  %1714 = vmatpush1.msra.mxu0 0.0
  %1715 = vmatprep.subr.mxu0 0.0
  %1716 = vmatpush1.msra.mxu0 0.0
  %1717 = vmatprep.subr.mxu0 0.0
  %1718 = vmatpush1.msra.mxu0 0.0
  %1719 = vmatprep.subr.mxu0 0.0
  %1720 = vmatpush1.msra.mxu0 0.0
  %1721 = vmatprep.subr.mxu0 0.0
  %1722 = vmatpush1.msra.mxu0 0.0
  %1723 = vmatprep.subr.mxu0 0.0
  %1724 = vmatpush1.msra.mxu0 0.0
  %1725 = vmatprep.subr.mxu0 0.0
  %1726 = vmatpush1.msra.mxu0 0.0
  %1727 = vmatprep.subr.mxu0 0.0
  %1728 = vmatpush1.msra.mxu0 0.0
  %1729 = vmatprep.subr.mxu0 0.0
  %1730 = vmatpush1.msra.mxu0 0.0
  %1731 = vmatprep.subr.mxu0 0.0
  %1732 = vmatpush1.msra.mxu0 0.0
  %1733 = vmatprep.subr.mxu0 0.0
  %1734 = vmatpush1.msra.mxu0 0.0
  %1735 = vmatprep.subr.mxu0 0.0
  %1736 = vmatpush1.msra.mxu0 0.0
  %1737 = vmatprep.subr.mxu0 0.0
  %1738 = vmatpush1.msra.mxu0 0.0
  %1739 = vmatprep.mubr.f32.mxu0 0.0
  %1740 = vmatmul.mubr.f32.gmra.mrb[0].mxu0 %v1673
  %v1741 = vpop.f32.mrb[0].mxu0
  %v1742 = vadd.f32 %v115, %v1741
  %v1743 = vpop.f32.mrb[0].mxu0
  %1744 = vdwg.mxu0
  %1746 = vrot.lane.b32.xlu0 %v1742, 64
  %v1747 = vpop.permute.xlu0 %1746
  %1749 = vst.msk [vmem:[%s2 + $0xc] sm:$0x3] %vm1131, %v1747
  %v1750 = vmul.f32 %v1742, 0.5
  %v1751 = vtanh.pop %v1750
  %v1752 = vmul.f32 %v1751, 0.5
  %v1753 = vadd.f32 %v1752, 0.5
  %v1754 = vtanh.pop %v1742
  %v1755 = vmul.f32 %v1753, %v1663
  %1757 = vrot.lane.b32.xlu0 %v1754, 96
  %v1758 = vpop.permute.xlu0 %1757
  %v1760 = vmul.f32 %v1753, %v1758
  %1762 = vrot.lane.b32.xlu0 %v1760, 16
  %v1763 = vpop.permute.xlu0 %1762
  %v1765 = vadd.f32 %v1755, %v1763
  %v1766 = vtanh.pop %v1765
  %1768 = vrot.lane.b32.xlu0 %v1766, 32
  %v1769 = vpop.permute.xlu0 %1768
  %v1771 = vmul.f32 %v1753, %v1769
  %1773 = vrot.lane.b32.xlu0 %v1771, 80
  %v1774 = vpop.permute.xlu0 %1773
  %v1775 = vsel %vm116, %v1774, 0
  %1777 = vmatprep.subr.mxu0 0.0
  %1778 = vmatpush1.msra.mxu0 %v18
  %1779 = vmatprep.subr.mxu0 0.0
  %1780 = vmatpush1.msra.mxu0 %v19
  %1781 = vmatprep.subr.mxu0 0.0
  %1782 = vmatpush1.msra.mxu0 0.0
  %1783 = vmatprep.subr.mxu0 0.0
  %1784 = vmatpush1.msra.mxu0 0.0
  %1785 = vmatprep.subr.mxu0 0.0
  %1786 = vmatpush1.msra.mxu0 0.0
  %1787 = vmatprep.subr.mxu0 0.0
  %1788 = vmatpush1.msra.mxu0 0.0
  %1789 = vmatprep.subr.mxu0 0.0
  %1790 = vmatpush1.msra.mxu0 0.0
  %1791 = vmatprep.subr.mxu0 0.0
  %1792 = vmatpush1.msra.mxu0 0.0
  %1793 = vmatprep.subr.mxu0 0.0
  %1794 = vmatpush1.msra.mxu0 0.0
  %1795 = vmatprep.subr.mxu0 0.0
  %1796 = vmatpush1.msra.mxu0 0.0
  %1797 = vmatprep.subr.mxu0 0.0
  %1798 = vmatpush1.msra.mxu0 0.0
  %1799 = vmatprep.subr.mxu0 0.0
  %1800 = vmatpush1.msra.mxu0 0.0
  %1801 = vmatprep.subr.mxu0 0.0
  %1802 = vmatpush1.msra.mxu0 0.0
  %1803 = vmatprep.subr.mxu0 0.0
  %1804 = vmatpush1.msra.mxu0 0.0
  %1805 = vmatprep.subr.mxu0 0.0
  %1806 = vmatpush1.msra.mxu0 0.0
  %1807 = vmatprep.subr.mxu0 0.0
  %1808 = vmatpush1.msra.mxu0 0.0
  %1809 = vmatprep.subr.mxu0 0.0
  %1810 = vmatpush1.msra.mxu0 0.0
  %1811 = vmatprep.subr.mxu0 0.0
  %1812 = vmatpush1.msra.mxu0 0.0
  %1813 = vmatprep.subr.mxu0 0.0
  %1814 = vmatpush1.msra.mxu0 0.0
  %1815 = vmatprep.subr.mxu0 0.0
  %1816 = vmatpush1.msra.mxu0 0.0
  %1817 = vmatprep.subr.mxu0 0.0
  %1818 = vmatpush1.msra.mxu0 0.0
  %1819 = vmatprep.subr.mxu0 0.0
  %1820 = vmatpush1.msra.mxu0 0.0
  %1821 = vmatprep.subr.mxu0 0.0
  %1822 = vmatpush1.msra.mxu0 0.0
  %1823 = vmatprep.subr.mxu0 0.0
  %1824 = vmatpush1.msra.mxu0 0.0
  %1825 = vmatprep.subr.mxu0 0.0
  %1826 = vmatpush1.msra.mxu0 0.0
  %1827 = vmatprep.subr.mxu0 0.0
  %1828 = vmatpush1.msra.mxu0 0.0
  %1829 = vmatprep.subr.mxu0 0.0
  %1830 = vmatpush1.msra.mxu0 0.0
  %1831 = vmatprep.subr.mxu0 0.0
  %1832 = vmatpush1.msra.mxu0 0.0
  %1833 = vmatprep.subr.mxu0 0.0
  %1834 = vmatpush1.msra.mxu0 0.0
  %1835 = vmatprep.subr.mxu0 0.0
  %1836 = vmatpush1.msra.mxu0 0.0
  %1837 = vmatprep.subr.mxu0 0.0
  %1838 = vmatpush1.msra.mxu0 0.0
  %1839 = vmatprep.subr.mxu0 0.0
  %1840 = vmatpush1.msra.mxu0 0.0
  %1841 = vmatprep.mubr.f32.mxu0 0.0
  %1842 = vmatmul.mubr.f32.gmra.mrb[0].mxu0 %v1775
  %v1843 = vpop.f32.mrb[0].mxu0
  %v1844 = vadd.f32 %v115, %v1843
  %v1845 = vpop.f32.mrb[0].mxu0
  %1846 = vdwg.mxu0
  %1848 = vrot.lane.b32.xlu0 %v1844, 64
  %v1849 = vpop.permute.xlu0 %1848
  %1851 = vst.msk [vmem:[%s2 + $0xe] sm:$0x3] %vm1131, %v1849
  %v1852 = vmul.f32 %v1844, 0.5
  %v1853 = vtanh.pop %v1852
  %v1854 = vmul.f32 %v1853, 0.5
  %v1855 = vadd.f32 %v1854, 0.5
  %v1856 = vtanh.pop %v1844
  %v1857 = vmul.f32 %v1855, %v1765
  %1859 = vrot.lane.b32.xlu0 %v1856, 96
  %v1860 = vpop.permute.xlu0 %1859
  %v1862 = vmul.f32 %v1855, %v1860
  %1864 = vrot.lane.b32.xlu0 %v1862, 16
  %v1865 = vpop.permute.xlu0 %1864
  %v1867 = vadd.f32 %v1857, %v1865
  %v1868 = vtanh.pop %v1867
  %1870 = vrot.lane.b32.xlu0 %v1868, 32
  %v1871 = vpop.permute.xlu0 %1870
  %v1873 = vmul.f32 %v1855, %v1871
  %1875 = vrot.lane.b32.xlu0 %v1873, 80
  %v1876 = vpop.permute.xlu0 %1875
  %v1877 = vsel %vm116, %v1876, 0
  %1879 = vmatprep.subr.mxu0 0.0
  %1880 = vmatpush1.msra.mxu0 %v18
  %1881 = vmatprep.subr.mxu0 0.0
  %1882 = vmatpush1.msra.mxu0 %v19
  %1883 = vmatprep.subr.mxu0 0.0
  %1884 = vmatpush1.msra.mxu0 0.0
  %1885 = vmatprep.subr.mxu0 0.0
  %1886 = vmatpush1.msra.mxu0 0.0
  %1887 = vmatprep.subr.mxu0 0.0
  %1888 = vmatpush1.msra.mxu0 0.0
  %1889 = vmatprep.subr.mxu0 0.0
  %1890 = vmatpush1.msra.mxu0 0.0
  %1891 = vmatprep.subr.mxu0 0.0
  %1892 = vmatpush1.msra.mxu0 0.0
  %1893 = vmatprep.subr.mxu0 0.0
  %1894 = vmatpush1.msra.mxu0 0.0
  %1895 = vmatprep.subr.mxu0 0.0
  %1896 = vmatpush1.msra.mxu0 0.0
  %1897 = vmatprep.subr.mxu0 0.0
  %1898 = vmatpush1.msra.mxu0 0.0
  %1899 = vmatprep.subr.mxu0 0.0
  %1900 = vmatpush1.msra.mxu0 0.0
  %1901 = vmatprep.subr.mxu0 0.0
  %1902 = vmatpush1.msra.mxu0 0.0
  %1903 = vmatprep.subr.mxu0 0.0
  %1904 = vmatpush1.msra.mxu0 0.0
  %1905 = vmatprep.subr.mxu0 0.0
  %1906 = vmatpush1.msra.mxu0 0.0
  %1907 = vmatprep.subr.mxu0 0.0
  %1908 = vmatpush1.msra.mxu0 0.0
  %1909 = vmatprep.subr.mxu0 0.0
  %1910 = vmatpush1.msra.mxu0 0.0
  %1911 = vmatprep.subr.mxu0 0.0
  %1912 = vmatpush1.msra.mxu0 0.0
  %1913 = vmatprep.subr.mxu0 0.0
  %1914 = vmatpush1.msra.mxu0 0.0
  %1915 = vmatprep.subr.mxu0 0.0
  %1916 = vmatpush1.msra.mxu0 0.0
  %1917 = vmatprep.subr.mxu0 0.0
  %1918 = vmatpush1.msra.mxu0 0.0
  %1919 = vmatprep.subr.mxu0 0.0
  %1920 = vmatpush1.msra.mxu0 0.0
  %1921 = vmatprep.subr.mxu0 0.0
  %1922 = vmatpush1.msra.mxu0 0.0
  %1923 = vmatprep.subr.mxu0 0.0
  %1924 = vmatpush1.msra.mxu0 0.0
  %1925 = vmatprep.subr.mxu0 0.0
  %1926 = vmatpush1.msra.mxu0 0.0
  %1927 = vmatprep.subr.mxu0 0.0
  %1928 = vmatpush1.msra.mxu0 0.0
  %1929 = vmatprep.subr.mxu0 0.0
  %1930 = vmatpush1.msra.mxu0 0.0
  %1931 = vmatprep.subr.mxu0 0.0
  %1932 = vmatpush1.msra.mxu0 0.0
  %1933 = vmatprep.subr.mxu0 0.0
  %1934 = vmatpush1.msra.mxu0 0.0
  %1935 = vmatprep.subr.mxu0 0.0
  %1936 = vmatpush1.msra.mxu0 0.0
  %1937 = vmatprep.subr.mxu0 0.0
  %1938 = vmatpush1.msra.mxu0 0.0
  %1939 = vmatprep.subr.mxu0 0.0
  %1940 = vmatpush1.msra.mxu0 0.0
  %1941 = vmatprep.subr.mxu0 0.0
  %1942 = vmatpush1.msra.mxu0 0.0
  %1943 = vmatprep.mubr.f32.mxu0 0.0
  %1944 = vmatmul.mubr.f32.gmra.mrb[0].mxu0 %v1877
  %v1945 = vpop.f32.mrb[0].mxu0
  %v1946 = vadd.f32 %v115, %v1945
  %v1947 = vpop.f32.mrb[0].mxu0
  %1948 = vdwg.mxu0
  %1950 = vrot.lane.b32.xlu0 %v1946, 64
  %v1951 = vpop.permute.xlu0 %1950
  %1953 = vst.msk [vmem:[%s2 + $0x10] sm:$0x3] %vm1131, %v1951
  %v1954 = vmul.f32 %v1946, 0.5
  %v1955 = vtanh.pop %v1954
  %v1956 = vmul.f32 %v1955, 0.5
  %v1957 = vadd.f32 %v1956, 0.5
  %v1958 = vtanh.pop %v1946
  %v1959 = vmul.f32 %v1957, %v1867
  %1961 = vrot.lane.b32.xlu0 %v1958, 96
  %v1962 = vpop.permute.xlu0 %1961
  %v1964 = vmul.f32 %v1957, %v1962
  %1966 = vrot.lane.b32.xlu0 %v1964, 16
  %v1967 = vpop.permute.xlu0 %1966
  %v1969 = vadd.f32 %v1959, %v1967
  %v1970 = vtanh.pop %v1969
  %1972 = vrot.lane.b32.xlu0 %v1970, 32
  %v1973 = vpop.permute.xlu0 %1972
  %v1975 = vmul.f32 %v1957, %v1973
  %1977 = vrot.lane.b32.xlu0 %v1975, 80
  %v1978 = vpop.permute.xlu0 %1977
  %v1979 = vsel %vm116, %v1978, 0
  %1981 = vmatprep.subr.mxu0 0.0
  %1982 = vmatpush1.msra.mxu0 %v18
  %1983 = vmatprep.subr.mxu0 0.0
  %1984 = vmatpush1.msra.mxu0 %v19
  %1985 = vmatprep.subr.mxu0 0.0
  %1986 = vmatpush1.msra.mxu0 0.0
  %1987 = vmatprep.subr.mxu0 0.0
  %1988 = vmatpush1.msra.mxu0 0.0
  %1989 = vmatprep.subr.mxu0 0.0
  %1990 = vmatpush1.msra.mxu0 0.0
  %1991 = vmatprep.subr.mxu0 0.0
  %1992 = vmatpush1.msra.mxu0 0.0
  %1993 = vmatprep.subr.mxu0 0.0
  %1994 = vmatpush1.msra.mxu0 0.0
  %1995 = vmatprep.subr.mxu0 0.0
  %1996 = vmatpush1.msra.mxu0 0.0
  %1997 = vmatprep.subr.mxu0 0.0
  %1998 = vmatpush1.msra.mxu0 0.0
  %1999 = vmatprep.subr.mxu0 0.0
  %2000 = vmatpush1.msra.mxu0 0.0
  %2001 = vmatprep.subr.mxu0 0.0
  %2002 = vmatpush1.msra.mxu0 0.0
  %2003 = vmatprep.subr.mxu0 0.0
  %2004 = vmatpush1.msra.mxu0 0.0
  %2005 = vmatprep.subr.mxu0 0.0
  %2006 = vmatpush1.msra.mxu0 0.0
  %2007 = vmatprep.subr.mxu0 0.0
  %2008 = vmatpush1.msra.mxu0 0.0
  %2009 = vmatprep.subr.mxu0 0.0
  %2010 = vmatpush1.msra.mxu0 0.0
  %2011 = vmatprep.subr.mxu0 0.0
  %2012 = vmatpush1.msra.mxu0 0.0
  %2013 = vmatprep.subr.mxu0 0.0
  %2014 = vmatpush1.msra.mxu0 0.0
  %2015 = vmatprep.subr.mxu0 0.0
  %2016 = vmatpush1.msra.mxu0 0.0
  %2017 = vmatprep.subr.mxu0 0.0
  %2018 = vmatpush1.msra.mxu0 0.0
  %2019 = vmatprep.subr.mxu0 0.0
  %2020 = vmatpush1.msra.mxu0 0.0
  %2021 = vmatprep.subr.mxu0 0.0
  %2022 = vmatpush1.msra.mxu0 0.0
  %2023 = vmatprep.subr.mxu0 0.0
  %2024 = vmatpush1.msra.mxu0 0.0
  %2025 = vmatprep.subr.mxu0 0.0
  %2026 = vmatpush1.msra.mxu0 0.0
  %2027 = vmatprep.subr.mxu0 0.0
  %2028 = vmatpush1.msra.mxu0 0.0
  %2029 = vmatprep.subr.mxu0 0.0
  %2030 = vmatpush1.msra.mxu0 0.0
  %2031 = vmatprep.subr.mxu0 0.0
  %2032 = vmatpush1.msra.mxu0 0.0
  %2033 = vmatprep.subr.mxu0 0.0
  %2034 = vmatpush1.msra.mxu0 0.0
  %2035 = vmatprep.subr.mxu0 0.0
  %2036 = vmatpush1.msra.mxu0 0.0
  %2037 = vmatprep.subr.mxu0 0.0
  %2038 = vmatpush1.msra.mxu0 0.0
  %2039 = vmatprep.subr.mxu0 0.0
  %2040 = vmatpush1.msra.mxu0 0.0
  %2041 = vmatprep.subr.mxu0 0.0
  %2042 = vmatpush1.msra.mxu0 0.0
  %2043 = vmatprep.subr.mxu0 0.0
  %2044 = vmatpush1.msra.mxu0 0.0
  %2045 = vmatprep.mubr.f32.mxu0 0.0
  %2046 = vmatmul.mubr.f32.gmra.mrb[0].mxu0 %v1979
  %v2047 = vpop.f32.mrb[0].mxu0
  %v2048 = vadd.f32 %v115, %v2047
  %v2049 = vpop.f32.mrb[0].mxu0
  %2050 = vdwg.mxu0
  %2052 = vrot.lane.b32.xlu0 %v2048, 64
  %v2053 = vpop.permute.xlu0 %2052
  %2055 = vst.msk [vmem:[%s2 + $0x12] sm:$0x3] %vm1131, %v2053
  %v2056 = vmul.f32 %v2048, 0.5
  %v2057 = vtanh.pop %v2056
  %v2058 = vmul.f32 %v2057, 0.5
  %v2059 = vadd.f32 %v2058, 0.5
  %v2060 = vtanh.pop %v2048
  %v2061 = vmul.f32 %v2059, %v1969
  %2063 = vrot.lane.b32.xlu0 %v2060, 96
  %v2064 = vpop.permute.xlu0 %2063
  %v2066 = vmul.f32 %v2059, %v2064
  %2068 = vrot.lane.b32.xlu0 %v2066, 16
  %v2069 = vpop.permute.xlu0 %2068
  %v2071 = vadd.f32 %v2061, %v2069
  %v2072 = vtanh.pop %v2071
  %2074 = vrot.lane.b32.xlu0 %v2072, 32
  %v2075 = vpop.permute.xlu0 %2074
  %v2077 = vmul.f32 %v2059, %v2075
  %2079 = vrot.lane.b32.xlu0 %v2077, 80
  %v2080 = vpop.permute.xlu0 %2079
  %v2081 = vsel %vm116, %v2080, 0
  %2083 = vmatprep.subr.mxu0 0.0
  %2084 = vmatpush1.msra.mxu0 %v18
  %2085 = vmatprep.subr.mxu0 0.0
  %2086 = vmatpush1.msra.mxu0 %v19
  %2087 = vmatprep.subr.mxu0 0.0
  %2088 = vmatpush1.msra.mxu0 0.0
  %2089 = vmatprep.subr.mxu0 0.0
  %2090 = vmatpush1.msra.mxu0 0.0
  %2091 = vmatprep.subr.mxu0 0.0
  %2092 = vmatpush1.msra.mxu0 0.0
  %2093 = vmatprep.subr.mxu0 0.0
  %2094 = vmatpush1.msra.mxu0 0.0
  %2095 = vmatprep.subr.mxu0 0.0
  %2096 = vmatpush1.msra.mxu0 0.0
  %2097 = vmatprep.subr.mxu0 0.0
  %2098 = vmatpush1.msra.mxu0 0.0
  %2099 = vmatprep.subr.mxu0 0.0
  %2100 = vmatpush1.msra.mxu0 0.0
  %2101 = vmatprep.subr.mxu0 0.0
  %2102 = vmatpush1.msra.mxu0 0.0
  %2103 = vmatprep.subr.mxu0 0.0
  %2104 = vmatpush1.msra.mxu0 0.0
  %2105 = vmatprep.subr.mxu0 0.0
  %2106 = vmatpush1.msra.mxu0 0.0
  %2107 = vmatprep.subr.mxu0 0.0
  %2108 = vmatpush1.msra.mxu0 0.0
  %2109 = vmatprep.subr.mxu0 0.0
  %2110 = vmatpush1.msra.mxu0 0.0
  %2111 = vmatprep.subr.mxu0 0.0
  %2112 = vmatpush1.msra.mxu0 0.0
  %2113 = vmatprep.subr.mxu0 0.0
  %2114 = vmatpush1.msra.mxu0 0.0
  %2115 = vmatprep.subr.mxu0 0.0
  %2116 = vmatpush1.msra.mxu0 0.0
  %2117 = vmatprep.subr.mxu0 0.0
  %2118 = vmatpush1.msra.mxu0 0.0
  %2119 = vmatprep.subr.mxu0 0.0
  %2120 = vmatpush1.msra.mxu0 0.0
  %2121 = vmatprep.subr.mxu0 0.0
  %2122 = vmatpush1.msra.mxu0 0.0
  %2123 = vmatprep.subr.mxu0 0.0
  %2124 = vmatpush1.msra.mxu0 0.0
  %2125 = vmatprep.subr.mxu0 0.0
  %2126 = vmatpush1.msra.mxu0 0.0
  %2127 = vmatprep.subr.mxu0 0.0
  %2128 = vmatpush1.msra.mxu0 0.0
  %2129 = vmatprep.subr.mxu0 0.0
  %2130 = vmatpush1.msra.mxu0 0.0
  %2131 = vmatprep.subr.mxu0 0.0
  %2132 = vmatpush1.msra.mxu0 0.0
  %2133 = vmatprep.subr.mxu0 0.0
  %2134 = vmatpush1.msra.mxu0 0.0
  %2135 = vmatprep.subr.mxu0 0.0
  %2136 = vmatpush1.msra.mxu0 0.0
  %2137 = vmatprep.subr.mxu0 0.0
  %2138 = vmatpush1.msra.mxu0 0.0
  %2139 = vmatprep.subr.mxu0 0.0
  %2140 = vmatpush1.msra.mxu0 0.0
  %2141 = vmatprep.subr.mxu0 0.0
  %2142 = vmatpush1.msra.mxu0 0.0
  %2143 = vmatprep.subr.mxu0 0.0
  %2144 = vmatpush1.msra.mxu0 0.0
  %2145 = vmatprep.subr.mxu0 0.0
  %2146 = vmatpush1.msra.mxu0 0.0
  %2147 = vmatprep.mubr.f32.mxu0 0.0
  %2148 = vmatmul.mubr.f32.gmra.mrb[0].mxu0 %v2081
  %v2149 = vpop.f32.mrb[0].mxu0
  %v2150 = vadd.f32 %v115, %v2149
  %v2151 = vpop.f32.mrb[0].mxu0
  %2152 = vdwg.mxu0
  %2154 = vrot.lane.b32.xlu0 %v2150, 64
  %v2155 = vpop.permute.xlu0 %2154
  %2157 = vst.msk [vmem:[%s2 + $0x14] sm:$0x3] %vm1131, %v2155
  %v2158 = vmul.f32 %v2150, 0.5
  %v2159 = vtanh.pop %v2158
  %v2160 = vmul.f32 %v2159, 0.5
  %v2161 = vadd.f32 %v2160, 0.5
  %v2162 = vtanh.pop %v2150
  %v2163 = vmul.f32 %v2161, %v2071
  %2165 = vrot.lane.b32.xlu0 %v2162, 96
  %v2166 = vpop.permute.xlu0 %2165
  %v2168 = vmul.f32 %v2161, %v2166
  %2170 = vrot.lane.b32.xlu0 %v2168, 16
  %v2171 = vpop.permute.xlu0 %2170
  %v2173 = vadd.f32 %v2163, %v2171
  %v2174 = vtanh.pop %v2173
  %2176 = vrot.lane.b32.xlu0 %v2174, 32
  %v2177 = vpop.permute.xlu0 %2176
  %v2179 = vmul.f32 %v2161, %v2177
  %2181 = vrot.lane.b32.xlu0 %v2179, 80
  %v2182 = vpop.permute.xlu0 %2181
  %v2183 = vsel %vm116, %v2182, 0
  %2185 = vmatprep.subr.mxu0 0.0
  %2186 = vmatpush1.msra.mxu0 %v18
  %2187 = vmatprep.subr.mxu0 0.0
  %2188 = vmatpush1.msra.mxu0 %v19
  %2189 = vmatprep.subr.mxu0 0.0
  %2190 = vmatpush1.msra.mxu0 0.0
  %2191 = vmatprep.subr.mxu0 0.0
  %2192 = vmatpush1.msra.mxu0 0.0
  %2193 = vmatprep.subr.mxu0 0.0
  %2194 = vmatpush1.msra.mxu0 0.0
  %2195 = vmatprep.subr.mxu0 0.0
  %2196 = vmatpush1.msra.mxu0 0.0
  %2197 = vmatprep.subr.mxu0 0.0
  %2198 = vmatpush1.msra.mxu0 0.0
  %2199 = vmatprep.subr.mxu0 0.0
  %2200 = vmatpush1.msra.mxu0 0.0
  %2201 = vmatprep.subr.mxu0 0.0
  %2202 = vmatpush1.msra.mxu0 0.0
  %2203 = vmatprep.subr.mxu0 0.0
  %2204 = vmatpush1.msra.mxu0 0.0
  %2205 = vmatprep.subr.mxu0 0.0
  %2206 = vmatpush1.msra.mxu0 0.0
  %2207 = vmatprep.subr.mxu0 0.0
  %2208 = vmatpush1.msra.mxu0 0.0
  %2209 = vmatprep.subr.mxu0 0.0
  %2210 = vmatpush1.msra.mxu0 0.0
  %2211 = vmatprep.subr.mxu0 0.0
  %2212 = vmatpush1.msra.mxu0 0.0
  %2213 = vmatprep.subr.mxu0 0.0
  %2214 = vmatpush1.msra.mxu0 0.0
  %2215 = vmatprep.subr.mxu0 0.0
  %2216 = vmatpush1.msra.mxu0 0.0
  %2217 = vmatprep.subr.mxu0 0.0
  %2218 = vmatpush1.msra.mxu0 0.0
  %2219 = vmatprep.subr.mxu0 0.0
  %2220 = vmatpush1.msra.mxu0 0.0
  %2221 = vmatprep.subr.mxu0 0.0
  %2222 = vmatpush1.msra.mxu0 0.0
  %2223 = vmatprep.subr.mxu0 0.0
  %2224 = vmatpush1.msra.mxu0 0.0
  %2225 = vmatprep.subr.mxu0 0.0
  %2226 = vmatpush1.msra.mxu0 0.0
  %2227 = vmatprep.subr.mxu0 0.0
  %2228 = vmatpush1.msra.mxu0 0.0
  %2229 = vmatprep.subr.mxu0 0.0
  %2230 = vmatpush1.msra.mxu0 0.0
  %2231 = vmatprep.subr.mxu0 0.0
  %2232 = vmatpush1.msra.mxu0 0.0
  %2233 = vmatprep.subr.mxu0 0.0
  %2234 = vmatpush1.msra.mxu0 0.0
  %2235 = vmatprep.subr.mxu0 0.0
  %2236 = vmatpush1.msra.mxu0 0.0
  %2237 = vmatprep.subr.mxu0 0.0
  %2238 = vmatpush1.msra.mxu0 0.0
  %2239 = vmatprep.subr.mxu0 0.0
  %2240 = vmatpush1.msra.mxu0 0.0
  %2241 = vmatprep.subr.mxu0 0.0
  %2242 = vmatpush1.msra.mxu0 0.0
  %2243 = vmatprep.subr.mxu0 0.0
  %2244 = vmatpush1.msra.mxu0 0.0
  %2245 = vmatprep.subr.mxu0 0.0
  %2246 = vmatpush1.msra.mxu0 0.0
  %2247 = vmatprep.subr.mxu0 0.0
  %2248 = vmatpush1.msra.mxu0 0.0
  %2249 = vmatprep.mubr.f32.mxu0 0.0
  %2250 = vmatmul.mubr.f32.gmra.mrb[0].mxu0 %v2183
  %v2251 = vpop.f32.mrb[0].mxu0
  %v2252 = vadd.f32 %v115, %v2251
  %v2253 = vpop.f32.mrb[0].mxu0
  %2254 = vdwg.mxu0
  %2256 = vrot.lane.b32.xlu0 %v2252, 64
  %v2257 = vpop.permute.xlu0 %2256
  %2259 = vst.msk [vmem:[%s2 + $0x16] sm:$0x3] %vm1131, %v2257
  %v2260 = vmul.f32 %v2252, 0.5
  %v2261 = vtanh.pop %v2260
  %v2262 = vmul.f32 %v2261, 0.5
  %v2263 = vadd.f32 %v2262, 0.5
  %v2264 = vtanh.pop %v2252
  %v2265 = vmul.f32 %v2263, %v2173
  %2267 = vrot.lane.b32.xlu0 %v2264, 96
  %v2268 = vpop.permute.xlu0 %2267
  %v2270 = vmul.f32 %v2263, %v2268
  %2272 = vrot.lane.b32.xlu0 %v2270, 16
  %v2273 = vpop.permute.xlu0 %2272
  %v2275 = vadd.f32 %v2265, %v2273
  %v2276 = vtanh.pop %v2275
  %2278 = vrot.lane.b32.xlu0 %v2276, 32
  %v2279 = vpop.permute.xlu0 %2278
  %v2281 = vmul.f32 %v2263, %v2279
  %2283 = vrot.lane.b32.xlu0 %v2281, 80
  %v2284 = vpop.permute.xlu0 %2283
  %v2285 = vsel %vm116, %v2284, 0
  %2287 = vmatprep.subr.mxu0 0.0
  %2288 = vmatpush1.msra.mxu0 %v18
  %2289 = vmatprep.subr.mxu0 0.0
  %2290 = vmatpush1.msra.mxu0 %v19
  %2291 = vmatprep.subr.mxu0 0.0
  %2292 = vmatpush1.msra.mxu0 0.0
  %2293 = vmatprep.subr.mxu0 0.0
  %2294 = vmatpush1.msra.mxu0 0.0
  %2295 = vmatprep.subr.mxu0 0.0
  %2296 = vmatpush1.msra.mxu0 0.0
  %2297 = vmatprep.subr.mxu0 0.0
  %2298 = vmatpush1.msra.mxu0 0.0
  %2299 = vmatprep.subr.mxu0 0.0
  %2300 = vmatpush1.msra.mxu0 0.0
  %2301 = vmatprep.subr.mxu0 0.0
  %2302 = vmatpush1.msra.mxu0 0.0
  %2303 = vmatprep.subr.mxu0 0.0
  %2304 = vmatpush1.msra.mxu0 0.0
  %2305 = vmatprep.subr.mxu0 0.0
  %2306 = vmatpush1.msra.mxu0 0.0
  %2307 = vmatprep.subr.mxu0 0.0
  %2308 = vmatpush1.msra.mxu0 0.0
  %2309 = vmatprep.subr.mxu0 0.0
  %2310 = vmatpush1.msra.mxu0 0.0
  %2311 = vmatprep.subr.mxu0 0.0
  %2312 = vmatpush1.msra.mxu0 0.0
  %2313 = vmatprep.subr.mxu0 0.0
  %2314 = vmatpush1.msra.mxu0 0.0
  %2315 = vmatprep.subr.mxu0 0.0
  %2316 = vmatpush1.msra.mxu0 0.0
  %2317 = vmatprep.subr.mxu0 0.0
  %2318 = vmatpush1.msra.mxu0 0.0
  %2319 = vmatprep.subr.mxu0 0.0
  %2320 = vmatpush1.msra.mxu0 0.0
  %2321 = vmatprep.subr.mxu0 0.0
  %2322 = vmatpush1.msra.mxu0 0.0
  %2323 = vmatprep.subr.mxu0 0.0
  %2324 = vmatpush1.msra.mxu0 0.0
  %2325 = vmatprep.subr.mxu0 0.0
  %2326 = vmatpush1.msra.mxu0 0.0
  %2327 = vmatprep.subr.mxu0 0.0
  %2328 = vmatpush1.msra.mxu0 0.0
  %2329 = vmatprep.subr.mxu0 0.0
  %2330 = vmatpush1.msra.mxu0 0.0
  %2331 = vmatprep.subr.mxu0 0.0
  %2332 = vmatpush1.msra.mxu0 0.0
  %2333 = vmatprep.subr.mxu0 0.0
  %2334 = vmatpush1.msra.mxu0 0.0
  %2335 = vmatprep.subr.mxu0 0.0
  %2336 = vmatpush1.msra.mxu0 0.0
  %2337 = vmatprep.subr.mxu0 0.0
  %2338 = vmatpush1.msra.mxu0 0.0
  %2339 = vmatprep.subr.mxu0 0.0
  %2340 = vmatpush1.msra.mxu0 0.0
  %2341 = vmatprep.subr.mxu0 0.0
  %2342 = vmatpush1.msra.mxu0 0.0
  %2343 = vmatprep.subr.mxu0 0.0
  %2344 = vmatpush1.msra.mxu0 0.0
  %2345 = vmatprep.subr.mxu0 0.0
  %2346 = vmatpush1.msra.mxu0 0.0
  %2347 = vmatprep.subr.mxu0 0.0
  %2348 = vmatpush1.msra.mxu0 0.0
  %2349 = vmatprep.subr.mxu0 0.0
  %2350 = vmatpush1.msra.mxu0 0.0
  %2351 = vmatprep.mubr.f32.mxu0 0.0
  %2352 = vmatmul.mubr.f32.gmra.mrb[0].mxu0 %v2285
  %v2353 = vpop.f32.mrb[0].mxu0
  %v2354 = vadd.f32 %v115, %v2353
  %v2355 = vpop.f32.mrb[0].mxu0
  %2356 = vdwg.mxu0
  %2358 = vrot.lane.b32.xlu0 %v2354, 64
  %v2359 = vpop.permute.xlu0 %2358
  %2361 = vst.msk [vmem:[%s2 + $0x18] sm:$0x3] %vm1131, %v2359
  %v2362 = vmul.f32 %v2354, 0.5
  %v2363 = vtanh.pop %v2362
  %v2364 = vmul.f32 %v2363, 0.5
  %v2365 = vadd.f32 %v2364, 0.5
  %v2366 = vtanh.pop %v2354
  %v2367 = vmul.f32 %v2365, %v2275
  %2369 = vrot.lane.b32.xlu0 %v2366, 96
  %v2370 = vpop.permute.xlu0 %2369
  %v2372 = vmul.f32 %v2365, %v2370
  %2374 = vrot.lane.b32.xlu0 %v2372, 16
  %v2375 = vpop.permute.xlu0 %2374
  %v2377 = vadd.f32 %v2367, %v2375
  %v2378 = vtanh.pop %v2377
  %2380 = vrot.lane.b32.xlu0 %v2378, 32
  %v2381 = vpop.permute.xlu0 %2380
  %v2383 = vmul.f32 %v2365, %v2381
  %2385 = vrot.lane.b32.xlu0 %v2383, 80
  %v2386 = vpop.permute.xlu0 %2385
  %v2387 = vsel %vm116, %v2386, 0
  %2389 = vmatprep.subr.mxu0 0.0
  %2390 = vmatpush1.msra.mxu0 %v18
  %2391 = vmatprep.subr.mxu0 0.0
  %2392 = vmatpush1.msra.mxu0 %v19
  %2393 = vmatprep.subr.mxu0 0.0
  %2394 = vmatpush1.msra.mxu0 0.0
  %2395 = vmatprep.subr.mxu0 0.0
  %2396 = vmatpush1.msra.mxu0 0.0
  %2397 = vmatprep.subr.mxu0 0.0
  %2398 = vmatpush1.msra.mxu0 0.0
  %2399 = vmatprep.subr.mxu0 0.0
  %2400 = vmatpush1.msra.mxu0 0.0
  %2401 = vmatprep.subr.mxu0 0.0
  %2402 = vmatpush1.msra.mxu0 0.0
  %2403 = vmatprep.subr.mxu0 0.0
  %2404 = vmatpush1.msra.mxu0 0.0
  %2405 = vmatprep.subr.mxu0 0.0
  %2406 = vmatpush1.msra.mxu0 0.0
  %2407 = vmatprep.subr.mxu0 0.0
  %2408 = vmatpush1.msra.mxu0 0.0
  %2409 = vmatprep.subr.mxu0 0.0
  %2410 = vmatpush1.msra.mxu0 0.0
  %2411 = vmatprep.subr.mxu0 0.0
  %2412 = vmatpush1.msra.mxu0 0.0
  %2413 = vmatprep.subr.mxu0 0.0
  %2414 = vmatpush1.msra.mxu0 0.0
  %2415 = vmatprep.subr.mxu0 0.0
  %2416 = vmatpush1.msra.mxu0 0.0
  %2417 = vmatprep.subr.mxu0 0.0
  %2418 = vmatpush1.msra.mxu0 0.0
  %2419 = vmatprep.subr.mxu0 0.0
  %2420 = vmatpush1.msra.mxu0 0.0
  %2421 = vmatprep.subr.mxu0 0.0
  %2422 = vmatpush1.msra.mxu0 0.0
  %2423 = vmatprep.subr.mxu0 0.0
  %2424 = vmatpush1.msra.mxu0 0.0
  %2425 = vmatprep.subr.mxu0 0.0
  %2426 = vmatpush1.msra.mxu0 0.0
  %2427 = vmatprep.subr.mxu0 0.0
  %2428 = vmatpush1.msra.mxu0 0.0
  %2429 = vmatprep.subr.mxu0 0.0
  %2430 = vmatpush1.msra.mxu0 0.0
  %2431 = vmatprep.subr.mxu0 0.0
  %2432 = vmatpush1.msra.mxu0 0.0
  %2433 = vmatprep.subr.mxu0 0.0
  %2434 = vmatpush1.msra.mxu0 0.0
  %2435 = vmatprep.subr.mxu0 0.0
  %2436 = vmatpush1.msra.mxu0 0.0
  %2437 = vmatprep.subr.mxu0 0.0
  %2438 = vmatpush1.msra.mxu0 0.0
  %2439 = vmatprep.subr.mxu0 0.0
  %2440 = vmatpush1.msra.mxu0 0.0
  %2441 = vmatprep.subr.mxu0 0.0
  %2442 = vmatpush1.msra.mxu0 0.0
  %2443 = vmatprep.subr.mxu0 0.0
  %2444 = vmatpush1.msra.mxu0 0.0
  %2445 = vmatprep.subr.mxu0 0.0
  %2446 = vmatpush1.msra.mxu0 0.0
  %2447 = vmatprep.subr.mxu0 0.0
  %2448 = vmatpush1.msra.mxu0 0.0
  %2449 = vmatprep.subr.mxu0 0.0
  %2450 = vmatpush1.msra.mxu0 0.0
  %2451 = vmatprep.subr.mxu0 0.0
  %2452 = vmatpush1.msra.mxu0 0.0
  %2453 = vmatprep.mubr.f32.mxu0 0.0
  %2454 = vmatmul.mubr.f32.gmra.mrb[0].mxu0 %v2387
  %v2455 = vpop.f32.mrb[0].mxu0
  %v2456 = vadd.f32 %v115, %v2455
  %v2457 = vpop.f32.mrb[0].mxu0
  %2458 = vdwg.mxu0
  %2460 = vrot.lane.b32.xlu0 %v2456, 64
  %v2461 = vpop.permute.xlu0 %2460
  %2463 = vst.msk [vmem:[%s2 + $0x1a] sm:$0x3] %vm1131, %v2461
  %v2464 = vmul.f32 %v2456, 0.5
  %v2465 = vtanh.pop %v2464
  %v2466 = vmul.f32 %v2465, 0.5
  %v2467 = vadd.f32 %v2466, 0.5
  %v2468 = vtanh.pop %v2456
  %v2469 = vmul.f32 %v2467, %v2377
  %2471 = vrot.lane.b32.xlu0 %v2468, 96
  %v2472 = vpop.permute.xlu0 %2471
  %v2474 = vmul.f32 %v2467, %v2472
  %2476 = vrot.lane.b32.xlu0 %v2474, 16
  %v2477 = vpop.permute.xlu0 %2476
  %v2479 = vadd.f32 %v2469, %v2477
  %v2480 = vtanh.pop %v2479
  %2482 = vrot.lane.b32.xlu0 %v2480, 32
  %v2483 = vpop.permute.xlu0 %2482
  %v2485 = vmul.f32 %v2467, %v2483
  %2487 = vrot.lane.b32.xlu0 %v2485, 80
  %v2488 = vpop.permute.xlu0 %2487
  %v2489 = vsel %vm116, %v2488, 0
  %2491 = vmatprep.subr.mxu0 0.0
  %2492 = vmatpush1.msra.mxu0 %v18
  %2493 = vmatprep.subr.mxu0 0.0
  %2494 = vmatpush1.msra.mxu0 %v19
  %2495 = vmatprep.subr.mxu0 0.0
  %2496 = vmatpush1.msra.mxu0 0.0
  %2497 = vmatprep.subr.mxu0 0.0
  %2498 = vmatpush1.msra.mxu0 0.0
  %2499 = vmatprep.subr.mxu0 0.0
  %2500 = vmatpush1.msra.mxu0 0.0
  %2501 = vmatprep.subr.mxu0 0.0
  %2502 = vmatpush1.msra.mxu0 0.0
  %2503 = vmatprep.subr.mxu0 0.0
  %2504 = vmatpush1.msra.mxu0 0.0
  %2505 = vmatprep.subr.mxu0 0.0
  %2506 = vmatpush1.msra.mxu0 0.0
  %2507 = vmatprep.subr.mxu0 0.0
  %2508 = vmatpush1.msra.mxu0 0.0
  %2509 = vmatprep.subr.mxu0 0.0
  %2510 = vmatpush1.msra.mxu0 0.0
  %2511 = vmatprep.subr.mxu0 0.0
  %2512 = vmatpush1.msra.mxu0 0.0
  %2513 = vmatprep.subr.mxu0 0.0
  %2514 = vmatpush1.msra.mxu0 0.0
  %2515 = vmatprep.subr.mxu0 0.0
  %2516 = vmatpush1.msra.mxu0 0.0
  %2517 = vmatprep.subr.mxu0 0.0
  %2518 = vmatpush1.msra.mxu0 0.0
  %2519 = vmatprep.subr.mxu0 0.0
  %2520 = vmatpush1.msra.mxu0 0.0
  %2521 = vmatprep.subr.mxu0 0.0
  %2522 = vmatpush1.msra.mxu0 0.0
  %2523 = vmatprep.subr.mxu0 0.0
  %2524 = vmatpush1.msra.mxu0 0.0
  %2525 = vmatprep.subr.mxu0 0.0
  %2526 = vmatpush1.msra.mxu0 0.0
  %2527 = vmatprep.subr.mxu0 0.0
  %2528 = vmatpush1.msra.mxu0 0.0
  %2529 = vmatprep.subr.mxu0 0.0
  %2530 = vmatpush1.msra.mxu0 0.0
  %2531 = vmatprep.subr.mxu0 0.0
  %2532 = vmatpush1.msra.mxu0 0.0
  %2533 = vmatprep.subr.mxu0 0.0
  %2534 = vmatpush1.msra.mxu0 0.0
  %2535 = vmatprep.subr.mxu0 0.0
  %2536 = vmatpush1.msra.mxu0 0.0
  %2537 = vmatprep.subr.mxu0 0.0
  %2538 = vmatpush1.msra.mxu0 0.0
  %2539 = vmatprep.subr.mxu0 0.0
  %2540 = vmatpush1.msra.mxu0 0.0
  %2541 = vmatprep.subr.mxu0 0.0
  %2542 = vmatpush1.msra.mxu0 0.0
  %2543 = vmatprep.subr.mxu0 0.0
  %2544 = vmatpush1.msra.mxu0 0.0
  %2545 = vmatprep.subr.mxu0 0.0
  %2546 = vmatpush1.msra.mxu0 0.0
  %2547 = vmatprep.subr.mxu0 0.0
  %2548 = vmatpush1.msra.mxu0 0.0
  %2549 = vmatprep.subr.mxu0 0.0
  %2550 = vmatpush1.msra.mxu0 0.0
  %2551 = vmatprep.subr.mxu0 0.0
  %2552 = vmatpush1.msra.mxu0 0.0
  %2553 = vmatprep.subr.mxu0 0.0
  %2554 = vmatpush1.msra.mxu0 0.0
  %2555 = vmatprep.mubr.f32.mxu0 0.0
  %2556 = vmatmul.mubr.f32.gmra.mrb[0].mxu0 %v2489
  %v2557 = vpop.f32.mrb[0].mxu0
  %v2558 = vadd.f32 %v115, %v2557
  %v2559 = vpop.f32.mrb[0].mxu0
  %2560 = vdwg.mxu0
  %2562 = vrot.lane.b32.xlu0 %v2558, 64
  %v2563 = vpop.permute.xlu0 %2562
  %2565 = vst.msk [vmem:[%s2 + $0x1c] sm:$0x3] %vm1131, %v2563
  %v2566 = vmul.f32 %v2558, 0.5
  %v2567 = vtanh.pop %v2566
  %v2568 = vmul.f32 %v2567, 0.5
  %v2569 = vadd.f32 %v2568, 0.5
  %v2570 = vtanh.pop %v2558
  %v2571 = vmul.f32 %v2569, %v2479
  %2573 = vrot.lane.b32.xlu0 %v2570, 96
  %v2574 = vpop.permute.xlu0 %2573
  %v2576 = vmul.f32 %v2569, %v2574
  %2578 = vrot.lane.b32.xlu0 %v2576, 16
  %v2579 = vpop.permute.xlu0 %2578
  %v2581 = vadd.f32 %v2571, %v2579
  %v2582 = vtanh.pop %v2581
  %2584 = vrot.lane.b32.xlu0 %v2582, 32
  %v2585 = vpop.permute.xlu0 %2584
  %v2587 = vmul.f32 %v2569, %v2585
  %2589 = vrot.lane.b32.xlu0 %v2587, 80
  %v2590 = vpop.permute.xlu0 %2589
  %v2591 = vsel %vm116, %v2590, 0
  %2593 = vmatprep.subr.mxu0 0.0
  %2594 = vmatpush1.msra.mxu0 %v18
  %2595 = vmatprep.subr.mxu0 0.0
  %2596 = vmatpush1.msra.mxu0 %v19
  %2597 = vmatprep.subr.mxu0 0.0
  %2598 = vmatpush1.msra.mxu0 0.0
  %2599 = vmatprep.subr.mxu0 0.0
  %2600 = vmatpush1.msra.mxu0 0.0
  %2601 = vmatprep.subr.mxu0 0.0
  %2602 = vmatpush1.msra.mxu0 0.0
  %2603 = vmatprep.subr.mxu0 0.0
  %2604 = vmatpush1.msra.mxu0 0.0
  %2605 = vmatprep.subr.mxu0 0.0
  %2606 = vmatpush1.msra.mxu0 0.0
  %2607 = vmatprep.subr.mxu0 0.0
  %2608 = vmatpush1.msra.mxu0 0.0
  %2609 = vmatprep.subr.mxu0 0.0
  %2610 = vmatpush1.msra.mxu0 0.0
  %2611 = vmatprep.subr.mxu0 0.0
  %2612 = vmatpush1.msra.mxu0 0.0
  %2613 = vmatprep.subr.mxu0 0.0
  %2614 = vmatpush1.msra.mxu0 0.0
  %2615 = vmatprep.subr.mxu0 0.0
  %2616 = vmatpush1.msra.mxu0 0.0
  %2617 = vmatprep.subr.mxu0 0.0
  %2618 = vmatpush1.msra.mxu0 0.0
  %2619 = vmatprep.subr.mxu0 0.0
  %2620 = vmatpush1.msra.mxu0 0.0
  %2621 = vmatprep.subr.mxu0 0.0
  %2622 = vmatpush1.msra.mxu0 0.0
  %2623 = vmatprep.subr.mxu0 0.0
  %2624 = vmatpush1.msra.mxu0 0.0
  %2625 = vmatprep.subr.mxu0 0.0
  %2626 = vmatpush1.msra.mxu0 0.0
  %2627 = vmatprep.subr.mxu0 0.0
  %2628 = vmatpush1.msra.mxu0 0.0
  %2629 = vmatprep.subr.mxu0 0.0
  %2630 = vmatpush1.msra.mxu0 0.0
  %2631 = vmatprep.subr.mxu0 0.0
  %2632 = vmatpush1.msra.mxu0 0.0
  %2633 = vmatprep.subr.mxu0 0.0
  %2634 = vmatpush1.msra.mxu0 0.0
  %2635 = vmatprep.subr.mxu0 0.0
  %2636 = vmatpush1.msra.mxu0 0.0
  %2637 = vmatprep.subr.mxu0 0.0
  %2638 = vmatpush1.msra.mxu0 0.0
  %2639 = vmatprep.subr.mxu0 0.0
  %2640 = vmatpush1.msra.mxu0 0.0
  %2641 = vmatprep.subr.mxu0 0.0
  %2642 = vmatpush1.msra.mxu0 0.0
  %2643 = vmatprep.subr.mxu0 0.0
  %2644 = vmatpush1.msra.mxu0 0.0
  %2645 = vmatprep.subr.mxu0 0.0
  %2646 = vmatpush1.msra.mxu0 0.0
  %2647 = vmatprep.subr.mxu0 0.0
  %2648 = vmatpush1.msra.mxu0 0.0
  %2649 = vmatprep.subr.mxu0 0.0
  %2650 = vmatpush1.msra.mxu0 0.0
  %2651 = vmatprep.subr.mxu0 0.0
  %2652 = vmatpush1.msra.mxu0 0.0
  %2653 = vmatprep.subr.mxu0 0.0
  %2654 = vmatpush1.msra.mxu0 0.0
  %2655 = vmatprep.subr.mxu0 0.0
  %2656 = vmatpush1.msra.mxu0 0.0
  %2657 = vmatprep.mubr.f32.mxu0 0.0
  %2658 = vmatmul.mubr.f32.gmra.mrb[0].mxu0 %v2591
  %v2659 = vpop.f32.mrb[0].mxu0
  %v2660 = vadd.f32 %v115, %v2659
  %v2661 = vpop.f32.mrb[0].mxu0
  %2662 = vdwg.mxu0
  %2664 = vrot.lane.b32.xlu0 %v2660, 64
  %v2665 = vpop.permute.xlu0 %2664
  %2667 = vst.msk [vmem:[%s2 + $0x1e] sm:$0x3] %vm1131, %v2665
  %v2668 = vmul.f32 %v2660, 0.5
  %v2669 = vtanh.pop %v2668
  %v2670 = vmul.f32 %v2669, 0.5
  %v2671 = vadd.f32 %v2670, 0.5
  %v2672 = vtanh.pop %v2660
  %v2673 = vmul.f32 %v2671, %v2581
  %2675 = vrot.lane.b32.xlu0 %v2672, 96
  %v2676 = vpop.permute.xlu0 %2675
  %v2678 = vmul.f32 %v2671, %v2676
  %2680 = vrot.lane.b32.xlu0 %v2678, 16
  %v2681 = vpop.permute.xlu0 %2680
  %v2683 = vadd.f32 %v2673, %v2681
  %v2684 = vtanh.pop %v2683
  %2686 = vrot.lane.b32.xlu0 %v2684, 32
  %v2687 = vpop.permute.xlu0 %2686
  %v2689 = vmul.f32 %v2671, %v2687
  %2691 = vrot.lane.b32.xlu0 %v2689, 80
  %v2692 = vpop.permute.xlu0 %2691
  %v2693 = vsel %vm116, %v2692, 0
  %2695 = vmatprep.subr.mxu0 0.0
  %2696 = vmatpush1.msra.mxu0 %v18
  %2697 = vmatprep.subr.mxu0 0.0
  %2698 = vmatpush1.msra.mxu0 %v19
  %2699 = vmatprep.subr.mxu0 0.0
  %2700 = vmatpush1.msra.mxu0 0.0
  %2701 = vmatprep.subr.mxu0 0.0
  %2702 = vmatpush1.msra.mxu0 0.0
  %2703 = vmatprep.subr.mxu0 0.0
  %2704 = vmatpush1.msra.mxu0 0.0
  %2705 = vmatprep.subr.mxu0 0.0
  %2706 = vmatpush1.msra.mxu0 0.0
  %2707 = vmatprep.subr.mxu0 0.0
  %2708 = vmatpush1.msra.mxu0 0.0
  %2709 = vmatprep.subr.mxu0 0.0
  %2710 = vmatpush1.msra.mxu0 0.0
  %2711 = vmatprep.subr.mxu0 0.0
  %2712 = vmatpush1.msra.mxu0 0.0
  %2713 = vmatprep.subr.mxu0 0.0
  %2714 = vmatpush1.msra.mxu0 0.0
  %2715 = vmatprep.subr.mxu0 0.0
  %2716 = vmatpush1.msra.mxu0 0.0
  %2717 = vmatprep.subr.mxu0 0.0
  %2718 = vmatpush1.msra.mxu0 0.0
  %2719 = vmatprep.subr.mxu0 0.0
  %2720 = vmatpush1.msra.mxu0 0.0
  %2721 = vmatprep.subr.mxu0 0.0
  %2722 = vmatpush1.msra.mxu0 0.0
  %2723 = vmatprep.subr.mxu0 0.0
  %2724 = vmatpush1.msra.mxu0 0.0
  %2725 = vmatprep.subr.mxu0 0.0
  %2726 = vmatpush1.msra.mxu0 0.0
  %2727 = vmatprep.subr.mxu0 0.0
  %2728 = vmatpush1.msra.mxu0 0.0
  %2729 = vmatprep.subr.mxu0 0.0
  %2730 = vmatpush1.msra.mxu0 0.0
  %2731 = vmatprep.subr.mxu0 0.0
  %2732 = vmatpush1.msra.mxu0 0.0
  %2733 = vmatprep.subr.mxu0 0.0
  %2734 = vmatpush1.msra.mxu0 0.0
  %2735 = vmatprep.subr.mxu0 0.0
  %2736 = vmatpush1.msra.mxu0 0.0
  %2737 = vmatprep.subr.mxu0 0.0
  %2738 = vmatpush1.msra.mxu0 0.0
  %2739 = vmatprep.subr.mxu0 0.0
  %2740 = vmatpush1.msra.mxu0 0.0
  %2741 = vmatprep.subr.mxu0 0.0
  %2742 = vmatpush1.msra.mxu0 0.0
  %2743 = vmatprep.subr.mxu0 0.0
  %2744 = vmatpush1.msra.mxu0 0.0
  %2745 = vmatprep.subr.mxu0 0.0
  %2746 = vmatpush1.msra.mxu0 0.0
  %2747 = vmatprep.subr.mxu0 0.0
  %2748 = vmatpush1.msra.mxu0 0.0
  %2749 = vmatprep.subr.mxu0 0.0
  %2750 = vmatpush1.msra.mxu0 0.0
  %2751 = vmatprep.subr.mxu0 0.0
  %2752 = vmatpush1.msra.mxu0 0.0
  %2753 = vmatprep.subr.mxu0 0.0
  %2754 = vmatpush1.msra.mxu0 0.0
  %2755 = vmatprep.subr.mxu0 0.0
  %2756 = vmatpush1.msra.mxu0 0.0
  %2757 = vmatprep.subr.mxu0 0.0
  %2758 = vmatpush1.msra.mxu0 0.0
  %2759 = vmatprep.mubr.f32.mxu0 0.0
  %2760 = vmatmul.mubr.f32.gmra.mrb[0].mxu0 %v2693
  %v2761 = vpop.f32.mrb[0].mxu0
  %v2762 = vadd.f32 %v115, %v2761
  %v2763 = vpop.f32.mrb[0].mxu0
  %2764 = vdwg.mxu0
  %2766 = vrot.lane.b32.xlu0 %v2762, 64
  %v2767 = vpop.permute.xlu0 %2766
  %2769 = vst.msk [vmem:[%s2 + $0x20] sm:$0x3] %vm1131, %v2767
  %v2770 = vmul.f32 %v2762, 0.5
  %v2771 = vtanh.pop %v2770
  %v2772 = vmul.f32 %v2771, 0.5
  %v2773 = vadd.f32 %v2772, 0.5
  %v2774 = vtanh.pop %v2762
  %v2775 = vmul.f32 %v2773, %v2683
  %2777 = vrot.lane.b32.xlu0 %v2774, 96
  %v2778 = vpop.permute.xlu0 %2777
  %v2780 = vmul.f32 %v2773, %v2778
  %2782 = vrot.lane.b32.xlu0 %v2780, 16
  %v2783 = vpop.permute.xlu0 %2782
  %v2785 = vadd.f32 %v2775, %v2783
  %v2786 = vtanh.pop %v2785
  %2788 = vrot.lane.b32.xlu0 %v2786, 32
  %v2789 = vpop.permute.xlu0 %2788
  %v2791 = vmul.f32 %v2773, %v2789
  %2793 = vrot.lane.b32.xlu0 %v2791, 80
  %v2794 = vpop.permute.xlu0 %2793
  %v2795 = vsel %vm116, %v2794, 0
  %2797 = vmatprep.subr.mxu0 0.0
  %2798 = vmatpush1.msra.mxu0 %v18
  %2799 = vmatprep.subr.mxu0 0.0
  %2800 = vmatpush1.msra.mxu0 %v19
  %2801 = vmatprep.subr.mxu0 0.0
  %2802 = vmatpush1.msra.mxu0 0.0
  %2803 = vmatprep.subr.mxu0 0.0
  %2804 = vmatpush1.msra.mxu0 0.0
  %2805 = vmatprep.subr.mxu0 0.0
  %2806 = vmatpush1.msra.mxu0 0.0
  %2807 = vmatprep.subr.mxu0 0.0
  %2808 = vmatpush1.msra.mxu0 0.0
  %2809 = vmatprep.subr.mxu0 0.0
  %2810 = vmatpush1.msra.mxu0 0.0
  %2811 = vmatprep.subr.mxu0 0.0
  %2812 = vmatpush1.msra.mxu0 0.0
  %2813 = vmatprep.subr.mxu0 0.0
  %2814 = vmatpush1.msra.mxu0 0.0
  %2815 = vmatprep.subr.mxu0 0.0
  %2816 = vmatpush1.msra.mxu0 0.0
  %2817 = vmatprep.subr.mxu0 0.0
  %2818 = vmatpush1.msra.mxu0 0.0
  %2819 = vmatprep.subr.mxu0 0.0
  %2820 = vmatpush1.msra.mxu0 0.0
  %2821 = vmatprep.subr.mxu0 0.0
  %2822 = vmatpush1.msra.mxu0 0.0
  %2823 = vmatprep.subr.mxu0 0.0
  %2824 = vmatpush1.msra.mxu0 0.0
  %2825 = vmatprep.subr.mxu0 0.0
  %2826 = vmatpush1.msra.mxu0 0.0
  %2827 = vmatprep.subr.mxu0 0.0
  %2828 = vmatpush1.msra.mxu0 0.0
  %2829 = vmatprep.subr.mxu0 0.0
  %2830 = vmatpush1.msra.mxu0 0.0
  %2831 = vmatprep.subr.mxu0 0.0
  %2832 = vmatpush1.msra.mxu0 0.0
  %2833 = vmatprep.subr.mxu0 0.0
  %2834 = vmatpush1.msra.mxu0 0.0
  %2835 = vmatprep.subr.mxu0 0.0
  %2836 = vmatpush1.msra.mxu0 0.0
  %2837 = vmatprep.subr.mxu0 0.0
  %2838 = vmatpush1.msra.mxu0 0.0
  %2839 = vmatprep.subr.mxu0 0.0
  %2840 = vmatpush1.msra.mxu0 0.0
  %2841 = vmatprep.subr.mxu0 0.0
  %2842 = vmatpush1.msra.mxu0 0.0
  %2843 = vmatprep.subr.mxu0 0.0
  %2844 = vmatpush1.msra.mxu0 0.0
  %2845 = vmatprep.subr.mxu0 0.0
  %2846 = vmatpush1.msra.mxu0 0.0
  %2847 = vmatprep.subr.mxu0 0.0
  %2848 = vmatpush1.msra.mxu0 0.0
  %2849 = vmatprep.subr.mxu0 0.0
  %2850 = vmatpush1.msra.mxu0 0.0
  %2851 = vmatprep.subr.mxu0 0.0
  %2852 = vmatpush1.msra.mxu0 0.0
  %2853 = vmatprep.subr.mxu0 0.0
  %2854 = vmatpush1.msra.mxu0 0.0
  %2855 = vmatprep.subr.mxu0 0.0
  %2856 = vmatpush1.msra.mxu0 0.0
  %2857 = vmatprep.subr.mxu0 0.0
  %2858 = vmatpush1.msra.mxu0 0.0
  %2859 = vmatprep.subr.mxu0 0.0
  %2860 = vmatpush1.msra.mxu0 0.0
  %2861 = vmatprep.mubr.f32.mxu0 0.0
  %2862 = vmatmul.mubr.f32.gmra.mrb[0].mxu0 %v2795
  %v2863 = vpop.f32.mrb[0].mxu0
  %v2864 = vadd.f32 %v115, %v2863
  %v2865 = vpop.f32.mrb[0].mxu0
  %2866 = vdwg.mxu0
  %2868 = vrot.lane.b32.xlu0 %v2864, 64
  %v2869 = vpop.permute.xlu0 %2868
  %2871 = vst.msk [vmem:[%s2 + $0x22] sm:$0x3] %vm1131, %v2869
  %v2872 = vmul.f32 %v2864, 0.5
  %v2873 = vtanh.pop %v2872
  %v2874 = vmul.f32 %v2873, 0.5
  %v2875 = vadd.f32 %v2874, 0.5
  %v2876 = vtanh.pop %v2864
  %v2877 = vmul.f32 %v2875, %v2785
  %2879 = vrot.lane.b32.xlu0 %v2876, 96
  %v2880 = vpop.permute.xlu0 %2879
  %v2882 = vmul.f32 %v2875, %v2880
  %2884 = vrot.lane.b32.xlu0 %v2882, 16
  %v2885 = vpop.permute.xlu0 %2884
  %v2887 = vadd.f32 %v2877, %v2885
  %v2888 = vtanh.pop %v2887
  %2890 = vrot.lane.b32.xlu0 %v2888, 32
  %v2891 = vpop.permute.xlu0 %2890
  %v2893 = vmul.f32 %v2875, %v2891
  %2895 = vrot.lane.b32.xlu0 %v2893, 80
  %v2896 = vpop.permute.xlu0 %2895
  %v2897 = vsel %vm116, %v2896, 0
  %2899 = vmatprep.subr.mxu0 0.0
  %2900 = vmatpush1.msra.mxu0 %v18
  %2901 = vmatprep.subr.mxu0 0.0
  %2902 = vmatpush1.msra.mxu0 %v19
  %2903 = vmatprep.subr.mxu0 0.0
  %2904 = vmatpush1.msra.mxu0 0.0
  %2905 = vmatprep.subr.mxu0 0.0
  %2906 = vmatpush1.msra.mxu0 0.0
  %2907 = vmatprep.subr.mxu0 0.0
  %2908 = vmatpush1.msra.mxu0 0.0
  %2909 = vmatprep.subr.mxu0 0.0
  %2910 = vmatpush1.msra.mxu0 0.0
  %2911 = vmatprep.subr.mxu0 0.0
  %2912 = vmatpush1.msra.mxu0 0.0
  %2913 = vmatprep.subr.mxu0 0.0
  %2914 = vmatpush1.msra.mxu0 0.0
  %2915 = vmatprep.subr.mxu0 0.0
  %2916 = vmatpush1.msra.mxu0 0.0
  %2917 = vmatprep.subr.mxu0 0.0
  %2918 = vmatpush1.msra.mxu0 0.0
  %2919 = vmatprep.subr.mxu0 0.0
  %2920 = vmatpush1.msra.mxu0 0.0
  %2921 = vmatprep.subr.mxu0 0.0
  %2922 = vmatpush1.msra.mxu0 0.0
  %2923 = vmatprep.subr.mxu0 0.0
  %2924 = vmatpush1.msra.mxu0 0.0
  %2925 = vmatprep.subr.mxu0 0.0
  %2926 = vmatpush1.msra.mxu0 0.0
  %2927 = vmatprep.subr.mxu0 0.0
  %2928 = vmatpush1.msra.mxu0 0.0
  %2929 = vmatprep.subr.mxu0 0.0
  %2930 = vmatpush1.msra.mxu0 0.0
  %2931 = vmatprep.subr.mxu0 0.0
  %2932 = vmatpush1.msra.mxu0 0.0
  %2933 = vmatprep.subr.mxu0 0.0
  %2934 = vmatpush1.msra.mxu0 0.0
  %2935 = vmatprep.subr.mxu0 0.0
  %2936 = vmatpush1.msra.mxu0 0.0
  %2937 = vmatprep.subr.mxu0 0.0
  %2938 = vmatpush1.msra.mxu0 0.0
  %2939 = vmatprep.subr.mxu0 0.0
  %2940 = vmatpush1.msra.mxu0 0.0
  %2941 = vmatprep.subr.mxu0 0.0
  %2942 = vmatpush1.msra.mxu0 0.0
  %2943 = vmatprep.subr.mxu0 0.0
  %2944 = vmatpush1.msra.mxu0 0.0
  %2945 = vmatprep.subr.mxu0 0.0
  %2946 = vmatpush1.msra.mxu0 0.0
  %2947 = vmatprep.subr.mxu0 0.0
  %2948 = vmatpush1.msra.mxu0 0.0
  %2949 = vmatprep.subr.mxu0 0.0
  %2950 = vmatpush1.msra.mxu0 0.0
  %2951 = vmatprep.subr.mxu0 0.0
  %2952 = vmatpush1.msra.mxu0 0.0
  %2953 = vmatprep.subr.mxu0 0.0
  %2954 = vmatpush1.msra.mxu0 0.0
  %2955 = vmatprep.subr.mxu0 0.0
  %2956 = vmatpush1.msra.mxu0 0.0
  %2957 = vmatprep.subr.mxu0 0.0
  %2958 = vmatpush1.msra.mxu0 0.0
  %2959 = vmatprep.subr.mxu0 0.0
  %2960 = vmatpush1.msra.mxu0 0.0
  %2961 = vmatprep.subr.mxu0 0.0
  %2962 = vmatpush1.msra.mxu0 0.0
  %2963 = vmatprep.mubr.f32.mxu0 0.0
  %2964 = vmatmul.mubr.f32.gmra.mrb[0].mxu0 %v2897
  %v2965 = vpop.f32.mrb[0].mxu0
  %v2966 = vadd.f32 %v115, %v2965
  %v2967 = vpop.f32.mrb[0].mxu0
  %2968 = vdwg.mxu0
  %2970 = vrot.lane.b32.xlu0 %v2966, 64
  %v2971 = vpop.permute.xlu0 %2970
  %2973 = vst.msk [vmem:[%s2 + $0x24] sm:$0x3] %vm1131, %v2971
  %v2974 = vmul.f32 %v2966, 0.5
  %v2975 = vtanh.pop %v2974
  %v2976 = vmul.f32 %v2975, 0.5
  %v2977 = vadd.f32 %v2976, 0.5
  %v2978 = vtanh.pop %v2966
  %v2979 = vmul.f32 %v2977, %v2887
  %2981 = vrot.lane.b32.xlu0 %v2978, 96
  %v2982 = vpop.permute.xlu0 %2981
  %v2984 = vmul.f32 %v2977, %v2982
  %2986 = vrot.lane.b32.xlu0 %v2984, 16
  %v2987 = vpop.permute.xlu0 %2986
  %v2989 = vadd.f32 %v2979, %v2987
  %v2990 = vtanh.pop %v2989
  %2992 = vrot.lane.b32.xlu0 %v2990, 32
  %v2993 = vpop.permute.xlu0 %2992
  %v2995 = vmul.f32 %v2977, %v2993
  %2997 = vrot.lane.b32.xlu0 %v2995, 80
  %v2998 = vpop.permute.xlu0 %2997
  %v2999 = vsel %vm116, %v2998, 0
  %3001 = vmatprep.subr.mxu0 0.0
  %3002 = vmatpush1.msra.mxu0 %v18
  %3003 = vmatprep.subr.mxu0 0.0
  %3004 = vmatpush1.msra.mxu0 %v19
  %3005 = vmatprep.subr.mxu0 0.0
  %3006 = vmatpush1.msra.mxu0 0.0
  %3007 = vmatprep.subr.mxu0 0.0
  %3008 = vmatpush1.msra.mxu0 0.0
  %3009 = vmatprep.subr.mxu0 0.0
  %3010 = vmatpush1.msra.mxu0 0.0
  %3011 = vmatprep.subr.mxu0 0.0
  %3012 = vmatpush1.msra.mxu0 0.0
  %3013 = vmatprep.subr.mxu0 0.0
  %3014 = vmatpush1.msra.mxu0 0.0
  %3015 = vmatprep.subr.mxu0 0.0
  %3016 = vmatpush1.msra.mxu0 0.0
  %3017 = vmatprep.subr.mxu0 0.0
  %3018 = vmatpush1.msra.mxu0 0.0
  %3019 = vmatprep.subr.mxu0 0.0
  %3020 = vmatpush1.msra.mxu0 0.0
  %3021 = vmatprep.subr.mxu0 0.0
  %3022 = vmatpush1.msra.mxu0 0.0
  %3023 = vmatprep.subr.mxu0 0.0
  %3024 = vmatpush1.msra.mxu0 0.0
  %3025 = vmatprep.subr.mxu0 0.0
  %3026 = vmatpush1.msra.mxu0 0.0
  %3027 = vmatprep.subr.mxu0 0.0
  %3028 = vmatpush1.msra.mxu0 0.0
  %3029 = vmatprep.subr.mxu0 0.0
  %3030 = vmatpush1.msra.mxu0 0.0
  %3031 = vmatprep.subr.mxu0 0.0
  %3032 = vmatpush1.msra.mxu0 0.0
  %3033 = vmatprep.subr.mxu0 0.0
  %3034 = vmatpush1.msra.mxu0 0.0
  %3035 = vmatprep.subr.mxu0 0.0
  %3036 = vmatpush1.msra.mxu0 0.0
  %3037 = vmatprep.subr.mxu0 0.0
  %3038 = vmatpush1.msra.mxu0 0.0
  %3039 = vmatprep.subr.mxu0 0.0
  %3040 = vmatpush1.msra.mxu0 0.0
  %3041 = vmatprep.subr.mxu0 0.0
  %3042 = vmatpush1.msra.mxu0 0.0
  %3043 = vmatprep.subr.mxu0 0.0
  %3044 = vmatpush1.msra.mxu0 0.0
  %3045 = vmatprep.subr.mxu0 0.0
  %3046 = vmatpush1.msra.mxu0 0.0
  %3047 = vmatprep.subr.mxu0 0.0
  %3048 = vmatpush1.msra.mxu0 0.0
  %3049 = vmatprep.subr.mxu0 0.0
  %3050 = vmatpush1.msra.mxu0 0.0
  %3051 = vmatprep.subr.mxu0 0.0
  %3052 = vmatpush1.msra.mxu0 0.0
  %3053 = vmatprep.subr.mxu0 0.0
  %3054 = vmatpush1.msra.mxu0 0.0
  %3055 = vmatprep.subr.mxu0 0.0
  %3056 = vmatpush1.msra.mxu0 0.0
  %3057 = vmatprep.subr.mxu0 0.0
  %3058 = vmatpush1.msra.mxu0 0.0
  %3059 = vmatprep.subr.mxu0 0.0
  %3060 = vmatpush1.msra.mxu0 0.0
  %3061 = vmatprep.subr.mxu0 0.0
  %3062 = vmatpush1.msra.mxu0 0.0
  %3063 = vmatprep.subr.mxu0 0.0
  %3064 = vmatpush1.msra.mxu0 0.0
  %3065 = vmatprep.mubr.f32.mxu0 0.0
  %3066 = vmatmul.mubr.f32.gmra.mrb[0].mxu0 %v2999
  %v3067 = vpop.f32.mrb[0].mxu0
  %v3068 = vadd.f32 %v115, %v3067
  %v3069 = vpop.f32.mrb[0].mxu0
  %3070 = vdwg.mxu0
  %3072 = vrot.lane.b32.xlu0 %v3068, 64
  %v3073 = vpop.permute.xlu0 %3072
  %3075 = vst.msk [vmem:[%s2 + $0x26] sm:$0x3] %vm1131, %v3073
  %v3076 = vmul.f32 %v3068, 0.5
  %v3077 = vtanh.pop %v3076
  %v3078 = vmul.f32 %v3077, 0.5
  %v3079 = vadd.f32 %v3078, 0.5
  %v3080 = vtanh.pop %v3068
  %v3081 = vmul.f32 %v3079, %v2989
  %3083 = vrot.lane.b32.xlu0 %v3080, 96
  %v3084 = vpop.permute.xlu0 %3083
  %v3086 = vmul.f32 %v3079, %v3084
  %3088 = vrot.lane.b32.xlu0 %v3086, 16
  %v3089 = vpop.permute.xlu0 %3088
  %v3091 = vadd.f32 %v3081, %v3089
  %v3092 = vtanh.pop %v3091
  %3094 = vrot.lane.b32.xlu0 %v3092, 32
  %v3095 = vpop.permute.xlu0 %3094
  %v3097 = vmul.f32 %v3079, %v3095
  %3099 = vrot.lane.b32.xlu0 %v3097, 80
  %v3100 = vpop.permute.xlu0 %3099
  %v3101 = vsel %vm116, %v3100, 0
  %3103 = vmatprep.subr.mxu0 0.0
  %3104 = vmatpush1.msra.mxu0 %v18
  %3105 = vmatprep.subr.mxu0 0.0
  %3106 = vmatpush1.msra.mxu0 %v19
  %3107 = vmatprep.subr.mxu0 0.0
  %3108 = vmatpush1.msra.mxu0 0.0
  %3109 = vmatprep.subr.mxu0 0.0
  %3110 = vmatpush1.msra.mxu0 0.0
  %3111 = vmatprep.subr.mxu0 0.0
  %3112 = vmatpush1.msra.mxu0 0.0
  %3113 = vmatprep.subr.mxu0 0.0
  %3114 = vmatpush1.msra.mxu0 0.0
  %3115 = vmatprep.subr.mxu0 0.0
  %3116 = vmatpush1.msra.mxu0 0.0
  %3117 = vmatprep.subr.mxu0 0.0
  %3118 = vmatpush1.msra.mxu0 0.0
  %3119 = vmatprep.subr.mxu0 0.0
  %3120 = vmatpush1.msra.mxu0 0.0
  %3121 = vmatprep.subr.mxu0 0.0
  %3122 = vmatpush1.msra.mxu0 0.0
  %3123 = vmatprep.subr.mxu0 0.0
  %3124 = vmatpush1.msra.mxu0 0.0
  %3125 = vmatprep.subr.mxu0 0.0
  %3126 = vmatpush1.msra.mxu0 0.0
  %3127 = vmatprep.subr.mxu0 0.0
  %3128 = vmatpush1.msra.mxu0 0.0
  %3129 = vmatprep.subr.mxu0 0.0
  %3130 = vmatpush1.msra.mxu0 0.0
  %3131 = vmatprep.subr.mxu0 0.0
  %3132 = vmatpush1.msra.mxu0 0.0
  %3133 = vmatprep.subr.mxu0 0.0
  %3134 = vmatpush1.msra.mxu0 0.0
  %3135 = vmatprep.subr.mxu0 0.0
  %3136 = vmatpush1.msra.mxu0 0.0
  %3137 = vmatprep.subr.mxu0 0.0
  %3138 = vmatpush1.msra.mxu0 0.0
  %3139 = vmatprep.subr.mxu0 0.0
  %3140 = vmatpush1.msra.mxu0 0.0
  %3141 = vmatprep.subr.mxu0 0.0
  %3142 = vmatpush1.msra.mxu0 0.0
  %3143 = vmatprep.subr.mxu0 0.0
  %3144 = vmatpush1.msra.mxu0 0.0
  %3145 = vmatprep.subr.mxu0 0.0
  %3146 = vmatpush1.msra.mxu0 0.0
  %3147 = vmatprep.subr.mxu0 0.0
  %3148 = vmatpush1.msra.mxu0 0.0
  %3149 = vmatprep.subr.mxu0 0.0
  %3150 = vmatpush1.msra.mxu0 0.0
  %3151 = vmatprep.subr.mxu0 0.0
  %3152 = vmatpush1.msra.mxu0 0.0
  %3153 = vmatprep.subr.mxu0 0.0
  %3154 = vmatpush1.msra.mxu0 0.0
  %3155 = vmatprep.subr.mxu0 0.0
  %3156 = vmatpush1.msra.mxu0 0.0
  %3157 = vmatprep.subr.mxu0 0.0
  %3158 = vmatpush1.msra.mxu0 0.0
  %3159 = vmatprep.subr.mxu0 0.0
  %3160 = vmatpush1.msra.mxu0 0.0
  %3161 = vmatprep.subr.mxu0 0.0
  %3162 = vmatpush1.msra.mxu0 0.0
  %3163 = vmatprep.subr.mxu0 0.0
  %3164 = vmatpush1.msra.mxu0 0.0
  %3165 = vmatprep.subr.mxu0 0.0
  %3166 = vmatpush1.msra.mxu0 0.0
  %3167 = vmatprep.mubr.f32.mxu0 0.0
  %3168 = vmatmul.mubr.f32.gmra.mrb[0].mxu0 %v3101
  %v3169 = vpop.f32.mrb[0].mxu0
  %v3170 = vadd.f32 %v115, %v3169
  %v3171 = vpop.f32.mrb[0].mxu0
  %3172 = vdwg.mxu0
  %3174 = vrot.lane.b32.xlu0 %v3170, 64
  %v3175 = vpop.permute.xlu0 %3174
  %3177 = vst.msk [vmem:[%s2 + $0x28] sm:$0x3] %vm1131, %v3175
  %v3178 = vmul.f32 %v3170, 0.5
  %v3179 = vtanh.pop %v3178
  %v3180 = vmul.f32 %v3179, 0.5
  %v3181 = vadd.f32 %v3180, 0.5
  %v3182 = vtanh.pop %v3170
  %v3183 = vmul.f32 %v3181, %v3091
  %3185 = vrot.lane.b32.xlu0 %v3182, 96
  %v3186 = vpop.permute.xlu0 %3185
  %v3188 = vmul.f32 %v3181, %v3186
  %3190 = vrot.lane.b32.xlu0 %v3188, 16
  %v3191 = vpop.permute.xlu0 %3190
  %v3193 = vadd.f32 %v3183, %v3191
  %v3194 = vtanh.pop %v3193
  %3196 = vrot.lane.b32.xlu0 %v3194, 32
  %v3197 = vpop.permute.xlu0 %3196
  %v3199 = vmul.f32 %v3181, %v3197
  %3201 = vrot.lane.b32.xlu0 %v3199, 80
  %v3202 = vpop.permute.xlu0 %3201
  %v3203 = vsel %vm116, %v3202, 0
  %3205 = vmatprep.subr.mxu0 0.0
  %3206 = vmatpush1.msra.mxu0 %v18
  %3207 = vmatprep.subr.mxu0 0.0
  %3208 = vmatpush1.msra.mxu0 %v19
  %3209 = vmatprep.subr.mxu0 0.0
  %3210 = vmatpush1.msra.mxu0 0.0
  %3211 = vmatprep.subr.mxu0 0.0
  %3212 = vmatpush1.msra.mxu0 0.0
  %3213 = vmatprep.subr.mxu0 0.0
  %3214 = vmatpush1.msra.mxu0 0.0
  %3215 = vmatprep.subr.mxu0 0.0
  %3216 = vmatpush1.msra.mxu0 0.0
  %3217 = vmatprep.subr.mxu0 0.0
  %3218 = vmatpush1.msra.mxu0 0.0
  %3219 = vmatprep.subr.mxu0 0.0
  %3220 = vmatpush1.msra.mxu0 0.0
  %3221 = vmatprep.subr.mxu0 0.0
  %3222 = vmatpush1.msra.mxu0 0.0
  %3223 = vmatprep.subr.mxu0 0.0
  %3224 = vmatpush1.msra.mxu0 0.0
  %3225 = vmatprep.subr.mxu0 0.0
  %3226 = vmatpush1.msra.mxu0 0.0
  %3227 = vmatprep.subr.mxu0 0.0
  %3228 = vmatpush1.msra.mxu0 0.0
  %3229 = vmatprep.subr.mxu0 0.0
  %3230 = vmatpush1.msra.mxu0 0.0
  %3231 = vmatprep.subr.mxu0 0.0
  %3232 = vmatpush1.msra.mxu0 0.0
  %3233 = vmatprep.subr.mxu0 0.0
  %3234 = vmatpush1.msra.mxu0 0.0
  %3235 = vmatprep.subr.mxu0 0.0
  %3236 = vmatpush1.msra.mxu0 0.0
  %3237 = vmatprep.subr.mxu0 0.0
  %3238 = vmatpush1.msra.mxu0 0.0
  %3239 = vmatprep.subr.mxu0 0.0
  %3240 = vmatpush1.msra.mxu0 0.0
  %3241 = vmatprep.subr.mxu0 0.0
  %3242 = vmatpush1.msra.mxu0 0.0
  %3243 = vmatprep.subr.mxu0 0.0
  %3244 = vmatpush1.msra.mxu0 0.0
  %3245 = vmatprep.subr.mxu0 0.0
  %3246 = vmatpush1.msra.mxu0 0.0
  %3247 = vmatprep.subr.mxu0 0.0
  %3248 = vmatpush1.msra.mxu0 0.0
  %3249 = vmatprep.subr.mxu0 0.0
  %3250 = vmatpush1.msra.mxu0 0.0
  %3251 = vmatprep.subr.mxu0 0.0
  %3252 = vmatpush1.msra.mxu0 0.0
  %3253 = vmatprep.subr.mxu0 0.0
  %3254 = vmatpush1.msra.mxu0 0.0
  %3255 = vmatprep.subr.mxu0 0.0
  %3256 = vmatpush1.msra.mxu0 0.0
  %3257 = vmatprep.subr.mxu0 0.0
  %3258 = vmatpush1.msra.mxu0 0.0
  %3259 = vmatprep.subr.mxu0 0.0
  %3260 = vmatpush1.msra.mxu0 0.0
  %3261 = vmatprep.subr.mxu0 0.0
  %3262 = vmatpush1.msra.mxu0 0.0
  %3263 = vmatprep.subr.mxu0 0.0
  %3264 = vmatpush1.msra.mxu0 0.0
  %3265 = vmatprep.subr.mxu0 0.0
  %3266 = vmatpush1.msra.mxu0 0.0
  %3267 = vmatprep.subr.mxu0 0.0
  %3268 = vmatpush1.msra.mxu0 0.0
  %3269 = vmatprep.mubr.f32.mxu0 0.0
  %3270 = vmatmul.mubr.f32.gmra.mrb[0].mxu0 %v3203
  %v3271 = vpop.f32.mrb[0].mxu0
  %v3272 = vadd.f32 %v115, %v3271
  %v3273 = vpop.f32.mrb[0].mxu0
  %3274 = vdwg.mxu0
  %3276 = vrot.lane.b32.xlu0 %v3272, 64
  %v3277 = vpop.permute.xlu0 %3276
  %3279 = vst.msk [vmem:[%s2 + $0x2a] sm:$0x3] %vm1131, %v3277
  %v3280 = vmul.f32 %v3272, 0.5
  %v3281 = vtanh.pop %v3280
  %v3282 = vmul.f32 %v3281, 0.5
  %v3283 = vadd.f32 %v3282, 0.5
  %v3284 = vtanh.pop %v3272
  %v3285 = vmul.f32 %v3283, %v3193
  %3287 = vrot.lane.b32.xlu0 %v3284, 96
  %v3288 = vpop.permute.xlu0 %3287
  %v3290 = vmul.f32 %v3283, %v3288
  %3292 = vrot.lane.b32.xlu0 %v3290, 16
  %v3293 = vpop.permute.xlu0 %3292
  %v3295 = vadd.f32 %v3285, %v3293
  %v3296 = vtanh.pop %v3295
  %3298 = vrot.lane.b32.xlu0 %v3296, 32
  %v3299 = vpop.permute.xlu0 %3298
  %v3301 = vmul.f32 %v3283, %v3299
  %3303 = vrot.lane.b32.xlu0 %v3301, 80
  %v3304 = vpop.permute.xlu0 %3303
  %v3305 = vsel %vm116, %v3304, 0
  %3307 = vmatprep.subr.mxu0 0.0
  %3308 = vmatpush1.msra.mxu0 %v18
  %3309 = vmatprep.subr.mxu0 0.0
  %3310 = vmatpush1.msra.mxu0 %v19
  %3311 = vmatprep.subr.mxu0 0.0
  %3312 = vmatpush1.msra.mxu0 0.0
  %3313 = vmatprep.subr.mxu0 0.0
  %3314 = vmatpush1.msra.mxu0 0.0
  %3315 = vmatprep.subr.mxu0 0.0
  %3316 = vmatpush1.msra.mxu0 0.0
  %3317 = vmatprep.subr.mxu0 0.0
  %3318 = vmatpush1.msra.mxu0 0.0
  %3319 = vmatprep.subr.mxu0 0.0
  %3320 = vmatpush1.msra.mxu0 0.0
  %3321 = vmatprep.subr.mxu0 0.0
  %3322 = vmatpush1.msra.mxu0 0.0
  %3323 = vmatprep.subr.mxu0 0.0
  %3324 = vmatpush1.msra.mxu0 0.0
  %3325 = vmatprep.subr.mxu0 0.0
  %3326 = vmatpush1.msra.mxu0 0.0
  %3327 = vmatprep.subr.mxu0 0.0
  %3328 = vmatpush1.msra.mxu0 0.0
  %3329 = vmatprep.subr.mxu0 0.0
  %3330 = vmatpush1.msra.mxu0 0.0
  %3331 = vmatprep.subr.mxu0 0.0
  %3332 = vmatpush1.msra.mxu0 0.0
  %3333 = vmatprep.subr.mxu0 0.0
  %3334 = vmatpush1.msra.mxu0 0.0
  %3335 = vmatprep.subr.mxu0 0.0
  %3336 = vmatpush1.msra.mxu0 0.0
  %3337 = vmatprep.subr.mxu0 0.0
  %3338 = vmatpush1.msra.mxu0 0.0
  %3339 = vmatprep.subr.mxu0 0.0
  %3340 = vmatpush1.msra.mxu0 0.0
  %3341 = vmatprep.subr.mxu0 0.0
  %3342 = vmatpush1.msra.mxu0 0.0
  %3343 = vmatprep.subr.mxu0 0.0
  %3344 = vmatpush1.msra.mxu0 0.0
  %3345 = vmatprep.subr.mxu0 0.0
  %3346 = vmatpush1.msra.mxu0 0.0
  %3347 = vmatprep.subr.mxu0 0.0
  %3348 = vmatpush1.msra.mxu0 0.0
  %3349 = vmatprep.subr.mxu0 0.0
  %3350 = vmatpush1.msra.mxu0 0.0
  %3351 = vmatprep.subr.mxu0 0.0
  %3352 = vmatpush1.msra.mxu0 0.0
  %3353 = vmatprep.subr.mxu0 0.0
  %3354 = vmatpush1.msra.mxu0 0.0
  %3355 = vmatprep.subr.mxu0 0.0
  %3356 = vmatpush1.msra.mxu0 0.0
  %3357 = vmatprep.subr.mxu0 0.0
  %3358 = vmatpush1.msra.mxu0 0.0
  %3359 = vmatprep.subr.mxu0 0.0
  %3360 = vmatpush1.msra.mxu0 0.0
  %3361 = vmatprep.subr.mxu0 0.0
  %3362 = vmatpush1.msra.mxu0 0.0
  %3363 = vmatprep.subr.mxu0 0.0
  %3364 = vmatpush1.msra.mxu0 0.0
  %3365 = vmatprep.subr.mxu0 0.0
  %3366 = vmatpush1.msra.mxu0 0.0
  %3367 = vmatprep.subr.mxu0 0.0
  %3368 = vmatpush1.msra.mxu0 0.0
  %3369 = vmatprep.subr.mxu0 0.0
  %3370 = vmatpush1.msra.mxu0 0.0
  %3371 = vmatprep.mubr.f32.mxu0 0.0
  %3372 = vmatmul.mubr.f32.gmra.mrb[0].mxu0 %v3305
  %v3373 = vpop.f32.mrb[0].mxu0
  %v3374 = vadd.f32 %v115, %v3373
  %v3375 = vpop.f32.mrb[0].mxu0
  %3376 = vdwg.mxu0
  %3378 = vrot.lane.b32.xlu0 %v3374, 64
  %v3379 = vpop.permute.xlu0 %3378
  %3381 = vst.msk [vmem:[%s2 + $0x2c] sm:$0x3] %vm1131, %v3379
  %v3382 = vmul.f32 %v3374, 0.5
  %v3383 = vtanh.pop %v3382
  %v3384 = vmul.f32 %v3383, 0.5
  %v3385 = vadd.f32 %v3384, 0.5
  %v3386 = vtanh.pop %v3374
  %v3387 = vmul.f32 %v3385, %v3295
  %3389 = vrot.lane.b32.xlu0 %v3386, 96
  %v3390 = vpop.permute.xlu0 %3389
  %v3392 = vmul.f32 %v3385, %v3390
  %3394 = vrot.lane.b32.xlu0 %v3392, 16
  %v3395 = vpop.permute.xlu0 %3394
  %v3397 = vadd.f32 %v3387, %v3395
  %v3398 = vtanh.pop %v3397
  %3400 = vrot.lane.b32.xlu0 %v3398, 32
  %v3401 = vpop.permute.xlu0 %3400
  %v3403 = vmul.f32 %v3385, %v3401
  %3405 = vrot.lane.b32.xlu0 %v3403, 80
  %v3406 = vpop.permute.xlu0 %3405
  %v3407 = vsel %vm116, %v3406, 0
  %3409 = vmatprep.subr.mxu0 0.0
  %3410 = vmatpush1.msra.mxu0 %v18
  %3411 = vmatprep.subr.mxu0 0.0
  %3412 = vmatpush1.msra.mxu0 %v19
  %3413 = vmatprep.subr.mxu0 0.0
  %3414 = vmatpush1.msra.mxu0 0.0
  %3415 = vmatprep.subr.mxu0 0.0
  %3416 = vmatpush1.msra.mxu0 0.0
  %3417 = vmatprep.subr.mxu0 0.0
  %3418 = vmatpush1.msra.mxu0 0.0
  %3419 = vmatprep.subr.mxu0 0.0
  %3420 = vmatpush1.msra.mxu0 0.0
  %3421 = vmatprep.subr.mxu0 0.0
  %3422 = vmatpush1.msra.mxu0 0.0
  %3423 = vmatprep.subr.mxu0 0.0
  %3424 = vmatpush1.msra.mxu0 0.0
  %3425 = vmatprep.subr.mxu0 0.0
  %3426 = vmatpush1.msra.mxu0 0.0
  %3427 = vmatprep.subr.mxu0 0.0
  %3428 = vmatpush1.msra.mxu0 0.0
  %3429 = vmatprep.subr.mxu0 0.0
  %3430 = vmatpush1.msra.mxu0 0.0
  %3431 = vmatprep.subr.mxu0 0.0
  %3432 = vmatpush1.msra.mxu0 0.0
  %3433 = vmatprep.subr.mxu0 0.0
  %3434 = vmatpush1.msra.mxu0 0.0
  %3435 = vmatprep.subr.mxu0 0.0
  %3436 = vmatpush1.msra.mxu0 0.0
  %3437 = vmatprep.subr.mxu0 0.0
  %3438 = vmatpush1.msra.mxu0 0.0
  %3439 = vmatprep.subr.mxu0 0.0
  %3440 = vmatpush1.msra.mxu0 0.0
  %3441 = vmatprep.subr.mxu0 0.0
  %3442 = vmatpush1.msra.mxu0 0.0
  %3443 = vmatprep.subr.mxu0 0.0
  %3444 = vmatpush1.msra.mxu0 0.0
  %3445 = vmatprep.subr.mxu0 0.0
  %3446 = vmatpush1.msra.mxu0 0.0
  %3447 = vmatprep.subr.mxu0 0.0
  %3448 = vmatpush1.msra.mxu0 0.0
  %3449 = vmatprep.subr.mxu0 0.0
  %3450 = vmatpush1.msra.mxu0 0.0
  %3451 = vmatprep.subr.mxu0 0.0
  %3452 = vmatpush1.msra.mxu0 0.0
  %3453 = vmatprep.subr.mxu0 0.0
  %3454 = vmatpush1.msra.mxu0 0.0
  %3455 = vmatprep.subr.mxu0 0.0
  %3456 = vmatpush1.msra.mxu0 0.0
  %3457 = vmatprep.subr.mxu0 0.0
  %3458 = vmatpush1.msra.mxu0 0.0
  %3459 = vmatprep.subr.mxu0 0.0
  %3460 = vmatpush1.msra.mxu0 0.0
  %3461 = vmatprep.subr.mxu0 0.0
  %3462 = vmatpush1.msra.mxu0 0.0
  %3463 = vmatprep.subr.mxu0 0.0
  %3464 = vmatpush1.msra.mxu0 0.0
  %3465 = vmatprep.subr.mxu0 0.0
  %3466 = vmatpush1.msra.mxu0 0.0
  %3467 = vmatprep.subr.mxu0 0.0
  %3468 = vmatpush1.msra.mxu0 0.0
  %3469 = vmatprep.subr.mxu0 0.0
  %3470 = vmatpush1.msra.mxu0 0.0
  %3471 = vmatprep.subr.mxu0 0.0
  %3472 = vmatpush1.msra.mxu0 0.0
  %3473 = vmatprep.mubr.f32.mxu0 0.0
  %3474 = vmatmul.mubr.f32.gmra.mrb[0].mxu0 %v3407
  %v3475 = vpop.f32.mrb[0].mxu0
  %v3476 = vadd.f32 %v115, %v3475
  %v3477 = vpop.f32.mrb[0].mxu0
  %3478 = vdwg.mxu0
  %3480 = vrot.lane.b32.xlu0 %v3476, 64
  %v3481 = vpop.permute.xlu0 %3480
  %3483 = vst.msk [vmem:[%s2 + $0x2e] sm:$0x3] %vm1131, %v3481
  %v3484 = vmul.f32 %v3476, 0.5
  %v3485 = vtanh.pop %v3484
  %v3486 = vmul.f32 %v3485, 0.5
  %v3487 = vadd.f32 %v3486, 0.5
  %v3488 = vtanh.pop %v3476
  %v3489 = vmul.f32 %v3487, %v3397
  %3491 = vrot.lane.b32.xlu0 %v3488, 96
  %v3492 = vpop.permute.xlu0 %3491
  %v3494 = vmul.f32 %v3487, %v3492
  %3496 = vrot.lane.b32.xlu0 %v3494, 16
  %v3497 = vpop.permute.xlu0 %3496
  %v3499 = vadd.f32 %v3489, %v3497
  %v3500 = vtanh.pop %v3499
  %3502 = vrot.lane.b32.xlu0 %v3500, 32
  %v3503 = vpop.permute.xlu0 %3502
  %v3505 = vmul.f32 %v3487, %v3503
  %3507 = vrot.lane.b32.xlu0 %v3505, 80
  %v3508 = vpop.permute.xlu0 %3507
  %v3509 = vsel %vm116, %v3508, 0
  %3511 = vmatprep.subr.mxu0 0.0
  %3512 = vmatpush1.msra.mxu0 %v18
  %3513 = vmatprep.subr.mxu0 0.0
  %3514 = vmatpush1.msra.mxu0 %v19
  %3515 = vmatprep.subr.mxu0 0.0
  %3516 = vmatpush1.msra.mxu0 0.0
  %3517 = vmatprep.subr.mxu0 0.0
  %3518 = vmatpush1.msra.mxu0 0.0
  %3519 = vmatprep.subr.mxu0 0.0
  %3520 = vmatpush1.msra.mxu0 0.0
  %3521 = vmatprep.subr.mxu0 0.0
  %3522 = vmatpush1.msra.mxu0 0.0
  %3523 = vmatprep.subr.mxu0 0.0
  %3524 = vmatpush1.msra.mxu0 0.0
  %3525 = vmatprep.subr.mxu0 0.0
  %3526 = vmatpush1.msra.mxu0 0.0
  %3527 = vmatprep.subr.mxu0 0.0
  %3528 = vmatpush1.msra.mxu0 0.0
  %3529 = vmatprep.subr.mxu0 0.0
  %3530 = vmatpush1.msra.mxu0 0.0
  %3531 = vmatprep.subr.mxu0 0.0
  %3532 = vmatpush1.msra.mxu0 0.0
  %3533 = vmatprep.subr.mxu0 0.0
  %3534 = vmatpush1.msra.mxu0 0.0
  %3535 = vmatprep.subr.mxu0 0.0
  %3536 = vmatpush1.msra.mxu0 0.0
  %3537 = vmatprep.subr.mxu0 0.0
  %3538 = vmatpush1.msra.mxu0 0.0
  %3539 = vmatprep.subr.mxu0 0.0
  %3540 = vmatpush1.msra.mxu0 0.0
  %3541 = vmatprep.subr.mxu0 0.0
  %3542 = vmatpush1.msra.mxu0 0.0
  %3543 = vmatprep.subr.mxu0 0.0
  %3544 = vmatpush1.msra.mxu0 0.0
  %3545 = vmatprep.subr.mxu0 0.0
  %3546 = vmatpush1.msra.mxu0 0.0
  %3547 = vmatprep.subr.mxu0 0.0
  %3548 = vmatpush1.msra.mxu0 0.0
  %3549 = vmatprep.subr.mxu0 0.0
  %3550 = vmatpush1.msra.mxu0 0.0
  %3551 = vmatprep.subr.mxu0 0.0
  %3552 = vmatpush1.msra.mxu0 0.0
  %3553 = vmatprep.subr.mxu0 0.0
  %3554 = vmatpush1.msra.mxu0 0.0
  %3555 = vmatprep.subr.mxu0 0.0
  %3556 = vmatpush1.msra.mxu0 0.0
  %3557 = vmatprep.subr.mxu0 0.0
  %3558 = vmatpush1.msra.mxu0 0.0
  %3559 = vmatprep.subr.mxu0 0.0
  %3560 = vmatpush1.msra.mxu0 0.0
  %3561 = vmatprep.subr.mxu0 0.0
  %3562 = vmatpush1.msra.mxu0 0.0
  %3563 = vmatprep.subr.mxu0 0.0
  %3564 = vmatpush1.msra.mxu0 0.0
  %3565 = vmatprep.subr.mxu0 0.0
  %3566 = vmatpush1.msra.mxu0 0.0
  %3567 = vmatprep.subr.mxu0 0.0
  %3568 = vmatpush1.msra.mxu0 0.0
  %3569 = vmatprep.subr.mxu0 0.0
  %3570 = vmatpush1.msra.mxu0 0.0
  %3571 = vmatprep.subr.mxu0 0.0
  %3572 = vmatpush1.msra.mxu0 0.0
  %3573 = vmatprep.subr.mxu0 0.0
  %3574 = vmatpush1.msra.mxu0 0.0
  %3575 = vmatprep.mubr.f32.mxu0 0.0
  %3576 = vmatmul.mubr.f32.gmra.mrb[0].mxu0 %v3509
  %v3577 = vpop.f32.mrb[0].mxu0
  %v3578 = vadd.f32 %v115, %v3577
  %v3579 = vpop.f32.mrb[0].mxu0
  %3580 = vdwg.mxu0
  %3582 = vrot.lane.b32.xlu0 %v3578, 64
  %v3583 = vpop.permute.xlu0 %3582
  %3585 = vst.msk [vmem:[%s2 + $0x30] sm:$0x3] %vm1131, %v3583
  %v3586 = vmul.f32 %v3578, 0.5
  %v3587 = vtanh.pop %v3586
  %v3588 = vmul.f32 %v3587, 0.5
  %v3589 = vadd.f32 %v3588, 0.5
  %v3590 = vtanh.pop %v3578
  %v3591 = vmul.f32 %v3589, %v3499
  %3593 = vrot.lane.b32.xlu0 %v3590, 96
  %v3594 = vpop.permute.xlu0 %3593
  %v3596 = vmul.f32 %v3589, %v3594
  %3598 = vrot.lane.b32.xlu0 %v3596, 16
  %v3599 = vpop.permute.xlu0 %3598
  %v3601 = vadd.f32 %v3591, %v3599
  %v3602 = vtanh.pop %v3601
  %3604 = vrot.lane.b32.xlu0 %v3602, 32
  %v3605 = vpop.permute.xlu0 %3604
  %v3607 = vmul.f32 %v3589, %v3605
  %3609 = vrot.lane.b32.xlu0 %v3607, 80
  %v3610 = vpop.permute.xlu0 %3609
  %v3611 = vsel %vm116, %v3610, 0
  %3613 = vmatprep.subr.mxu0 0.0
  %3614 = vmatpush1.msra.mxu0 %v18
  %3615 = vmatprep.subr.mxu0 0.0
  %3616 = vmatpush1.msra.mxu0 %v19
  %3617 = vmatprep.subr.mxu0 0.0
  %3618 = vmatpush1.msra.mxu0 0.0
  %3619 = vmatprep.subr.mxu0 0.0
  %3620 = vmatpush1.msra.mxu0 0.0
  %3621 = vmatprep.subr.mxu0 0.0
  %3622 = vmatpush1.msra.mxu0 0.0
  %3623 = vmatprep.subr.mxu0 0.0
  %3624 = vmatpush1.msra.mxu0 0.0
  %3625 = vmatprep.subr.mxu0 0.0
  %3626 = vmatpush1.msra.mxu0 0.0
  %3627 = vmatprep.subr.mxu0 0.0
  %3628 = vmatpush1.msra.mxu0 0.0
  %3629 = vmatprep.subr.mxu0 0.0
  %3630 = vmatpush1.msra.mxu0 0.0
  %3631 = vmatprep.subr.mxu0 0.0
  %3632 = vmatpush1.msra.mxu0 0.0
  %3633 = vmatprep.subr.mxu0 0.0
  %3634 = vmatpush1.msra.mxu0 0.0
  %3635 = vmatprep.subr.mxu0 0.0
  %3636 = vmatpush1.msra.mxu0 0.0
  %3637 = vmatprep.subr.mxu0 0.0
  %3638 = vmatpush1.msra.mxu0 0.0
  %3639 = vmatprep.subr.mxu0 0.0
  %3640 = vmatpush1.msra.mxu0 0.0
  %3641 = vmatprep.subr.mxu0 0.0
  %3642 = vmatpush1.msra.mxu0 0.0
  %3643 = vmatprep.subr.mxu0 0.0
  %3644 = vmatpush1.msra.mxu0 0.0
  %3645 = vmatprep.subr.mxu0 0.0
  %3646 = vmatpush1.msra.mxu0 0.0
  %3647 = vmatprep.subr.mxu0 0.0
  %3648 = vmatpush1.msra.mxu0 0.0
  %3649 = vmatprep.subr.mxu0 0.0
  %3650 = vmatpush1.msra.mxu0 0.0
  %3651 = vmatprep.subr.mxu0 0.0
  %3652 = vmatpush1.msra.mxu0 0.0
  %3653 = vmatprep.subr.mxu0 0.0
  %3654 = vmatpush1.msra.mxu0 0.0
  %3655 = vmatprep.subr.mxu0 0.0
  %3656 = vmatpush1.msra.mxu0 0.0
  %3657 = vmatprep.subr.mxu0 0.0
  %3658 = vmatpush1.msra.mxu0 0.0
  %3659 = vmatprep.subr.mxu0 0.0
  %3660 = vmatpush1.msra.mxu0 0.0
  %3661 = vmatprep.subr.mxu0 0.0
  %3662 = vmatpush1.msra.mxu0 0.0
  %3663 = vmatprep.subr.mxu0 0.0
  %3664 = vmatpush1.msra.mxu0 0.0
  %3665 = vmatprep.subr.mxu0 0.0
  %3666 = vmatpush1.msra.mxu0 0.0
  %3667 = vmatprep.subr.mxu0 0.0
  %3668 = vmatpush1.msra.mxu0 0.0
  %3669 = vmatprep.subr.mxu0 0.0
  %3670 = vmatpush1.msra.mxu0 0.0
  %3671 = vmatprep.subr.mxu0 0.0
  %3672 = vmatpush1.msra.mxu0 0.0
  %3673 = vmatprep.subr.mxu0 0.0
  %3674 = vmatpush1.msra.mxu0 0.0
  %3675 = vmatprep.subr.mxu0 0.0
  %3676 = vmatpush1.msra.mxu0 0.0
  %3677 = vmatprep.mubr.f32.mxu0 0.0
  %3678 = vmatmul.mubr.f32.gmra.mrb[0].mxu0 %v3611
  %v3679 = vpop.f32.mrb[0].mxu0
  %v3680 = vadd.f32 %v115, %v3679
  %v3681 = vpop.f32.mrb[0].mxu0
  %3682 = vdwg.mxu0
  %3684 = vrot.lane.b32.xlu0 %v3680, 64
  %v3685 = vpop.permute.xlu0 %3684
  %3687 = vst.msk [vmem:[%s2 + $0x32] sm:$0x3] %vm1131, %v3685
  %v3688 = vmul.f32 %v3680, 0.5
  %v3689 = vtanh.pop %v3688
  %v3690 = vmul.f32 %v3689, 0.5
  %v3691 = vadd.f32 %v3690, 0.5
  %v3692 = vtanh.pop %v3680
  %v3693 = vmul.f32 %v3691, %v3601
  %3695 = vrot.lane.b32.xlu0 %v3692, 96
  %v3696 = vpop.permute.xlu0 %3695
  %v3698 = vmul.f32 %v3691, %v3696
  %3700 = vrot.lane.b32.xlu0 %v3698, 16
  %v3701 = vpop.permute.xlu0 %3700
  %v3703 = vadd.f32 %v3693, %v3701
  %v3704 = vtanh.pop %v3703
  %3706 = vrot.lane.b32.xlu0 %v3704, 32
  %v3707 = vpop.permute.xlu0 %3706
  %v3709 = vmul.f32 %v3691, %v3707
  %3711 = vrot.lane.b32.xlu0 %v3709, 80
  %v3712 = vpop.permute.xlu0 %3711
  %v3713 = vsel %vm116, %v3712, 0
  %3715 = vmatprep.subr.mxu0 0.0
  %3716 = vmatpush1.msra.mxu0 %v18
  %3717 = vmatprep.subr.mxu0 0.0
  %3718 = vmatpush1.msra.mxu0 %v19
  %3719 = vmatprep.subr.mxu0 0.0
  %3720 = vmatpush1.msra.mxu0 0.0
  %3721 = vmatprep.subr.mxu0 0.0
  %3722 = vmatpush1.msra.mxu0 0.0
  %3723 = vmatprep.subr.mxu0 0.0
  %3724 = vmatpush1.msra.mxu0 0.0
  %3725 = vmatprep.subr.mxu0 0.0
  %3726 = vmatpush1.msra.mxu0 0.0
  %3727 = vmatprep.subr.mxu0 0.0
  %3728 = vmatpush1.msra.mxu0 0.0
  %3729 = vmatprep.subr.mxu0 0.0
  %3730 = vmatpush1.msra.mxu0 0.0
  %3731 = vmatprep.subr.mxu0 0.0
  %3732 = vmatpush1.msra.mxu0 0.0
  %3733 = vmatprep.subr.mxu0 0.0
  %3734 = vmatpush1.msra.mxu0 0.0
  %3735 = vmatprep.subr.mxu0 0.0
  %3736 = vmatpush1.msra.mxu0 0.0
  %3737 = vmatprep.subr.mxu0 0.0
  %3738 = vmatpush1.msra.mxu0 0.0
  %3739 = vmatprep.subr.mxu0 0.0
  %3740 = vmatpush1.msra.mxu0 0.0
  %3741 = vmatprep.subr.mxu0 0.0
  %3742 = vmatpush1.msra.mxu0 0.0
  %3743 = vmatprep.subr.mxu0 0.0
  %3744 = vmatpush1.msra.mxu0 0.0
  %3745 = vmatprep.subr.mxu0 0.0
  %3746 = vmatpush1.msra.mxu0 0.0
  %3747 = vmatprep.subr.mxu0 0.0
  %3748 = vmatpush1.msra.mxu0 0.0
  %3749 = vmatprep.subr.mxu0 0.0
  %3750 = vmatpush1.msra.mxu0 0.0
  %3751 = vmatprep.subr.mxu0 0.0
  %3752 = vmatpush1.msra.mxu0 0.0
  %3753 = vmatprep.subr.mxu0 0.0
  %3754 = vmatpush1.msra.mxu0 0.0
  %3755 = vmatprep.subr.mxu0 0.0
  %3756 = vmatpush1.msra.mxu0 0.0
  %3757 = vmatprep.subr.mxu0 0.0
  %3758 = vmatpush1.msra.mxu0 0.0
  %3759 = vmatprep.subr.mxu0 0.0
  %3760 = vmatpush1.msra.mxu0 0.0
  %3761 = vmatprep.subr.mxu0 0.0
  %3762 = vmatpush1.msra.mxu0 0.0
  %3763 = vmatprep.subr.mxu0 0.0
  %3764 = vmatpush1.msra.mxu0 0.0
  %3765 = vmatprep.subr.mxu0 0.0
  %3766 = vmatpush1.msra.mxu0 0.0
  %3767 = vmatprep.subr.mxu0 0.0
  %3768 = vmatpush1.msra.mxu0 0.0
  %3769 = vmatprep.subr.mxu0 0.0
  %3770 = vmatpush1.msra.mxu0 0.0
  %3771 = vmatprep.subr.mxu0 0.0
  %3772 = vmatpush1.msra.mxu0 0.0
  %3773 = vmatprep.subr.mxu0 0.0
  %3774 = vmatpush1.msra.mxu0 0.0
  %3775 = vmatprep.subr.mxu0 0.0
  %3776 = vmatpush1.msra.mxu0 0.0
  %3777 = vmatprep.subr.mxu0 0.0
  %3778 = vmatpush1.msra.mxu0 0.0
  %3779 = vmatprep.mubr.f32.mxu0 0.0
  %3780 = vmatmul.mubr.f32.gmra.mrb[0].mxu0 %v3713
  %v3781 = vpop.f32.mrb[0].mxu0
  %v3782 = vadd.f32 %v115, %v3781
  %v3783 = vpop.f32.mrb[0].mxu0
  %3784 = vdwg.mxu0
  %3786 = vrot.lane.b32.xlu0 %v3782, 64
  %v3787 = vpop.permute.xlu0 %3786
  %3789 = vst.msk [vmem:[%s2 + $0x34] sm:$0x3] %vm1131, %v3787
  %v3790 = vmul.f32 %v3782, 0.5
  %v3791 = vtanh.pop %v3790
  %v3792 = vmul.f32 %v3791, 0.5
  %v3793 = vadd.f32 %v3792, 0.5
  %v3794 = vtanh.pop %v3782
  %v3795 = vmul.f32 %v3793, %v3703
  %3797 = vrot.lane.b32.xlu0 %v3794, 96
  %v3798 = vpop.permute.xlu0 %3797
  %v3800 = vmul.f32 %v3793, %v3798
  %3802 = vrot.lane.b32.xlu0 %v3800, 16
  %v3803 = vpop.permute.xlu0 %3802
  %v3805 = vadd.f32 %v3795, %v3803
  %v3806 = vtanh.pop %v3805
  %3808 = vrot.lane.b32.xlu0 %v3806, 32
  %v3809 = vpop.permute.xlu0 %3808
  %v3811 = vmul.f32 %v3793, %v3809
  %3813 = vrot.lane.b32.xlu0 %v3811, 80
  %v3814 = vpop.permute.xlu0 %3813
  %v3815 = vsel %vm116, %v3814, 0
  %3817 = vmatprep.subr.mxu0 0.0
  %3818 = vmatpush1.msra.mxu0 %v18
  %3819 = vmatprep.subr.mxu0 0.0
  %3820 = vmatpush1.msra.mxu0 %v19
  %3821 = vmatprep.subr.mxu0 0.0
  %3822 = vmatpush1.msra.mxu0 0.0
  %3823 = vmatprep.subr.mxu0 0.0
  %3824 = vmatpush1.msra.mxu0 0.0
  %3825 = vmatprep.subr.mxu0 0.0
  %3826 = vmatpush1.msra.mxu0 0.0
  %3827 = vmatprep.subr.mxu0 0.0
  %3828 = vmatpush1.msra.mxu0 0.0
  %3829 = vmatprep.subr.mxu0 0.0
  %3830 = vmatpush1.msra.mxu0 0.0
  %3831 = vmatprep.subr.mxu0 0.0
  %3832 = vmatpush1.msra.mxu0 0.0
  %3833 = vmatprep.subr.mxu0 0.0
  %3834 = vmatpush1.msra.mxu0 0.0
  %3835 = vmatprep.subr.mxu0 0.0
  %3836 = vmatpush1.msra.mxu0 0.0
  %3837 = vmatprep.subr.mxu0 0.0
  %3838 = vmatpush1.msra.mxu0 0.0
  %3839 = vmatprep.subr.mxu0 0.0
  %3840 = vmatpush1.msra.mxu0 0.0
  %3841 = vmatprep.subr.mxu0 0.0
  %3842 = vmatpush1.msra.mxu0 0.0
  %3843 = vmatprep.subr.mxu0 0.0
  %3844 = vmatpush1.msra.mxu0 0.0
  %3845 = vmatprep.subr.mxu0 0.0
  %3846 = vmatpush1.msra.mxu0 0.0
  %3847 = vmatprep.subr.mxu0 0.0
  %3848 = vmatpush1.msra.mxu0 0.0
  %3849 = vmatprep.subr.mxu0 0.0
  %3850 = vmatpush1.msra.mxu0 0.0
  %3851 = vmatprep.subr.mxu0 0.0
  %3852 = vmatpush1.msra.mxu0 0.0
  %3853 = vmatprep.subr.mxu0 0.0
  %3854 = vmatpush1.msra.mxu0 0.0
  %3855 = vmatprep.subr.mxu0 0.0
  %3856 = vmatpush1.msra.mxu0 0.0
  %3857 = vmatprep.subr.mxu0 0.0
  %3858 = vmatpush1.msra.mxu0 0.0
  %3859 = vmatprep.subr.mxu0 0.0
  %3860 = vmatpush1.msra.mxu0 0.0
  %3861 = vmatprep.subr.mxu0 0.0
  %3862 = vmatpush1.msra.mxu0 0.0
  %3863 = vmatprep.subr.mxu0 0.0
  %3864 = vmatpush1.msra.mxu0 0.0
  %3865 = vmatprep.subr.mxu0 0.0
  %3866 = vmatpush1.msra.mxu0 0.0
  %3867 = vmatprep.subr.mxu0 0.0
  %3868 = vmatpush1.msra.mxu0 0.0
  %3869 = vmatprep.subr.mxu0 0.0
  %3870 = vmatpush1.msra.mxu0 0.0
  %3871 = vmatprep.subr.mxu0 0.0
  %3872 = vmatpush1.msra.mxu0 0.0
  %3873 = vmatprep.subr.mxu0 0.0
  %3874 = vmatpush1.msra.mxu0 0.0
  %3875 = vmatprep.subr.mxu0 0.0
  %3876 = vmatpush1.msra.mxu0 0.0
  %3877 = vmatprep.subr.mxu0 0.0
  %3878 = vmatpush1.msra.mxu0 0.0
  %3879 = vmatprep.subr.mxu0 0.0
  %3880 = vmatpush1.msra.mxu0 0.0
  %3881 = vmatprep.mubr.f32.mxu0 0.0
  %3882 = vmatmul.mubr.f32.gmra.mrb[0].mxu0 %v3815
  %v3883 = vpop.f32.mrb[0].mxu0
  %v3884 = vadd.f32 %v115, %v3883
  %v3885 = vpop.f32.mrb[0].mxu0
  %3886 = vdwg.mxu0
  %3888 = vrot.lane.b32.xlu0 %v3884, 64
  %v3889 = vpop.permute.xlu0 %3888
  %3891 = vst.msk [vmem:[%s2 + $0x36] sm:$0x3] %vm1131, %v3889
  %v3892 = vmul.f32 %v3884, 0.5
  %v3893 = vtanh.pop %v3892
  %v3894 = vmul.f32 %v3893, 0.5
  %v3895 = vadd.f32 %v3894, 0.5
  %v3896 = vtanh.pop %v3884
  %v3897 = vmul.f32 %v3895, %v3805
  %3899 = vrot.lane.b32.xlu0 %v3896, 96
  %v3900 = vpop.permute.xlu0 %3899
  %v3902 = vmul.f32 %v3895, %v3900
  %3904 = vrot.lane.b32.xlu0 %v3902, 16
  %v3905 = vpop.permute.xlu0 %3904
  %v3907 = vadd.f32 %v3897, %v3905
  %v3908 = vtanh.pop %v3907
  %3910 = vrot.lane.b32.xlu0 %v3908, 32
  %v3911 = vpop.permute.xlu0 %3910
  %v3913 = vmul.f32 %v3895, %v3911
  %3915 = vrot.lane.b32.xlu0 %v3913, 80
  %v3916 = vpop.permute.xlu0 %3915
  %v3917 = vsel %vm116, %v3916, 0
  %3919 = vmatprep.subr.mxu0 0.0
  %3920 = vmatpush1.msra.mxu0 %v18
  %3921 = vmatprep.subr.mxu0 0.0
  %3922 = vmatpush1.msra.mxu0 %v19
  %3923 = vmatprep.subr.mxu0 0.0
  %3924 = vmatpush1.msra.mxu0 0.0
  %3925 = vmatprep.subr.mxu0 0.0
  %3926 = vmatpush1.msra.mxu0 0.0
  %3927 = vmatprep.subr.mxu0 0.0
  %3928 = vmatpush1.msra.mxu0 0.0
  %3929 = vmatprep.subr.mxu0 0.0
  %3930 = vmatpush1.msra.mxu0 0.0
  %3931 = vmatprep.subr.mxu0 0.0
  %3932 = vmatpush1.msra.mxu0 0.0
  %3933 = vmatprep.subr.mxu0 0.0
  %3934 = vmatpush1.msra.mxu0 0.0
  %3935 = vmatprep.subr.mxu0 0.0
  %3936 = vmatpush1.msra.mxu0 0.0
  %3937 = vmatprep.subr.mxu0 0.0
  %3938 = vmatpush1.msra.mxu0 0.0
  %3939 = vmatprep.subr.mxu0 0.0
  %3940 = vmatpush1.msra.mxu0 0.0
  %3941 = vmatprep.subr.mxu0 0.0
  %3942 = vmatpush1.msra.mxu0 0.0
  %3943 = vmatprep.subr.mxu0 0.0
  %3944 = vmatpush1.msra.mxu0 0.0
  %3945 = vmatprep.subr.mxu0 0.0
  %3946 = vmatpush1.msra.mxu0 0.0
  %3947 = vmatprep.subr.mxu0 0.0
  %3948 = vmatpush1.msra.mxu0 0.0
  %3949 = vmatprep.subr.mxu0 0.0
  %3950 = vmatpush1.msra.mxu0 0.0
  %3951 = vmatprep.subr.mxu0 0.0
  %3952 = vmatpush1.msra.mxu0 0.0
  %3953 = vmatprep.subr.mxu0 0.0
  %3954 = vmatpush1.msra.mxu0 0.0
  %3955 = vmatprep.subr.mxu0 0.0
  %3956 = vmatpush1.msra.mxu0 0.0
  %3957 = vmatprep.subr.mxu0 0.0
  %3958 = vmatpush1.msra.mxu0 0.0
  %3959 = vmatprep.subr.mxu0 0.0
  %3960 = vmatpush1.msra.mxu0 0.0
  %3961 = vmatprep.subr.mxu0 0.0
  %3962 = vmatpush1.msra.mxu0 0.0
  %3963 = vmatprep.subr.mxu0 0.0
  %3964 = vmatpush1.msra.mxu0 0.0
  %3965 = vmatprep.subr.mxu0 0.0
  %3966 = vmatpush1.msra.mxu0 0.0
  %3967 = vmatprep.subr.mxu0 0.0
  %3968 = vmatpush1.msra.mxu0 0.0
  %3969 = vmatprep.subr.mxu0 0.0
  %3970 = vmatpush1.msra.mxu0 0.0
  %3971 = vmatprep.subr.mxu0 0.0
  %3972 = vmatpush1.msra.mxu0 0.0
  %3973 = vmatprep.subr.mxu0 0.0
  %3974 = vmatpush1.msra.mxu0 0.0
  %3975 = vmatprep.subr.mxu0 0.0
  %3976 = vmatpush1.msra.mxu0 0.0
  %3977 = vmatprep.subr.mxu0 0.0
  %3978 = vmatpush1.msra.mxu0 0.0
  %3979 = vmatprep.subr.mxu0 0.0
  %3980 = vmatpush1.msra.mxu0 0.0
  %3981 = vmatprep.subr.mxu0 0.0
  %3982 = vmatpush1.msra.mxu0 0.0
  %3983 = vmatprep.mubr.f32.mxu0 0.0
  %3984 = vmatmul.mubr.f32.gmra.mrb[0].mxu0 %v3917
  %v3985 = vpop.f32.mrb[0].mxu0
  %v3986 = vadd.f32 %v115, %v3985
  %v3987 = vpop.f32.mrb[0].mxu0
  %3988 = vdwg.mxu0
  %3990 = vrot.lane.b32.xlu0 %v3986, 64
  %v3991 = vpop.permute.xlu0 %3990
  %3993 = vst.msk [vmem:[%s2 + $0x38] sm:$0x3] %vm1131, %v3991
  %v3994 = vmul.f32 %v3986, 0.5
  %v3995 = vtanh.pop %v3994
  %v3996 = vmul.f32 %v3995, 0.5
  %v3997 = vadd.f32 %v3996, 0.5
  %v3998 = vtanh.pop %v3986
  %v3999 = vmul.f32 %v3997, %v3907
  %4001 = vrot.lane.b32.xlu0 %v3998, 96
  %v4002 = vpop.permute.xlu0 %4001
  %v4004 = vmul.f32 %v3997, %v4002
  %4006 = vrot.lane.b32.xlu0 %v4004, 16
  %v4007 = vpop.permute.xlu0 %4006
  %v4009 = vadd.f32 %v3999, %v4007
  %v4010 = vtanh.pop %v4009
  %4012 = vrot.lane.b32.xlu0 %v4010, 32
  %v4013 = vpop.permute.xlu0 %4012
  %v4015 = vmul.f32 %v3997, %v4013
  %4017 = vrot.lane.b32.xlu0 %v4015, 80
  %v4018 = vpop.permute.xlu0 %4017
  %v4019 = vsel %vm116, %v4018, 0
  %4021 = vmatprep.subr.mxu0 0.0
  %4022 = vmatpush1.msra.mxu0 %v18
  %4023 = vmatprep.subr.mxu0 0.0
  %4024 = vmatpush1.msra.mxu0 %v19
  %4025 = vmatprep.subr.mxu0 0.0
  %4026 = vmatpush1.msra.mxu0 0.0
  %4027 = vmatprep.subr.mxu0 0.0
  %4028 = vmatpush1.msra.mxu0 0.0
  %4029 = vmatprep.subr.mxu0 0.0
  %4030 = vmatpush1.msra.mxu0 0.0
  %4031 = vmatprep.subr.mxu0 0.0
  %4032 = vmatpush1.msra.mxu0 0.0
  %4033 = vmatprep.subr.mxu0 0.0
  %4034 = vmatpush1.msra.mxu0 0.0
  %4035 = vmatprep.subr.mxu0 0.0
  %4036 = vmatpush1.msra.mxu0 0.0
  %4037 = vmatprep.subr.mxu0 0.0
  %4038 = vmatpush1.msra.mxu0 0.0
  %4039 = vmatprep.subr.mxu0 0.0
  %4040 = vmatpush1.msra.mxu0 0.0
  %4041 = vmatprep.subr.mxu0 0.0
  %4042 = vmatpush1.msra.mxu0 0.0
  %4043 = vmatprep.subr.mxu0 0.0
  %4044 = vmatpush1.msra.mxu0 0.0
  %4045 = vmatprep.subr.mxu0 0.0
  %4046 = vmatpush1.msra.mxu0 0.0
  %4047 = vmatprep.subr.mxu0 0.0
  %4048 = vmatpush1.msra.mxu0 0.0
  %4049 = vmatprep.subr.mxu0 0.0
  %4050 = vmatpush1.msra.mxu0 0.0
  %4051 = vmatprep.subr.mxu0 0.0
  %4052 = vmatpush1.msra.mxu0 0.0
  %4053 = vmatprep.subr.mxu0 0.0
  %4054 = vmatpush1.msra.mxu0 0.0
  %4055 = vmatprep.subr.mxu0 0.0
  %4056 = vmatpush1.msra.mxu0 0.0
  %4057 = vmatprep.subr.mxu0 0.0
  %4058 = vmatpush1.msra.mxu0 0.0
  %4059 = vmatprep.subr.mxu0 0.0
  %4060 = vmatpush1.msra.mxu0 0.0
  %4061 = vmatprep.subr.mxu0 0.0
  %4062 = vmatpush1.msra.mxu0 0.0
  %4063 = vmatprep.subr.mxu0 0.0
  %4064 = vmatpush1.msra.mxu0 0.0
  %4065 = vmatprep.subr.mxu0 0.0
  %4066 = vmatpush1.msra.mxu0 0.0
  %4067 = vmatprep.subr.mxu0 0.0
  %4068 = vmatpush1.msra.mxu0 0.0
  %4069 = vmatprep.subr.mxu0 0.0
  %4070 = vmatpush1.msra.mxu0 0.0
  %4071 = vmatprep.subr.mxu0 0.0
  %4072 = vmatpush1.msra.mxu0 0.0
  %4073 = vmatprep.subr.mxu0 0.0
  %4074 = vmatpush1.msra.mxu0 0.0
  %4075 = vmatprep.subr.mxu0 0.0
  %4076 = vmatpush1.msra.mxu0 0.0
  %4077 = vmatprep.subr.mxu0 0.0
  %4078 = vmatpush1.msra.mxu0 0.0
  %4079 = vmatprep.subr.mxu0 0.0
  %4080 = vmatpush1.msra.mxu0 0.0
  %4081 = vmatprep.subr.mxu0 0.0
  %4082 = vmatpush1.msra.mxu0 0.0
  %4083 = vmatprep.subr.mxu0 0.0
  %4084 = vmatpush1.msra.mxu0 0.0
  %4085 = vmatprep.mubr.f32.mxu0 0.0
  %4086 = vmatmul.mubr.f32.gmra.mrb[0].mxu0 %v4019
  %v4087 = vpop.f32.mrb[0].mxu0
  %v4088 = vadd.f32 %v115, %v4087
  %v4089 = vpop.f32.mrb[0].mxu0
  %4090 = vdwg.mxu0
  %4092 = vrot.lane.b32.xlu0 %v4088, 64
  %v4093 = vpop.permute.xlu0 %4092
  %4095 = vst.msk [vmem:[%s2 + $0x3a] sm:$0x3] %vm1131, %v4093
  %v4096 = vmul.f32 %v4088, 0.5
  %v4097 = vtanh.pop %v4096
  %v4098 = vmul.f32 %v4097, 0.5
  %v4099 = vadd.f32 %v4098, 0.5
  %v4100 = vtanh.pop %v4088
  %v4101 = vmul.f32 %v4099, %v4009
  %4103 = vrot.lane.b32.xlu0 %v4100, 96
  %v4104 = vpop.permute.xlu0 %4103
  %v4106 = vmul.f32 %v4099, %v4104
  %4108 = vrot.lane.b32.xlu0 %v4106, 16
  %v4109 = vpop.permute.xlu0 %4108
  %v4111 = vadd.f32 %v4101, %v4109
  %v4112 = vtanh.pop %v4111
  %4114 = vrot.lane.b32.xlu0 %v4112, 32
  %v4115 = vpop.permute.xlu0 %4114
  %v4117 = vmul.f32 %v4099, %v4115
  %4119 = vrot.lane.b32.xlu0 %v4117, 80
  %v4120 = vpop.permute.xlu0 %4119
  %v4121 = vsel %vm116, %v4120, 0
  %4123 = vmatprep.subr.mxu0 0.0
  %4124 = vmatpush1.msra.mxu0 %v18
  %4125 = vmatprep.subr.mxu0 0.0
  %4126 = vmatpush1.msra.mxu0 %v19
  %4127 = vmatprep.subr.mxu0 0.0
  %4128 = vmatpush1.msra.mxu0 0.0
  %4129 = vmatprep.subr.mxu0 0.0
  %4130 = vmatpush1.msra.mxu0 0.0
  %4131 = vmatprep.subr.mxu0 0.0
  %4132 = vmatpush1.msra.mxu0 0.0
  %4133 = vmatprep.subr.mxu0 0.0
  %4134 = vmatpush1.msra.mxu0 0.0
  %4135 = vmatprep.subr.mxu0 0.0
  %4136 = vmatpush1.msra.mxu0 0.0
  %4137 = vmatprep.subr.mxu0 0.0
  %4138 = vmatpush1.msra.mxu0 0.0
  %4139 = vmatprep.subr.mxu0 0.0
  %4140 = vmatpush1.msra.mxu0 0.0
  %4141 = vmatprep.subr.mxu0 0.0
  %4142 = vmatpush1.msra.mxu0 0.0
  %4143 = vmatprep.subr.mxu0 0.0
  %4144 = vmatpush1.msra.mxu0 0.0
  %4145 = vmatprep.subr.mxu0 0.0
  %4146 = vmatpush1.msra.mxu0 0.0
  %4147 = vmatprep.subr.mxu0 0.0
  %4148 = vmatpush1.msra.mxu0 0.0
  %4149 = vmatprep.subr.mxu0 0.0
  %4150 = vmatpush1.msra.mxu0 0.0
  %4151 = vmatprep.subr.mxu0 0.0
  %4152 = vmatpush1.msra.mxu0 0.0
  %4153 = vmatprep.subr.mxu0 0.0
  %4154 = vmatpush1.msra.mxu0 0.0
  %4155 = vmatprep.subr.mxu0 0.0
  %4156 = vmatpush1.msra.mxu0 0.0
  %4157 = vmatprep.subr.mxu0 0.0
  %4158 = vmatpush1.msra.mxu0 0.0
  %4159 = vmatprep.subr.mxu0 0.0
  %4160 = vmatpush1.msra.mxu0 0.0
  %4161 = vmatprep.subr.mxu0 0.0
  %4162 = vmatpush1.msra.mxu0 0.0
  %4163 = vmatprep.subr.mxu0 0.0
  %4164 = vmatpush1.msra.mxu0 0.0
  %4165 = vmatprep.subr.mxu0 0.0
  %4166 = vmatpush1.msra.mxu0 0.0
  %4167 = vmatprep.subr.mxu0 0.0
  %4168 = vmatpush1.msra.mxu0 0.0
  %4169 = vmatprep.subr.mxu0 0.0
  %4170 = vmatpush1.msra.mxu0 0.0
  %4171 = vmatprep.subr.mxu0 0.0
  %4172 = vmatpush1.msra.mxu0 0.0
  %4173 = vmatprep.subr.mxu0 0.0
  %4174 = vmatpush1.msra.mxu0 0.0
  %4175 = vmatprep.subr.mxu0 0.0
  %4176 = vmatpush1.msra.mxu0 0.0
  %4177 = vmatprep.subr.mxu0 0.0
  %4178 = vmatpush1.msra.mxu0 0.0
  %4179 = vmatprep.subr.mxu0 0.0
  %4180 = vmatpush1.msra.mxu0 0.0
  %4181 = vmatprep.subr.mxu0 0.0
  %4182 = vmatpush1.msra.mxu0 0.0
  %4183 = vmatprep.subr.mxu0 0.0
  %4184 = vmatpush1.msra.mxu0 0.0
  %4185 = vmatprep.subr.mxu0 0.0
  %4186 = vmatpush1.msra.mxu0 0.0
  %4187 = vmatprep.mubr.f32.mxu0 0.0
  %4188 = vmatmul.mubr.f32.gmra.mrb[0].mxu0 %v4121
  %v4189 = vpop.f32.mrb[0].mxu0
  %v4190 = vadd.f32 %v115, %v4189
  %v4191 = vpop.f32.mrb[0].mxu0
  %4192 = vdwg.mxu0
  %4194 = vrot.lane.b32.xlu0 %v4190, 64
  %v4195 = vpop.permute.xlu0 %4194
  %4197 = vst.msk [vmem:[%s2 + $0x3c] sm:$0x3] %vm1131, %v4195
  %v4198 = vmul.f32 %v4190, 0.5
  %v4199 = vtanh.pop %v4198
  %v4200 = vmul.f32 %v4199, 0.5
  %v4201 = vadd.f32 %v4200, 0.5
  %v4202 = vtanh.pop %v4190
  %v4203 = vmul.f32 %v4201, %v4111
  %4205 = vrot.lane.b32.xlu0 %v4202, 96
  %v4206 = vpop.permute.xlu0 %4205
  %v4208 = vmul.f32 %v4201, %v4206
  %4210 = vrot.lane.b32.xlu0 %v4208, 16
  %v4211 = vpop.permute.xlu0 %4210
  %v4213 = vadd.f32 %v4203, %v4211
  %v4214 = vtanh.pop %v4213
  %4216 = vrot.lane.b32.xlu0 %v4214, 32
  %v4217 = vpop.permute.xlu0 %4216
  %v4219 = vmul.f32 %v4201, %v4217
  %4221 = vrot.lane.b32.xlu0 %v4219, 80
  %v4222 = vpop.permute.xlu0 %4221
  %v4223 = vsel %vm116, %v4222, 0
  %4225 = vmatprep.subr.mxu0 0.0
  %4226 = vmatpush1.msra.mxu0 %v18
  %4227 = vmatprep.subr.mxu0 0.0
  %4228 = vmatpush1.msra.mxu0 %v19
  %4229 = vmatprep.subr.mxu0 0.0
  %4230 = vmatpush1.msra.mxu0 0.0
  %4231 = vmatprep.subr.mxu0 0.0
  %4232 = vmatpush1.msra.mxu0 0.0
  %4233 = vmatprep.subr.mxu0 0.0
  %4234 = vmatpush1.msra.mxu0 0.0
  %4235 = vmatprep.subr.mxu0 0.0
  %4236 = vmatpush1.msra.mxu0 0.0
  %4237 = vmatprep.subr.mxu0 0.0
  %4238 = vmatpush1.msra.mxu0 0.0
  %4239 = vmatprep.subr.mxu0 0.0
  %4240 = vmatpush1.msra.mxu0 0.0
  %4241 = vmatprep.subr.mxu0 0.0
  %4242 = vmatpush1.msra.mxu0 0.0
  %4243 = vmatprep.subr.mxu0 0.0
  %4244 = vmatpush1.msra.mxu0 0.0
  %4245 = vmatprep.subr.mxu0 0.0
  %4246 = vmatpush1.msra.mxu0 0.0
  %4247 = vmatprep.subr.mxu0 0.0
  %4248 = vmatpush1.msra.mxu0 0.0
  %4249 = vmatprep.subr.mxu0 0.0
  %4250 = vmatpush1.msra.mxu0 0.0
  %4251 = vmatprep.subr.mxu0 0.0
  %4252 = vmatpush1.msra.mxu0 0.0
  %4253 = vmatprep.subr.mxu0 0.0
  %4254 = vmatpush1.msra.mxu0 0.0
  %4255 = vmatprep.subr.mxu0 0.0
  %4256 = vmatpush1.msra.mxu0 0.0
  %4257 = vmatprep.subr.mxu0 0.0
  %4258 = vmatpush1.msra.mxu0 0.0
  %4259 = vmatprep.subr.mxu0 0.0
  %4260 = vmatpush1.msra.mxu0 0.0
  %4261 = vmatprep.subr.mxu0 0.0
  %4262 = vmatpush1.msra.mxu0 0.0
  %4263 = vmatprep.subr.mxu0 0.0
  %4264 = vmatpush1.msra.mxu0 0.0
  %4265 = vmatprep.subr.mxu0 0.0
  %4266 = vmatpush1.msra.mxu0 0.0
  %4267 = vmatprep.subr.mxu0 0.0
  %4268 = vmatpush1.msra.mxu0 0.0
  %4269 = vmatprep.subr.mxu0 0.0
  %4270 = vmatpush1.msra.mxu0 0.0
  %4271 = vmatprep.subr.mxu0 0.0
  %4272 = vmatpush1.msra.mxu0 0.0
  %4273 = vmatprep.subr.mxu0 0.0
  %4274 = vmatpush1.msra.mxu0 0.0
  %4275 = vmatprep.subr.mxu0 0.0
  %4276 = vmatpush1.msra.mxu0 0.0
  %4277 = vmatprep.subr.mxu0 0.0
  %4278 = vmatpush1.msra.mxu0 0.0
  %4279 = vmatprep.subr.mxu0 0.0
  %4280 = vmatpush1.msra.mxu0 0.0
  %4281 = vmatprep.subr.mxu0 0.0
  %4282 = vmatpush1.msra.mxu0 0.0
  %4283 = vmatprep.subr.mxu0 0.0
  %4284 = vmatpush1.msra.mxu0 0.0
  %4285 = vmatprep.subr.mxu0 0.0
  %4286 = vmatpush1.msra.mxu0 0.0
  %4287 = vmatprep.subr.mxu0 0.0
  %4288 = vmatpush1.msra.mxu0 0.0
  %4289 = vmatprep.mubr.f32.mxu0 0.0
  %4290 = vmatmul.mubr.f32.gmra.mrb[0].mxu0 %v4223
  %v4291 = vpop.f32.mrb[0].mxu0
  %v4292 = vadd.f32 %v115, %v4291
  %v4293 = vpop.f32.mrb[0].mxu0
  %4294 = vdwg.mxu0
  %4296 = vrot.lane.b32.xlu0 %v4292, 64
  %v4297 = vpop.permute.xlu0 %4296
  %4299 = vst.msk [vmem:[%s2 + $0x3e] sm:$0x3] %vm1131, %v4297
  %v4300 = vmul.f32 %v4292, 0.5
  %v4301 = vtanh.pop %v4300
  %v4302 = vmul.f32 %v4301, 0.5
  %v4303 = vadd.f32 %v4302, 0.5
  %v4304 = vtanh.pop %v4292
  %v4305 = vmul.f32 %v4303, %v4213
  %4307 = vrot.lane.b32.xlu0 %v4304, 96
  %v4308 = vpop.permute.xlu0 %4307
  %v4310 = vmul.f32 %v4303, %v4308
  %4312 = vrot.lane.b32.xlu0 %v4310, 16
  %v4313 = vpop.permute.xlu0 %4312
  %v4315 = vadd.f32 %v4305, %v4313
  %v4316 = vtanh.pop %v4315
  %4318 = vrot.lane.b32.xlu0 %v4316, 32
  %v4319 = vpop.permute.xlu0 %4318
  %v4321 = vmul.f32 %v4303, %v4319
  %4323 = vrot.lane.b32.xlu0 %v4321, 80
  %v4324 = vpop.permute.xlu0 %4323
  %v4325 = vsel %vm116, %v4324, 0
  %4327 = vmatprep.subr.mxu0 0.0
  %4328 = vmatpush1.msra.mxu0 %v18
  %4329 = vmatprep.subr.mxu0 0.0
  %4330 = vmatpush1.msra.mxu0 %v19
  %4331 = vmatprep.subr.mxu0 0.0
  %4332 = vmatpush1.msra.mxu0 0.0
  %4333 = vmatprep.subr.mxu0 0.0
  %4334 = vmatpush1.msra.mxu0 0.0
  %4335 = vmatprep.subr.mxu0 0.0
  %4336 = vmatpush1.msra.mxu0 0.0
  %4337 = vmatprep.subr.mxu0 0.0
  %4338 = vmatpush1.msra.mxu0 0.0
  %4339 = vmatprep.subr.mxu0 0.0
  %4340 = vmatpush1.msra.mxu0 0.0
  %4341 = vmatprep.subr.mxu0 0.0
  %4342 = vmatpush1.msra.mxu0 0.0
  %4343 = vmatprep.subr.mxu0 0.0
  %4344 = vmatpush1.msra.mxu0 0.0
  %4345 = vmatprep.subr.mxu0 0.0
  %4346 = vmatpush1.msra.mxu0 0.0
  %4347 = vmatprep.subr.mxu0 0.0
  %4348 = vmatpush1.msra.mxu0 0.0
  %4349 = vmatprep.subr.mxu0 0.0
  %4350 = vmatpush1.msra.mxu0 0.0
  %4351 = vmatprep.subr.mxu0 0.0
  %4352 = vmatpush1.msra.mxu0 0.0
  %4353 = vmatprep.subr.mxu0 0.0
  %4354 = vmatpush1.msra.mxu0 0.0
  %4355 = vmatprep.subr.mxu0 0.0
  %4356 = vmatpush1.msra.mxu0 0.0
  %4357 = vmatprep.subr.mxu0 0.0
  %4358 = vmatpush1.msra.mxu0 0.0
  %4359 = vmatprep.subr.mxu0 0.0
  %4360 = vmatpush1.msra.mxu0 0.0
  %4361 = vmatprep.subr.mxu0 0.0
  %4362 = vmatpush1.msra.mxu0 0.0
  %4363 = vmatprep.subr.mxu0 0.0
  %4364 = vmatpush1.msra.mxu0 0.0
  %4365 = vmatprep.subr.mxu0 0.0
  %4366 = vmatpush1.msra.mxu0 0.0
  %4367 = vmatprep.subr.mxu0 0.0
  %4368 = vmatpush1.msra.mxu0 0.0
  %4369 = vmatprep.subr.mxu0 0.0
  %4370 = vmatpush1.msra.mxu0 0.0
  %4371 = vmatprep.subr.mxu0 0.0
  %4372 = vmatpush1.msra.mxu0 0.0
  %4373 = vmatprep.subr.mxu0 0.0
  %4374 = vmatpush1.msra.mxu0 0.0
  %4375 = vmatprep.subr.mxu0 0.0
  %4376 = vmatpush1.msra.mxu0 0.0
  %4377 = vmatprep.subr.mxu0 0.0
  %4378 = vmatpush1.msra.mxu0 0.0
  %4379 = vmatprep.subr.mxu0 0.0
  %4380 = vmatpush1.msra.mxu0 0.0
  %4381 = vmatprep.subr.mxu0 0.0
  %4382 = vmatpush1.msra.mxu0 0.0
  %4383 = vmatprep.subr.mxu0 0.0
  %4384 = vmatpush1.msra.mxu0 0.0
  %4385 = vmatprep.subr.mxu0 0.0
  %4386 = vmatpush1.msra.mxu0 0.0
  %4387 = vmatprep.subr.mxu0 0.0
  %4388 = vmatpush1.msra.mxu0 0.0
  %4389 = vmatprep.subr.mxu0 0.0
  %4390 = vmatpush1.msra.mxu0 0.0
  %4391 = vmatprep.mubr.f32.mxu0 0.0
  %4392 = vmatmul.mubr.f32.gmra.mrb[0].mxu0 %v4325
  %v4393 = vpop.f32.mrb[0].mxu0
  %v4394 = vadd.f32 %v115, %v4393
  %v4395 = vpop.f32.mrb[0].mxu0
  %4396 = vdwg.mxu0
  %4398 = vrot.lane.b32.xlu0 %v4394, 64
  %v4399 = vpop.permute.xlu0 %4398
  %4401 = vst.msk [vmem:[%s2 + $0x40] sm:$0x3] %vm1131, %v4399
  %v4402 = vmul.f32 %v4394, 0.5
  %v4403 = vtanh.pop %v4402
  %v4404 = vmul.f32 %v4403, 0.5
  %v4405 = vadd.f32 %v4404, 0.5
  %v4406 = vtanh.pop %v4394
  %v4407 = vmul.f32 %v4405, %v4315
  %4409 = vrot.lane.b32.xlu0 %v4406, 96
  %v4410 = vpop.permute.xlu0 %4409
  %v4412 = vmul.f32 %v4405, %v4410
  %4414 = vrot.lane.b32.xlu0 %v4412, 16
  %v4415 = vpop.permute.xlu0 %4414
  %v4417 = vadd.f32 %v4407, %v4415
  %v4418 = vtanh.pop %v4417
  %4420 = vrot.lane.b32.xlu0 %v4418, 32
  %v4421 = vpop.permute.xlu0 %4420
  %v4423 = vmul.f32 %v4405, %v4421
  %4425 = vrot.lane.b32.xlu0 %v4423, 80
  %v4426 = vpop.permute.xlu0 %4425
  %v4427 = vsel %vm116, %v4426, 0
  %4429 = vmatprep.subr.mxu0 0.0
  %4430 = vmatpush1.msra.mxu0 %v18
  %4431 = vmatprep.subr.mxu0 0.0
  %4432 = vmatpush1.msra.mxu0 %v19
  %4433 = vmatprep.subr.mxu0 0.0
  %4434 = vmatpush1.msra.mxu0 0.0
  %4435 = vmatprep.subr.mxu0 0.0
  %4436 = vmatpush1.msra.mxu0 0.0
  %4437 = vmatprep.subr.mxu0 0.0
  %4438 = vmatpush1.msra.mxu0 0.0
  %4439 = vmatprep.subr.mxu0 0.0
  %4440 = vmatpush1.msra.mxu0 0.0
  %4441 = vmatprep.subr.mxu0 0.0
  %4442 = vmatpush1.msra.mxu0 0.0
  %4443 = vmatprep.subr.mxu0 0.0
  %4444 = vmatpush1.msra.mxu0 0.0
  %4445 = vmatprep.subr.mxu0 0.0
  %4446 = vmatpush1.msra.mxu0 0.0
  %4447 = vmatprep.subr.mxu0 0.0
  %4448 = vmatpush1.msra.mxu0 0.0
  %4449 = vmatprep.subr.mxu0 0.0
  %4450 = vmatpush1.msra.mxu0 0.0
  %4451 = vmatprep.subr.mxu0 0.0
  %4452 = vmatpush1.msra.mxu0 0.0
  %4453 = vmatprep.subr.mxu0 0.0
  %4454 = vmatpush1.msra.mxu0 0.0
  %4455 = vmatprep.subr.mxu0 0.0
  %4456 = vmatpush1.msra.mxu0 0.0
  %4457 = vmatprep.subr.mxu0 0.0
  %4458 = vmatpush1.msra.mxu0 0.0
  %4459 = vmatprep.subr.mxu0 0.0
  %4460 = vmatpush1.msra.mxu0 0.0
  %4461 = vmatprep.subr.mxu0 0.0
  %4462 = vmatpush1.msra.mxu0 0.0
  %4463 = vmatprep.subr.mxu0 0.0
  %4464 = vmatpush1.msra.mxu0 0.0
  %4465 = vmatprep.subr.mxu0 0.0
  %4466 = vmatpush1.msra.mxu0 0.0
  %4467 = vmatprep.subr.mxu0 0.0
  %4468 = vmatpush1.msra.mxu0 0.0
  %4469 = vmatprep.subr.mxu0 0.0
  %4470 = vmatpush1.msra.mxu0 0.0
  %4471 = vmatprep.subr.mxu0 0.0
  %4472 = vmatpush1.msra.mxu0 0.0
  %4473 = vmatprep.subr.mxu0 0.0
  %4474 = vmatpush1.msra.mxu0 0.0
  %4475 = vmatprep.subr.mxu0 0.0
  %4476 = vmatpush1.msra.mxu0 0.0
  %4477 = vmatprep.subr.mxu0 0.0
  %4478 = vmatpush1.msra.mxu0 0.0
  %4479 = vmatprep.subr.mxu0 0.0
  %4480 = vmatpush1.msra.mxu0 0.0
  %4481 = vmatprep.subr.mxu0 0.0
  %4482 = vmatpush1.msra.mxu0 0.0
  %4483 = vmatprep.subr.mxu0 0.0
  %4484 = vmatpush1.msra.mxu0 0.0
  %4485 = vmatprep.subr.mxu0 0.0
  %4486 = vmatpush1.msra.mxu0 0.0
  %4487 = vmatprep.subr.mxu0 0.0
  %4488 = vmatpush1.msra.mxu0 0.0
  %4489 = vmatprep.subr.mxu0 0.0
  %4490 = vmatpush1.msra.mxu0 0.0
  %4491 = vmatprep.subr.mxu0 0.0
  %4492 = vmatpush1.msra.mxu0 0.0
  %4493 = vmatprep.mubr.f32.mxu0 0.0
  %4494 = vmatmul.mubr.f32.gmra.mrb[0].mxu0 %v4427
  %v4495 = vpop.f32.mrb[0].mxu0
  %v4496 = vadd.f32 %v115, %v4495
  %v4497 = vpop.f32.mrb[0].mxu0
  %4498 = vdwg.mxu0
  %4500 = vrot.lane.b32.xlu0 %v4496, 64
  %v4501 = vpop.permute.xlu0 %4500
  %4503 = vst.msk [vmem:[%s2 + $0x42] sm:$0x3] %vm1131, %v4501
  %v4504 = vmul.f32 %v4496, 0.5
  %v4505 = vtanh.pop %v4504
  %v4506 = vmul.f32 %v4505, 0.5
  %v4507 = vadd.f32 %v4506, 0.5
  %v4508 = vtanh.pop %v4496
  %v4509 = vmul.f32 %v4507, %v4417
  %4511 = vrot.lane.b32.xlu0 %v4508, 96
  %v4512 = vpop.permute.xlu0 %4511
  %v4514 = vmul.f32 %v4507, %v4512
  %4516 = vrot.lane.b32.xlu0 %v4514, 16
  %v4517 = vpop.permute.xlu0 %4516
  %v4519 = vadd.f32 %v4509, %v4517
  %v4520 = vtanh.pop %v4519
  %4522 = vrot.lane.b32.xlu0 %v4520, 32
  %v4523 = vpop.permute.xlu0 %4522
  %v4525 = vmul.f32 %v4507, %v4523
  %4527 = vrot.lane.b32.xlu0 %v4525, 80
  %v4528 = vpop.permute.xlu0 %4527
  %v4529 = vsel %vm116, %v4528, 0
  %4531 = vmatprep.subr.mxu0 0.0
  %4532 = vmatpush1.msra.mxu0 %v18
  %4533 = vmatprep.subr.mxu0 0.0
  %4534 = vmatpush1.msra.mxu0 %v19
  %4535 = vmatprep.subr.mxu0 0.0
  %4536 = vmatpush1.msra.mxu0 0.0
  %4537 = vmatprep.subr.mxu0 0.0
  %4538 = vmatpush1.msra.mxu0 0.0
  %4539 = vmatprep.subr.mxu0 0.0
  %4540 = vmatpush1.msra.mxu0 0.0
  %4541 = vmatprep.subr.mxu0 0.0
  %4542 = vmatpush1.msra.mxu0 0.0
  %4543 = vmatprep.subr.mxu0 0.0
  %4544 = vmatpush1.msra.mxu0 0.0
  %4545 = vmatprep.subr.mxu0 0.0
  %4546 = vmatpush1.msra.mxu0 0.0
  %4547 = vmatprep.subr.mxu0 0.0
  %4548 = vmatpush1.msra.mxu0 0.0
  %4549 = vmatprep.subr.mxu0 0.0
  %4550 = vmatpush1.msra.mxu0 0.0
  %4551 = vmatprep.subr.mxu0 0.0
  %4552 = vmatpush1.msra.mxu0 0.0
  %4553 = vmatprep.subr.mxu0 0.0
  %4554 = vmatpush1.msra.mxu0 0.0
  %4555 = vmatprep.subr.mxu0 0.0
  %4556 = vmatpush1.msra.mxu0 0.0
  %4557 = vmatprep.subr.mxu0 0.0
  %4558 = vmatpush1.msra.mxu0 0.0
  %4559 = vmatprep.subr.mxu0 0.0
  %4560 = vmatpush1.msra.mxu0 0.0
  %4561 = vmatprep.subr.mxu0 0.0
  %4562 = vmatpush1.msra.mxu0 0.0
  %4563 = vmatprep.subr.mxu0 0.0
  %4564 = vmatpush1.msra.mxu0 0.0
  %4565 = vmatprep.subr.mxu0 0.0
  %4566 = vmatpush1.msra.mxu0 0.0
  %4567 = vmatprep.subr.mxu0 0.0
  %4568 = vmatpush1.msra.mxu0 0.0
  %4569 = vmatprep.subr.mxu0 0.0
  %4570 = vmatpush1.msra.mxu0 0.0
  %4571 = vmatprep.subr.mxu0 0.0
  %4572 = vmatpush1.msra.mxu0 0.0
  %4573 = vmatprep.subr.mxu0 0.0
  %4574 = vmatpush1.msra.mxu0 0.0
  %4575 = vmatprep.subr.mxu0 0.0
  %4576 = vmatpush1.msra.mxu0 0.0
  %4577 = vmatprep.subr.mxu0 0.0
  %4578 = vmatpush1.msra.mxu0 0.0
  %4579 = vmatprep.subr.mxu0 0.0
  %4580 = vmatpush1.msra.mxu0 0.0
  %4581 = vmatprep.subr.mxu0 0.0
  %4582 = vmatpush1.msra.mxu0 0.0
  %4583 = vmatprep.subr.mxu0 0.0
  %4584 = vmatpush1.msra.mxu0 0.0
  %4585 = vmatprep.subr.mxu0 0.0
  %4586 = vmatpush1.msra.mxu0 0.0
  %4587 = vmatprep.subr.mxu0 0.0
  %4588 = vmatpush1.msra.mxu0 0.0
  %4589 = vmatprep.subr.mxu0 0.0
  %4590 = vmatpush1.msra.mxu0 0.0
  %4591 = vmatprep.subr.mxu0 0.0
  %4592 = vmatpush1.msra.mxu0 0.0
  %4593 = vmatprep.subr.mxu0 0.0
  %4594 = vmatpush1.msra.mxu0 0.0
  %4595 = vmatprep.mubr.f32.mxu0 0.0
  %4596 = vmatmul.mubr.f32.gmra.mrb[0].mxu0 %v4529
  %v4597 = vpop.f32.mrb[0].mxu0
  %v4598 = vadd.f32 %v115, %v4597
  %v4599 = vpop.f32.mrb[0].mxu0
  %4600 = vdwg.mxu0
  %4602 = vrot.lane.b32.xlu0 %v4598, 64
  %v4603 = vpop.permute.xlu0 %4602
  %4605 = vst.msk [vmem:[%s2 + $0x44] sm:$0x3] %vm1131, %v4603
  %v4606 = vmul.f32 %v4598, 0.5
  %v4607 = vtanh.pop %v4606
  %v4608 = vmul.f32 %v4607, 0.5
  %v4609 = vadd.f32 %v4608, 0.5
  %v4610 = vtanh.pop %v4598
  %v4611 = vmul.f32 %v4609, %v4519
  %4613 = vrot.lane.b32.xlu0 %v4610, 96
  %v4614 = vpop.permute.xlu0 %4613
  %v4616 = vmul.f32 %v4609, %v4614
  %4618 = vrot.lane.b32.xlu0 %v4616, 16
  %v4619 = vpop.permute.xlu0 %4618
  %v4621 = vadd.f32 %v4611, %v4619
  %v4622 = vtanh.pop %v4621
  %4624 = vrot.lane.b32.xlu0 %v4622, 32
  %v4625 = vpop.permute.xlu0 %4624
  %v4627 = vmul.f32 %v4609, %v4625
  %4629 = vrot.lane.b32.xlu0 %v4627, 80
  %v4630 = vpop.permute.xlu0 %4629
  %v4631 = vsel %vm116, %v4630, 0
  %4633 = vmatprep.subr.mxu0 0.0
  %4634 = vmatpush1.msra.mxu0 %v18
  %4635 = vmatprep.subr.mxu0 0.0
  %4636 = vmatpush1.msra.mxu0 %v19
  %4637 = vmatprep.subr.mxu0 0.0
  %4638 = vmatpush1.msra.mxu0 0.0
  %4639 = vmatprep.subr.mxu0 0.0
  %4640 = vmatpush1.msra.mxu0 0.0
  %4641 = vmatprep.subr.mxu0 0.0
  %4642 = vmatpush1.msra.mxu0 0.0
  %4643 = vmatprep.subr.mxu0 0.0
  %4644 = vmatpush1.msra.mxu0 0.0
  %4645 = vmatprep.subr.mxu0 0.0
  %4646 = vmatpush1.msra.mxu0 0.0
  %4647 = vmatprep.subr.mxu0 0.0
  %4648 = vmatpush1.msra.mxu0 0.0
  %4649 = vmatprep.subr.mxu0 0.0
  %4650 = vmatpush1.msra.mxu0 0.0
  %4651 = vmatprep.subr.mxu0 0.0
  %4652 = vmatpush1.msra.mxu0 0.0
  %4653 = vmatprep.subr.mxu0 0.0
  %4654 = vmatpush1.msra.mxu0 0.0
  %4655 = vmatprep.subr.mxu0 0.0
  %4656 = vmatpush1.msra.mxu0 0.0
  %4657 = vmatprep.subr.mxu0 0.0
  %4658 = vmatpush1.msra.mxu0 0.0
  %4659 = vmatprep.subr.mxu0 0.0
  %4660 = vmatpush1.msra.mxu0 0.0
  %4661 = vmatprep.subr.mxu0 0.0
  %4662 = vmatpush1.msra.mxu0 0.0
  %4663 = vmatprep.subr.mxu0 0.0
  %4664 = vmatpush1.msra.mxu0 0.0
  %4665 = vmatprep.subr.mxu0 0.0
  %4666 = vmatpush1.msra.mxu0 0.0
  %4667 = vmatprep.subr.mxu0 0.0
  %4668 = vmatpush1.msra.mxu0 0.0
  %4669 = vmatprep.subr.mxu0 0.0
  %4670 = vmatpush1.msra.mxu0 0.0
  %4671 = vmatprep.subr.mxu0 0.0
  %4672 = vmatpush1.msra.mxu0 0.0
  %4673 = vmatprep.subr.mxu0 0.0
  %4674 = vmatpush1.msra.mxu0 0.0
  %4675 = vmatprep.subr.mxu0 0.0
  %4676 = vmatpush1.msra.mxu0 0.0
  %4677 = vmatprep.subr.mxu0 0.0
  %4678 = vmatpush1.msra.mxu0 0.0
  %4679 = vmatprep.subr.mxu0 0.0
  %4680 = vmatpush1.msra.mxu0 0.0
  %4681 = vmatprep.subr.mxu0 0.0
  %4682 = vmatpush1.msra.mxu0 0.0
  %4683 = vmatprep.subr.mxu0 0.0
  %4684 = vmatpush1.msra.mxu0 0.0
  %4685 = vmatprep.subr.mxu0 0.0
  %4686 = vmatpush1.msra.mxu0 0.0
  %4687 = vmatprep.subr.mxu0 0.0
  %4688 = vmatpush1.msra.mxu0 0.0
  %4689 = vmatprep.subr.mxu0 0.0
  %4690 = vmatpush1.msra.mxu0 0.0
  %4691 = vmatprep.subr.mxu0 0.0
  %4692 = vmatpush1.msra.mxu0 0.0
  %4693 = vmatprep.subr.mxu0 0.0
  %4694 = vmatpush1.msra.mxu0 0.0
  %4695 = vmatprep.subr.mxu0 0.0
  %4696 = vmatpush1.msra.mxu0 0.0
  %4697 = vmatprep.mubr.f32.mxu0 0.0
  %4698 = vmatmul.mubr.f32.gmra.mrb[0].mxu0 %v4631
  %v4699 = vpop.f32.mrb[0].mxu0
  %v4700 = vadd.f32 %v115, %v4699
  %v4701 = vpop.f32.mrb[0].mxu0
  %4702 = vdwg.mxu0
  %4704 = vrot.lane.b32.xlu0 %v4700, 64
  %v4705 = vpop.permute.xlu0 %4704
  %4707 = vst.msk [vmem:[%s2 + $0x46] sm:$0x3] %vm1131, %v4705
  %v4708 = vmul.f32 %v4700, 0.5
  %v4709 = vtanh.pop %v4708
  %v4710 = vmul.f32 %v4709, 0.5
  %v4711 = vadd.f32 %v4710, 0.5
  %v4712 = vtanh.pop %v4700
  %v4713 = vmul.f32 %v4711, %v4621
  %4715 = vrot.lane.b32.xlu0 %v4712, 96
  %v4716 = vpop.permute.xlu0 %4715
  %v4718 = vmul.f32 %v4711, %v4716
  %4720 = vrot.lane.b32.xlu0 %v4718, 16
  %v4721 = vpop.permute.xlu0 %4720
  %v4723 = vadd.f32 %v4713, %v4721
  %v4724 = vtanh.pop %v4723
  %4726 = vrot.lane.b32.xlu0 %v4724, 32
  %v4727 = vpop.permute.xlu0 %4726
  %v4729 = vmul.f32 %v4711, %v4727
  %4731 = vrot.lane.b32.xlu0 %v4729, 80
  %v4732 = vpop.permute.xlu0 %4731
  %v4733 = vsel %vm116, %v4732, 0
  %4735 = vmatprep.subr.mxu0 0.0
  %4736 = vmatpush1.msra.mxu0 %v18
  %4737 = vmatprep.subr.mxu0 0.0
  %4738 = vmatpush1.msra.mxu0 %v19
  %4739 = vmatprep.subr.mxu0 0.0
  %4740 = vmatpush1.msra.mxu0 0.0
  %4741 = vmatprep.subr.mxu0 0.0
  %4742 = vmatpush1.msra.mxu0 0.0
  %4743 = vmatprep.subr.mxu0 0.0
  %4744 = vmatpush1.msra.mxu0 0.0
  %4745 = vmatprep.subr.mxu0 0.0
  %4746 = vmatpush1.msra.mxu0 0.0
  %4747 = vmatprep.subr.mxu0 0.0
  %4748 = vmatpush1.msra.mxu0 0.0
  %4749 = vmatprep.subr.mxu0 0.0
  %4750 = vmatpush1.msra.mxu0 0.0
  %4751 = vmatprep.subr.mxu0 0.0
  %4752 = vmatpush1.msra.mxu0 0.0
  %4753 = vmatprep.subr.mxu0 0.0
  %4754 = vmatpush1.msra.mxu0 0.0
  %4755 = vmatprep.subr.mxu0 0.0
  %4756 = vmatpush1.msra.mxu0 0.0
  %4757 = vmatprep.subr.mxu0 0.0
  %4758 = vmatpush1.msra.mxu0 0.0
  %4759 = vmatprep.subr.mxu0 0.0
  %4760 = vmatpush1.msra.mxu0 0.0
  %4761 = vmatprep.subr.mxu0 0.0
  %4762 = vmatpush1.msra.mxu0 0.0
  %4763 = vmatprep.subr.mxu0 0.0
  %4764 = vmatpush1.msra.mxu0 0.0
  %4765 = vmatprep.subr.mxu0 0.0
  %4766 = vmatpush1.msra.mxu0 0.0
  %4767 = vmatprep.subr.mxu0 0.0
  %4768 = vmatpush1.msra.mxu0 0.0
  %4769 = vmatprep.subr.mxu0 0.0
  %4770 = vmatpush1.msra.mxu0 0.0
  %4771 = vmatprep.subr.mxu0 0.0
  %4772 = vmatpush1.msra.mxu0 0.0
  %4773 = vmatprep.subr.mxu0 0.0
  %4774 = vmatpush1.msra.mxu0 0.0
  %4775 = vmatprep.subr.mxu0 0.0
  %4776 = vmatpush1.msra.mxu0 0.0
  %4777 = vmatprep.subr.mxu0 0.0
  %4778 = vmatpush1.msra.mxu0 0.0
  %4779 = vmatprep.subr.mxu0 0.0
  %4780 = vmatpush1.msra.mxu0 0.0
  %4781 = vmatprep.subr.mxu0 0.0
  %4782 = vmatpush1.msra.mxu0 0.0
  %4783 = vmatprep.subr.mxu0 0.0
  %4784 = vmatpush1.msra.mxu0 0.0
  %4785 = vmatprep.subr.mxu0 0.0
  %4786 = vmatpush1.msra.mxu0 0.0
  %4787 = vmatprep.subr.mxu0 0.0
  %4788 = vmatpush1.msra.mxu0 0.0
  %4789 = vmatprep.subr.mxu0 0.0
  %4790 = vmatpush1.msra.mxu0 0.0
  %4791 = vmatprep.subr.mxu0 0.0
  %4792 = vmatpush1.msra.mxu0 0.0
  %4793 = vmatprep.subr.mxu0 0.0
  %4794 = vmatpush1.msra.mxu0 0.0
  %4795 = vmatprep.subr.mxu0 0.0
  %4796 = vmatpush1.msra.mxu0 0.0
  %4797 = vmatprep.subr.mxu0 0.0
  %4798 = vmatpush1.msra.mxu0 0.0
  %4799 = vmatprep.mubr.f32.mxu0 0.0
  %4800 = vmatmul.mubr.f32.gmra.mrb[0].mxu0 %v4733
  %v4801 = vpop.f32.mrb[0].mxu0
  %v4802 = vadd.f32 %v115, %v4801
  %v4803 = vpop.f32.mrb[0].mxu0
  %4804 = vdwg.mxu0
  %4806 = vrot.lane.b32.xlu0 %v4802, 64
  %v4807 = vpop.permute.xlu0 %4806
  %4809 = vst.msk [vmem:[%s2 + $0x48] sm:$0x3] %vm1131, %v4807
  %v4810 = vmul.f32 %v4802, 0.5
  %v4811 = vtanh.pop %v4810
  %v4812 = vmul.f32 %v4811, 0.5
  %v4813 = vadd.f32 %v4812, 0.5
  %v4814 = vtanh.pop %v4802
  %v4815 = vmul.f32 %v4813, %v4723
  %4817 = vrot.lane.b32.xlu0 %v4814, 96
  %v4818 = vpop.permute.xlu0 %4817
  %v4820 = vmul.f32 %v4813, %v4818
  %4822 = vrot.lane.b32.xlu0 %v4820, 16
  %v4823 = vpop.permute.xlu0 %4822
  %v4825 = vadd.f32 %v4815, %v4823
  %v4826 = vtanh.pop %v4825
  %4828 = vrot.lane.b32.xlu0 %v4826, 32
  %v4829 = vpop.permute.xlu0 %4828
  %v4831 = vmul.f32 %v4813, %v4829
  %4833 = vrot.lane.b32.xlu0 %v4831, 80
  %v4834 = vpop.permute.xlu0 %4833
  %v4835 = vsel %vm116, %v4834, 0
  %4837 = vmatprep.subr.mxu0 0.0
  %4838 = vmatpush1.msra.mxu0 %v18
  %4839 = vmatprep.subr.mxu0 0.0
  %4840 = vmatpush1.msra.mxu0 %v19
  %4841 = vmatprep.subr.mxu0 0.0
  %4842 = vmatpush1.msra.mxu0 0.0
  %4843 = vmatprep.subr.mxu0 0.0
  %4844 = vmatpush1.msra.mxu0 0.0
  %4845 = vmatprep.subr.mxu0 0.0
  %4846 = vmatpush1.msra.mxu0 0.0
  %4847 = vmatprep.subr.mxu0 0.0
  %4848 = vmatpush1.msra.mxu0 0.0
  %4849 = vmatprep.subr.mxu0 0.0
  %4850 = vmatpush1.msra.mxu0 0.0
  %4851 = vmatprep.subr.mxu0 0.0
  %4852 = vmatpush1.msra.mxu0 0.0
  %4853 = vmatprep.subr.mxu0 0.0
  %4854 = vmatpush1.msra.mxu0 0.0
  %4855 = vmatprep.subr.mxu0 0.0
  %4856 = vmatpush1.msra.mxu0 0.0
  %4857 = vmatprep.subr.mxu0 0.0
  %4858 = vmatpush1.msra.mxu0 0.0
  %4859 = vmatprep.subr.mxu0 0.0
  %4860 = vmatpush1.msra.mxu0 0.0
  %4861 = vmatprep.subr.mxu0 0.0
  %4862 = vmatpush1.msra.mxu0 0.0
  %4863 = vmatprep.subr.mxu0 0.0
  %4864 = vmatpush1.msra.mxu0 0.0
  %4865 = vmatprep.subr.mxu0 0.0
  %4866 = vmatpush1.msra.mxu0 0.0
  %4867 = vmatprep.subr.mxu0 0.0
  %4868 = vmatpush1.msra.mxu0 0.0
  %4869 = vmatprep.subr.mxu0 0.0
  %4870 = vmatpush1.msra.mxu0 0.0
  %4871 = vmatprep.subr.mxu0 0.0
  %4872 = vmatpush1.msra.mxu0 0.0
  %4873 = vmatprep.subr.mxu0 0.0
  %4874 = vmatpush1.msra.mxu0 0.0
  %4875 = vmatprep.subr.mxu0 0.0
  %4876 = vmatpush1.msra.mxu0 0.0
  %4877 = vmatprep.subr.mxu0 0.0
  %4878 = vmatpush1.msra.mxu0 0.0
  %4879 = vmatprep.subr.mxu0 0.0
  %4880 = vmatpush1.msra.mxu0 0.0
  %4881 = vmatprep.subr.mxu0 0.0
  %4882 = vmatpush1.msra.mxu0 0.0
  %4883 = vmatprep.subr.mxu0 0.0
  %4884 = vmatpush1.msra.mxu0 0.0
  %4885 = vmatprep.subr.mxu0 0.0
  %4886 = vmatpush1.msra.mxu0 0.0
  %4887 = vmatprep.subr.mxu0 0.0
  %4888 = vmatpush1.msra.mxu0 0.0
  %4889 = vmatprep.subr.mxu0 0.0
  %4890 = vmatpush1.msra.mxu0 0.0
  %4891 = vmatprep.subr.mxu0 0.0
  %4892 = vmatpush1.msra.mxu0 0.0
  %4893 = vmatprep.subr.mxu0 0.0
  %4894 = vmatpush1.msra.mxu0 0.0
  %4895 = vmatprep.subr.mxu0 0.0
  %4896 = vmatpush1.msra.mxu0 0.0
  %4897 = vmatprep.subr.mxu0 0.0
  %4898 = vmatpush1.msra.mxu0 0.0
  %4899 = vmatprep.subr.mxu0 0.0
  %4900 = vmatpush1.msra.mxu0 0.0
  %4901 = vmatprep.mubr.f32.mxu0 0.0
  %4902 = vmatmul.mubr.f32.gmra.mrb[0].mxu0 %v4835
  %v4903 = vpop.f32.mrb[0].mxu0
  %v4904 = vadd.f32 %v115, %v4903
  %v4905 = vpop.f32.mrb[0].mxu0
  %4906 = vdwg.mxu0
  %4908 = vrot.lane.b32.xlu0 %v4904, 64
  %v4909 = vpop.permute.xlu0 %4908
  %4911 = vst.msk [vmem:[%s2 + $0x4a] sm:$0x3] %vm1131, %v4909
  %v4912 = vmul.f32 %v4904, 0.5
  %v4913 = vtanh.pop %v4912
  %v4914 = vmul.f32 %v4913, 0.5
  %v4915 = vadd.f32 %v4914, 0.5
  %v4916 = vtanh.pop %v4904
  %v4917 = vmul.f32 %v4915, %v4825
  %4919 = vrot.lane.b32.xlu0 %v4916, 96
  %v4920 = vpop.permute.xlu0 %4919
  %v4922 = vmul.f32 %v4915, %v4920
  %4924 = vrot.lane.b32.xlu0 %v4922, 16
  %v4925 = vpop.permute.xlu0 %4924
  %v4927 = vadd.f32 %v4917, %v4925
  %v4928 = vtanh.pop %v4927
  %4930 = vrot.lane.b32.xlu0 %v4928, 32
  %v4931 = vpop.permute.xlu0 %4930
  %v4933 = vmul.f32 %v4915, %v4931
  %4935 = vrot.lane.b32.xlu0 %v4933, 80
  %v4936 = vpop.permute.xlu0 %4935
  %v4937 = vsel %vm116, %v4936, 0
  %4939 = vmatprep.subr.mxu0 0.0
  %4940 = vmatpush1.msra.mxu0 %v18
  %4941 = vmatprep.subr.mxu0 0.0
  %4942 = vmatpush1.msra.mxu0 %v19
  %4943 = vmatprep.subr.mxu0 0.0
  %4944 = vmatpush1.msra.mxu0 0.0
  %4945 = vmatprep.subr.mxu0 0.0
  %4946 = vmatpush1.msra.mxu0 0.0
  %4947 = vmatprep.subr.mxu0 0.0
  %4948 = vmatpush1.msra.mxu0 0.0
  %4949 = vmatprep.subr.mxu0 0.0
  %4950 = vmatpush1.msra.mxu0 0.0
  %4951 = vmatprep.subr.mxu0 0.0
  %4952 = vmatpush1.msra.mxu0 0.0
  %4953 = vmatprep.subr.mxu0 0.0
  %4954 = vmatpush1.msra.mxu0 0.0
  %4955 = vmatprep.subr.mxu0 0.0
  %4956 = vmatpush1.msra.mxu0 0.0
  %4957 = vmatprep.subr.mxu0 0.0
  %4958 = vmatpush1.msra.mxu0 0.0
  %4959 = vmatprep.subr.mxu0 0.0
  %4960 = vmatpush1.msra.mxu0 0.0
  %4961 = vmatprep.subr.mxu0 0.0
  %4962 = vmatpush1.msra.mxu0 0.0
  %4963 = vmatprep.subr.mxu0 0.0
  %4964 = vmatpush1.msra.mxu0 0.0
  %4965 = vmatprep.subr.mxu0 0.0
  %4966 = vmatpush1.msra.mxu0 0.0
  %4967 = vmatprep.subr.mxu0 0.0
  %4968 = vmatpush1.msra.mxu0 0.0
  %4969 = vmatprep.subr.mxu0 0.0
  %4970 = vmatpush1.msra.mxu0 0.0
  %4971 = vmatprep.subr.mxu0 0.0
  %4972 = vmatpush1.msra.mxu0 0.0
  %4973 = vmatprep.subr.mxu0 0.0
  %4974 = vmatpush1.msra.mxu0 0.0
  %4975 = vmatprep.subr.mxu0 0.0
  %4976 = vmatpush1.msra.mxu0 0.0
  %4977 = vmatprep.subr.mxu0 0.0
  %4978 = vmatpush1.msra.mxu0 0.0
  %4979 = vmatprep.subr.mxu0 0.0
  %4980 = vmatpush1.msra.mxu0 0.0
  %4981 = vmatprep.subr.mxu0 0.0
  %4982 = vmatpush1.msra.mxu0 0.0
  %4983 = vmatprep.subr.mxu0 0.0
  %4984 = vmatpush1.msra.mxu0 0.0
  %4985 = vmatprep.subr.mxu0 0.0
  %4986 = vmatpush1.msra.mxu0 0.0
  %4987 = vmatprep.subr.mxu0 0.0
  %4988 = vmatpush1.msra.mxu0 0.0
  %4989 = vmatprep.subr.mxu0 0.0
  %4990 = vmatpush1.msra.mxu0 0.0
  %4991 = vmatprep.subr.mxu0 0.0
  %4992 = vmatpush1.msra.mxu0 0.0
  %4993 = vmatprep.subr.mxu0 0.0
  %4994 = vmatpush1.msra.mxu0 0.0
  %4995 = vmatprep.subr.mxu0 0.0
  %4996 = vmatpush1.msra.mxu0 0.0
  %4997 = vmatprep.subr.mxu0 0.0
  %4998 = vmatpush1.msra.mxu0 0.0
  %4999 = vmatprep.subr.mxu0 0.0
  %5000 = vmatpush1.msra.mxu0 0.0
  %5001 = vmatprep.subr.mxu0 0.0
  %5002 = vmatpush1.msra.mxu0 0.0
  %5003 = vmatprep.mubr.f32.mxu0 0.0
  %5004 = vmatmul.mubr.f32.gmra.mrb[0].mxu0 %v4937
  %v5005 = vpop.f32.mrb[0].mxu0
  %v5006 = vadd.f32 %v115, %v5005
  %v5007 = vpop.f32.mrb[0].mxu0
  %5008 = vdwg.mxu0
  %5010 = vrot.lane.b32.xlu0 %v5006, 64
  %v5011 = vpop.permute.xlu0 %5010
  %5013 = vst.msk [vmem:[%s2 + $0x4c] sm:$0x3] %vm1131, %v5011
  %v5014 = vmul.f32 %v5006, 0.5
  %v5015 = vtanh.pop %v5014
  %v5016 = vmul.f32 %v5015, 0.5
  %v5017 = vadd.f32 %v5016, 0.5
  %v5018 = vtanh.pop %v5006
  %v5019 = vmul.f32 %v5017, %v4927
  %5021 = vrot.lane.b32.xlu0 %v5018, 96
  %v5022 = vpop.permute.xlu0 %5021
  %v5024 = vmul.f32 %v5017, %v5022
  %5026 = vrot.lane.b32.xlu0 %v5024, 16
  %v5027 = vpop.permute.xlu0 %5026
  %v5029 = vadd.f32 %v5019, %v5027
  %v5030 = vtanh.pop %v5029
  %5032 = vrot.lane.b32.xlu0 %v5030, 32
  %v5033 = vpop.permute.xlu0 %5032
  %v5035 = vmul.f32 %v5017, %v5033
  %5037 = vrot.lane.b32.xlu0 %v5035, 80
  %v5038 = vpop.permute.xlu0 %5037
  %v5039 = vsel %vm116, %v5038, 0
  %5041 = vmatprep.subr.mxu0 0.0
  %5042 = vmatpush1.msra.mxu0 %v18
  %5043 = vmatprep.subr.mxu0 0.0
  %5044 = vmatpush1.msra.mxu0 %v19
  %5045 = vmatprep.subr.mxu0 0.0
  %5046 = vmatpush1.msra.mxu0 0.0
  %5047 = vmatprep.subr.mxu0 0.0
  %5048 = vmatpush1.msra.mxu0 0.0
  %5049 = vmatprep.subr.mxu0 0.0
  %5050 = vmatpush1.msra.mxu0 0.0
  %5051 = vmatprep.subr.mxu0 0.0
  %5052 = vmatpush1.msra.mxu0 0.0
  %5053 = vmatprep.subr.mxu0 0.0
  %5054 = vmatpush1.msra.mxu0 0.0
  %5055 = vmatprep.subr.mxu0 0.0
  %5056 = vmatpush1.msra.mxu0 0.0
  %5057 = vmatprep.subr.mxu0 0.0
  %5058 = vmatpush1.msra.mxu0 0.0
  %5059 = vmatprep.subr.mxu0 0.0
  %5060 = vmatpush1.msra.mxu0 0.0
  %5061 = vmatprep.subr.mxu0 0.0
  %5062 = vmatpush1.msra.mxu0 0.0
  %5063 = vmatprep.subr.mxu0 0.0
  %5064 = vmatpush1.msra.mxu0 0.0
  %5065 = vmatprep.subr.mxu0 0.0
  %5066 = vmatpush1.msra.mxu0 0.0
  %5067 = vmatprep.subr.mxu0 0.0
  %5068 = vmatpush1.msra.mxu0 0.0
  %5069 = vmatprep.subr.mxu0 0.0
  %5070 = vmatpush1.msra.mxu0 0.0
  %5071 = vmatprep.subr.mxu0 0.0
  %5072 = vmatpush1.msra.mxu0 0.0
  %5073 = vmatprep.subr.mxu0 0.0
  %5074 = vmatpush1.msra.mxu0 0.0
  %5075 = vmatprep.subr.mxu0 0.0
  %5076 = vmatpush1.msra.mxu0 0.0
  %5077 = vmatprep.subr.mxu0 0.0
  %5078 = vmatpush1.msra.mxu0 0.0
  %5079 = vmatprep.subr.mxu0 0.0
  %5080 = vmatpush1.msra.mxu0 0.0
  %5081 = vmatprep.subr.mxu0 0.0
  %5082 = vmatpush1.msra.mxu0 0.0
  %5083 = vmatprep.subr.mxu0 0.0
  %5084 = vmatpush1.msra.mxu0 0.0
  %5085 = vmatprep.subr.mxu0 0.0
  %5086 = vmatpush1.msra.mxu0 0.0
  %5087 = vmatprep.subr.mxu0 0.0
  %5088 = vmatpush1.msra.mxu0 0.0
  %5089 = vmatprep.subr.mxu0 0.0
  %5090 = vmatpush1.msra.mxu0 0.0
  %5091 = vmatprep.subr.mxu0 0.0
  %5092 = vmatpush1.msra.mxu0 0.0
  %5093 = vmatprep.subr.mxu0 0.0
  %5094 = vmatpush1.msra.mxu0 0.0
  %5095 = vmatprep.subr.mxu0 0.0
  %5096 = vmatpush1.msra.mxu0 0.0
  %5097 = vmatprep.subr.mxu0 0.0
  %5098 = vmatpush1.msra.mxu0 0.0
  %5099 = vmatprep.subr.mxu0 0.0
  %5100 = vmatpush1.msra.mxu0 0.0
  %5101 = vmatprep.subr.mxu0 0.0
  %5102 = vmatpush1.msra.mxu0 0.0
  %5103 = vmatprep.subr.mxu0 0.0
  %5104 = vmatpush1.msra.mxu0 0.0
  %5105 = vmatprep.mubr.f32.mxu0 0.0
  %5106 = vmatmul.mubr.f32.gmra.mrb[0].mxu0 %v5039
  %v5107 = vpop.f32.mrb[0].mxu0
  %v5108 = vadd.f32 %v115, %v5107
  %v5109 = vpop.f32.mrb[0].mxu0
  %5110 = vdwg.mxu0
  %5112 = vrot.lane.b32.xlu0 %v5108, 64
  %v5113 = vpop.permute.xlu0 %5112
  %5115 = vst.msk [vmem:[%s2 + $0x4e] sm:$0x3] %vm1131, %v5113
  %v5116 = vmul.f32 %v5108, 0.5
  %v5117 = vtanh.pop %v5116
  %v5118 = vmul.f32 %v5117, 0.5
  %v5119 = vadd.f32 %v5118, 0.5
  %v5120 = vtanh.pop %v5108
  %v5121 = vmul.f32 %v5119, %v5029
  %5123 = vrot.lane.b32.xlu0 %v5120, 96
  %v5124 = vpop.permute.xlu0 %5123
  %v5126 = vmul.f32 %v5119, %v5124
  %5128 = vrot.lane.b32.xlu0 %v5126, 16
  %v5129 = vpop.permute.xlu0 %5128
  %v5131 = vadd.f32 %v5121, %v5129
  %v5132 = vtanh.pop %v5131
  %5134 = vrot.lane.b32.xlu0 %v5132, 32
  %v5135 = vpop.permute.xlu0 %5134
  %v5137 = vmul.f32 %v5119, %v5135
  %5139 = vrot.lane.b32.xlu0 %v5137, 80
  %v5140 = vpop.permute.xlu0 %5139
  %v5141 = vsel %vm116, %v5140, 0
  %5143 = vmatprep.subr.mxu0 0.0
  %5144 = vmatpush1.msra.mxu0 %v18
  %5145 = vmatprep.subr.mxu0 0.0
  %5146 = vmatpush1.msra.mxu0 %v19
  %5147 = vmatprep.subr.mxu0 0.0
  %5148 = vmatpush1.msra.mxu0 0.0
  %5149 = vmatprep.subr.mxu0 0.0
  %5150 = vmatpush1.msra.mxu0 0.0
  %5151 = vmatprep.subr.mxu0 0.0
  %5152 = vmatpush1.msra.mxu0 0.0
  %5153 = vmatprep.subr.mxu0 0.0
  %5154 = vmatpush1.msra.mxu0 0.0
  %5155 = vmatprep.subr.mxu0 0.0
  %5156 = vmatpush1.msra.mxu0 0.0
  %5157 = vmatprep.subr.mxu0 0.0
  %5158 = vmatpush1.msra.mxu0 0.0
  %5159 = vmatprep.subr.mxu0 0.0
  %5160 = vmatpush1.msra.mxu0 0.0
  %5161 = vmatprep.subr.mxu0 0.0
  %5162 = vmatpush1.msra.mxu0 0.0
  %5163 = vmatprep.subr.mxu0 0.0
  %5164 = vmatpush1.msra.mxu0 0.0
  %5165 = vmatprep.subr.mxu0 0.0
  %5166 = vmatpush1.msra.mxu0 0.0
  %5167 = vmatprep.subr.mxu0 0.0
  %5168 = vmatpush1.msra.mxu0 0.0
  %5169 = vmatprep.subr.mxu0 0.0
  %5170 = vmatpush1.msra.mxu0 0.0
  %5171 = vmatprep.subr.mxu0 0.0
  %5172 = vmatpush1.msra.mxu0 0.0
  %5173 = vmatprep.subr.mxu0 0.0
  %5174 = vmatpush1.msra.mxu0 0.0
  %5175 = vmatprep.subr.mxu0 0.0
  %5176 = vmatpush1.msra.mxu0 0.0
  %5177 = vmatprep.subr.mxu0 0.0
  %5178 = vmatpush1.msra.mxu0 0.0
  %5179 = vmatprep.subr.mxu0 0.0
  %5180 = vmatpush1.msra.mxu0 0.0
  %5181 = vmatprep.subr.mxu0 0.0
  %5182 = vmatpush1.msra.mxu0 0.0
  %5183 = vmatprep.subr.mxu0 0.0
  %5184 = vmatpush1.msra.mxu0 0.0
  %5185 = vmatprep.subr.mxu0 0.0
  %5186 = vmatpush1.msra.mxu0 0.0
  %5187 = vmatprep.subr.mxu0 0.0
  %5188 = vmatpush1.msra.mxu0 0.0
  %5189 = vmatprep.subr.mxu0 0.0
  %5190 = vmatpush1.msra.mxu0 0.0
  %5191 = vmatprep.subr.mxu0 0.0
  %5192 = vmatpush1.msra.mxu0 0.0
  %5193 = vmatprep.subr.mxu0 0.0
  %5194 = vmatpush1.msra.mxu0 0.0
  %5195 = vmatprep.subr.mxu0 0.0
  %5196 = vmatpush1.msra.mxu0 0.0
  %5197 = vmatprep.subr.mxu0 0.0
  %5198 = vmatpush1.msra.mxu0 0.0
  %5199 = vmatprep.subr.mxu0 0.0
  %5200 = vmatpush1.msra.mxu0 0.0
  %5201 = vmatprep.subr.mxu0 0.0
  %5202 = vmatpush1.msra.mxu0 0.0
  %5203 = vmatprep.subr.mxu0 0.0
  %5204 = vmatpush1.msra.mxu0 0.0
  %5205 = vmatprep.subr.mxu0 0.0
  %5206 = vmatpush1.msra.mxu0 0.0
  %5207 = vmatprep.mubr.f32.mxu0 0.0
  %5208 = vmatmul.mubr.f32.gmra.mrb[0].mxu0 %v5141
  %v5209 = vpop.f32.mrb[0].mxu0
  %v5210 = vadd.f32 %v115, %v5209
  %v5211 = vpop.f32.mrb[0].mxu0
  %5212 = vdwg.mxu0
  %5214 = vrot.lane.b32.xlu0 %v5210, 64
  %v5215 = vpop.permute.xlu0 %5214
  %5217 = vst.msk [vmem:[%s2 + $0x50] sm:$0x3] %vm1131, %v5215
  %v5218 = vmul.f32 %v5210, 0.5
  %v5219 = vtanh.pop %v5218
  %v5220 = vmul.f32 %v5219, 0.5
  %v5221 = vadd.f32 %v5220, 0.5
  %v5222 = vtanh.pop %v5210
  %v5223 = vmul.f32 %v5221, %v5131
  %5225 = vrot.lane.b32.xlu0 %v5222, 96
  %v5226 = vpop.permute.xlu0 %5225
  %v5228 = vmul.f32 %v5221, %v5226
  %5230 = vrot.lane.b32.xlu0 %v5228, 16
  %v5231 = vpop.permute.xlu0 %5230
  %v5233 = vadd.f32 %v5223, %v5231
  %v5234 = vtanh.pop %v5233
  %5236 = vrot.lane.b32.xlu0 %v5234, 32
  %v5237 = vpop.permute.xlu0 %5236
  %v5239 = vmul.f32 %v5221, %v5237
  %5241 = vrot.lane.b32.xlu0 %v5239, 80
  %v5242 = vpop.permute.xlu0 %5241
  %v5243 = vsel %vm116, %v5242, 0
  %5245 = vmatprep.subr.mxu0 0.0
  %5246 = vmatpush1.msra.mxu0 %v18
  %5247 = vmatprep.subr.mxu0 0.0
  %5248 = vmatpush1.msra.mxu0 %v19
  %5249 = vmatprep.subr.mxu0 0.0
  %5250 = vmatpush1.msra.mxu0 0.0
  %5251 = vmatprep.subr.mxu0 0.0
  %5252 = vmatpush1.msra.mxu0 0.0
  %5253 = vmatprep.subr.mxu0 0.0
  %5254 = vmatpush1.msra.mxu0 0.0
  %5255 = vmatprep.subr.mxu0 0.0
  %5256 = vmatpush1.msra.mxu0 0.0
  %5257 = vmatprep.subr.mxu0 0.0
  %5258 = vmatpush1.msra.mxu0 0.0
  %5259 = vmatprep.subr.mxu0 0.0
  %5260 = vmatpush1.msra.mxu0 0.0
  %5261 = vmatprep.subr.mxu0 0.0
  %5262 = vmatpush1.msra.mxu0 0.0
  %5263 = vmatprep.subr.mxu0 0.0
  %5264 = vmatpush1.msra.mxu0 0.0
  %5265 = vmatprep.subr.mxu0 0.0
  %5266 = vmatpush1.msra.mxu0 0.0
  %5267 = vmatprep.subr.mxu0 0.0
  %5268 = vmatpush1.msra.mxu0 0.0
  %5269 = vmatprep.subr.mxu0 0.0
  %5270 = vmatpush1.msra.mxu0 0.0
  %5271 = vmatprep.subr.mxu0 0.0
  %5272 = vmatpush1.msra.mxu0 0.0
  %5273 = vmatprep.subr.mxu0 0.0
  %5274 = vmatpush1.msra.mxu0 0.0
  %5275 = vmatprep.subr.mxu0 0.0
  %5276 = vmatpush1.msra.mxu0 0.0
  %5277 = vmatprep.subr.mxu0 0.0
  %5278 = vmatpush1.msra.mxu0 0.0
  %5279 = vmatprep.subr.mxu0 0.0
  %5280 = vmatpush1.msra.mxu0 0.0
  %5281 = vmatprep.subr.mxu0 0.0
  %5282 = vmatpush1.msra.mxu0 0.0
  %5283 = vmatprep.subr.mxu0 0.0
  %5284 = vmatpush1.msra.mxu0 0.0
  %5285 = vmatprep.subr.mxu0 0.0
  %5286 = vmatpush1.msra.mxu0 0.0
  %5287 = vmatprep.subr.mxu0 0.0
  %5288 = vmatpush1.msra.mxu0 0.0
  %5289 = vmatprep.subr.mxu0 0.0
  %5290 = vmatpush1.msra.mxu0 0.0
  %5291 = vmatprep.subr.mxu0 0.0
  %5292 = vmatpush1.msra.mxu0 0.0
  %5293 = vmatprep.subr.mxu0 0.0
  %5294 = vmatpush1.msra.mxu0 0.0
  %5295 = vmatprep.subr.mxu0 0.0
  %5296 = vmatpush1.msra.mxu0 0.0
  %5297 = vmatprep.subr.mxu0 0.0
  %5298 = vmatpush1.msra.mxu0 0.0
  %5299 = vmatprep.subr.mxu0 0.0
  %5300 = vmatpush1.msra.mxu0 0.0
  %5301 = vmatprep.subr.mxu0 0.0
  %5302 = vmatpush1.msra.mxu0 0.0
  %5303 = vmatprep.subr.mxu0 0.0
  %5304 = vmatpush1.msra.mxu0 0.0
  %5305 = vmatprep.subr.mxu0 0.0
  %5306 = vmatpush1.msra.mxu0 0.0
  %5307 = vmatprep.subr.mxu0 0.0
  %5308 = vmatpush1.msra.mxu0 0.0
  %5309 = vmatprep.mubr.f32.mxu0 0.0
  %5310 = vmatmul.mubr.f32.gmra.mrb[0].mxu0 %v5243
  %v5311 = vpop.f32.mrb[0].mxu0
  %v5312 = vadd.f32 %v115, %v5311
  %v5313 = vpop.f32.mrb[0].mxu0
  %5314 = vdwg.mxu0
  %5316 = vrot.lane.b32.xlu0 %v5312, 64
  %v5317 = vpop.permute.xlu0 %5316
  %5319 = vst.msk [vmem:[%s2 + $0x52] sm:$0x3] %vm1131, %v5317
  %v5320 = vmul.f32 %v5312, 0.5
  %v5321 = vtanh.pop %v5320
  %v5322 = vmul.f32 %v5321, 0.5
  %v5323 = vadd.f32 %v5322, 0.5
  %v5324 = vtanh.pop %v5312
  %v5325 = vmul.f32 %v5323, %v5233
  %5327 = vrot.lane.b32.xlu0 %v5324, 96
  %v5328 = vpop.permute.xlu0 %5327
  %v5330 = vmul.f32 %v5323, %v5328
  %5332 = vrot.lane.b32.xlu0 %v5330, 16
  %v5333 = vpop.permute.xlu0 %5332
  %v5335 = vadd.f32 %v5325, %v5333
  %v5336 = vtanh.pop %v5335
  %5338 = vrot.lane.b32.xlu0 %v5336, 32
  %v5339 = vpop.permute.xlu0 %5338
  %v5341 = vmul.f32 %v5323, %v5339
  %5343 = vrot.lane.b32.xlu0 %v5341, 80
  %v5344 = vpop.permute.xlu0 %5343
  %v5345 = vsel %vm116, %v5344, 0
  %5347 = vmatprep.subr.mxu0 0.0
  %5348 = vmatpush1.msra.mxu0 %v18
  %5349 = vmatprep.subr.mxu0 0.0
  %5350 = vmatpush1.msra.mxu0 %v19
  %5351 = vmatprep.subr.mxu0 0.0
  %5352 = vmatpush1.msra.mxu0 0.0
  %5353 = vmatprep.subr.mxu0 0.0
  %5354 = vmatpush1.msra.mxu0 0.0
  %5355 = vmatprep.subr.mxu0 0.0
  %5356 = vmatpush1.msra.mxu0 0.0
  %5357 = vmatprep.subr.mxu0 0.0
  %5358 = vmatpush1.msra.mxu0 0.0
  %5359 = vmatprep.subr.mxu0 0.0
  %5360 = vmatpush1.msra.mxu0 0.0
  %5361 = vmatprep.subr.mxu0 0.0
  %5362 = vmatpush1.msra.mxu0 0.0
  %5363 = vmatprep.subr.mxu0 0.0
  %5364 = vmatpush1.msra.mxu0 0.0
  %5365 = vmatprep.subr.mxu0 0.0
  %5366 = vmatpush1.msra.mxu0 0.0
  %5367 = vmatprep.subr.mxu0 0.0
  %5368 = vmatpush1.msra.mxu0 0.0
  %5369 = vmatprep.subr.mxu0 0.0
  %5370 = vmatpush1.msra.mxu0 0.0
  %5371 = vmatprep.subr.mxu0 0.0
  %5372 = vmatpush1.msra.mxu0 0.0
  %5373 = vmatprep.subr.mxu0 0.0
  %5374 = vmatpush1.msra.mxu0 0.0
  %5375 = vmatprep.subr.mxu0 0.0
  %5376 = vmatpush1.msra.mxu0 0.0
  %5377 = vmatprep.subr.mxu0 0.0
  %5378 = vmatpush1.msra.mxu0 0.0
  %5379 = vmatprep.subr.mxu0 0.0
  %5380 = vmatpush1.msra.mxu0 0.0
  %5381 = vmatprep.subr.mxu0 0.0
  %5382 = vmatpush1.msra.mxu0 0.0
  %5383 = vmatprep.subr.mxu0 0.0
  %5384 = vmatpush1.msra.mxu0 0.0
  %5385 = vmatprep.subr.mxu0 0.0
  %5386 = vmatpush1.msra.mxu0 0.0
  %5387 = vmatprep.subr.mxu0 0.0
  %5388 = vmatpush1.msra.mxu0 0.0
  %5389 = vmatprep.subr.mxu0 0.0
  %5390 = vmatpush1.msra.mxu0 0.0
  %5391 = vmatprep.subr.mxu0 0.0
  %5392 = vmatpush1.msra.mxu0 0.0
  %5393 = vmatprep.subr.mxu0 0.0
  %5394 = vmatpush1.msra.mxu0 0.0
  %5395 = vmatprep.subr.mxu0 0.0
  %5396 = vmatpush1.msra.mxu0 0.0
  %5397 = vmatprep.subr.mxu0 0.0
  %5398 = vmatpush1.msra.mxu0 0.0
  %5399 = vmatprep.subr.mxu0 0.0
  %5400 = vmatpush1.msra.mxu0 0.0
  %5401 = vmatprep.subr.mxu0 0.0
  %5402 = vmatpush1.msra.mxu0 0.0
  %5403 = vmatprep.subr.mxu0 0.0
  %5404 = vmatpush1.msra.mxu0 0.0
  %5405 = vmatprep.subr.mxu0 0.0
  %5406 = vmatpush1.msra.mxu0 0.0
  %5407 = vmatprep.subr.mxu0 0.0
  %5408 = vmatpush1.msra.mxu0 0.0
  %5409 = vmatprep.subr.mxu0 0.0
  %5410 = vmatpush1.msra.mxu0 0.0
  %5411 = vmatprep.mubr.f32.mxu0 0.0
  %5412 = vmatmul.mubr.f32.gmra.mrb[0].mxu0 %v5345
  %v5413 = vpop.f32.mrb[0].mxu0
  %v5414 = vadd.f32 %v115, %v5413
  %v5415 = vpop.f32.mrb[0].mxu0
  %5416 = vdwg.mxu0
  %5418 = vrot.lane.b32.xlu0 %v5414, 64
  %v5419 = vpop.permute.xlu0 %5418
  %5421 = vst.msk [vmem:[%s2 + $0x54] sm:$0x3] %vm1131, %v5419
  %v5422 = vmul.f32 %v5414, 0.5
  %v5423 = vtanh.pop %v5422
  %v5424 = vmul.f32 %v5423, 0.5
  %v5425 = vadd.f32 %v5424, 0.5
  %v5426 = vtanh.pop %v5414
  %v5427 = vmul.f32 %v5425, %v5335
  %5429 = vrot.lane.b32.xlu0 %v5426, 96
  %v5430 = vpop.permute.xlu0 %5429
  %v5432 = vmul.f32 %v5425, %v5430
  %5434 = vrot.lane.b32.xlu0 %v5432, 16
  %v5435 = vpop.permute.xlu0 %5434
  %v5437 = vadd.f32 %v5427, %v5435
  %v5438 = vtanh.pop %v5437
  %5440 = vrot.lane.b32.xlu0 %v5438, 32
  %v5441 = vpop.permute.xlu0 %5440
  %v5443 = vmul.f32 %v5425, %v5441
  %5445 = vrot.lane.b32.xlu0 %v5443, 80
  %v5446 = vpop.permute.xlu0 %5445
  %v5447 = vsel %vm116, %v5446, 0
  %5449 = vmatprep.subr.mxu0 0.0
  %5450 = vmatpush1.msra.mxu0 %v18
  %5451 = vmatprep.subr.mxu0 0.0
  %5452 = vmatpush1.msra.mxu0 %v19
  %5453 = vmatprep.subr.mxu0 0.0
  %5454 = vmatpush1.msra.mxu0 0.0
  %5455 = vmatprep.subr.mxu0 0.0
  %5456 = vmatpush1.msra.mxu0 0.0
  %5457 = vmatprep.subr.mxu0 0.0
  %5458 = vmatpush1.msra.mxu0 0.0
  %5459 = vmatprep.subr.mxu0 0.0
  %5460 = vmatpush1.msra.mxu0 0.0
  %5461 = vmatprep.subr.mxu0 0.0
  %5462 = vmatpush1.msra.mxu0 0.0
  %5463 = vmatprep.subr.mxu0 0.0
  %5464 = vmatpush1.msra.mxu0 0.0
  %5465 = vmatprep.subr.mxu0 0.0
  %5466 = vmatpush1.msra.mxu0 0.0
  %5467 = vmatprep.subr.mxu0 0.0
  %5468 = vmatpush1.msra.mxu0 0.0
  %5469 = vmatprep.subr.mxu0 0.0
  %5470 = vmatpush1.msra.mxu0 0.0
  %5471 = vmatprep.subr.mxu0 0.0
  %5472 = vmatpush1.msra.mxu0 0.0
  %5473 = vmatprep.subr.mxu0 0.0
  %5474 = vmatpush1.msra.mxu0 0.0
  %5475 = vmatprep.subr.mxu0 0.0
  %5476 = vmatpush1.msra.mxu0 0.0
  %5477 = vmatprep.subr.mxu0 0.0
  %5478 = vmatpush1.msra.mxu0 0.0
  %5479 = vmatprep.subr.mxu0 0.0
  %5480 = vmatpush1.msra.mxu0 0.0
  %5481 = vmatprep.subr.mxu0 0.0
  %5482 = vmatpush1.msra.mxu0 0.0
  %5483 = vmatprep.subr.mxu0 0.0
  %5484 = vmatpush1.msra.mxu0 0.0
  %5485 = vmatprep.subr.mxu0 0.0
  %5486 = vmatpush1.msra.mxu0 0.0
  %5487 = vmatprep.subr.mxu0 0.0
  %5488 = vmatpush1.msra.mxu0 0.0
  %5489 = vmatprep.subr.mxu0 0.0
  %5490 = vmatpush1.msra.mxu0 0.0
  %5491 = vmatprep.subr.mxu0 0.0
  %5492 = vmatpush1.msra.mxu0 0.0
  %5493 = vmatprep.subr.mxu0 0.0
  %5494 = vmatpush1.msra.mxu0 0.0
  %5495 = vmatprep.subr.mxu0 0.0
  %5496 = vmatpush1.msra.mxu0 0.0
  %5497 = vmatprep.subr.mxu0 0.0
  %5498 = vmatpush1.msra.mxu0 0.0
  %5499 = vmatprep.subr.mxu0 0.0
  %5500 = vmatpush1.msra.mxu0 0.0
  %5501 = vmatprep.subr.mxu0 0.0
  %5502 = vmatpush1.msra.mxu0 0.0
  %5503 = vmatprep.subr.mxu0 0.0
  %5504 = vmatpush1.msra.mxu0 0.0
  %5505 = vmatprep.subr.mxu0 0.0
  %5506 = vmatpush1.msra.mxu0 0.0
  %5507 = vmatprep.subr.mxu0 0.0
  %5508 = vmatpush1.msra.mxu0 0.0
  %5509 = vmatprep.subr.mxu0 0.0
  %5510 = vmatpush1.msra.mxu0 0.0
  %5511 = vmatprep.subr.mxu0 0.0
  %5512 = vmatpush1.msra.mxu0 0.0
  %5513 = vmatprep.mubr.f32.mxu0 0.0
  %5514 = vmatmul.mubr.f32.gmra.mrb[0].mxu0 %v5447
  %v5515 = vpop.f32.mrb[0].mxu0
  %v5516 = vadd.f32 %v115, %v5515
  %v5517 = vpop.f32.mrb[0].mxu0
  %5518 = vdwg.mxu0
  %5520 = vrot.lane.b32.xlu0 %v5516, 64
  %v5521 = vpop.permute.xlu0 %5520
  %5523 = vst.msk [vmem:[%s2 + $0x56] sm:$0x3] %vm1131, %v5521
  %v5524 = vmul.f32 %v5516, 0.5
  %v5525 = vtanh.pop %v5524
  %v5526 = vmul.f32 %v5525, 0.5
  %v5527 = vadd.f32 %v5526, 0.5
  %v5528 = vtanh.pop %v5516
  %v5529 = vmul.f32 %v5527, %v5437
  %5531 = vrot.lane.b32.xlu0 %v5528, 96
  %v5532 = vpop.permute.xlu0 %5531
  %v5534 = vmul.f32 %v5527, %v5532
  %5536 = vrot.lane.b32.xlu0 %v5534, 16
  %v5537 = vpop.permute.xlu0 %5536
  %v5539 = vadd.f32 %v5529, %v5537
  %v5540 = vtanh.pop %v5539
  %5542 = vrot.lane.b32.xlu0 %v5540, 32
  %v5543 = vpop.permute.xlu0 %5542
  %v5545 = vmul.f32 %v5527, %v5543
  %5547 = vrot.lane.b32.xlu0 %v5545, 80
  %v5548 = vpop.permute.xlu0 %5547
  %v5549 = vsel %vm116, %v5548, 0
  %5551 = vmatprep.subr.mxu0 0.0
  %5552 = vmatpush1.msra.mxu0 %v18
  %5553 = vmatprep.subr.mxu0 0.0
  %5554 = vmatpush1.msra.mxu0 %v19
  %5555 = vmatprep.subr.mxu0 0.0
  %5556 = vmatpush1.msra.mxu0 0.0
  %5557 = vmatprep.subr.mxu0 0.0
  %5558 = vmatpush1.msra.mxu0 0.0
  %5559 = vmatprep.subr.mxu0 0.0
  %5560 = vmatpush1.msra.mxu0 0.0
  %5561 = vmatprep.subr.mxu0 0.0
  %5562 = vmatpush1.msra.mxu0 0.0
  %5563 = vmatprep.subr.mxu0 0.0
  %5564 = vmatpush1.msra.mxu0 0.0
  %5565 = vmatprep.subr.mxu0 0.0
  %5566 = vmatpush1.msra.mxu0 0.0
  %5567 = vmatprep.subr.mxu0 0.0
  %5568 = vmatpush1.msra.mxu0 0.0
  %5569 = vmatprep.subr.mxu0 0.0
  %5570 = vmatpush1.msra.mxu0 0.0
  %5571 = vmatprep.subr.mxu0 0.0
  %5572 = vmatpush1.msra.mxu0 0.0
  %5573 = vmatprep.subr.mxu0 0.0
  %5574 = vmatpush1.msra.mxu0 0.0
  %5575 = vmatprep.subr.mxu0 0.0
  %5576 = vmatpush1.msra.mxu0 0.0
  %5577 = vmatprep.subr.mxu0 0.0
  %5578 = vmatpush1.msra.mxu0 0.0
  %5579 = vmatprep.subr.mxu0 0.0
  %5580 = vmatpush1.msra.mxu0 0.0
  %5581 = vmatprep.subr.mxu0 0.0
  %5582 = vmatpush1.msra.mxu0 0.0
  %5583 = vmatprep.subr.mxu0 0.0
  %5584 = vmatpush1.msra.mxu0 0.0
  %5585 = vmatprep.subr.mxu0 0.0
  %5586 = vmatpush1.msra.mxu0 0.0
  %5587 = vmatprep.subr.mxu0 0.0
  %5588 = vmatpush1.msra.mxu0 0.0
  %5589 = vmatprep.subr.mxu0 0.0
  %5590 = vmatpush1.msra.mxu0 0.0
  %5591 = vmatprep.subr.mxu0 0.0
  %5592 = vmatpush1.msra.mxu0 0.0
  %5593 = vmatprep.subr.mxu0 0.0
  %5594 = vmatpush1.msra.mxu0 0.0
  %5595 = vmatprep.subr.mxu0 0.0
  %5596 = vmatpush1.msra.mxu0 0.0
  %5597 = vmatprep.subr.mxu0 0.0
  %5598 = vmatpush1.msra.mxu0 0.0
  %5599 = vmatprep.subr.mxu0 0.0
  %5600 = vmatpush1.msra.mxu0 0.0
  %5601 = vmatprep.subr.mxu0 0.0
  %5602 = vmatpush1.msra.mxu0 0.0
  %5603 = vmatprep.subr.mxu0 0.0
  %5604 = vmatpush1.msra.mxu0 0.0
  %5605 = vmatprep.subr.mxu0 0.0
  %5606 = vmatpush1.msra.mxu0 0.0
  %5607 = vmatprep.subr.mxu0 0.0
  %5608 = vmatpush1.msra.mxu0 0.0
  %5609 = vmatprep.subr.mxu0 0.0
  %5610 = vmatpush1.msra.mxu0 0.0
  %5611 = vmatprep.subr.mxu0 0.0
  %5612 = vmatpush1.msra.mxu0 0.0
  %5613 = vmatprep.subr.mxu0 0.0
  %5614 = vmatpush1.msra.mxu0 0.0
  %5615 = vmatprep.mubr.f32.mxu0 0.0
  %5616 = vmatmul.mubr.f32.gmra.mrb[0].mxu0 %v5549
  %v5617 = vpop.f32.mrb[0].mxu0
  %v5618 = vadd.f32 %v115, %v5617
  %v5619 = vpop.f32.mrb[0].mxu0
  %5620 = vdwg.mxu0
  %5622 = vrot.lane.b32.xlu0 %v5618, 64
  %v5623 = vpop.permute.xlu0 %5622
  %5625 = vst.msk [vmem:[%s2 + $0x58] sm:$0x3] %vm1131, %v5623
  %v5626 = vmul.f32 %v5618, 0.5
  %v5627 = vtanh.pop %v5626
  %v5628 = vmul.f32 %v5627, 0.5
  %v5629 = vadd.f32 %v5628, 0.5
  %v5630 = vtanh.pop %v5618
  %v5631 = vmul.f32 %v5629, %v5539
  %5633 = vrot.lane.b32.xlu0 %v5630, 96
  %v5634 = vpop.permute.xlu0 %5633
  %v5636 = vmul.f32 %v5629, %v5634
  %5638 = vrot.lane.b32.xlu0 %v5636, 16
  %v5639 = vpop.permute.xlu0 %5638
  %v5641 = vadd.f32 %v5631, %v5639
  %v5642 = vtanh.pop %v5641
  %5644 = vrot.lane.b32.xlu0 %v5642, 32
  %v5645 = vpop.permute.xlu0 %5644
  %v5647 = vmul.f32 %v5629, %v5645
  %5649 = vrot.lane.b32.xlu0 %v5647, 80
  %v5650 = vpop.permute.xlu0 %5649
  %v5651 = vsel %vm116, %v5650, 0
  %5653 = vmatprep.subr.mxu0 0.0
  %5654 = vmatpush1.msra.mxu0 %v18
  %5655 = vmatprep.subr.mxu0 0.0
  %5656 = vmatpush1.msra.mxu0 %v19
  %5657 = vmatprep.subr.mxu0 0.0
  %5658 = vmatpush1.msra.mxu0 0.0
  %5659 = vmatprep.subr.mxu0 0.0
  %5660 = vmatpush1.msra.mxu0 0.0
  %5661 = vmatprep.subr.mxu0 0.0
  %5662 = vmatpush1.msra.mxu0 0.0
  %5663 = vmatprep.subr.mxu0 0.0
  %5664 = vmatpush1.msra.mxu0 0.0
  %5665 = vmatprep.subr.mxu0 0.0
  %5666 = vmatpush1.msra.mxu0 0.0
  %5667 = vmatprep.subr.mxu0 0.0
  %5668 = vmatpush1.msra.mxu0 0.0
  %5669 = vmatprep.subr.mxu0 0.0
  %5670 = vmatpush1.msra.mxu0 0.0
  %5671 = vmatprep.subr.mxu0 0.0
  %5672 = vmatpush1.msra.mxu0 0.0
  %5673 = vmatprep.subr.mxu0 0.0
  %5674 = vmatpush1.msra.mxu0 0.0
  %5675 = vmatprep.subr.mxu0 0.0
  %5676 = vmatpush1.msra.mxu0 0.0
  %5677 = vmatprep.subr.mxu0 0.0
  %5678 = vmatpush1.msra.mxu0 0.0
  %5679 = vmatprep.subr.mxu0 0.0
  %5680 = vmatpush1.msra.mxu0 0.0
  %5681 = vmatprep.subr.mxu0 0.0
  %5682 = vmatpush1.msra.mxu0 0.0
  %5683 = vmatprep.subr.mxu0 0.0
  %5684 = vmatpush1.msra.mxu0 0.0
  %5685 = vmatprep.subr.mxu0 0.0
  %5686 = vmatpush1.msra.mxu0 0.0
  %5687 = vmatprep.subr.mxu0 0.0
  %5688 = vmatpush1.msra.mxu0 0.0
  %5689 = vmatprep.subr.mxu0 0.0
  %5690 = vmatpush1.msra.mxu0 0.0
  %5691 = vmatprep.subr.mxu0 0.0
  %5692 = vmatpush1.msra.mxu0 0.0
  %5693 = vmatprep.subr.mxu0 0.0
  %5694 = vmatpush1.msra.mxu0 0.0
  %5695 = vmatprep.subr.mxu0 0.0
  %5696 = vmatpush1.msra.mxu0 0.0
  %5697 = vmatprep.subr.mxu0 0.0
  %5698 = vmatpush1.msra.mxu0 0.0
  %5699 = vmatprep.subr.mxu0 0.0
  %5700 = vmatpush1.msra.mxu0 0.0
  %5701 = vmatprep.subr.mxu0 0.0
  %5702 = vmatpush1.msra.mxu0 0.0
  %5703 = vmatprep.subr.mxu0 0.0
  %5704 = vmatpush1.msra.mxu0 0.0
  %5705 = vmatprep.subr.mxu0 0.0
  %5706 = vmatpush1.msra.mxu0 0.0
  %5707 = vmatprep.subr.mxu0 0.0
  %5708 = vmatpush1.msra.mxu0 0.0
  %5709 = vmatprep.subr.mxu0 0.0
  %5710 = vmatpush1.msra.mxu0 0.0
  %5711 = vmatprep.subr.mxu0 0.0
  %5712 = vmatpush1.msra.mxu0 0.0
  %5713 = vmatprep.subr.mxu0 0.0
  %5714 = vmatpush1.msra.mxu0 0.0
  %5715 = vmatprep.subr.mxu0 0.0
  %5716 = vmatpush1.msra.mxu0 0.0
  %5717 = vmatprep.mubr.f32.mxu0 0.0
  %5718 = vmatmul.mubr.f32.gmra.mrb[0].mxu0 %v5651
  %v5719 = vpop.f32.mrb[0].mxu0
  %v5720 = vadd.f32 %v115, %v5719
  %v5721 = vpop.f32.mrb[0].mxu0
  %5722 = vdwg.mxu0
  %5724 = vrot.lane.b32.xlu0 %v5720, 64
  %v5725 = vpop.permute.xlu0 %5724
  %5727 = vst.msk [vmem:[%s2 + $0x5a] sm:$0x3] %vm1131, %v5725
  %v5728 = vmul.f32 %v5720, 0.5
  %v5729 = vtanh.pop %v5728
  %v5730 = vmul.f32 %v5729, 0.5
  %v5731 = vadd.f32 %v5730, 0.5
  %v5732 = vtanh.pop %v5720
  %v5733 = vmul.f32 %v5731, %v5641
  %5735 = vrot.lane.b32.xlu0 %v5732, 96
  %v5736 = vpop.permute.xlu0 %5735
  %v5738 = vmul.f32 %v5731, %v5736
  %5740 = vrot.lane.b32.xlu0 %v5738, 16
  %v5741 = vpop.permute.xlu0 %5740
  %v5743 = vadd.f32 %v5733, %v5741
  %v5744 = vtanh.pop %v5743
  %5746 = vrot.lane.b32.xlu0 %v5744, 32
  %v5747 = vpop.permute.xlu0 %5746
  %v5749 = vmul.f32 %v5731, %v5747
  %5751 = vrot.lane.b32.xlu0 %v5749, 80
  %v5752 = vpop.permute.xlu0 %5751
  %v5753 = vsel %vm116, %v5752, 0
  %5755 = vmatprep.subr.mxu0 0.0
  %5756 = vmatpush1.msra.mxu0 %v18
  %5757 = vmatprep.subr.mxu0 0.0
  %5758 = vmatpush1.msra.mxu0 %v19
  %5759 = vmatprep.subr.mxu0 0.0
  %5760 = vmatpush1.msra.mxu0 0.0
  %5761 = vmatprep.subr.mxu0 0.0
  %5762 = vmatpush1.msra.mxu0 0.0
  %5763 = vmatprep.subr.mxu0 0.0
  %5764 = vmatpush1.msra.mxu0 0.0
  %5765 = vmatprep.subr.mxu0 0.0
  %5766 = vmatpush1.msra.mxu0 0.0
  %5767 = vmatprep.subr.mxu0 0.0
  %5768 = vmatpush1.msra.mxu0 0.0
  %5769 = vmatprep.subr.mxu0 0.0
  %5770 = vmatpush1.msra.mxu0 0.0
  %5771 = vmatprep.subr.mxu0 0.0
  %5772 = vmatpush1.msra.mxu0 0.0
  %5773 = vmatprep.subr.mxu0 0.0
  %5774 = vmatpush1.msra.mxu0 0.0
  %5775 = vmatprep.subr.mxu0 0.0
  %5776 = vmatpush1.msra.mxu0 0.0
  %5777 = vmatprep.subr.mxu0 0.0
  %5778 = vmatpush1.msra.mxu0 0.0
  %5779 = vmatprep.subr.mxu0 0.0
  %5780 = vmatpush1.msra.mxu0 0.0
  %5781 = vmatprep.subr.mxu0 0.0
  %5782 = vmatpush1.msra.mxu0 0.0
  %5783 = vmatprep.subr.mxu0 0.0
  %5784 = vmatpush1.msra.mxu0 0.0
  %5785 = vmatprep.subr.mxu0 0.0
  %5786 = vmatpush1.msra.mxu0 0.0
  %5787 = vmatprep.subr.mxu0 0.0
  %5788 = vmatpush1.msra.mxu0 0.0
  %5789 = vmatprep.subr.mxu0 0.0
  %5790 = vmatpush1.msra.mxu0 0.0
  %5791 = vmatprep.subr.mxu0 0.0
  %5792 = vmatpush1.msra.mxu0 0.0
  %5793 = vmatprep.subr.mxu0 0.0
  %5794 = vmatpush1.msra.mxu0 0.0
  %5795 = vmatprep.subr.mxu0 0.0
  %5796 = vmatpush1.msra.mxu0 0.0
  %5797 = vmatprep.subr.mxu0 0.0
  %5798 = vmatpush1.msra.mxu0 0.0
  %5799 = vmatprep.subr.mxu0 0.0
  %5800 = vmatpush1.msra.mxu0 0.0
  %5801 = vmatprep.subr.mxu0 0.0
  %5802 = vmatpush1.msra.mxu0 0.0
  %5803 = vmatprep.subr.mxu0 0.0
  %5804 = vmatpush1.msra.mxu0 0.0
  %5805 = vmatprep.subr.mxu0 0.0
  %5806 = vmatpush1.msra.mxu0 0.0
  %5807 = vmatprep.subr.mxu0 0.0
  %5808 = vmatpush1.msra.mxu0 0.0
  %5809 = vmatprep.subr.mxu0 0.0
  %5810 = vmatpush1.msra.mxu0 0.0
  %5811 = vmatprep.subr.mxu0 0.0
  %5812 = vmatpush1.msra.mxu0 0.0
  %5813 = vmatprep.subr.mxu0 0.0
  %5814 = vmatpush1.msra.mxu0 0.0
  %5815 = vmatprep.subr.mxu0 0.0
  %5816 = vmatpush1.msra.mxu0 0.0
  %5817 = vmatprep.subr.mxu0 0.0
  %5818 = vmatpush1.msra.mxu0 0.0
  %5819 = vmatprep.mubr.f32.mxu0 0.0
  %5820 = vmatmul.mubr.f32.gmra.mrb[0].mxu0 %v5753
  %v5821 = vpop.f32.mrb[0].mxu0
  %v5822 = vadd.f32 %v115, %v5821
  %v5823 = vpop.f32.mrb[0].mxu0
  %5824 = vdwg.mxu0
  %5826 = vrot.lane.b32.xlu0 %v5822, 64
  %v5827 = vpop.permute.xlu0 %5826
  %5829 = vst.msk [vmem:[%s2 + $0x5c] sm:$0x3] %vm1131, %v5827
  %v5830 = vmul.f32 %v5822, 0.5
  %v5831 = vtanh.pop %v5830
  %v5832 = vmul.f32 %v5831, 0.5
  %v5833 = vadd.f32 %v5832, 0.5
  %v5834 = vtanh.pop %v5822
  %v5835 = vmul.f32 %v5833, %v5743
  %5837 = vrot.lane.b32.xlu0 %v5834, 96
  %v5838 = vpop.permute.xlu0 %5837
  %v5840 = vmul.f32 %v5833, %v5838
  %5842 = vrot.lane.b32.xlu0 %v5840, 16
  %v5843 = vpop.permute.xlu0 %5842
  %v5845 = vadd.f32 %v5835, %v5843
  %v5846 = vtanh.pop %v5845
  %5848 = vrot.lane.b32.xlu0 %v5846, 32
  %v5849 = vpop.permute.xlu0 %5848
  %v5851 = vmul.f32 %v5833, %v5849
  %5853 = vrot.lane.b32.xlu0 %v5851, 80
  %v5854 = vpop.permute.xlu0 %5853
  %v5855 = vsel %vm116, %v5854, 0
  %5857 = vmatprep.subr.mxu0 0.0
  %5858 = vmatpush1.msra.mxu0 %v18
  %5859 = vmatprep.subr.mxu0 0.0
  %5860 = vmatpush1.msra.mxu0 %v19
  %5861 = vmatprep.subr.mxu0 0.0
  %5862 = vmatpush1.msra.mxu0 0.0
  %5863 = vmatprep.subr.mxu0 0.0
  %5864 = vmatpush1.msra.mxu0 0.0
  %5865 = vmatprep.subr.mxu0 0.0
  %5866 = vmatpush1.msra.mxu0 0.0
  %5867 = vmatprep.subr.mxu0 0.0
  %5868 = vmatpush1.msra.mxu0 0.0
  %5869 = vmatprep.subr.mxu0 0.0
  %5870 = vmatpush1.msra.mxu0 0.0
  %5871 = vmatprep.subr.mxu0 0.0
  %5872 = vmatpush1.msra.mxu0 0.0
  %5873 = vmatprep.subr.mxu0 0.0
  %5874 = vmatpush1.msra.mxu0 0.0
  %5875 = vmatprep.subr.mxu0 0.0
  %5876 = vmatpush1.msra.mxu0 0.0
  %5877 = vmatprep.subr.mxu0 0.0
  %5878 = vmatpush1.msra.mxu0 0.0
  %5879 = vmatprep.subr.mxu0 0.0
  %5880 = vmatpush1.msra.mxu0 0.0
  %5881 = vmatprep.subr.mxu0 0.0
  %5882 = vmatpush1.msra.mxu0 0.0
  %5883 = vmatprep.subr.mxu0 0.0
  %5884 = vmatpush1.msra.mxu0 0.0
  %5885 = vmatprep.subr.mxu0 0.0
  %5886 = vmatpush1.msra.mxu0 0.0
  %5887 = vmatprep.subr.mxu0 0.0
  %5888 = vmatpush1.msra.mxu0 0.0
  %5889 = vmatprep.subr.mxu0 0.0
  %5890 = vmatpush1.msra.mxu0 0.0
  %5891 = vmatprep.subr.mxu0 0.0
  %5892 = vmatpush1.msra.mxu0 0.0
  %5893 = vmatprep.subr.mxu0 0.0
  %5894 = vmatpush1.msra.mxu0 0.0
  %5895 = vmatprep.subr.mxu0 0.0
  %5896 = vmatpush1.msra.mxu0 0.0
  %5897 = vmatprep.subr.mxu0 0.0
  %5898 = vmatpush1.msra.mxu0 0.0
  %5899 = vmatprep.subr.mxu0 0.0
  %5900 = vmatpush1.msra.mxu0 0.0
  %5901 = vmatprep.subr.mxu0 0.0
  %5902 = vmatpush1.msra.mxu0 0.0
  %5903 = vmatprep.subr.mxu0 0.0
  %5904 = vmatpush1.msra.mxu0 0.0
  %5905 = vmatprep.subr.mxu0 0.0
  %5906 = vmatpush1.msra.mxu0 0.0
  %5907 = vmatprep.subr.mxu0 0.0
  %5908 = vmatpush1.msra.mxu0 0.0
  %5909 = vmatprep.subr.mxu0 0.0
  %5910 = vmatpush1.msra.mxu0 0.0
  %5911 = vmatprep.subr.mxu0 0.0
  %5912 = vmatpush1.msra.mxu0 0.0
  %5913 = vmatprep.subr.mxu0 0.0
  %5914 = vmatpush1.msra.mxu0 0.0
  %5915 = vmatprep.subr.mxu0 0.0
  %5916 = vmatpush1.msra.mxu0 0.0
  %5917 = vmatprep.subr.mxu0 0.0
  %5918 = vmatpush1.msra.mxu0 0.0
  %5919 = vmatprep.subr.mxu0 0.0
  %5920 = vmatpush1.msra.mxu0 0.0
  %5921 = vmatprep.mubr.f32.mxu0 0.0
  %5922 = vmatmul.mubr.f32.gmra.mrb[0].mxu0 %v5855
  %v5923 = vpop.f32.mrb[0].mxu0
  %v5924 = vadd.f32 %v115, %v5923
  %v5925 = vpop.f32.mrb[0].mxu0
  %5926 = vdwg.mxu0
  %5928 = vrot.lane.b32.xlu0 %v5924, 64
  %v5929 = vpop.permute.xlu0 %5928
  %5931 = vst.msk [vmem:[%s2 + $0x5e] sm:$0x3] %vm1131, %v5929
  %v5932 = vmul.f32 %v5924, 0.5
  %v5933 = vtanh.pop %v5932
  %v5934 = vmul.f32 %v5933, 0.5
  %v5935 = vadd.f32 %v5934, 0.5
  %v5936 = vtanh.pop %v5924
  %v5937 = vmul.f32 %v5935, %v5845
  %5939 = vrot.lane.b32.xlu0 %v5936, 96
  %v5940 = vpop.permute.xlu0 %5939
  %v5942 = vmul.f32 %v5935, %v5940
  %5944 = vrot.lane.b32.xlu0 %v5942, 16
  %v5945 = vpop.permute.xlu0 %5944
  %v5947 = vadd.f32 %v5937, %v5945
  %v5948 = vtanh.pop %v5947
  %5950 = vrot.lane.b32.xlu0 %v5948, 32
  %v5951 = vpop.permute.xlu0 %5950
  %v5953 = vmul.f32 %v5935, %v5951
  %5955 = vrot.lane.b32.xlu0 %v5953, 80
  %v5956 = vpop.permute.xlu0 %5955
  %v5957 = vsel %vm116, %v5956, 0
  %5959 = vmatprep.subr.mxu0 0.0
  %5960 = vmatpush1.msra.mxu0 %v18
  %5961 = vmatprep.subr.mxu0 0.0
  %5962 = vmatpush1.msra.mxu0 %v19
  %5963 = vmatprep.subr.mxu0 0.0
  %5964 = vmatpush1.msra.mxu0 0.0
  %5965 = vmatprep.subr.mxu0 0.0
  %5966 = vmatpush1.msra.mxu0 0.0
  %5967 = vmatprep.subr.mxu0 0.0
  %5968 = vmatpush1.msra.mxu0 0.0
  %5969 = vmatprep.subr.mxu0 0.0
  %5970 = vmatpush1.msra.mxu0 0.0
  %5971 = vmatprep.subr.mxu0 0.0
  %5972 = vmatpush1.msra.mxu0 0.0
  %5973 = vmatprep.subr.mxu0 0.0
  %5974 = vmatpush1.msra.mxu0 0.0
  %5975 = vmatprep.subr.mxu0 0.0
  %5976 = vmatpush1.msra.mxu0 0.0
  %5977 = vmatprep.subr.mxu0 0.0
  %5978 = vmatpush1.msra.mxu0 0.0
  %5979 = vmatprep.subr.mxu0 0.0
  %5980 = vmatpush1.msra.mxu0 0.0
  %5981 = vmatprep.subr.mxu0 0.0
  %5982 = vmatpush1.msra.mxu0 0.0
  %5983 = vmatprep.subr.mxu0 0.0
  %5984 = vmatpush1.msra.mxu0 0.0
  %5985 = vmatprep.subr.mxu0 0.0
  %5986 = vmatpush1.msra.mxu0 0.0
  %5987 = vmatprep.subr.mxu0 0.0
  %5988 = vmatpush1.msra.mxu0 0.0
  %5989 = vmatprep.subr.mxu0 0.0
  %5990 = vmatpush1.msra.mxu0 0.0
  %5991 = vmatprep.subr.mxu0 0.0
  %5992 = vmatpush1.msra.mxu0 0.0
  %5993 = vmatprep.subr.mxu0 0.0
  %5994 = vmatpush1.msra.mxu0 0.0
  %5995 = vmatprep.subr.mxu0 0.0
  %5996 = vmatpush1.msra.mxu0 0.0
  %5997 = vmatprep.subr.mxu0 0.0
  %5998 = vmatpush1.msra.mxu0 0.0
  %5999 = vmatprep.subr.mxu0 0.0
  %6000 = vmatpush1.msra.mxu0 0.0
  %6001 = vmatprep.subr.mxu0 0.0
  %6002 = vmatpush1.msra.mxu0 0.0
  %6003 = vmatprep.subr.mxu0 0.0
  %6004 = vmatpush1.msra.mxu0 0.0
  %6005 = vmatprep.subr.mxu0 0.0
  %6006 = vmatpush1.msra.mxu0 0.0
  %6007 = vmatprep.subr.mxu0 0.0
  %6008 = vmatpush1.msra.mxu0 0.0
  %6009 = vmatprep.subr.mxu0 0.0
  %6010 = vmatpush1.msra.mxu0 0.0
  %6011 = vmatprep.subr.mxu0 0.0
  %6012 = vmatpush1.msra.mxu0 0.0
  %6013 = vmatprep.subr.mxu0 0.0
  %6014 = vmatpush1.msra.mxu0 0.0
  %6015 = vmatprep.subr.mxu0 0.0
  %6016 = vmatpush1.msra.mxu0 0.0
  %6017 = vmatprep.subr.mxu0 0.0
  %6018 = vmatpush1.msra.mxu0 0.0
  %6019 = vmatprep.subr.mxu0 0.0
  %6020 = vmatpush1.msra.mxu0 0.0
  %6021 = vmatprep.subr.mxu0 0.0
  %6022 = vmatpush1.msra.mxu0 0.0
  %6023 = vmatprep.mubr.f32.mxu0 0.0
  %6024 = vmatmul.mubr.f32.gmra.mrb[0].mxu0 %v5957
  %v6025 = vpop.f32.mrb[0].mxu0
  %v6026 = vadd.f32 %v115, %v6025
  %v6027 = vpop.f32.mrb[0].mxu0
  %6028 = vdwg.mxu0
  %6030 = vrot.lane.b32.xlu0 %v6026, 64
  %v6031 = vpop.permute.xlu0 %6030
  %6033 = vst.msk [vmem:[%s2 + $0x60] sm:$0x3] %vm1131, %v6031
  %v6034 = vmul.f32 %v6026, 0.5
  %v6035 = vtanh.pop %v6034
  %v6036 = vmul.f32 %v6035, 0.5
  %v6037 = vadd.f32 %v6036, 0.5
  %v6038 = vtanh.pop %v6026
  %v6039 = vmul.f32 %v6037, %v5947
  %6041 = vrot.lane.b32.xlu0 %v6038, 96
  %v6042 = vpop.permute.xlu0 %6041
  %v6044 = vmul.f32 %v6037, %v6042
  %6046 = vrot.lane.b32.xlu0 %v6044, 16
  %v6047 = vpop.permute.xlu0 %6046
  %v6049 = vadd.f32 %v6039, %v6047
  %v6050 = vtanh.pop %v6049
  %6052 = vrot.lane.b32.xlu0 %v6050, 32
  %v6053 = vpop.permute.xlu0 %6052
  %v6055 = vmul.f32 %v6037, %v6053
  %6057 = vrot.lane.b32.xlu0 %v6055, 80
  %v6058 = vpop.permute.xlu0 %6057
  %v6059 = vsel %vm116, %v6058, 0
  %6061 = vmatprep.subr.mxu0 0.0
  %6062 = vmatpush1.msra.mxu0 %v18
  %6063 = vmatprep.subr.mxu0 0.0
  %6064 = vmatpush1.msra.mxu0 %v19
  %6065 = vmatprep.subr.mxu0 0.0
  %6066 = vmatpush1.msra.mxu0 0.0
  %6067 = vmatprep.subr.mxu0 0.0
  %6068 = vmatpush1.msra.mxu0 0.0
  %6069 = vmatprep.subr.mxu0 0.0
  %6070 = vmatpush1.msra.mxu0 0.0
  %6071 = vmatprep.subr.mxu0 0.0
  %6072 = vmatpush1.msra.mxu0 0.0
  %6073 = vmatprep.subr.mxu0 0.0
  %6074 = vmatpush1.msra.mxu0 0.0
  %6075 = vmatprep.subr.mxu0 0.0
  %6076 = vmatpush1.msra.mxu0 0.0
  %6077 = vmatprep.subr.mxu0 0.0
  %6078 = vmatpush1.msra.mxu0 0.0
  %6079 = vmatprep.subr.mxu0 0.0
  %6080 = vmatpush1.msra.mxu0 0.0
  %6081 = vmatprep.subr.mxu0 0.0
  %6082 = vmatpush1.msra.mxu0 0.0
  %6083 = vmatprep.subr.mxu0 0.0
  %6084 = vmatpush1.msra.mxu0 0.0
  %6085 = vmatprep.subr.mxu0 0.0
  %6086 = vmatpush1.msra.mxu0 0.0
  %6087 = vmatprep.subr.mxu0 0.0
  %6088 = vmatpush1.msra.mxu0 0.0
  %6089 = vmatprep.subr.mxu0 0.0
  %6090 = vmatpush1.msra.mxu0 0.0
  %6091 = vmatprep.subr.mxu0 0.0
  %6092 = vmatpush1.msra.mxu0 0.0
  %6093 = vmatprep.subr.mxu0 0.0
  %6094 = vmatpush1.msra.mxu0 0.0
  %6095 = vmatprep.subr.mxu0 0.0
  %6096 = vmatpush1.msra.mxu0 0.0
  %6097 = vmatprep.subr.mxu0 0.0
  %6098 = vmatpush1.msra.mxu0 0.0
  %6099 = vmatprep.subr.mxu0 0.0
  %6100 = vmatpush1.msra.mxu0 0.0
  %6101 = vmatprep.subr.mxu0 0.0
  %6102 = vmatpush1.msra.mxu0 0.0
  %6103 = vmatprep.subr.mxu0 0.0
  %6104 = vmatpush1.msra.mxu0 0.0
  %6105 = vmatprep.subr.mxu0 0.0
  %6106 = vmatpush1.msra.mxu0 0.0
  %6107 = vmatprep.subr.mxu0 0.0
  %6108 = vmatpush1.msra.mxu0 0.0
  %6109 = vmatprep.subr.mxu0 0.0
  %6110 = vmatpush1.msra.mxu0 0.0
  %6111 = vmatprep.subr.mxu0 0.0
  %6112 = vmatpush1.msra.mxu0 0.0
  %6113 = vmatprep.subr.mxu0 0.0
  %6114 = vmatpush1.msra.mxu0 0.0
  %6115 = vmatprep.subr.mxu0 0.0
  %6116 = vmatpush1.msra.mxu0 0.0
  %6117 = vmatprep.subr.mxu0 0.0
  %6118 = vmatpush1.msra.mxu0 0.0
  %6119 = vmatprep.subr.mxu0 0.0
  %6120 = vmatpush1.msra.mxu0 0.0
  %6121 = vmatprep.subr.mxu0 0.0
  %6122 = vmatpush1.msra.mxu0 0.0
  %6123 = vmatprep.subr.mxu0 0.0
  %6124 = vmatpush1.msra.mxu0 0.0
  %6125 = vmatprep.mubr.f32.mxu0 0.0
  %6126 = vmatmul.mubr.f32.gmra.mrb[0].mxu0 %v6059
  %v6127 = vpop.f32.mrb[0].mxu0
  %v6128 = vadd.f32 %v115, %v6127
  %v6129 = vpop.f32.mrb[0].mxu0
  %6130 = vdwg.mxu0
  %6132 = vrot.lane.b32.xlu0 %v6128, 64
  %v6133 = vpop.permute.xlu0 %6132
  %6135 = vst.msk [vmem:[%s2 + $0x62] sm:$0x3] %vm1131, %v6133
  // Predicated region
  $region10: #{lstm_seq2seq_forward.1} parent=0 // pred_check
    _
  $region11: #{lstm_seq2seq_forward.1} parent=0 // pred_check_branch
    %6137 = sbr.rel (0) target = $region13
  $region12: #{lstm_seq2seq_forward.1} parent=0 // pred_region
    _
  $region13: #{lstm_seq2seq_forward.1} parent=0 // pred_fallthru
    _
  // Predicated region
  $region14: #{lstm_seq2seq_forward.1} parent=0 // pred_check
    _
  $region15: #{lstm_seq2seq_forward.1} parent=0 // pred_check_branch
    %6139 = sbr.rel (0) target = $region17
  $region16: #{lstm_seq2seq_forward.1} parent=0 // pred_region
    _
  $region17: #{lstm_seq2seq_forward.1} parent=0 // pred_fallthru
    _

</llo_original>
